<compile_context>
chip_gen: v7x
topology: tpu7x:2x2x1
jax: 0.10.0
libtpu: 0.0.40
codegen_flags: <defaults>
</compile_context>

<pallas_src>
import functools

import jax
import jax.numpy as jnp
from jax.experimental import pallas as pl
from jax.experimental.pallas import tpu as pltpu

K = 6                     # knn neighbors (DynamicEdgeConv default)
LEAKY = 0.1               # LeakyReLU negative slope
BN_EPS = 1e-5             # BatchNorm1d eps
MAX_TILE = 256            # query-row tile for the pairwise-distance kernel
LANE = 128                # pad narrow output channels to this many lanes (unmasked stores)
MXU_DTYPE = jnp.bfloat16  # MXU operand dtype (accumulation stays float32)


# --------------------------- small helpers ---------------------------

def _round_up(x, m):
    return ((x + m - 1) // m) * m


def _pad_out_cols(w, b):
    """Zero-pad the output-channel dim to a multiple of 128 lanes; return true width."""
    cout = w.shape[1]
    cpad = _round_up(cout, LANE)
    if cpad != cout:
        w = jnp.pad(w, ((0, 0), (0, cpad - cout)))
        b = jnp.pad(b, ((0, 0), (0, cpad - cout)))
    return w, b, cout


# --------------------------- Pallas kernels ---------------------------

def _sqdist_kernel(xi_ref, xt_ref, d_ref, *, vpu_path):
    xi = xi_ref[...]                                        # (TN, C)
    xt = xt_ref[...]                                        # (C, N)  (pre-transposed in JAX)
    if vpu_path:
        # C is tiny (e.g. 2 for coordinates): a (TN,C)@(C,N) dot would use ~C/128 of the MXU
        # contraction depth, so compute sum_c (x_i,c - x_j,c)^2 directly on the VPU instead.
        d = jnp.zeros(d_ref.shape, jnp.float32)
        for c in range(xi.shape[1]):
            diff = xi[:, c:c + 1] - xt[c:c + 1, :]          # (TN, N)
            d = d + diff * diff
        d_ref[...] = d
    else:
        sq_i = jnp.sum(xi * xi, axis=-1, keepdims=True)     # (TN, 1)
        sq_j = jnp.sum(xt * xt, axis=0, keepdims=True)      # (1, N)
        cross = jnp.dot(xi, xt, preferred_element_type=jnp.float32)
        d_ref[...] = sq_i + sq_j - 2.0 * cross


def pairwise_sqdist(x):
    n, c = x.shape
    tn = min(n, MAX_TILE)
    assert n % tn == 0
    kern = functools.partial(_sqdist_kernel, vpu_path=(c <= 4))
    return pl.pallas_call(
        kern,
        out_shape=jax.ShapeDtypeStruct((n, n), jnp.float32),
        grid=(n // tn,),
        in_specs=[pl.BlockSpec((tn, c), lambda i: (i, 0)),
                  pl.BlockSpec((c, n), lambda i: (0, 0))],
        out_specs=pl.BlockSpec((tn, n), lambda i: (i, 0)),
        compiler_params=pltpu.CompilerParams(dimension_semantics=("parallel",)),
    )(x, x.T)


def _edgeconv_kernel(feat_ref, w1_ref, b1_ref, w2_ref, b2_ref, w3_ref, b3_ref, out_ref, *, k):
    # EdgeConv message MLP, aggr='add'.  All K neighbor slots are stacked row-wise so the
    # MLP runs as 3 matmuls with M = K*N rows (MXU-friendly) instead of K tiny per-slot
    # matmuls.  The eval-mode BatchNorms are pre-folded into w2/b2 and w3/b3.
    n = out_ref.shape[0]
    h = feat_ref[...]                                                        # (K*N, 2C) bf16
    h = jnp.dot(h, w1_ref[...], preferred_element_type=jnp.float32) + b1_ref[...]
    h = jnp.where(h > 0, h, LEAKY * h).astype(MXU_DTYPE)
    h = jnp.dot(h, w2_ref[...], preferred_element_type=jnp.float32) + b2_ref[...]
    h = jnp.where(h > 0, h, LEAKY * h).astype(MXU_DTYPE)
    h = jnp.dot(h, w3_ref[...], preferred_element_type=jnp.float32) + b3_ref[...]
    acc = h[0:n, :]                                                          # 'add' over K slots
    for s in range(1, k):
        acc = acc + h[s * n:(s + 1) * n, :]
    out_ref[...] = acc


def edgeconv_mlp(feat2d, wb, n, cout):
    # TODO(synk): single-block kernel (everything fits VMEM at demo sizes); tile the node axis
    # with a (K, TN, 2C) BlockSpec for very large graphs.
    cpad = wb[4].shape[1]
    k = feat2d.shape[0] // n
    kern = functools.partial(_edgeconv_kernel, k=k)
    args = (feat2d,) + tuple(wb)
    out = pl.pallas_call(
        kern,
        out_shape=jax.ShapeDtypeStruct((n, cpad), jnp.float32),
        grid=(1,),
        in_specs=[pl.BlockSpec(a.shape, lambda i, nd=a.ndim: (0,) * nd) for a in args],
        out_specs=pl.BlockSpec((n, cpad), lambda i: (0, 0)),
    )(*args)
    return out if cout == cpad else out[:, :cout]


def _gcn_chain_kernel(*refs, n_layers):
    # refs = (adj, h0, w_0, b_0, ..., w_{L-1}, b_{L-1}, out)
    adj = refs[0][...]                                       # (N, N) bf16, resident in VMEM
    out_ref = refs[-1]
    h = refs[1][...]                                         # (N, C0) bf16
    y = None
    for li in range(n_layers):
        w = refs[2 + 2 * li][...]
        b = refs[3 + 2 * li][...]
        xw = jnp.dot(h, w, preferred_element_type=jnp.float32)               # X @ W (once)
        y = jnp.dot(adj, xw.astype(MXU_DTYPE), preferred_element_type=jnp.float32) + b
        if li < n_layers - 1:                                # LeakyReLU on all but the last GCN
            y = jnp.where(y > 0, y, LEAKY * y)
            h = y.astype(MXU_DTYPE)
    out_ref[...] = y


def gcn_chain(adj, h0, layers, cout):
    # TODO(synk): whole-graph single-block kernel; for graphs too large for VMEM (esp. v7x's
    # 64 MiB) block the adjacency contraction axis with an 'arbitrary' grid axis + accumulator.
    n = adj.shape[0]
    cpad = layers[-1][0].shape[1]
    args = [adj, h0]
    for w, b in layers:
        args.extend([w, b])
    kern = functools.partial(_gcn_chain_kernel, n_layers=len(layers))
    out = pl.pallas_call(
        kern,
        out_shape=jax.ShapeDtypeStruct((n, cpad), jnp.float32),
        grid=(1,),
        in_specs=[pl.BlockSpec(a.shape, lambda i, nd=a.ndim: (0,) * nd) for a in args],
        out_specs=pl.BlockSpec((n, cpad), lambda i: (0, 0)),
    )(*args)
    return out if cout == cpad else out[:, :cout]


# --------------------------- parameter prep (fold BN, pad, cast) ---------------------------

def prepare_edgeconv(p):
    """Fold eval-mode BatchNorms into the following Linear, pad Cout to 128, cast weights bf16."""
    def bn_fold(g, be, m, v):
        s = g * jax.lax.rsqrt(v + BN_EPS)
        return s, be - m * s
    s1, t1 = bn_fold(p["g1"], p["be1"], p["m1"], p["v1"])
    s2, t2 = bn_fold(p["g2"], p["be2"], p["m2"], p["v2"])
    w1, b1 = p["w1"], p["b1"]
    w2 = p["w2"] * s1.T
    b2 = p["b2"] + t1 @ p["w2"]
    w3 = p["w3"] * s2.T
    b3 = p["b3"] + t2 @ p["w3"]
    w3, b3, cout = _pad_out_cols(w3, b3)
    wb = (w1.astype(MXU_DTYPE), b1, w2.astype(MXU_DTYPE), b2, w3.astype(MXU_DTYPE), b3)
    return wb, cout


def prepare_gcn_layers(params):
    w5, b5, cout = _pad_out_cols(params["gcn5_w"], params["gcn5_b"])
    layers = [(params["gcn4_w"], params["gcn4_b"])] + list(params["gcns2"]) + [(w5, b5)]
    layers = [(w.astype(MXU_DTYPE), b) for (w, b) in layers]
    return layers, cout


# --------------------------- JAX glue ---------------------------

def knn_indices(x, k):
    # knn_graph(x, k, loop=False): k nearest neighbors per node, self excluded.
    n = x.shape[0]
    d = pairwise_sqdist(x)
    d = d + jnp.eye(n, dtype=d.dtype) * 1e30
    _, idx = jax.lax.top_k(-d, k)                            # (N, k)
    return idx


def dynamic_edge_conv(x, p, k=K):
    # DynamicEdgeConv.forward: knn_graph then EdgeConv with message mlp([x_i, x_j - x_i]), aggr='add'.
    n, c = x.shape
    idx = knn_indices(x, k)                                  # (N, k)    glue
    x_j = x[idx.T]                                           # (k, N, C) neighbor gather (glue)
    x_i = jnp.broadcast_to(x[None, :, :], x_j.shape)
    feat = jnp.concatenate([x_i, x_j - x_i], axis=-1)        # (k, N, 2C) slot-major: no transpose
    feat2d = feat.reshape(k * n, 2 * c).astype(MXU_DTYPE)    # contiguous reshape (free)
    wb, cout = prepare_edgeconv(p)
    return edgeconv_mlp(feat2d, wb, n, cout)


def gcn_norm_adj(edge_index, n):
    # GCNConv gcn_norm with add_self_loops=True: A_hat = D^-1/2 (A + I) D^-1/2 (target-degree).
    src, tgt = edge_index
    a = jnp.zeros((n, n), jnp.float32).at[tgt, src].add(1.0)
    a = a + jnp.eye(n, dtype=jnp.float32)
    deg = jnp.sum(a, axis=1)
    dinv = jax.lax.rsqrt(deg)
    return dinv[:, None] * a * dinv[None, :]


def flow_ml_error_forward(u, coord, edge_index, params):
    n = u.shape[0]
    x = dynamic_edge_conv(coord, params["ec1"])                   # (N, 64)
    append = x
    for p in params["ecs"]:
        x = dynamic_edge_conv(x, p)                               # (N, 64)
        # NOTE: original does `torch.cat((append, x), dim=1)` and discards the result (dead code).
    x = dynamic_edge_conv(x, params["ec2"])                       # (N, 128)
    x = dynamic_edge_conv(jnp.concatenate([append, x], axis=1),
                          params["ec3"])                          # (N, 1)
    adj = gcn_norm_adj(edge_index, n).astype(MXU_DTYPE)
    layers, cout = prepare_gcn_layers(params)
    h0 = jnp.concatenate([u, x], axis=1).astype(MXU_DTYPE)        # (N, in_channels + 1)
    return gcn_chain(adj, h0, layers, cout)                       # (N, out_channels)


# --------------------------- parameter init ---------------------------

def init_linear(key, cin, cout, scale=0.1):
    kw, kb = jax.random.split(key)
    w = scale * jax.random.normal(kw, (cin, cout), jnp.float32)
    b = scale * jax.random.normal(kb, (1, cout), jnp.float32)
    return w, b


def init_edgeconv(key, cin, cout):
    # mlp: Linear(2*cin,32) LeakyReLU BN(32) Linear(32,32) LeakyReLU BN(32) Linear(32,cout)
    k1, k2, k3 = jax.random.split(key, 3)
    w1, b1 = init_linear(k1, 2 * cin, 32)
    w2, b2 = init_linear(k2, 32, 32)
    w3, b3 = init_linear(k3, 32, cout)
    ones32 = jnp.ones((1, 32), jnp.float32)
    zeros32 = jnp.zeros((1, 32), jnp.float32)
    # TODO(synk): BatchNorm1d implemented with eval-mode running stats (mean=0, var=1),
    # not training-mode batch statistics.
    return dict(w1=w1, b1=b1, g1=ones32, be1=zeros32, m1=zeros32, v1=ones32,
                w2=w2, b2=b2, g2=ones32, be2=zeros32, m2=zeros32, v2=ones32,
                w3=w3, b3=b3)


if __name__ == "__main__":
    N = 64          # number of graph nodes
    IN_CH = 3       # data.x feature dim (FlowMLError in_channels)
    OUT_CH = 2      # FlowMLError out_channels

    key = jax.random.PRNGKey(0)
    ks = jax.random.split(key, 12)

    u = jax.random.normal(ks[0], (N, IN_CH), jnp.float32)     # data.x
    coord = jax.random.normal(ks[1], (N, 2), jnp.float32)     # data.pos (2D points)
    # deterministic edge_index: bidirectional ring graph
    idx = jnp.arange(N)
    src = jnp.concatenate([idx, (idx + 1) % N])
    tgt = jnp.concatenate([(idx + 1) % N, idx])
    edge_index = jnp.stack([src, tgt]).astype(jnp.int32)       # (2, 2N)

    params = dict(
        ec1=init_edgeconv(ks[2], 2, 64),
        ecs=[init_edgeconv(ks[3], 64, 64), init_edgeconv(ks[4], 64, 64)],
        ec2=init_edgeconv(ks[5], 64, 128),
        ec3=init_edgeconv(ks[6], 192, 1),
    )
    w, b = init_linear(ks[7], IN_CH + 1, 64)
    params["gcn4_w"], params["gcn4_b"] = w, b
    params["gcns2"] = [init_linear(ks[8 + i], 64, 64) for i in range(3)]
    w, b = init_linear(ks[11], 64, OUT_CH)
    params["gcn5_w"], params["gcn5_b"] = w, b

    fwd = jax.jit(flow_ml_error_forward)
    out = fwd(u, coord, edge_index, params)
    out = jax.block_until_ready(out)
    assert out.shape == (N, OUT_CH) and out.dtype == jnp.float32
    print("KERNEL_OK")
</pallas_src>

<mosaic_0001>
module attributes {stable_mosaic.version = 11 : i64} {
  func.func private @main(%arg0: i32) attributes {dimension_semantics = [#tpu.dimension_semantics<core_parallel>], iteration_bounds = array<i64: 2>, tpu.core_type = #tpu.core_type<sc_scalar_subcore>, window_params = []} {
    return
  }
}

module attributes {stable_mosaic.version = 11 : i64} {
  func.func private @main(%arg0: i32) attributes {dimension_semantics = [#tpu.dimension_semantics<core_parallel>], iteration_bounds = array<i64: 2>, tpu.core_type = #tpu.core_type<sc_scalar_subcore>, window_params = []} {
    return
  }
}

module attributes {stable_mosaic.version = 11 : i64} {
  func.func @_sqdist_kernel(%arg0: i32, %arg1: memref<64x2xf32, #tpu.memory_space<vmem>>, %arg2: memref<2x64xf32, #tpu.memory_space<vmem>>, %arg3: memref<64x64xf32, #tpu.memory_space<vmem>>) attributes {dimension_semantics = [#tpu.dimension_semantics<parallel>], iteration_bounds = array<i64: 1>, scalar_prefetch = 0 : i64, scratch_operands = 0 : i64, tpu.core_type = #tpu.core_type<tc>, window_params = [{transform_indices = @transform_0, window_bounds = array<i64: 64, 2>}, {pipeline_mode = #tpu.pipeline_mode<synchronous>, transform_indices = @transform_1, window_bounds = array<i64: 2, 64>}, {transform_indices = @transform_2, window_bounds = array<i64: 64, 64>}]} {
    %c0 = arith.constant 0 : index
    %c0_0 = arith.constant 0 : index
    %0 = vector.load %arg1[%c0, %c0_0] : memref<64x2xf32, #tpu.memory_space<vmem>>, vector<64x2xf32>
    %c0_1 = arith.constant 0 : index
    %c0_2 = arith.constant 0 : index
    %1 = vector.load %arg2[%c0_1, %c0_2] : memref<2x64xf32, #tpu.memory_space<vmem>>, vector<2x64xf32>
    %cst = arith.constant 0.000000e+00 : f32
    %2 = vector.broadcast %cst : f32 to vector<64x64xf32>
    %3 = vector.extract_strided_slice %0 {offsets = [0, 0], sizes = [64, 1], strides = [1, 1]} : vector<64x2xf32> to vector<64x1xf32>
    %4 = vector.extract_strided_slice %1 {offsets = [0, 0], sizes = [1, 64], strides = [1, 1]} : vector<2x64xf32> to vector<1x64xf32>
    %5 = vector.broadcast %3 : vector<64x1xf32> to vector<64x64xf32>
    %6 = vector.broadcast %4 : vector<1x64xf32> to vector<64x64xf32>
    %7 = arith.subf %5, %6 : vector<64x64xf32>
    %8 = arith.mulf %7, %7 : vector<64x64xf32>
    %9 = arith.addf %2, %8 : vector<64x64xf32>
    %10 = vector.extract_strided_slice %0 {offsets = [0, 1], sizes = [64, 1], strides = [1, 1]} : vector<64x2xf32> to vector<64x1xf32>
    %11 = vector.extract_strided_slice %1 {offsets = [1, 0], sizes = [1, 64], strides = [1, 1]} : vector<2x64xf32> to vector<1x64xf32>
    %12 = vector.broadcast %10 : vector<64x1xf32> to vector<64x64xf32>
    %13 = vector.broadcast %11 : vector<1x64xf32> to vector<64x64xf32>
    %14 = arith.subf %12, %13 : vector<64x64xf32>
    %15 = arith.mulf %14, %14 : vector<64x64xf32>
    %16 = arith.addf %9, %15 : vector<64x64xf32>
    %c0_3 = arith.constant 0 : index
    %c0_4 = arith.constant 0 : index
    %17 = vector.load %arg3[%c0_3, %c0_4] : memref<64x64xf32, #tpu.memory_space<vmem>>, vector<64x64xf32>
    tpu.vector_store %arg3[%c0_3, %c0_4], %16 {strides = array<i32>} : memref<64x64xf32, #tpu.memory_space<vmem>>, vector<64x64xf32>,
    return
  }
  func.func @transform_0(%arg0: i32) -> (i32, i32) {
    %c0_i32 = arith.constant 0 : i32
    %c0_i32_0 = arith.constant 0 : i32
    return %arg0, %c0_i32 : i32, i32
  }
  func.func @transform_1(%arg0: i32) -> (i32, i32) {
    %c0_i32 = arith.constant 0 : i32
    %c0_i32_0 = arith.constant 0 : i32
    %c0_i32_1 = arith.constant 0 : i32
    return %c0_i32, %c0_i32_0 : i32, i32
  }
  func.func @transform_2(%arg0: i32) -> (i32, i32) {
    %c0_i32 = arith.constant 0 : i32
    %c0_i32_0 = arith.constant 0 : i32
    return %arg0, %c0_i32 : i32, i32
  }
}

module attributes {stable_mosaic.version = 11 : i64} {
  func.func @_sqdist_kernel(%arg0: i32, %arg1: memref<64x64xf32, #tpu.memory_space<vmem>>, %arg2: memref<64x64xf32, #tpu.memory_space<vmem>>, %arg3: memref<64x64xf32, #tpu.memory_space<vmem>>) attributes {dimension_semantics = [#tpu.dimension_semantics<parallel>], iteration_bounds = array<i64: 1>, scalar_prefetch = 0 : i64, scratch_operands = 0 : i64, tpu.core_type = #tpu.core_type<tc>, window_params = [{transform_indices = @transform_0, window_bounds = array<i64: 64, 64>}, {pipeline_mode = #tpu.pipeline_mode<synchronous>, transform_indices = @transform_1, window_bounds = array<i64: 64, 64>}, {transform_indices = @transform_2, window_bounds = array<i64: 64, 64>}]} {
    %c0 = arith.constant 0 : index
    %c0_0 = arith.constant 0 : index
    %0 = vector.load %arg1[%c0, %c0_0] : memref<64x64xf32, #tpu.memory_space<vmem>>, vector<64x64xf32>
    %c0_1 = arith.constant 0 : index
    %c0_2 = arith.constant 0 : index
    %1 = vector.load %arg2[%c0_1, %c0_2] : memref<64x64xf32, #tpu.memory_space<vmem>>, vector<64x64xf32>
    %2 = arith.mulf %0, %0 : vector<64x64xf32>
    %cst = arith.constant dense<0.000000e+00> : vector<64xf32>
    %3 = vector.multi_reduction <add>, %2, %cst [1] : vector<64x64xf32> to vector<64xf32>
    %4 = vector.shape_cast %3 : vector<64xf32> to vector<64x1xf32>
    %5 = arith.mulf %1, %1 : vector<64x64xf32>
    %cst_3 = arith.constant dense<0.000000e+00> : vector<64xf32>
    %6 = vector.multi_reduction <add>, %5, %cst_3 [0] : vector<64x64xf32> to vector<64xf32>
    %7 = vector.shape_cast %6 : vector<64xf32> to vector<1x64xf32>
    %cst_4 = arith.constant dense<0.000000e+00> : vector<64x64xf32>
    %8 = tpu.matmul %0, %1, %cst_4 {dimension_numbers = #tpu.dot_dimension_numbers<[1], [0], [0], [1], [0, 0, 1, 1], [], []>} : vector<64x64xf32>, vector<64x64xf32>, vector<64x64xf32> -> vector<64x64xf32>
    %9 = vector.broadcast %4 : vector<64x1xf32> to vector<64x64xf32>
    %10 = vector.broadcast %7 : vector<1x64xf32> to vector<64x64xf32>
    %11 = arith.addf %9, %10 : vector<64x64xf32>
    %cst_5 = arith.constant 2.000000e+00 : f32
    %12 = vector.broadcast %cst_5 : f32 to vector<64x64xf32>
    %13 = arith.mulf %12, %8 : vector<64x64xf32>
    %14 = arith.subf %11, %13 : vector<64x64xf32>
    %c0_6 = arith.constant 0 : index
    %c0_7 = arith.constant 0 : index
    %15 = vector.load %arg3[%c0_6, %c0_7] : memref<64x64xf32, #tpu.memory_space<vmem>>, vector<64x64xf32>
    tpu.vector_store %arg3[%c0_6, %c0_7], %14 {strides = array<i32>} : memref<64x64xf32, #tpu.memory_space<vmem>>, vector<64x64xf32>,
    return
  }
  func.func @transform_0(%arg0: i32) -> (i32, i32) {
    %c0_i32 = arith.constant 0 : i32
    %c0_i32_0 = arith.constant 0 : i32
    return %arg0, %c0_i32 : i32, i32
  }
  func.func @transform_1(%arg0: i32) -> (i32, i32) {
    %c0_i32 = arith.constant 0 : i32
    %c0_i32_0 = arith.constant 0 : i32
    %c0_i32_1 = arith.constant 0 : i32
    return %c0_i32, %c0_i32_0 : i32, i32
  }
  func.func @transform_2(%arg0: i32) -> (i32, i32) {
    %c0_i32 = arith.constant 0 : i32
    %c0_i32_0 = arith.constant 0 : i32
    return %arg0, %c0_i32 : i32, i32
  }
}

module attributes {stable_mosaic.version = 11 : i64} {
  func.func @_edgeconv_kernel(%arg0: i32, %arg1: memref<384x4xbf16, #tpu.memory_space<vmem>>, %arg2: memref<4x32xbf16, #tpu.memory_space<vmem>>, %arg3: memref<1x32xf32, #tpu.memory_space<vmem>>, %arg4: memref<32x32xbf16, #tpu.memory_space<vmem>>, %arg5: memref<1x32xf32, #tpu.memory_space<vmem>>, %arg6: memref<32x128xbf16, #tpu.memory_space<vmem>>, %arg7: memref<1x128xf32, #tpu.memory_space<vmem>>, %arg8: memref<64x128xf32, #tpu.memory_space<vmem>>) attributes {dimension_semantics = [#tpu.dimension_semantics<arbitrary>], iteration_bounds = array<i64: 1>, scalar_prefetch = 0 : i64, scratch_operands = 0 : i64, tpu.core_type = #tpu.core_type<tc>, window_params = [{pipeline_mode = #tpu.pipeline_mode<synchronous>, transform_indices = @transform_0, window_bounds = array<i64: 384, 4>}, {pipeline_mode = #tpu.pipeline_mode<synchronous>, transform_indices = @transform_1, window_bounds = array<i64: 4, 32>}, {pipeline_mode = #tpu.pipeline_mode<synchronous>, transform_indices = @transform_2, window_bounds = array<i64: 1, 32>}, {pipeline_mode = #tpu.pipeline_mode<synchronous>, transform_indices = @transform_3, window_bounds = array<i64: 32, 32>}, {pipeline_mode = #tpu.pipeline_mode<synchronous>, transform_indices = @transform_4, window_bounds = array<i64: 1, 32>}, {pipeline_mode = #tpu.pipeline_mode<synchronous>, transform_indices = @transform_5, window_bounds = array<i64: 32, 128>}, {pipeline_mode = #tpu.pipeline_mode<synchronous>, transform_indices = @transform_6, window_bounds = array<i64: 1, 128>}, {pipeline_mode = #tpu.pipeline_mode<synchronous>, transform_indices = @transform_7, window_bounds = array<i64: 64, 128>}]} {
    %c0 = arith.constant 0 : index
    %c0_0 = arith.constant 0 : index
    %0 = vector.load %arg1[%c0, %c0_0] : memref<384x4xbf16, #tpu.memory_space<vmem>>, vector<384x4xbf16>
    %c0_1 = arith.constant 0 : index
    %c0_2 = arith.constant 0 : index
    %1 = vector.load %arg2[%c0_1, %c0_2] : memref<4x32xbf16, #tpu.memory_space<vmem>>, vector<4x32xbf16>
    %cst = arith.constant dense<0.000000e+00> : vector<384x32xf32>
    %2 = tpu.matmul %0, %1, %cst {dimension_numbers = #tpu.dot_dimension_numbers<[1], [0], [0], [1], [0, 0, 1, 1], [], []>} : vector<384x4xbf16>, vector<4x32xbf16>, vector<384x32xf32> -> vector<384x32xf32>
    %c0_3 = arith.constant 0 : index
    %c0_4 = arith.constant 0 : index
    %3 = vector.load %arg3[%c0_3, %c0_4] : memref<1x32xf32, #tpu.memory_space<vmem>>, vector<1x32xf32>
    %4 = vector.broadcast %3 : vector<1x32xf32> to vector<384x32xf32>
    %5 = arith.addf %2, %4 : vector<384x32xf32>
    %cst_5 = arith.constant 0.000000e+00 : f32
    %6 = vector.broadcast %cst_5 : f32 to vector<384x32xf32>
    %7 = arith.cmpf ogt, %5, %6 : vector<384x32xf32>
    %cst_6 = arith.constant 1.000000e-01 : f32
    %8 = vector.broadcast %cst_6 : f32 to vector<384x32xf32>
    %9 = arith.mulf %8, %5 : vector<384x32xf32>
    %10 = arith.select %7, %5, %9 : vector<384x32xi1>, vector<384x32xf32>
    %11 = arith.truncf %10 : vector<384x32xf32> to vector<384x32xbf16>
    %c0_7 = arith.constant 0 : index
    %c0_8 = arith.constant 0 : index
    %12 = vector.load %arg4[%c0_7, %c0_8] : memref<32x32xbf16, #tpu.memory_space<vmem>>, vector<32x32xbf16>
    %cst_9 = arith.constant dense<0.000000e+00> : vector<384x32xf32>
    %13 = tpu.matmul %11, %12, %cst_9 {dimension_numbers = #tpu.dot_dimension_numbers<[1], [0], [0], [1], [0, 0, 1, 1], [], []>} : vector<384x32xbf16>, vector<32x32xbf16>, vector<384x32xf32> -> vector<384x32xf32>
    %c0_10 = arith.constant 0 : index
    %c0_11 = arith.constant 0 : index
    %14 = vector.load %arg5[%c0_10, %c0_11] : memref<1x32xf32, #tpu.memory_space<vmem>>, vector<1x32xf32>
    %15 = vector.broadcast %14 : vector<1x32xf32> to vector<384x32xf32>
    %16 = arith.addf %13, %15 : vector<384x32xf32>
    %cst_12 = arith.constant 0.000000e+00 : f32
    %17 = vector.broadcast %cst_12 : f32 to vector<384x32xf32>
    %18 = arith.cmpf ogt, %16, %17 : vector<384x32xf32>
    %cst_13 = arith.constant 1.000000e-01 : f32
    %19 = vector.broadcast %cst_13 : f32 to vector<384x32xf32>
    %20 = arith.mulf %19, %16 : vector<384x32xf32>
    %21 = arith.select %18, %16, %20 : vector<384x32xi1>, vector<384x32xf32>
    %22 = arith.truncf %21 : vector<384x32xf32> to vector<384x32xbf16>
    %c0_14 = arith.constant 0 : index
    %c0_15 = arith.constant 0 : index
    %23 = vector.load %arg6[%c0_14, %c0_15] : memref<32x128xbf16, #tpu.memory_space<vmem>>, vector<32x128xbf16>
    %cst_16 = arith.constant dense<0.000000e+00> : vector<384x128xf32>
    %24 = tpu.matmul %22, %23, %cst_16 {dimension_numbers = #tpu.dot_dimension_numbers<[1], [0], [0], [1], [0, 0, 1, 1], [], []>} : vector<384x32xbf16>, vector<32x128xbf16>, vector<384x128xf32> -> vector<384x128xf32>
    %c0_17 = arith.constant 0 : index
    %c0_18 = arith.constant 0 : index
    %25 = vector.load %arg7[%c0_17, %c0_18] : memref<1x128xf32, #tpu.memory_space<vmem>>, vector<1x128xf32>
    %26 = vector.broadcast %25 : vector<1x128xf32> to vector<384x128xf32>
    %27 = arith.addf %24, %26 : vector<384x128xf32>
    %28 = vector.extract_strided_slice %27 {offsets = [0, 0], sizes = [64, 128], strides = [1, 1]} : vector<384x128xf32> to vector<64x128xf32>
    %29 = vector.extract_strided_slice %27 {offsets = [64, 0], sizes = [64, 128], strides = [1, 1]} : vector<384x128xf32> to vector<64x128xf32>
    %30 = arith.addf %28, %29 : vector<64x128xf32>
    %31 = vector.extract_strided_slice %27 {offsets = [128, 0], sizes = [64, 128], strides = [1, 1]} : vector<384x128xf32> to vector<64x128xf32>
    %32 = arith.addf %30, %31 : vector<64x128xf32>
    %33 = vector.extract_strided_slice %27 {offsets = [192, 0], sizes = [64, 128], strides = [1, 1]} : vector<384x128xf32> to vector<64x128xf32>
    %34 = arith.addf %32, %33 : vector<64x128xf32>
    %35 = vector.extract_strided_slice %27 {offsets = [256, 0], sizes = [64, 128], strides = [1, 1]} : vector<384x128xf32> to vector<64x128xf32>
    %36 = arith.addf %34, %35 : vector<64x128xf32>
    %37 = vector.extract_strided_slice %27 {offsets = [320, 0], sizes = [64, 128], strides = [1, 1]} : vector<384x128xf32> to vector<64x128xf32>
    %38 = arith.addf %36, %37 : vector<64x128xf32>
    %c0_19 = arith.constant 0 : index
    %c0_20 = arith.constant 0 : index
    %39 = vector.load %arg8[%c0_19, %c0_20] : memref<64x128xf32, #tpu.memory_space<vmem>>, vector<64x128xf32>
    tpu.vector_store %arg8[%c0_19, %c0_20], %38 {strides = array<i32>} : memref<64x128xf32, #tpu.memory_space<vmem>>, vector<64x128xf32>,
    return
  }
  func.func @transform_0(%arg0: i32) -> (i32, i32) {
    %c0_i32 = arith.constant 0 : i32
    %c0_i32_0 = arith.constant 0 : i32
    %c0_i32_1 = arith.constant 0 : i32
    return %c0_i32, %c0_i32_0 : i32, i32
  }
  func.func @transform_1(%arg0: i32) -> (i32, i32) {
    %c0_i32 = arith.constant 0 : i32
    %c0_i32_0 = arith.constant 0 : i32
    %c0_i32_1 = arith.constant 0 : i32
    return %c0_i32, %c0_i32_0 : i32, i32
  }
  func.func @transform_2(%arg0: i32) -> (i32, i32) {
    %c0_i32 = arith.constant 0 : i32
    %c0_i32_0 = arith.constant 0 : i32
    %c0_i32_1 = arith.constant 0 : i32
    return %c0_i32, %c0_i32_0 : i32, i32
  }
  func.func @transform_3(%arg0: i32) -> (i32, i32) {
    %c0_i32 = arith.constant 0 : i32
    %c0_i32_0 = arith.constant 0 : i32
    %c0_i32_1 = arith.constant 0 : i32
    return %c0_i32, %c0_i32_0 : i32, i32
  }
  func.func @transform_4(%arg0: i32) -> (i32, i32) {
    %c0_i32 = arith.constant 0 : i32
    %c0_i32_0 = arith.constant 0 : i32
    %c0_i32_1 = arith.constant 0 : i32
    return %c0_i32, %c0_i32_0 : i32, i32
  }
  func.func @transform_5(%arg0: i32) -> (i32, i32) {
    %c0_i32 = arith.constant 0 : i32
    %c0_i32_0 = arith.constant 0 : i32
    %c0_i32_1 = arith.constant 0 : i32
    return %c0_i32, %c0_i32_0 : i32, i32
  }
  func.func @transform_6(%arg0: i32) -> (i32, i32) {
    %c0_i32 = arith.constant 0 : i32
    %c0_i32_0 = arith.constant 0 : i32
    %c0_i32_1 = arith.constant 0 : i32
    return %c0_i32, %c0_i32_0 : i32, i32
  }
  func.func @transform_7(%arg0: i32) -> (i32, i32) {
    %c0_i32 = arith.constant 0 : i32
    %c0_i32_0 = arith.constant 0 : i32
    %c0_i32_1 = arith.constant 0 : i32
    return %c0_i32, %c0_i32_0 : i32, i32
  }
}

module attributes {stable_mosaic.version = 11 : i64} {
  func.func @_edgeconv_kernel(%arg0: i32, %arg1: memref<384x128xbf16, #tpu.memory_space<vmem>>, %arg2: memref<128x32xbf16, #tpu.memory_space<vmem>>, %arg3: memref<1x32xf32, #tpu.memory_space<vmem>>, %arg4: memref<32x32xbf16, #tpu.memory_space<vmem>>, %arg5: memref<1x32xf32, #tpu.memory_space<vmem>>, %arg6: memref<32x128xbf16, #tpu.memory_space<vmem>>, %arg7: memref<1x128xf32, #tpu.memory_space<vmem>>, %arg8: memref<64x128xf32, #tpu.memory_space<vmem>>) attributes {dimension_semantics = [#tpu.dimension_semantics<arbitrary>], iteration_bounds = array<i64: 1>, scalar_prefetch = 0 : i64, scratch_operands = 0 : i64, tpu.core_type = #tpu.core_type<tc>, window_params = [{pipeline_mode = #tpu.pipeline_mode<synchronous>, transform_indices = @transform_0, window_bounds = array<i64: 384, 128>}, {pipeline_mode = #tpu.pipeline_mode<synchronous>, transform_indices = @transform_1, window_bounds = array<i64: 128, 32>}, {pipeline_mode = #tpu.pipeline_mode<synchronous>, transform_indices = @transform_2, window_bounds = array<i64: 1, 32>}, {pipeline_mode = #tpu.pipeline_mode<synchronous>, transform_indices = @transform_3, window_bounds = array<i64: 32, 32>}, {pipeline_mode = #tpu.pipeline_mode<synchronous>, transform_indices = @transform_4, window_bounds = array<i64: 1, 32>}, {pipeline_mode = #tpu.pipeline_mode<synchronous>, transform_indices = @transform_5, window_bounds = array<i64: 32, 128>}, {pipeline_mode = #tpu.pipeline_mode<synchronous>, transform_indices = @transform_6, window_bounds = array<i64: 1, 128>}, {pipeline_mode = #tpu.pipeline_mode<synchronous>, transform_indices = @transform_7, window_bounds = array<i64: 64, 128>}]} {
    %c0 = arith.constant 0 : index
    %c0_0 = arith.constant 0 : index
    %0 = vector.load %arg1[%c0, %c0_0] : memref<384x128xbf16, #tpu.memory_space<vmem>>, vector<384x128xbf16>
    %c0_1 = arith.constant 0 : index
    %c0_2 = arith.constant 0 : index
    %1 = vector.load %arg2[%c0_1, %c0_2] : memref<128x32xbf16, #tpu.memory_space<vmem>>, vector<128x32xbf16>
    %cst = arith.constant dense<0.000000e+00> : vector<384x32xf32>
    %2 = tpu.matmul %0, %1, %cst {dimension_numbers = #tpu.dot_dimension_numbers<[1], [0], [0], [1], [0, 0, 1, 1], [], []>} : vector<384x128xbf16>, vector<128x32xbf16>, vector<384x32xf32> -> vector<384x32xf32>
    %c0_3 = arith.constant 0 : index
    %c0_4 = arith.constant 0 : index
    %3 = vector.load %arg3[%c0_3, %c0_4] : memref<1x32xf32, #tpu.memory_space<vmem>>, vector<1x32xf32>
    %4 = vector.broadcast %3 : vector<1x32xf32> to vector<384x32xf32>
    %5 = arith.addf %2, %4 : vector<384x32xf32>
    %cst_5 = arith.constant 0.000000e+00 : f32
    %6 = vector.broadcast %cst_5 : f32 to vector<384x32xf32>
    %7 = arith.cmpf ogt, %5, %6 : vector<384x32xf32>
    %cst_6 = arith.constant 1.000000e-01 : f32
    %8 = vector.broadcast %cst_6 : f32 to vector<384x32xf32>
    %9 = arith.mulf %8, %5 : vector<384x32xf32>
    %10 = arith.select %7, %5, %9 : vector<384x32xi1>, vector<384x32xf32>
    %11 = arith.truncf %10 : vector<384x32xf32> to vector<384x32xbf16>
    %c0_7 = arith.constant 0 : index
    %c0_8 = arith.constant 0 : index
    %12 = vector.load %arg4[%c0_7, %c0_8] : memref<32x32xbf16, #tpu.memory_space<vmem>>, vector<32x32xbf16>
    %cst_9 = arith.constant dense<0.000000e+00> : vector<384x32xf32>
    %13 = tpu.matmul %11, %12, %cst_9 {dimension_numbers = #tpu.dot_dimension_numbers<[1], [0], [0], [1], [0, 0, 1, 1], [], []>} : vector<384x32xbf16>, vector<32x32xbf16>, vector<384x32xf32> -> vector<384x32xf32>
    %c0_10 = arith.constant 0 : index
    %c0_11 = arith.constant 0 : index
    %14 = vector.load %arg5[%c0_10, %c0_11] : memref<1x32xf32, #tpu.memory_space<vmem>>, vector<1x32xf32>
    %15 = vector.broadcast %14 : vector<1x32xf32> to vector<384x32xf32>
    %16 = arith.addf %13, %15 : vector<384x32xf32>
    %cst_12 = arith.constant 0.000000e+00 : f32
    %17 = vector.broadcast %cst_12 : f32 to vector<384x32xf32>
    %18 = arith.cmpf ogt, %16, %17 : vector<384x32xf32>
    %cst_13 = arith.constant 1.000000e-01 : f32
    %19 = vector.broadcast %cst_13 : f32 to vector<384x32xf32>
    %20 = arith.mulf %19, %16 : vector<384x32xf32>
    %21 = arith.select %18, %16, %20 : vector<384x32xi1>, vector<384x32xf32>
    %22 = arith.truncf %21 : vector<384x32xf32> to vector<384x32xbf16>
    %c0_14 = arith.constant 0 : index
    %c0_15 = arith.constant 0 : index
    %23 = vector.load %arg6[%c0_14, %c0_15] : memref<32x128xbf16, #tpu.memory_space<vmem>>, vector<32x128xbf16>
    %cst_16 = arith.constant dense<0.000000e+00> : vector<384x128xf32>
    %24 = tpu.matmul %22, %23, %cst_16 {dimension_numbers = #tpu.dot_dimension_numbers<[1], [0], [0], [1], [0, 0, 1, 1], [], []>} : vector<384x32xbf16>, vector<32x128xbf16>, vector<384x128xf32> -> vector<384x128xf32>
    %c0_17 = arith.constant 0 : index
    %c0_18 = arith.constant 0 : index
    %25 = vector.load %arg7[%c0_17, %c0_18] : memref<1x128xf32, #tpu.memory_space<vmem>>, vector<1x128xf32>
    %26 = vector.broadcast %25 : vector<1x128xf32> to vector<384x128xf32>
    %27 = arith.addf %24, %26 : vector<384x128xf32>
    %28 = vector.extract_strided_slice %27 {offsets = [0, 0], sizes = [64, 128], strides = [1, 1]} : vector<384x128xf32> to vector<64x128xf32>
    %29 = vector.extract_strided_slice %27 {offsets = [64, 0], sizes = [64, 128], strides = [1, 1]} : vector<384x128xf32> to vector<64x128xf32>
    %30 = arith.addf %28, %29 : vector<64x128xf32>
    %31 = vector.extract_strided_slice %27 {offsets = [128, 0], sizes = [64, 128], strides = [1, 1]} : vector<384x128xf32> to vector<64x128xf32>
    %32 = arith.addf %30, %31 : vector<64x128xf32>
    %33 = vector.extract_strided_slice %27 {offsets = [192, 0], sizes = [64, 128], strides = [1, 1]} : vector<384x128xf32> to vector<64x128xf32>
    %34 = arith.addf %32, %33 : vector<64x128xf32>
    %35 = vector.extract_strided_slice %27 {offsets = [256, 0], sizes = [64, 128], strides = [1, 1]} : vector<384x128xf32> to vector<64x128xf32>
    %36 = arith.addf %34, %35 : vector<64x128xf32>
    %37 = vector.extract_strided_slice %27 {offsets = [320, 0], sizes = [64, 128], strides = [1, 1]} : vector<384x128xf32> to vector<64x128xf32>
    %38 = arith.addf %36, %37 : vector<64x128xf32>
    %c0_19 = arith.constant 0 : index
    %c0_20 = arith.constant 0 : index
    %39 = vector.load %arg8[%c0_19, %c0_20] : memref<64x128xf32, #tpu.memory_space<vmem>>, vector<64x128xf32>
    tpu.vector_store %arg8[%c0_19, %c0_20], %38 {strides = array<i32>} : memref<64x128xf32, #tpu.memory_space<vmem>>, vector<64x128xf32>,
    return
  }
  func.func @transform_0(%arg0: i32) -> (i32, i32) {
    %c0_i32 = arith.constant 0 : i32
    %c0_i32_0 = arith.constant 0 : i32
    %c0_i32_1 = arith.constant 0 : i32
    return %c0_i32, %c0_i32_0 : i32, i32
  }
  func.func @transform_1(%arg0: i32) -> (i32, i32) {
    %c0_i32 = arith.constant 0 : i32
    %c0_i32_0 = arith.constant 0 : i32
    %c0_i32_1 = arith.constant 0 : i32
    return %c0_i32, %c0_i32_0 : i32, i32
  }
  func.func @transform_2(%arg0: i32) -> (i32, i32) {
    %c0_i32 = arith.constant 0 : i32
    %c0_i32_0 = arith.constant 0 : i32
    %c0_i32_1 = arith.constant 0 : i32
    return %c0_i32, %c0_i32_0 : i32, i32
  }
  func.func @transform_3(%arg0: i32) -> (i32, i32) {
    %c0_i32 = arith.constant 0 : i32
    %c0_i32_0 = arith.constant 0 : i32
    %c0_i32_1 = arith.constant 0 : i32
    return %c0_i32, %c0_i32_0 : i32, i32
  }
  func.func @transform_4(%arg0: i32) -> (i32, i32) {
    %c0_i32 = arith.constant 0 : i32
    %c0_i32_0 = arith.constant 0 : i32
    %c0_i32_1 = arith.constant 0 : i32
    return %c0_i32, %c0_i32_0 : i32, i32
  }
  func.func @transform_5(%arg0: i32) -> (i32, i32) {
    %c0_i32 = arith.constant 0 : i32
    %c0_i32_0 = arith.constant 0 : i32
    %c0_i32_1 = arith.constant 0 : i32
    return %c0_i32, %c0_i32_0 : i32, i32
  }
  func.func @transform_6(%arg0: i32) -> (i32, i32) {
    %c0_i32 = arith.constant 0 : i32
    %c0_i32_0 = arith.constant 0 : i32
    %c0_i32_1 = arith.constant 0 : i32
    return %c0_i32, %c0_i32_0 : i32, i32
  }
  func.func @transform_7(%arg0: i32) -> (i32, i32) {
    %c0_i32 = arith.constant 0 : i32
    %c0_i32_0 = arith.constant 0 : i32
    %c0_i32_1 = arith.constant 0 : i32
    return %c0_i32, %c0_i32_0 : i32, i32
  }
}

module attributes {stable_mosaic.version = 11 : i64} {
  func.func @_sqdist_kernel(%arg0: i32, %arg1: memref<64x192xf32, #tpu.memory_space<vmem>>, %arg2: memref<192x64xf32, #tpu.memory_space<vmem>>, %arg3: memref<64x64xf32, #tpu.memory_space<vmem>>) attributes {dimension_semantics = [#tpu.dimension_semantics<parallel>], iteration_bounds = array<i64: 1>, scalar_prefetch = 0 : i64, scratch_operands = 0 : i64, tpu.core_type = #tpu.core_type<tc>, window_params = [{transform_indices = @transform_0, window_bounds = array<i64: 64, 192>}, {pipeline_mode = #tpu.pipeline_mode<synchronous>, transform_indices = @transform_1, window_bounds = array<i64: 192, 64>}, {transform_indices = @transform_2, window_bounds = array<i64: 64, 64>}]} {
    %c0 = arith.constant 0 : index
    %c0_0 = arith.constant 0 : index
    %0 = vector.load %arg1[%c0, %c0_0] : memref<64x192xf32, #tpu.memory_space<vmem>>, vector<64x192xf32>
    %c0_1 = arith.constant 0 : index
    %c0_2 = arith.constant 0 : index
    %1 = vector.load %arg2[%c0_1, %c0_2] : memref<192x64xf32, #tpu.memory_space<vmem>>, vector<192x64xf32>
    %2 = arith.mulf %0, %0 : vector<64x192xf32>
    %cst = arith.constant dense<0.000000e+00> : vector<64xf32>
    %3 = vector.multi_reduction <add>, %2, %cst [1] : vector<64x192xf32> to vector<64xf32>
    %4 = vector.shape_cast %3 : vector<64xf32> to vector<64x1xf32>
    %5 = arith.mulf %1, %1 : vector<192x64xf32>
    %cst_3 = arith.constant dense<0.000000e+00> : vector<64xf32>
    %6 = vector.multi_reduction <add>, %5, %cst_3 [0] : vector<192x64xf32> to vector<64xf32>
    %7 = vector.shape_cast %6 : vector<64xf32> to vector<1x64xf32>
    %cst_4 = arith.constant dense<0.000000e+00> : vector<64x64xf32>
    %8 = tpu.matmul %0, %1, %cst_4 {dimension_numbers = #tpu.dot_dimension_numbers<[1], [0], [0], [1], [0, 0, 1, 1], [], []>} : vector<64x192xf32>, vector<192x64xf32>, vector<64x64xf32> -> vector<64x64xf32>
    %9 = vector.broadcast %4 : vector<64x1xf32> to vector<64x64xf32>
    %10 = vector.broadcast %7 : vector<1x64xf32> to vector<64x64xf32>
    %11 = arith.addf %9, %10 : vector<64x64xf32>
    %cst_5 = arith.constant 2.000000e+00 : f32
    %12 = vector.broadcast %cst_5 : f32 to vector<64x64xf32>
    %13 = arith.mulf %12, %8 : vector<64x64xf32>
    %14 = arith.subf %11, %13 : vector<64x64xf32>
    %c0_6 = arith.constant 0 : index
    %c0_7 = arith.constant 0 : index
    %15 = vector.load %arg3[%c0_6, %c0_7] : memref<64x64xf32, #tpu.memory_space<vmem>>, vector<64x64xf32>
    tpu.vector_store %arg3[%c0_6, %c0_7], %14 {strides = array<i32>} : memref<64x64xf32, #tpu.memory_space<vmem>>, vector<64x64xf32>,
    return
  }
  func.func @transform_0(%arg0: i32) -> (i32, i32) {
    %c0_i32 = arith.constant 0 : i32
    %c0_i32_0 = arith.constant 0 : i32
    return %arg0, %c0_i32 : i32, i32
  }
  func.func @transform_1(%arg0: i32) -> (i32, i32) {
    %c0_i32 = arith.constant 0 : i32
    %c0_i32_0 = arith.constant 0 : i32
    %c0_i32_1 = arith.constant 0 : i32
    return %c0_i32, %c0_i32_0 : i32, i32
  }
  func.func @transform_2(%arg0: i32) -> (i32, i32) {
    %c0_i32 = arith.constant 0 : i32
    %c0_i32_0 = arith.constant 0 : i32
    return %arg0, %c0_i32 : i32, i32
  }
}

module attributes {stable_mosaic.version = 11 : i64} {
  func.func @_edgeconv_kernel(%arg0: i32, %arg1: memref<384x384xbf16, #tpu.memory_space<vmem>>, %arg2: memref<384x32xbf16, #tpu.memory_space<vmem>>, %arg3: memref<1x32xf32, #tpu.memory_space<vmem>>, %arg4: memref<32x32xbf16, #tpu.memory_space<vmem>>, %arg5: memref<1x32xf32, #tpu.memory_space<vmem>>, %arg6: memref<32x128xbf16, #tpu.memory_space<vmem>>, %arg7: memref<1x128xf32, #tpu.memory_space<vmem>>, %arg8: memref<64x128xf32, #tpu.memory_space<vmem>>) attributes {dimension_semantics = [#tpu.dimension_semantics<arbitrary>], iteration_bounds = array<i64: 1>, scalar_prefetch = 0 : i64, scratch_operands = 0 : i64, tpu.core_type = #tpu.core_type<tc>, window_params = [{pipeline_mode = #tpu.pipeline_mode<synchronous>, transform_indices = @transform_0, window_bounds = array<i64: 384, 384>}, {pipeline_mode = #tpu.pipeline_mode<synchronous>, transform_indices = @transform_1, window_bounds = array<i64: 384, 32>}, {pipeline_mode = #tpu.pipeline_mode<synchronous>, transform_indices = @transform_2, window_bounds = array<i64: 1, 32>}, {pipeline_mode = #tpu.pipeline_mode<synchronous>, transform_indices = @transform_3, window_bounds = array<i64: 32, 32>}, {pipeline_mode = #tpu.pipeline_mode<synchronous>, transform_indices = @transform_4, window_bounds = array<i64: 1, 32>}, {pipeline_mode = #tpu.pipeline_mode<synchronous>, transform_indices = @transform_5, window_bounds = array<i64: 32, 128>}, {pipeline_mode = #tpu.pipeline_mode<synchronous>, transform_indices = @transform_6, window_bounds = array<i64: 1, 128>}, {pipeline_mode = #tpu.pipeline_mode<synchronous>, transform_indices = @transform_7, window_bounds = array<i64: 64, 128>}]} {
    %c0 = arith.constant 0 : index
    %c0_0 = arith.constant 0 : index
    %0 = vector.load %arg1[%c0, %c0_0] : memref<384x384xbf16, #tpu.memory_space<vmem>>, vector<384x384xbf16>
    %c0_1 = arith.constant 0 : index
    %c0_2 = arith.constant 0 : index
    %1 = vector.load %arg2[%c0_1, %c0_2] : memref<384x32xbf16, #tpu.memory_space<vmem>>, vector<384x32xbf16>
    %cst = arith.constant dense<0.000000e+00> : vector<384x32xf32>
    %2 = tpu.matmul %0, %1, %cst {dimension_numbers = #tpu.dot_dimension_numbers<[1], [0], [0], [1], [0, 0, 1, 1], [], []>} : vector<384x384xbf16>, vector<384x32xbf16>, vector<384x32xf32> -> vector<384x32xf32>
    %c0_3 = arith.constant 0 : index
    %c0_4 = arith.constant 0 : index
    %3 = vector.load %arg3[%c0_3, %c0_4] : memref<1x32xf32, #tpu.memory_space<vmem>>, vector<1x32xf32>
    %4 = vector.broadcast %3 : vector<1x32xf32> to vector<384x32xf32>
    %5 = arith.addf %2, %4 : vector<384x32xf32>
    %cst_5 = arith.constant 0.000000e+00 : f32
    %6 = vector.broadcast %cst_5 : f32 to vector<384x32xf32>
    %7 = arith.cmpf ogt, %5, %6 : vector<384x32xf32>
    %cst_6 = arith.constant 1.000000e-01 : f32
    %8 = vector.broadcast %cst_6 : f32 to vector<384x32xf32>
    %9 = arith.mulf %8, %5 : vector<384x32xf32>
    %10 = arith.select %7, %5, %9 : vector<384x32xi1>, vector<384x32xf32>
    %11 = arith.truncf %10 : vector<384x32xf32> to vector<384x32xbf16>
    %c0_7 = arith.constant 0 : index
    %c0_8 = arith.constant 0 : index
    %12 = vector.load %arg4[%c0_7, %c0_8] : memref<32x32xbf16, #tpu.memory_space<vmem>>, vector<32x32xbf16>
    %cst_9 = arith.constant dense<0.000000e+00> : vector<384x32xf32>
    %13 = tpu.matmul %11, %12, %cst_9 {dimension_numbers = #tpu.dot_dimension_numbers<[1], [0], [0], [1], [0, 0, 1, 1], [], []>} : vector<384x32xbf16>, vector<32x32xbf16>, vector<384x32xf32> -> vector<384x32xf32>
    %c0_10 = arith.constant 0 : index
    %c0_11 = arith.constant 0 : index
    %14 = vector.load %arg5[%c0_10, %c0_11] : memref<1x32xf32, #tpu.memory_space<vmem>>, vector<1x32xf32>
    %15 = vector.broadcast %14 : vector<1x32xf32> to vector<384x32xf32>
    %16 = arith.addf %13, %15 : vector<384x32xf32>
    %cst_12 = arith.constant 0.000000e+00 : f32
    %17 = vector.broadcast %cst_12 : f32 to vector<384x32xf32>
    %18 = arith.cmpf ogt, %16, %17 : vector<384x32xf32>
    %cst_13 = arith.constant 1.000000e-01 : f32
    %19 = vector.broadcast %cst_13 : f32 to vector<384x32xf32>
    %20 = arith.mulf %19, %16 : vector<384x32xf32>
    %21 = arith.select %18, %16, %20 : vector<384x32xi1>, vector<384x32xf32>
    %22 = arith.truncf %21 : vector<384x32xf32> to vector<384x32xbf16>
    %c0_14 = arith.constant 0 : index
    %c0_15 = arith.constant 0 : index
    %23 = vector.load %arg6[%c0_14, %c0_15] : memref<32x128xbf16, #tpu.memory_space<vmem>>, vector<32x128xbf16>
    %cst_16 = arith.constant dense<0.000000e+00> : vector<384x128xf32>
    %24 = tpu.matmul %22, %23, %cst_16 {dimension_numbers = #tpu.dot_dimension_numbers<[1], [0], [0], [1], [0, 0, 1, 1], [], []>} : vector<384x32xbf16>, vector<32x128xbf16>, vector<384x128xf32> -> vector<384x128xf32>
    %c0_17 = arith.constant 0 : index
    %c0_18 = arith.constant 0 : index
    %25 = vector.load %arg7[%c0_17, %c0_18] : memref<1x128xf32, #tpu.memory_space<vmem>>, vector<1x128xf32>
    %26 = vector.broadcast %25 : vector<1x128xf32> to vector<384x128xf32>
    %27 = arith.addf %24, %26 : vector<384x128xf32>
    %28 = vector.extract_strided_slice %27 {offsets = [0, 0], sizes = [64, 128], strides = [1, 1]} : vector<384x128xf32> to vector<64x128xf32>
    %29 = vector.extract_strided_slice %27 {offsets = [64, 0], sizes = [64, 128], strides = [1, 1]} : vector<384x128xf32> to vector<64x128xf32>
    %30 = arith.addf %28, %29 : vector<64x128xf32>
    %31 = vector.extract_strided_slice %27 {offsets = [128, 0], sizes = [64, 128], strides = [1, 1]} : vector<384x128xf32> to vector<64x128xf32>
    %32 = arith.addf %30, %31 : vector<64x128xf32>
    %33 = vector.extract_strided_slice %27 {offsets = [192, 0], sizes = [64, 128], strides = [1, 1]} : vector<384x128xf32> to vector<64x128xf32>
    %34 = arith.addf %32, %33 : vector<64x128xf32>
    %35 = vector.extract_strided_slice %27 {offsets = [256, 0], sizes = [64, 128], strides = [1, 1]} : vector<384x128xf32> to vector<64x128xf32>
    %36 = arith.addf %34, %35 : vector<64x128xf32>
    %37 = vector.extract_strided_slice %27 {offsets = [320, 0], sizes = [64, 128], strides = [1, 1]} : vector<384x128xf32> to vector<64x128xf32>
    %38 = arith.addf %36, %37 : vector<64x128xf32>
    %c0_19 = arith.constant 0 : index
    %c0_20 = arith.constant 0 : index
    %39 = vector.load %arg8[%c0_19, %c0_20] : memref<64x128xf32, #tpu.memory_space<vmem>>, vector<64x128xf32>
    tpu.vector_store %arg8[%c0_19, %c0_20], %38 {strides = array<i32>} : memref<64x128xf32, #tpu.memory_space<vmem>>, vector<64x128xf32>,
    return
  }
  func.func @transform_0(%arg0: i32) -> (i32, i32) {
    %c0_i32 = arith.constant 0 : i32
    %c0_i32_0 = arith.constant 0 : i32
    %c0_i32_1 = arith.constant 0 : i32
    return %c0_i32, %c0_i32_0 : i32, i32
  }
  func.func @transform_1(%arg0: i32) -> (i32, i32) {
    %c0_i32 = arith.constant 0 : i32
    %c0_i32_0 = arith.constant 0 : i32
    %c0_i32_1 = arith.constant 0 : i32
    return %c0_i32, %c0_i32_0 : i32, i32
  }
  func.func @transform_2(%arg0: i32) -> (i32, i32) {
    %c0_i32 = arith.constant 0 : i32
    %c0_i32_0 = arith.constant 0 : i32
    %c0_i32_1 = arith.constant 0 : i32
    return %c0_i32, %c0_i32_0 : i32, i32
  }
  func.func @transform_3(%arg0: i32) -> (i32, i32) {
    %c0_i32 = arith.constant 0 : i32
    %c0_i32_0 = arith.constant 0 : i32
    %c0_i32_1 = arith.constant 0 : i32
    return %c0_i32, %c0_i32_0 : i32, i32
  }
  func.func @transform_4(%arg0: i32) -> (i32, i32) {
    %c0_i32 = arith.constant 0 : i32
    %c0_i32_0 = arith.constant 0 : i32
    %c0_i32_1 = arith.constant 0 : i32
    return %c0_i32, %c0_i32_0 : i32, i32
  }
  func.func @transform_5(%arg0: i32) -> (i32, i32) {
    %c0_i32 = arith.constant 0 : i32
    %c0_i32_0 = arith.constant 0 : i32
    %c0_i32_1 = arith.constant 0 : i32
    return %c0_i32, %c0_i32_0 : i32, i32
  }
  func.func @transform_6(%arg0: i32) -> (i32, i32) {
    %c0_i32 = arith.constant 0 : i32
    %c0_i32_0 = arith.constant 0 : i32
    %c0_i32_1 = arith.constant 0 : i32
    return %c0_i32, %c0_i32_0 : i32, i32
  }
  func.func @transform_7(%arg0: i32) -> (i32, i32) {
    %c0_i32 = arith.constant 0 : i32
    %c0_i32_0 = arith.constant 0 : i32
    %c0_i32_1 = arith.constant 0 : i32
    return %c0_i32, %c0_i32_0 : i32, i32
  }
}

module attributes {stable_mosaic.version = 11 : i64} {
  func.func @_gcn_chain_kernel(%arg0: i32, %arg1: memref<64x64xbf16, #tpu.memory_space<vmem>>, %arg2: memref<64x4xbf16, #tpu.memory_space<vmem>>, %arg3: memref<4x64xbf16, #tpu.memory_space<vmem>>, %arg4: memref<1x64xf32, #tpu.memory_space<vmem>>, %arg5: memref<64x64xbf16, #tpu.memory_space<vmem>>, %arg6: memref<1x64xf32, #tpu.memory_space<vmem>>, %arg7: memref<64x64xbf16, #tpu.memory_space<vmem>>, %arg8: memref<1x64xf32, #tpu.memory_space<vmem>>, %arg9: memref<64x64xbf16, #tpu.memory_space<vmem>>, %arg10: memref<1x64xf32, #tpu.memory_space<vmem>>, %arg11: memref<64x128xbf16, #tpu.memory_space<vmem>>, %arg12: memref<1x128xf32, #tpu.memory_space<vmem>>, %arg13: memref<64x128xf32, #tpu.memory_space<vmem>>) attributes {dimension_semantics = [#tpu.dimension_semantics<arbitrary>], iteration_bounds = array<i64: 1>, scalar_prefetch = 0 : i64, scratch_operands = 0 : i64, tpu.core_type = #tpu.core_type<tc>, window_params = [{pipeline_mode = #tpu.pipeline_mode<synchronous>, transform_indices = @transform_0, window_bounds = array<i64: 64, 64>}, {pipeline_mode = #tpu.pipeline_mode<synchronous>, transform_indices = @transform_1, window_bounds = array<i64: 64, 4>}, {pipeline_mode = #tpu.pipeline_mode<synchronous>, transform_indices = @transform_2, window_bounds = array<i64: 4, 64>}, {pipeline_mode = #tpu.pipeline_mode<synchronous>, transform_indices = @transform_3, window_bounds = array<i64: 1, 64>}, {pipeline_mode = #tpu.pipeline_mode<synchronous>, transform_indices = @transform_4, window_bounds = array<i64: 64, 64>}, {pipeline_mode = #tpu.pipeline_mode<synchronous>, transform_indices = @transform_5, window_bounds = array<i64: 1, 64>}, {pipeline_mode = #tpu.pipeline_mode<synchronous>, transform_indices = @transform_6, window_bounds = array<i64: 64, 64>}, {pipeline_mode = #tpu.pipeline_mode<synchronous>, transform_indices = @transform_7, window_bounds = array<i64: 1, 64>}, {pipeline_mode = #tpu.pipeline_mode<synchronous>, transform_indices = @transform_8, window_bounds = array<i64: 64, 64>}, {pipeline_mode = #tpu.pipeline_mode<synchronous>, transform_indices = @transform_9, window_bounds = array<i64: 1, 64>}, {pipeline_mode = #tpu.pipeline_mode<synchronous>, transform_indices = @transform_10, window_bounds = array<i64: 64, 128>}, {pipeline_mode = #tpu.pipeline_mode<synchronous>, transform_indices = @transform_11, window_bounds = array<i64: 1, 128>}, {pipeline_mode = #tpu.pipeline_mode<synchronous>, transform_indices = @transform_12, window_bounds = array<i64: 64, 128>}]} {
    %c0 = arith.constant 0 : index
    %c0_0 = arith.constant 0 : index
    %0 = vector.load %arg1[%c0, %c0_0] : memref<64x64xbf16, #tpu.memory_space<vmem>>, vector<64x64xbf16>
    %c0_1 = arith.constant 0 : index
    %c0_2 = arith.constant 0 : index
    %1 = vector.load %arg2[%c0_1, %c0_2] : memref<64x4xbf16, #tpu.memory_space<vmem>>, vector<64x4xbf16>
    %c0_3 = arith.constant 0 : index
    %c0_4 = arith.constant 0 : index
    %2 = vector.load %arg3[%c0_3, %c0_4] : memref<4x64xbf16, #tpu.memory_space<vmem>>, vector<4x64xbf16>
    %c0_5 = arith.constant 0 : index
    %c0_6 = arith.constant 0 : index
    %3 = vector.load %arg4[%c0_5, %c0_6] : memref<1x64xf32, #tpu.memory_space<vmem>>, vector<1x64xf32>
    %cst = arith.constant dense<0.000000e+00> : vector<64x64xf32>
    %4 = tpu.matmul %1, %2, %cst {dimension_numbers = #tpu.dot_dimension_numbers<[1], [0], [0], [1], [0, 0, 1, 1], [], []>} : vector<64x4xbf16>, vector<4x64xbf16>, vector<64x64xf32> -> vector<64x64xf32>
    %5 = arith.truncf %4 : vector<64x64xf32> to vector<64x64xbf16>
    %cst_7 = arith.constant dense<0.000000e+00> : vector<64x64xf32>
    %6 = tpu.matmul %0, %5, %cst_7 {dimension_numbers = #tpu.dot_dimension_numbers<[1], [0], [0], [1], [0, 0, 1, 1], [], []>} : vector<64x64xbf16>, vector<64x64xbf16>, vector<64x64xf32> -> vector<64x64xf32>
    %7 = vector.broadcast %3 : vector<1x64xf32> to vector<64x64xf32>
    %8 = arith.addf %6, %7 : vector<64x64xf32>
    %cst_8 = arith.constant 0.000000e+00 : f32
    %9 = vector.broadcast %cst_8 : f32 to vector<64x64xf32>
    %10 = arith.cmpf ogt, %8, %9 : vector<64x64xf32>
    %cst_9 = arith.constant 1.000000e-01 : f32
    %11 = vector.broadcast %cst_9 : f32 to vector<64x64xf32>
    %12 = arith.mulf %11, %8 : vector<64x64xf32>
    %13 = arith.select %10, %8, %12 : vector<64x64xi1>, vector<64x64xf32>
    %14 = arith.truncf %13 : vector<64x64xf32> to vector<64x64xbf16>
    %c0_10 = arith.constant 0 : index
    %c0_11 = arith.constant 0 : index
    %15 = vector.load %arg5[%c0_10, %c0_11] : memref<64x64xbf16, #tpu.memory_space<vmem>>, vector<64x64xbf16>
    %c0_12 = arith.constant 0 : index
    %c0_13 = arith.constant 0 : index
    %16 = vector.load %arg6[%c0_12, %c0_13] : memref<1x64xf32, #tpu.memory_space<vmem>>, vector<1x64xf32>
    %cst_14 = arith.constant dense<0.000000e+00> : vector<64x64xf32>
    %17 = tpu.matmul %14, %15, %cst_14 {dimension_numbers = #tpu.dot_dimension_numbers<[1], [0], [0], [1], [0, 0, 1, 1], [], []>} : vector<64x64xbf16>, vector<64x64xbf16>, vector<64x64xf32> -> vector<64x64xf32>
    %18 = arith.truncf %17 : vector<64x64xf32> to vector<64x64xbf16>
    %cst_15 = arith.constant dense<0.000000e+00> : vector<64x64xf32>
    %19 = tpu.matmul %0, %18, %cst_15 {dimension_numbers = #tpu.dot_dimension_numbers<[1], [0], [0], [1], [0, 0, 1, 1], [], []>} : vector<64x64xbf16>, vector<64x64xbf16>, vector<64x64xf32> -> vector<64x64xf32>
    %20 = vector.broadcast %16 : vector<1x64xf32> to vector<64x64xf32>
    %21 = arith.addf %19, %20 : vector<64x64xf32>
    %cst_16 = arith.constant 0.000000e+00 : f32
    %22 = vector.broadcast %cst_16 : f32 to vector<64x64xf32>
    %23 = arith.cmpf ogt, %21, %22 : vector<64x64xf32>
    %cst_17 = arith.constant 1.000000e-01 : f32
    %24 = vector.broadcast %cst_17 : f32 to vector<64x64xf32>
    %25 = arith.mulf %24, %21 : vector<64x64xf32>
    %26 = arith.select %23, %21, %25 : vector<64x64xi1>, vector<64x64xf32>
    %27 = arith.truncf %26 : vector<64x64xf32> to vector<64x64xbf16>
    %c0_18 = arith.constant 0 : index
    %c0_19 = arith.constant 0 : index
    %28 = vector.load %arg7[%c0_18, %c0_19] : memref<64x64xbf16, #tpu.memory_space<vmem>>, vector<64x64xbf16>
    %c0_20 = arith.constant 0 : index
    %c0_21 = arith.constant 0 : index
    %29 = vector.load %arg8[%c0_20, %c0_21] : memref<1x64xf32, #tpu.memory_space<vmem>>, vector<1x64xf32>
    %cst_22 = arith.constant dense<0.000000e+00> : vector<64x64xf32>
    %30 = tpu.matmul %27, %28, %cst_22 {dimension_numbers = #tpu.dot_dimension_numbers<[1], [0], [0], [1], [0, 0, 1, 1], [], []>} : vector<64x64xbf16>, vector<64x64xbf16>, vector<64x64xf32> -> vector<64x64xf32>
    %31 = arith.truncf %30 : vector<64x64xf32> to vector<64x64xbf16>
    %cst_23 = arith.constant dense<0.000000e+00> : vector<64x64xf32>
    %32 = tpu.matmul %0, %31, %cst_23 {dimension_numbers = #tpu.dot_dimension_numbers<[1], [0], [0], [1], [0, 0, 1, 1], [], []>} : vector<64x64xbf16>, vector<64x64xbf16>, vector<64x64xf32> -> vector<64x64xf32>
    %33 = vector.broadcast %29 : vector<1x64xf32> to vector<64x64xf32>
    %34 = arith.addf %32, %33 : vector<64x64xf32>
    %cst_24 = arith.constant 0.000000e+00 : f32
    %35 = vector.broadcast %cst_24 : f32 to vector<64x64xf32>
    %36 = arith.cmpf ogt, %34, %35 : vector<64x64xf32>
    %cst_25 = arith.constant 1.000000e-01 : f32
    %37 = vector.broadcast %cst_25 : f32 to vector<64x64xf32>
    %38 = arith.mulf %37, %34 : vector<64x64xf32>
    %39 = arith.select %36, %34, %38 : vector<64x64xi1>, vector<64x64xf32>
    %40 = arith.truncf %39 : vector<64x64xf32> to vector<64x64xbf16>
    %c0_26 = arith.constant 0 : index
    %c0_27 = arith.constant 0 : index
    %41 = vector.load %arg9[%c0_26, %c0_27] : memref<64x64xbf16, #tpu.memory_space<vmem>>, vector<64x64xbf16>
    %c0_28 = arith.constant 0 : index
    %c0_29 = arith.constant 0 : index
    %42 = vector.load %arg10[%c0_28, %c0_29] : memref<1x64xf32, #tpu.memory_space<vmem>>, vector<1x64xf32>
    %cst_30 = arith.constant dense<0.000000e+00> : vector<64x64xf32>
    %43 = tpu.matmul %40, %41, %cst_30 {dimension_numbers = #tpu.dot_dimension_numbers<[1], [0], [0], [1], [0, 0, 1, 1], [], []>} : vector<64x64xbf16>, vector<64x64xbf16>, vector<64x64xf32> -> vector<64x64xf32>
    %44 = arith.truncf %43 : vector<64x64xf32> to vector<64x64xbf16>
    %cst_31 = arith.constant dense<0.000000e+00> : vector<64x64xf32>
    %45 = tpu.matmul %0, %44, %cst_31 {dimension_numbers = #tpu.dot_dimension_numbers<[1], [0], [0], [1], [0, 0, 1, 1], [], []>} : vector<64x64xbf16>, vector<64x64xbf16>, vector<64x64xf32> -> vector<64x64xf32>
    %46 = vector.broadcast %42 : vector<1x64xf32> to vector<64x64xf32>
    %47 = arith.addf %45, %46 : vector<64x64xf32>
    %cst_32 = arith.constant 0.000000e+00 : f32
    %48 = vector.broadcast %cst_32 : f32 to vector<64x64xf32>
    %49 = arith.cmpf ogt, %47, %48 : vector<64x64xf32>
    %cst_33 = arith.constant 1.000000e-01 : f32
    %50 = vector.broadcast %cst_33 : f32 to vector<64x64xf32>
    %51 = arith.mulf %50, %47 : vector<64x64xf32>
    %52 = arith.select %49, %47, %51 : vector<64x64xi1>, vector<64x64xf32>
    %53 = arith.truncf %52 : vector<64x64xf32> to vector<64x64xbf16>
    %c0_34 = arith.constant 0 : index
    %c0_35 = arith.constant 0 : index
    %54 = vector.load %arg11[%c0_34, %c0_35] : memref<64x128xbf16, #tpu.memory_space<vmem>>, vector<64x128xbf16>
    %c0_36 = arith.constant 0 : index
    %c0_37 = arith.constant 0 : index
    %55 = vector.load %arg12[%c0_36, %c0_37] : memref<1x128xf32, #tpu.memory_space<vmem>>, vector<1x128xf32>
    %cst_38 = arith.constant dense<0.000000e+00> : vector<64x128xf32>
    %56 = tpu.matmul %53, %54, %cst_38 {dimension_numbers = #tpu.dot_dimension_numbers<[1], [0], [0], [1], [0, 0, 1, 1], [], []>} : vector<64x64xbf16>, vector<64x128xbf16>, vector<64x128xf32> -> vector<64x128xf32>
    %57 = arith.truncf %56 : vector<64x128xf32> to vector<64x128xbf16>
    %cst_39 = arith.constant dense<0.000000e+00> : vector<64x128xf32>
    %58 = tpu.matmul %0, %57, %cst_39 {dimension_numbers = #tpu.dot_dimension_numbers<[1], [0], [0], [1], [0, 0, 1, 1], [], []>} : vector<64x64xbf16>, vector<64x128xbf16>, vector<64x128xf32> -> vector<64x128xf32>
    %59 = vector.broadcast %55 : vector<1x128xf32> to vector<64x128xf32>
    %60 = arith.addf %58, %59 : vector<64x128xf32>
    %c0_40 = arith.constant 0 : index
    %c0_41 = arith.constant 0 : index
    %61 = vector.load %arg13[%c0_40, %c0_41] : memref<64x128xf32, #tpu.memory_space<vmem>>, vector<64x128xf32>
    tpu.vector_store %arg13[%c0_40, %c0_41], %60 {strides = array<i32>} : memref<64x128xf32, #tpu.memory_space<vmem>>, vector<64x128xf32>,
    return
  }
  func.func @transform_0(%arg0: i32) -> (i32, i32) {
    %c0_i32 = arith.constant 0 : i32
    %c0_i32_0 = arith.constant 0 : i32
    %c0_i32_1 = arith.constant 0 : i32
    return %c0_i32, %c0_i32_0 : i32, i32
  }
  func.func @transform_1(%arg0: i32) -> (i32, i32) {
    %c0_i32 = arith.constant 0 : i32
    %c0_i32_0 = arith.constant 0 : i32
    %c0_i32_1 = arith.constant 0 : i32
    return %c0_i32, %c0_i32_0 : i32, i32
  }
  func.func @transform_2(%arg0: i32) -> (i32, i32) {
    %c0_i32 = arith.constant 0 : i32
    %c0_i32_0 = arith.constant 0 : i32
    %c0_i32_1 = arith.constant 0 : i32
    return %c0_i32, %c0_i32_0 : i32, i32
  }
  func.func @transform_3(%arg0: i32) -> (i32, i32) {
    %c0_i32 = arith.constant 0 : i32
    %c0_i32_0 = arith.constant 0 : i32
    %c0_i32_1 = arith.constant 0 : i32
    return %c0_i32, %c0_i32_0 : i32, i32
  }
  func.func @transform_4(%arg0: i32) -> (i32, i32) {
    %c0_i32 = arith.constant 0 : i32
    %c0_i32_0 = arith.constant 0 : i32
    %c0_i32_1 = arith.constant 0 : i32
    return %c0_i32, %c0_i32_0 : i32, i32
  }
  func.func @transform_5(%arg0: i32) -> (i32, i32) {
    %c0_i32 = arith.constant 0 : i32
    %c0_i32_0 = arith.constant 0 : i32
    %c0_i32_1 = arith.constant 0 : i32
    return %c0_i32, %c0_i32_0 : i32, i32
  }
  func.func @transform_6(%arg0: i32) -> (i32, i32) {
    %c0_i32 = arith.constant 0 : i32
    %c0_i32_0 = arith.constant 0 : i32
    %c0_i32_1 = arith.constant 0 : i32
    return %c0_i32, %c0_i32_0 : i32, i32
  }
  func.func @transform_7(%arg0: i32) -> (i32, i32) {
    %c0_i32 = arith.constant 0 : i32
    %c0_i32_0 = arith.constant 0 : i32
    %c0_i32_1 = arith.constant 0 : i32
    return %c0_i32, %c0_i32_0 : i32, i32
  }
  func.func @transform_8(%arg0: i32) -> (i32, i32) {
    %c0_i32 = arith.constant 0 : i32
    %c0_i32_0 = arith.constant 0 : i32
    %c0_i32_1 = arith.constant 0 : i32
    return %c0_i32, %c0_i32_0 : i32, i32
  }
  func.func @transform_9(%arg0: i32) -> (i32, i32) {
    %c0_i32 = arith.constant 0 : i32
    %c0_i32_0 = arith.constant 0 : i32
    %c0_i32_1 = arith.constant 0 : i32
    return %c0_i32, %c0_i32_0 : i32, i32
  }
  func.func @transform_10(%arg0: i32) -> (i32, i32) {
    %c0_i32 = arith.constant 0 : i32
    %c0_i32_0 = arith.constant 0 : i32
    %c0_i32_1 = arith.constant 0 : i32
    return %c0_i32, %c0_i32_0 : i32, i32
  }
  func.func @transform_11(%arg0: i32) -> (i32, i32) {
    %c0_i32 = arith.constant 0 : i32
    %c0_i32_0 = arith.constant 0 : i32
    %c0_i32_1 = arith.constant 0 : i32
    return %c0_i32, %c0_i32_0 : i32, i32
  }
  func.func @transform_12(%arg0: i32) -> (i32, i32) {
    %c0_i32 = arith.constant 0 : i32
    %c0_i32_0 = arith.constant 0 : i32
    %c0_i32_1 = arith.constant 0 : i32
    return %c0_i32, %c0_i32_0 : i32, i32
  }
}

</mosaic_0001>

<llo_original>
// kernel: flow_ml_error_forward.11
$region0: #{flow_ml_error_forward.11}
  #allocation0 [shape = 'u32[]', space=smem, size = 0x4, offset = 0x4, fixed_abs, tag = 'smem constant byte address 0x4 - core index']
  #allocation1 [shape = 'u32[144,128]{1,0:T(1,128)}', space=vmem, size = 0x12000, scoped, tag = 'internal scratch']
  %s0 = inlined_call_operand.vmem [shape: f32[64,2], index: 0, kind: input, shape index: {}]
  %s1 = inlined_call_operand.vmem [shape: f32[2,64], index: 1, kind: input, shape index: {}]
  %s2 = inlined_call_operand.vmem [shape: f32[64,64], index: 2, kind: output, shape index: {}]
  %s3 = sld [smem:[#allocation0]]
  $region18: #{flow_ml_error_forward.11} parent=0
    _
  %s5 = ssub.s32 1, %s3
  %s6 = scalar_select 0, %s5, %s3
  // Predicated region
  $region2: #{flow_ml_error_forward.11} parent=0 // pred_check
    _
  $region3: #{flow_ml_error_forward.11} parent=0 // pred_check_branch
    %8 = sbr.rel (0) target = $region5
  $region4: #{flow_ml_error_forward.11} parent=0 // pred_region
    _
  $region5: #{flow_ml_error_forward.11} parent=0 // pred_fallthru
    _
  // Predicated region
  $region6: #{flow_ml_error_forward.11} parent=0 // pred_check
    _
  $region7: #{flow_ml_error_forward.11} parent=0 // pred_check_branch
    %10 = sbr.rel (0) target = $region9
  $region8: #{flow_ml_error_forward.11} parent=0 // pred_region
    _
  $region9: #{flow_ml_error_forward.11} parent=0 // pred_fallthru
    _
  %v11 = vld [vmem:[%s0] sm:$0xff]
  %v12 = vld [vmem:[%s0 + $0x8] sm:$0xff]
  %v13 = vld [vmem:[%s0 + $0x10] sm:$0xff]
  %v14 = vld [vmem:[%s0 + $0x18] sm:$0xff]
  %v15 = vld [vmem:[%s0 + $0x20] sm:$0xff]
  %v16 = vld [vmem:[%s0 + $0x28] sm:$0xff]
  %v17 = vld [vmem:[%s0 + $0x30] sm:$0xff]
  %v18 = vld [vmem:[%s0 + $0x38] sm:$0xff]
  %v19 = vld [vmem:[%s1] sm:$0x3]
  %21 = vset.pattern.permute.xlu0 0
  %22 = vperm.xlu0 %21, %v11
  %v23 = vpop.permute.xlu0 %22
  %26 = vset.pattern.permute.xlu0 0
  %27 = vperm.xlu0 %26, %v12
  %v28 = vpop.permute.xlu0 %27
  %31 = vset.pattern.permute.xlu0 0
  %32 = vperm.xlu0 %31, %v13
  %v33 = vpop.permute.xlu0 %32
  %36 = vset.pattern.permute.xlu0 0
  %37 = vperm.xlu0 %36, %v14
  %v38 = vpop.permute.xlu0 %37
  %41 = vset.pattern.permute.xlu0 0
  %42 = vperm.xlu0 %41, %v15
  %v43 = vpop.permute.xlu0 %42
  %46 = vset.pattern.permute.xlu0 0
  %47 = vperm.xlu0 %46, %v16
  %v48 = vpop.permute.xlu0 %47
  %51 = vset.pattern.permute.xlu0 0
  %52 = vperm.xlu0 %51, %v17
  %v53 = vpop.permute.xlu0 %52
  %56 = vset.pattern.permute.xlu0 0
  %57 = vperm.xlu0 %56, %v18
  %v58 = vpop.permute.xlu0 %57
  %v60 = vlaneseq
  %v61 = vshrl.u32 %v60, 7
  %v62 = vsub.s32 0, %v61
  %v63 = vrot.slane %v19, %v62
  %v64 = vsub.f32 %v23, %v63
  %v65 = vsub.f32 %v28, %v63
  %v66 = vsub.f32 %v33, %v63
  %v67 = vsub.f32 %v38, %v63
  %v68 = vsub.f32 %v43, %v63
  %v69 = vsub.f32 %v48, %v63
  %v70 = vsub.f32 %v53, %v63
  %v71 = vsub.f32 %v58, %v63
  %v72 = vmul.f32 %v64, %v64
  %v73 = vmul.f32 %v65, %v65
  %v74 = vmul.f32 %v66, %v66
  %v75 = vmul.f32 %v67, %v67
  %v76 = vmul.f32 %v68, %v68
  %v77 = vmul.f32 %v69, %v69
  %v78 = vmul.f32 %v70, %v70
  %v79 = vmul.f32 %v71, %v71
  %v80 = vadd.f32 %v72, 0.0
  %v81 = vadd.f32 %v73, 0.0
  %v82 = vadd.f32 %v74, 0.0
  %v83 = vadd.f32 %v75, 0.0
  %v84 = vadd.f32 %v76, 0.0
  %v85 = vadd.f32 %v77, 0.0
  %v86 = vadd.f32 %v78, 0.0
  %v87 = vadd.f32 %v79, 0.0
  %88 = vset.pattern.permute.xlu0 1
  %89 = vperm.xlu0 %88, %v11
  %v90 = vpop.permute.xlu0 %89
  %92 = vset.pattern.permute.xlu0 1
  %93 = vperm.xlu0 %92, %v12
  %v94 = vpop.permute.xlu0 %93
  %96 = vset.pattern.permute.xlu0 1
  %97 = vperm.xlu0 %96, %v13
  %v98 = vpop.permute.xlu0 %97
  %100 = vset.pattern.permute.xlu0 1
  %101 = vperm.xlu0 %100, %v14
  %v102 = vpop.permute.xlu0 %101
  %104 = vset.pattern.permute.xlu0 1
  %105 = vperm.xlu0 %104, %v15
  %v106 = vpop.permute.xlu0 %105
  %108 = vset.pattern.permute.xlu0 1
  %109 = vperm.xlu0 %108, %v16
  %v110 = vpop.permute.xlu0 %109
  %112 = vset.pattern.permute.xlu0 1
  %113 = vperm.xlu0 %112, %v17
  %v114 = vpop.permute.xlu0 %113
  %116 = vset.pattern.permute.xlu0 1
  %117 = vperm.xlu0 %116, %v18
  %v118 = vpop.permute.xlu0 %117
  %v120 = vlaneseq
  %v121 = vshrl.u32 %v120, 7
  %v122 = vsub.s32 1, %v121
  %v123 = vrot.slane %v19, %v122
  %v124 = vsub.f32 %v90, %v123
  %v125 = vsub.f32 %v94, %v123
  %v126 = vsub.f32 %v98, %v123
  %v127 = vsub.f32 %v102, %v123
  %v128 = vsub.f32 %v106, %v123
  %v129 = vsub.f32 %v110, %v123
  %v130 = vsub.f32 %v114, %v123
  %v131 = vsub.f32 %v118, %v123
  %v132 = vmul.f32 %v124, %v124
  %v133 = vmul.f32 %v125, %v125
  %v134 = vmul.f32 %v126, %v126
  %v135 = vmul.f32 %v127, %v127
  %v136 = vmul.f32 %v128, %v128
  %v137 = vmul.f32 %v129, %v129
  %v138 = vmul.f32 %v130, %v130
  %v139 = vmul.f32 %v131, %v131
  %v140 = vadd.f32 %v80, %v132
  %v141 = vadd.f32 %v81, %v133
  %v142 = vadd.f32 %v82, %v134
  %v143 = vadd.f32 %v83, %v135
  %v144 = vadd.f32 %v84, %v136
  %v145 = vadd.f32 %v85, %v137
  %v146 = vadd.f32 %v86, %v138
  %v147 = vadd.f32 %v87, %v139
  %vm148 = vcmask 523264
  %149 = vst.msk [vmem:[%s2] sm:$0xff] %vm148, %v140
  %150 = vst.msk [vmem:[%s2 + $0x8] sm:$0xff] %vm148, %v141
  %151 = vst.msk [vmem:[%s2 + $0x10] sm:$0xff] %vm148, %v142
  %152 = vst.msk [vmem:[%s2 + $0x18] sm:$0xff] %vm148, %v143
  %153 = vst.msk [vmem:[%s2 + $0x20] sm:$0xff] %vm148, %v144
  %154 = vst.msk [vmem:[%s2 + $0x28] sm:$0xff] %vm148, %v145
  %155 = vst.msk [vmem:[%s2 + $0x30] sm:$0xff] %vm148, %v146
  %156 = vst.msk [vmem:[%s2 + $0x38] sm:$0xff] %vm148, %v147
  // Predicated region
  $region10: #{flow_ml_error_forward.11} parent=0 // pred_check
    _
  $region11: #{flow_ml_error_forward.11} parent=0 // pred_check_branch
    %158 = sbr.rel (0) target = $region13
  $region12: #{flow_ml_error_forward.11} parent=0 // pred_region
    _
  $region13: #{flow_ml_error_forward.11} parent=0 // pred_fallthru
    _
  // Predicated region
  $region14: #{flow_ml_error_forward.11} parent=0 // pred_check
    _
  $region15: #{flow_ml_error_forward.11} parent=0 // pred_check_branch
    %160 = sbr.rel (0) target = $region17
  $region16: #{flow_ml_error_forward.11} parent=0 // pred_region
    _
  $region17: #{flow_ml_error_forward.11} parent=0 // pred_fallthru
    _

// kernel: flow_ml_error_forward.13
$region0: #{flow_ml_error_forward.13}
  #allocation0 [shape = 'u32[]', space=smem, size = 0x4, offset = 0x4, fixed_abs, tag = 'smem constant byte address 0x4 - core index']
  #allocation1 [shape = 'u32[144,128]{1,0:T(1,128)}', space=vmem, size = 0x12000, scoped, tag = 'internal scratch']
  %s0 = inlined_call_operand.vmem [shape: f32[64,64], index: 0, kind: input, shape index: {}]
  %s1 = inlined_call_operand.vmem [shape: f32[64,64], index: 1, kind: input, shape index: {}]
  %s2 = inlined_call_operand.vmem [shape: f32[64,64], index: 2, kind: output, shape index: {}]
  %s3 = sld [smem:[#allocation0]]
  $region18: #{flow_ml_error_forward.13} parent=0
    _
  %s5 = ssub.s32 1, %s3
  %s6 = scalar_select 0, %s5, %s3
  // Predicated region
  $region2: #{flow_ml_error_forward.13} parent=0 // pred_check
    _
  $region3: #{flow_ml_error_forward.13} parent=0 // pred_check_branch
    %8 = sbr.rel (0) target = $region5
  $region4: #{flow_ml_error_forward.13} parent=0 // pred_region
    _
  $region5: #{flow_ml_error_forward.13} parent=0 // pred_fallthru
    _
  // Predicated region
  $region6: #{flow_ml_error_forward.13} parent=0 // pred_check
    _
  $region7: #{flow_ml_error_forward.13} parent=0 // pred_check_branch
    %10 = sbr.rel (0) target = $region9
  $region8: #{flow_ml_error_forward.13} parent=0 // pred_region
    _
  $region9: #{flow_ml_error_forward.13} parent=0 // pred_fallthru
    _
  %v11 = vld [vmem:[%s0] sm:$0xff]
  %v12 = vld [vmem:[%s0 + $0x8] sm:$0xff]
  %v13 = vld [vmem:[%s0 + $0x10] sm:$0xff]
  %v14 = vld [vmem:[%s0 + $0x18] sm:$0xff]
  %v15 = vld [vmem:[%s0 + $0x20] sm:$0xff]
  %v16 = vld [vmem:[%s0 + $0x28] sm:$0xff]
  %v17 = vld [vmem:[%s0 + $0x30] sm:$0xff]
  %v18 = vld [vmem:[%s0 + $0x38] sm:$0xff]
  %v19 = vld [vmem:[%s1] sm:$0xff]
  %v20 = vld [vmem:[%s1 + $0x8] sm:$0xff]
  %v21 = vld [vmem:[%s1 + $0x10] sm:$0xff]
  %v22 = vld [vmem:[%s1 + $0x18] sm:$0xff]
  %v23 = vld [vmem:[%s1 + $0x20] sm:$0xff]
  %v24 = vld [vmem:[%s1 + $0x28] sm:$0xff]
  %v25 = vld [vmem:[%s1 + $0x30] sm:$0xff]
  %v26 = vld [vmem:[%s1 + $0x38] sm:$0xff]
  %v27 = vmul.f32 %v11, %v11
  %v28 = vmul.f32 %v12, %v12
  %v29 = vmul.f32 %v13, %v13
  %v30 = vmul.f32 %v14, %v14
  %v31 = vmul.f32 %v15, %v15
  %v32 = vmul.f32 %v16, %v16
  %v33 = vmul.f32 %v17, %v17
  %v34 = vmul.f32 %v18, %v18
  %vm35 = vcmask 523264
  %v36 = vsel %vm35, %v27, 0.0
  %37 = vadd.xlane.f32.xlu0 %v36
  %v38 = vpop.xlane.xlu0 %37
  %v39 = vsel %vm35, %v28, 0.0
  %40 = vadd.xlane.f32.xlu0 %v39
  %v41 = vpop.xlane.xlu0 %40
  %v42 = vsel %vm35, %v29, 0.0
  %43 = vadd.xlane.f32.xlu0 %v42
  %v44 = vpop.xlane.xlu0 %43
  %v45 = vsel %vm35, %v30, 0.0
  %46 = vadd.xlane.f32.xlu0 %v45
  %v47 = vpop.xlane.xlu0 %46
  %v48 = vsel %vm35, %v31, 0.0
  %49 = vadd.xlane.f32.xlu0 %v48
  %v50 = vpop.xlane.xlu0 %49
  %v51 = vsel %vm35, %v32, 0.0
  %52 = vadd.xlane.f32.xlu0 %v51
  %v53 = vpop.xlane.xlu0 %52
  %v54 = vsel %vm35, %v33, 0.0
  %55 = vadd.xlane.f32.xlu0 %v54
  %v56 = vpop.xlane.xlu0 %55
  %v57 = vsel %vm35, %v34, 0.0
  %58 = vadd.xlane.f32.xlu0 %v57
  %v59 = vpop.xlane.xlu0 %58
  %v60 = vmul.f32 %v19, %v19
  %v61 = vmul.f32 %v20, %v20
  %v62 = vmul.f32 %v21, %v21
  %v63 = vmul.f32 %v22, %v22
  %v64 = vmul.f32 %v23, %v23
  %v65 = vmul.f32 %v24, %v24
  %v66 = vmul.f32 %v25, %v25
  %v67 = vmul.f32 %v26, %v26
  %v68 = vsel %vm35, %v60, 0.0
  %v69 = vsel %vm35, %v61, 0.0
  %v70 = vadd.f32 %v68, %v69
  %v71 = vsel %vm35, %v62, 0.0
  %v72 = vadd.f32 %v70, %v71
  %v73 = vsel %vm35, %v63, 0.0
  %v74 = vadd.f32 %v72, %v73
  %v75 = vsel %vm35, %v64, 0.0
  %v76 = vadd.f32 %v74, %v75
  %v77 = vsel %vm35, %v65, 0.0
  %v78 = vadd.f32 %v76, %v77
  %v79 = vsel %vm35, %v66, 0.0
  %v80 = vadd.f32 %v78, %v79
  %v81 = vsel %vm35, %v67, 0.0
  %v82 = vadd.f32 %v80, %v81
  %v83 = vrot.slane %v82, 4
  %v84 = vadd.f32 %v82, %v83
  %v85 = vrot.slane %v84, 2
  %v86 = vadd.f32 %v84, %v85
  %v87 = vrot.slane %v86, 1
  %v88 = vadd.f32 %v86, %v87
  %v90 = vsel %vm35, %v11, 0
  %v93 = vsel %vm35, %v12, 0
  %v96 = vsel %vm35, %v13, 0
  %v99 = vsel %vm35, %v14, 0
  %v102 = vsel %vm35, %v15, 0
  %v105 = vsel %vm35, %v16, 0
  %v108 = vsel %vm35, %v17, 0
  %v111 = vsel %vm35, %v18, 0
  %113 = vmatprep.subr.mxu0 0.0
  %114 = vmatpush1.msra.mxu0 %v19
  %115 = vmatprep.subr.mxu0 0.0
  %116 = vmatpush1.msra.mxu0 %v20
  %117 = vmatprep.subr.mxu0 0.0
  %118 = vmatpush1.msra.mxu0 %v21
  %119 = vmatprep.subr.mxu0 0.0
  %120 = vmatpush1.msra.mxu0 %v22
  %121 = vmatprep.subr.mxu0 0.0
  %122 = vmatpush1.msra.mxu0 %v23
  %123 = vmatprep.subr.mxu0 0.0
  %124 = vmatpush1.msra.mxu0 %v24
  %125 = vmatprep.subr.mxu0 0.0
  %126 = vmatpush1.msra.mxu0 %v25
  %127 = vmatprep.subr.mxu0 0.0
  %128 = vmatpush1.msra.mxu0 %v26
  %129 = vmatprep.subr.mxu0 0.0
  %130 = vmatpush1.msra.mxu0 0.0
  %131 = vmatprep.subr.mxu0 0.0
  %132 = vmatpush1.msra.mxu0 0.0
  %133 = vmatprep.subr.mxu0 0.0
  %134 = vmatpush1.msra.mxu0 0.0
  %135 = vmatprep.subr.mxu0 0.0
  %136 = vmatpush1.msra.mxu0 0.0
  %137 = vmatprep.subr.mxu0 0.0
  %138 = vmatpush1.msra.mxu0 0.0
  %139 = vmatprep.subr.mxu0 0.0
  %140 = vmatpush1.msra.mxu0 0.0
  %141 = vmatprep.subr.mxu0 0.0
  %142 = vmatpush1.msra.mxu0 0.0
  %143 = vmatprep.subr.mxu0 0.0
  %144 = vmatpush1.msra.mxu0 0.0
  %145 = vmatprep.subr.mxu0 0.0
  %146 = vmatpush1.msra.mxu0 0.0
  %147 = vmatprep.subr.mxu0 0.0
  %148 = vmatpush1.msra.mxu0 0.0
  %149 = vmatprep.subr.mxu0 0.0
  %150 = vmatpush1.msra.mxu0 0.0
  %151 = vmatprep.subr.mxu0 0.0
  %152 = vmatpush1.msra.mxu0 0.0
  %153 = vmatprep.subr.mxu0 0.0
  %154 = vmatpush1.msra.mxu0 0.0
  %155 = vmatprep.subr.mxu0 0.0
  %156 = vmatpush1.msra.mxu0 0.0
  %157 = vmatprep.subr.mxu0 0.0
  %158 = vmatpush1.msra.mxu0 0.0
  %159 = vmatprep.subr.mxu0 0.0
  %160 = vmatpush1.msra.mxu0 0.0
  %161 = vmatprep.subr.mxu0 0.0
  %162 = vmatpush1.msra.mxu0 0.0
  %163 = vmatprep.subr.mxu0 0.0
  %164 = vmatpush1.msra.mxu0 0.0
  %165 = vmatprep.subr.mxu0 0.0
  %166 = vmatpush1.msra.mxu0 0.0
  %167 = vmatprep.subr.mxu0 0.0
  %168 = vmatpush1.msra.mxu0 0.0
  %169 = vmatprep.subr.mxu0 0.0
  %170 = vmatpush1.msra.mxu0 0.0
  %171 = vmatprep.subr.mxu0 0.0
  %172 = vmatpush1.msra.mxu0 0.0
  %173 = vmatprep.subr.mxu0 0.0
  %174 = vmatpush1.msra.mxu0 0.0
  %175 = vmatprep.subr.mxu0 0.0
  %176 = vmatpush1.msra.mxu0 0.0
  %177 = vmatprep.mubr.f32.mxu0 0.0
  %178 = vmatmul.mubr.f32.gmra.mrb[0].mxu0 %v90
  %v179 = vpop.f32.mrb[0].mxu0
  %v180 = vadd.f32 0.0, %v179
  %v181 = vpop.f32.mrb[0].mxu0
  %182 = vmatprep.mubr.f32.mxu0 0.0
  %183 = vmatmul.mubr.f32.gmra.mrb[0].mxu0 %v93
  %v184 = vpop.f32.mrb[0].mxu0
  %v185 = vadd.f32 0.0, %v184
  %v186 = vpop.f32.mrb[0].mxu0
  %187 = vmatprep.mubr.f32.mxu0 0.0
  %188 = vmatmul.mubr.f32.gmra.mrb[0].mxu0 %v96
  %v189 = vpop.f32.mrb[0].mxu0
  %v190 = vadd.f32 0.0, %v189
  %v191 = vpop.f32.mrb[0].mxu0
  %192 = vmatprep.mubr.f32.mxu0 0.0
  %193 = vmatmul.mubr.f32.gmra.mrb[0].mxu0 %v99
  %v194 = vpop.f32.mrb[0].mxu0
  %v195 = vadd.f32 0.0, %v194
  %v196 = vpop.f32.mrb[0].mxu0
  %197 = vmatprep.mubr.f32.mxu0 0.0
  %198 = vmatmul.mubr.f32.gmra.mrb[0].mxu0 %v102
  %v199 = vpop.f32.mrb[0].mxu0
  %v200 = vadd.f32 0.0, %v199
  %v201 = vpop.f32.mrb[0].mxu0
  %202 = vmatprep.mubr.f32.mxu0 0.0
  %203 = vmatmul.mubr.f32.gmra.mrb[0].mxu0 %v105
  %v204 = vpop.f32.mrb[0].mxu0
  %v205 = vadd.f32 0.0, %v204
  %v206 = vpop.f32.mrb[0].mxu0
  %207 = vmatprep.mubr.f32.mxu0 0.0
  %208 = vmatmul.mubr.f32.gmra.mrb[0].mxu0 %v108
  %v209 = vpop.f32.mrb[0].mxu0
  %v210 = vadd.f32 0.0, %v209
  %v211 = vpop.f32.mrb[0].mxu0
  %212 = vmatprep.mubr.f32.mxu0 0.0
  %213 = vmatmul.mubr.f32.gmra.mrb[0].mxu0 %v111
  %v214 = vpop.f32.mrb[0].mxu0
  %v215 = vadd.f32 0.0, %v214
  %v216 = vpop.f32.mrb[0].mxu0
  %217 = vdwg.mxu0
  %v218 = vadd.f32 %v38, %v88
  %v219 = vadd.f32 %v41, %v88
  %v220 = vadd.f32 %v44, %v88
  %v221 = vadd.f32 %v47, %v88
  %v222 = vadd.f32 %v50, %v88
  %v223 = vadd.f32 %v53, %v88
  %v224 = vadd.f32 %v56, %v88
  %v225 = vadd.f32 %v59, %v88
  %v226 = vmul.f32 %v180, 2.0
  %v227 = vmul.f32 %v185, 2.0
  %v228 = vmul.f32 %v190, 2.0
  %v229 = vmul.f32 %v195, 2.0
  %v230 = vmul.f32 %v200, 2.0
  %v231 = vmul.f32 %v205, 2.0
  %v232 = vmul.f32 %v210, 2.0
  %v233 = vmul.f32 %v215, 2.0
  %v234 = vsub.f32 %v218, %v226
  %v235 = vsub.f32 %v219, %v227
  %v236 = vsub.f32 %v220, %v228
  %v237 = vsub.f32 %v221, %v229
  %v238 = vsub.f32 %v222, %v230
  %v239 = vsub.f32 %v223, %v231
  %v240 = vsub.f32 %v224, %v232
  %v241 = vsub.f32 %v225, %v233
  %242 = vst.msk [vmem:[%s2] sm:$0xff] %vm35, %v234
  %243 = vst.msk [vmem:[%s2 + $0x8] sm:$0xff] %vm35, %v235
  %244 = vst.msk [vmem:[%s2 + $0x10] sm:$0xff] %vm35, %v236
  %245 = vst.msk [vmem:[%s2 + $0x18] sm:$0xff] %vm35, %v237
  %246 = vst.msk [vmem:[%s2 + $0x20] sm:$0xff] %vm35, %v238
  %247 = vst.msk [vmem:[%s2 + $0x28] sm:$0xff] %vm35, %v239
  %248 = vst.msk [vmem:[%s2 + $0x30] sm:$0xff] %vm35, %v240
  %249 = vst.msk [vmem:[%s2 + $0x38] sm:$0xff] %vm35, %v241
  // Predicated region
  $region10: #{flow_ml_error_forward.13} parent=0 // pred_check
    _
  $region11: #{flow_ml_error_forward.13} parent=0 // pred_check_branch
    %251 = sbr.rel (0) target = $region13
  $region12: #{flow_ml_error_forward.13} parent=0 // pred_region
    _
  $region13: #{flow_ml_error_forward.13} parent=0 // pred_fallthru
    _
  // Predicated region
  $region14: #{flow_ml_error_forward.13} parent=0 // pred_check
    _
  $region15: #{flow_ml_error_forward.13} parent=0 // pred_check_branch
    %253 = sbr.rel (0) target = $region17
  $region16: #{flow_ml_error_forward.13} parent=0 // pred_region
    _
  $region17: #{flow_ml_error_forward.13} parent=0 // pred_fallthru
    _

// kernel: flow_ml_error_forward.12
$region0: #{flow_ml_error_forward.12}
  #allocation0 [shape = 'u32[]', space=smem, size = 0x4, offset = 0x4, fixed_abs, tag = 'smem constant byte address 0x4 - core index']
  #allocation1 [shape = 'u32[144,128]{1,0:T(1,128)}', space=vmem, size = 0x12000, scoped, tag = 'internal scratch']
  %s0 = inlined_call_operand.vmem [shape: bf16[384,4], index: 0, kind: input, shape index: {}]
  %s1 = inlined_call_operand.vmem [shape: bf16[4,32], index: 1, kind: input, shape index: {}]
  %s2 = inlined_call_operand.vmem [shape: f32[1,32], index: 2, kind: input, shape index: {}]
  %s3 = inlined_call_operand.vmem [shape: bf16[32,32], index: 3, kind: input, shape index: {}]
  %s4 = inlined_call_operand.vmem [shape: f32[1,32], index: 4, kind: input, shape index: {}]
  %s5 = inlined_call_operand.vmem [shape: bf16[32,128], index: 5, kind: input, shape index: {}]
  %s6 = inlined_call_operand.vmem [shape: f32[1,128], index: 6, kind: input, shape index: {}]
  %s7 = inlined_call_operand.vmem [shape: f32[64,128], index: 7, kind: output, shape index: {}]
  %s8 = sld [smem:[#allocation0]]
  $region38: #{flow_ml_error_forward.12} parent=0
    _
  %s10 = ssub.s32 1, %s8
  %s11 = scalar_select 0, %s10, %s8
  // Predicated region
  $region2: #{flow_ml_error_forward.12} parent=0 // pred_check
    _
  $region3: #{flow_ml_error_forward.12} parent=0 // pred_check_branch
    %13 = sbr.rel (0) target = $region5
  $region4: #{flow_ml_error_forward.12} parent=0 // pred_region
    _
  $region5: #{flow_ml_error_forward.12} parent=0 // pred_fallthru
    _
  // Predicated region
  $region6: #{flow_ml_error_forward.12} parent=0 // pred_check
    _
  $region7: #{flow_ml_error_forward.12} parent=0 // pred_check_branch
    %15 = sbr.rel (0) target = $region9
  $region8: #{flow_ml_error_forward.12} parent=0 // pred_region
    _
  $region9: #{flow_ml_error_forward.12} parent=0 // pred_fallthru
    _
  // Predicated region
  $region10: #{flow_ml_error_forward.12} parent=0 // pred_check
    _
  $region11: #{flow_ml_error_forward.12} parent=0 // pred_check_branch
    %17 = sbr.rel (0) target = $region13
  $region12: #{flow_ml_error_forward.12} parent=0 // pred_region
    _
  $region13: #{flow_ml_error_forward.12} parent=0 // pred_fallthru
    _
  // Predicated region
  $region14: #{flow_ml_error_forward.12} parent=0 // pred_check
    _
  $region15: #{flow_ml_error_forward.12} parent=0 // pred_check_branch
    %19 = sbr.rel (0) target = $region17
  $region16: #{flow_ml_error_forward.12} parent=0 // pred_region
    _
  $region17: #{flow_ml_error_forward.12} parent=0 // pred_fallthru
    _
  // Predicated region
  $region18: #{flow_ml_error_forward.12} parent=0 // pred_check
    _
  $region19: #{flow_ml_error_forward.12} parent=0 // pred_check_branch
    %21 = sbr.rel (0) target = $region21
  $region20: #{flow_ml_error_forward.12} parent=0 // pred_region
    _
  $region21: #{flow_ml_error_forward.12} parent=0 // pred_fallthru
    _
  // Predicated region
  $region22: #{flow_ml_error_forward.12} parent=0 // pred_check
    _
  $region23: #{flow_ml_error_forward.12} parent=0 // pred_check_branch
    %23 = sbr.rel (0) target = $region25
  $region24: #{flow_ml_error_forward.12} parent=0 // pred_region
    _
  $region25: #{flow_ml_error_forward.12} parent=0 // pred_fallthru
    _
  // Predicated region
  $region26: #{flow_ml_error_forward.12} parent=0 // pred_check
    _
  $region27: #{flow_ml_error_forward.12} parent=0 // pred_check_branch
    %25 = sbr.rel (0) target = $region29
  $region28: #{flow_ml_error_forward.12} parent=0 // pred_region
    _
  $region29: #{flow_ml_error_forward.12} parent=0 // pred_fallthru
    _
  %v27 = vld [vmem:[%s0] sm:$0xf]
  %v28 = vld [vmem:[%s0 + $0x4] sm:$0xf]
  %v29 = vld [vmem:[%s0 + $0x8] sm:$0xf]
  %v30 = vld [vmem:[%s0 + $0xc] sm:$0xf]
  %v31 = vld [vmem:[%s0 + $0x10] sm:$0xf]
  %v32 = vld [vmem:[%s0 + $0x14] sm:$0xf]
  %v33 = vld [vmem:[%s0 + $0x18] sm:$0xf]
  %v34 = vld [vmem:[%s0 + $0x1c] sm:$0xf]
  %v35 = vld [vmem:[%s0 + $0x20] sm:$0xf]
  %v36 = vld [vmem:[%s0 + $0x24] sm:$0xf]
  %v37 = vld [vmem:[%s0 + $0x28] sm:$0xf]
  %v38 = vld [vmem:[%s0 + $0x2c] sm:$0xf]
  %v39 = vld [vmem:[%s0 + $0x30] sm:$0xf]
  %v40 = vld [vmem:[%s0 + $0x34] sm:$0xf]
  %v41 = vld [vmem:[%s0 + $0x38] sm:$0xf]
  %v42 = vld [vmem:[%s0 + $0x3c] sm:$0xf]
  %v43 = vld [vmem:[%s0 + $0x40] sm:$0xf]
  %v44 = vld [vmem:[%s0 + $0x44] sm:$0xf]
  %v45 = vld [vmem:[%s0 + $0x48] sm:$0xf]
  %v46 = vld [vmem:[%s0 + $0x4c] sm:$0xf]
  %v47 = vld [vmem:[%s0 + $0x50] sm:$0xf]
  %v48 = vld [vmem:[%s0 + $0x54] sm:$0xf]
  %v49 = vld [vmem:[%s0 + $0x58] sm:$0xf]
  %v50 = vld [vmem:[%s0 + $0x5c] sm:$0xf]
  %v51 = vld [vmem:[%s0 + $0x60] sm:$0xf]
  %v52 = vld [vmem:[%s0 + $0x64] sm:$0xf]
  %v53 = vld [vmem:[%s0 + $0x68] sm:$0xf]
  %v54 = vld [vmem:[%s0 + $0x6c] sm:$0xf]
  %v55 = vld [vmem:[%s0 + $0x70] sm:$0xf]
  %v56 = vld [vmem:[%s0 + $0x74] sm:$0xf]
  %v57 = vld [vmem:[%s0 + $0x78] sm:$0xf]
  %v58 = vld [vmem:[%s0 + $0x7c] sm:$0xf]
  %v59 = vld [vmem:[%s0 + $0x80] sm:$0xf]
  %v60 = vld [vmem:[%s0 + $0x84] sm:$0xf]
  %v61 = vld [vmem:[%s0 + $0x88] sm:$0xf]
  %v62 = vld [vmem:[%s0 + $0x8c] sm:$0xf]
  %v63 = vld [vmem:[%s0 + $0x90] sm:$0xf]
  %v64 = vld [vmem:[%s0 + $0x94] sm:$0xf]
  %v65 = vld [vmem:[%s0 + $0x98] sm:$0xf]
  %v66 = vld [vmem:[%s0 + $0x9c] sm:$0xf]
  %v67 = vld [vmem:[%s0 + $0xa0] sm:$0xf]
  %v68 = vld [vmem:[%s0 + $0xa4] sm:$0xf]
  %v69 = vld [vmem:[%s0 + $0xa8] sm:$0xf]
  %v70 = vld [vmem:[%s0 + $0xac] sm:$0xf]
  %v71 = vld [vmem:[%s0 + $0xb0] sm:$0xf]
  %v72 = vld [vmem:[%s0 + $0xb4] sm:$0xf]
  %v73 = vld [vmem:[%s0 + $0xb8] sm:$0xf]
  %v74 = vld [vmem:[%s0 + $0xbc] sm:$0xf]
  %v75 = vld [vmem:[%s1] sm:$0x3]
  %v76 = vld [vmem:[%s2] sm:$0x1]
  %v78 = vlaneseq
  %v79 = vshrl.u32 %v78, 7
  %v80 = vsub.s32 0, %v79
  %v81 = vrot.slane %v76, %v80
  %v131 = vunpack.c.l.b16 %v27
  %v132 = vunpack.c.l.b16 %v28
  %v133 = vunpack.c.l.b16 %v29
  %v134 = vunpack.c.l.b16 %v30
  %v135 = vunpack.c.l.b16 %v31
  %v136 = vunpack.c.l.b16 %v32
  %v137 = vunpack.c.l.b16 %v33
  %v138 = vunpack.c.l.b16 %v34
  %v139 = vunpack.c.l.b16 %v35
  %v140 = vunpack.c.l.b16 %v36
  %v141 = vunpack.c.l.b16 %v37
  %v142 = vunpack.c.l.b16 %v38
  %v143 = vunpack.c.l.b16 %v39
  %v144 = vunpack.c.l.b16 %v40
  %v145 = vunpack.c.l.b16 %v41
  %v146 = vunpack.c.l.b16 %v42
  %v147 = vunpack.c.l.b16 %v43
  %v148 = vunpack.c.l.b16 %v44
  %v149 = vunpack.c.l.b16 %v45
  %v150 = vunpack.c.l.b16 %v46
  %v151 = vunpack.c.l.b16 %v47
  %v152 = vunpack.c.l.b16 %v48
  %v153 = vunpack.c.l.b16 %v49
  %v154 = vunpack.c.l.b16 %v50
  %v155 = vunpack.c.l.b16 %v51
  %v156 = vunpack.c.l.b16 %v52
  %v157 = vunpack.c.l.b16 %v53
  %v158 = vunpack.c.l.b16 %v54
  %v159 = vunpack.c.l.b16 %v55
  %v160 = vunpack.c.l.b16 %v56
  %v161 = vunpack.c.l.b16 %v57
  %v162 = vunpack.c.l.b16 %v58
  %v163 = vunpack.c.l.b16 %v59
  %v164 = vunpack.c.l.b16 %v60
  %v165 = vunpack.c.l.b16 %v61
  %v166 = vunpack.c.l.b16 %v62
  %v167 = vunpack.c.l.b16 %v63
  %v168 = vunpack.c.l.b16 %v64
  %v169 = vunpack.c.l.b16 %v65
  %v170 = vunpack.c.l.b16 %v66
  %v171 = vunpack.c.l.b16 %v67
  %v172 = vunpack.c.l.b16 %v68
  %v173 = vunpack.c.l.b16 %v69
  %v174 = vunpack.c.l.b16 %v70
  %v175 = vunpack.c.l.b16 %v71
  %v176 = vunpack.c.l.b16 %v72
  %v177 = vunpack.c.l.b16 %v73
  %v178 = vunpack.c.l.b16 %v74
  %v179 = vpack.c.b16 %v132, %v131
  %v180 = vpack.c.b16 %v134, %v133
  %v181 = vpack.c.b16 %v136, %v135
  %v182 = vpack.c.b16 %v138, %v137
  %v183 = vpack.c.b16 %v140, %v139
  %v184 = vpack.c.b16 %v142, %v141
  %v185 = vpack.c.b16 %v144, %v143
  %v186 = vpack.c.b16 %v146, %v145
  %v187 = vpack.c.b16 %v148, %v147
  %v188 = vpack.c.b16 %v150, %v149
  %v189 = vpack.c.b16 %v152, %v151
  %v190 = vpack.c.b16 %v154, %v153
  %v191 = vpack.c.b16 %v156, %v155
  %v192 = vpack.c.b16 %v158, %v157
  %v193 = vpack.c.b16 %v160, %v159
  %v194 = vpack.c.b16 %v162, %v161
  %v195 = vpack.c.b16 %v164, %v163
  %v196 = vpack.c.b16 %v166, %v165
  %v197 = vpack.c.b16 %v168, %v167
  %v198 = vpack.c.b16 %v170, %v169
  %v199 = vpack.c.b16 %v172, %v171
  %v200 = vpack.c.b16 %v174, %v173
  %v201 = vpack.c.b16 %v176, %v175
  %v202 = vpack.c.b16 %v178, %v177
  %vm203 = vcmask 31744
  %v205 = vsel %vm203, %v179, 0
  %v208 = vsel %vm203, %v180, 0
  %v211 = vsel %vm203, %v181, 0
  %v214 = vsel %vm203, %v182, 0
  %v217 = vsel %vm203, %v183, 0
  %v220 = vsel %vm203, %v184, 0
  %v223 = vsel %vm203, %v185, 0
  %v226 = vsel %vm203, %v186, 0
  %v229 = vsel %vm203, %v187, 0
  %v232 = vsel %vm203, %v188, 0
  %v235 = vsel %vm203, %v189, 0
  %v238 = vsel %vm203, %v190, 0
  %v241 = vsel %vm203, %v191, 0
  %v244 = vsel %vm203, %v192, 0
  %v247 = vsel %vm203, %v193, 0
  %v250 = vsel %vm203, %v194, 0
  %v253 = vsel %vm203, %v195, 0
  %v256 = vsel %vm203, %v196, 0
  %v259 = vsel %vm203, %v197, 0
  %v262 = vsel %vm203, %v198, 0
  %v265 = vsel %vm203, %v199, 0
  %v268 = vsel %vm203, %v200, 0
  %v271 = vsel %vm203, %v201, 0
  %v274 = vsel %vm203, %v202, 0
  %vm276 = vcmask 1041408
  %v278 = vsel %vm276, %v75, 0
  %280 = vmatprep.subr.bf16.mxu0 0
  %281 = vmatpush1.bf16.msra.mxu0 %v278
  %282 = vmatprep.subr.bf16.mxu0 0
  %283 = vmatpush1.bf16.msra.mxu0 0
  %284 = vmatprep.subr.bf16.mxu0 0
  %285 = vmatpush1.bf16.msra.mxu0 0
  %286 = vmatprep.subr.bf16.mxu0 0
  %287 = vmatpush1.bf16.msra.mxu0 0
  %288 = vmatprep.subr.bf16.mxu0 0
  %289 = vmatpush1.bf16.msra.mxu0 0
  %290 = vmatprep.subr.bf16.mxu0 0
  %291 = vmatpush1.bf16.msra.mxu0 0
  %292 = vmatprep.subr.bf16.mxu0 0
  %293 = vmatpush1.bf16.msra.mxu0 0
  %294 = vmatprep.subr.bf16.mxu0 0
  %295 = vmatpush1.bf16.msra.mxu0 0
  %296 = vmatprep.subr.bf16.mxu0 0
  %297 = vmatpush1.bf16.msra.mxu0 0
  %298 = vmatprep.subr.bf16.mxu0 0
  %299 = vmatpush1.bf16.msra.mxu0 0
  %300 = vmatprep.subr.bf16.mxu0 0
  %301 = vmatpush1.bf16.msra.mxu0 0
  %302 = vmatprep.subr.bf16.mxu0 0
  %303 = vmatpush1.bf16.msra.mxu0 0
  %304 = vmatprep.subr.bf16.mxu0 0
  %305 = vmatpush1.bf16.msra.mxu0 0
  %306 = vmatprep.subr.bf16.mxu0 0
  %307 = vmatpush1.bf16.msra.mxu0 0
  %308 = vmatprep.subr.bf16.mxu0 0
  %309 = vmatpush1.bf16.msra.mxu0 0
  %310 = vmatprep.subr.bf16.mxu0 0
  %311 = vmatpush1.bf16.msra.mxu0 0
  %312 = vmatprep.mubr.bf16.mxu0 0
  %313 = vmatmul.mubr.bf16.gmra.mrb[0].mxu0 %v205
  %v314 = vpop.f32.mrb[0].mxu0
  %v315 = vadd.f32 %v81, %v314
  %v316 = vpop.f32.mrb[0].mxu0
  %v317 = vpop.f32.mrb[0].mxu0
  %v318 = vadd.f32 %v81, %v317
  %v319 = vpop.f32.mrb[0].mxu0
  %320 = vmatprep.mubr.bf16.mxu0 0
  %321 = vmatmul.mubr.bf16.gmra.mrb[0].mxu0 %v208
  %v322 = vpop.f32.mrb[0].mxu0
  %v323 = vadd.f32 %v81, %v322
  %v324 = vpop.f32.mrb[0].mxu0
  %v325 = vpop.f32.mrb[0].mxu0
  %v326 = vadd.f32 %v81, %v325
  %v327 = vpop.f32.mrb[0].mxu0
  %328 = vmatprep.mubr.bf16.mxu0 0
  %329 = vmatmul.mubr.bf16.gmra.mrb[0].mxu0 %v211
  %v330 = vpop.f32.mrb[0].mxu0
  %v331 = vadd.f32 %v81, %v330
  %v332 = vpop.f32.mrb[0].mxu0
  %v333 = vpop.f32.mrb[0].mxu0
  %v334 = vadd.f32 %v81, %v333
  %v335 = vpop.f32.mrb[0].mxu0
  %336 = vmatprep.mubr.bf16.mxu0 0
  %337 = vmatmul.mubr.bf16.gmra.mrb[0].mxu0 %v214
  %v338 = vpop.f32.mrb[0].mxu0
  %v339 = vadd.f32 %v81, %v338
  %v340 = vpop.f32.mrb[0].mxu0
  %v341 = vpop.f32.mrb[0].mxu0
  %v342 = vadd.f32 %v81, %v341
  %v343 = vpop.f32.mrb[0].mxu0
  %344 = vmatprep.mubr.bf16.mxu0 0
  %345 = vmatmul.mubr.bf16.gmra.mrb[0].mxu0 %v217
  %v346 = vpop.f32.mrb[0].mxu0
  %v347 = vadd.f32 %v81, %v346
  %v348 = vpop.f32.mrb[0].mxu0
  %v349 = vpop.f32.mrb[0].mxu0
  %v350 = vadd.f32 %v81, %v349
  %v351 = vpop.f32.mrb[0].mxu0
  %352 = vmatprep.mubr.bf16.mxu0 0
  %353 = vmatmul.mubr.bf16.gmra.mrb[0].mxu0 %v220
  %v354 = vpop.f32.mrb[0].mxu0
  %v355 = vadd.f32 %v81, %v354
  %v356 = vpop.f32.mrb[0].mxu0
  %v357 = vpop.f32.mrb[0].mxu0
  %v358 = vadd.f32 %v81, %v357
  %v359 = vpop.f32.mrb[0].mxu0
  %360 = vmatprep.mubr.bf16.mxu0 0
  %361 = vmatmul.mubr.bf16.gmra.mrb[0].mxu0 %v223
  %v362 = vpop.f32.mrb[0].mxu0
  %v363 = vadd.f32 %v81, %v362
  %v364 = vpop.f32.mrb[0].mxu0
  %v365 = vpop.f32.mrb[0].mxu0
  %v366 = vadd.f32 %v81, %v365
  %v367 = vpop.f32.mrb[0].mxu0
  %368 = vmatprep.mubr.bf16.mxu0 0
  %369 = vmatmul.mubr.bf16.gmra.mrb[0].mxu0 %v226
  %v370 = vpop.f32.mrb[0].mxu0
  %v371 = vadd.f32 %v81, %v370
  %v372 = vpop.f32.mrb[0].mxu0
  %v373 = vpop.f32.mrb[0].mxu0
  %v374 = vadd.f32 %v81, %v373
  %v375 = vpop.f32.mrb[0].mxu0
  %376 = vmatprep.mubr.bf16.mxu0 0
  %377 = vmatmul.mubr.bf16.gmra.mrb[0].mxu0 %v229
  %v378 = vpop.f32.mrb[0].mxu0
  %v379 = vadd.f32 %v81, %v378
  %v380 = vpop.f32.mrb[0].mxu0
  %v381 = vpop.f32.mrb[0].mxu0
  %v382 = vadd.f32 %v81, %v381
  %v383 = vpop.f32.mrb[0].mxu0
  %384 = vmatprep.mubr.bf16.mxu0 0
  %385 = vmatmul.mubr.bf16.gmra.mrb[0].mxu0 %v232
  %v386 = vpop.f32.mrb[0].mxu0
  %v387 = vadd.f32 %v81, %v386
  %v388 = vpop.f32.mrb[0].mxu0
  %v389 = vpop.f32.mrb[0].mxu0
  %v390 = vadd.f32 %v81, %v389
  %v391 = vpop.f32.mrb[0].mxu0
  %392 = vmatprep.mubr.bf16.mxu0 0
  %393 = vmatmul.mubr.bf16.gmra.mrb[0].mxu0 %v235
  %v394 = vpop.f32.mrb[0].mxu0
  %v395 = vadd.f32 %v81, %v394
  %v396 = vpop.f32.mrb[0].mxu0
  %v397 = vpop.f32.mrb[0].mxu0
  %v398 = vadd.f32 %v81, %v397
  %v399 = vpop.f32.mrb[0].mxu0
  %400 = vmatprep.mubr.bf16.mxu0 0
  %401 = vmatmul.mubr.bf16.gmra.mrb[0].mxu0 %v238
  %v402 = vpop.f32.mrb[0].mxu0
  %v403 = vadd.f32 %v81, %v402
  %v404 = vpop.f32.mrb[0].mxu0
  %v405 = vpop.f32.mrb[0].mxu0
  %v406 = vadd.f32 %v81, %v405
  %v407 = vpop.f32.mrb[0].mxu0
  %408 = vmatprep.mubr.bf16.mxu0 0
  %409 = vmatmul.mubr.bf16.gmra.mrb[0].mxu0 %v241
  %v410 = vpop.f32.mrb[0].mxu0
  %v411 = vadd.f32 %v81, %v410
  %v412 = vpop.f32.mrb[0].mxu0
  %v413 = vpop.f32.mrb[0].mxu0
  %v414 = vadd.f32 %v81, %v413
  %v415 = vpop.f32.mrb[0].mxu0
  %416 = vmatprep.mubr.bf16.mxu0 0
  %417 = vmatmul.mubr.bf16.gmra.mrb[0].mxu0 %v244
  %v418 = vpop.f32.mrb[0].mxu0
  %v419 = vadd.f32 %v81, %v418
  %v420 = vpop.f32.mrb[0].mxu0
  %v421 = vpop.f32.mrb[0].mxu0
  %v422 = vadd.f32 %v81, %v421
  %v423 = vpop.f32.mrb[0].mxu0
  %424 = vmatprep.mubr.bf16.mxu0 0
  %425 = vmatmul.mubr.bf16.gmra.mrb[0].mxu0 %v247
  %v426 = vpop.f32.mrb[0].mxu0
  %v427 = vadd.f32 %v81, %v426
  %v428 = vpop.f32.mrb[0].mxu0
  %v429 = vpop.f32.mrb[0].mxu0
  %v430 = vadd.f32 %v81, %v429
  %v431 = vpop.f32.mrb[0].mxu0
  %432 = vmatprep.mubr.bf16.mxu0 0
  %433 = vmatmul.mubr.bf16.gmra.mrb[0].mxu0 %v250
  %v434 = vpop.f32.mrb[0].mxu0
  %v435 = vadd.f32 %v81, %v434
  %v436 = vpop.f32.mrb[0].mxu0
  %v437 = vpop.f32.mrb[0].mxu0
  %v438 = vadd.f32 %v81, %v437
  %v439 = vpop.f32.mrb[0].mxu0
  %440 = vmatprep.mubr.bf16.mxu0 0
  %441 = vmatmul.mubr.bf16.gmra.mrb[0].mxu0 %v253
  %v442 = vpop.f32.mrb[0].mxu0
  %v443 = vadd.f32 %v81, %v442
  %v444 = vpop.f32.mrb[0].mxu0
  %v445 = vpop.f32.mrb[0].mxu0
  %v446 = vadd.f32 %v81, %v445
  %v447 = vpop.f32.mrb[0].mxu0
  %448 = vmatprep.mubr.bf16.mxu0 0
  %449 = vmatmul.mubr.bf16.gmra.mrb[0].mxu0 %v256
  %v450 = vpop.f32.mrb[0].mxu0
  %v451 = vadd.f32 %v81, %v450
  %v452 = vpop.f32.mrb[0].mxu0
  %v453 = vpop.f32.mrb[0].mxu0
  %v454 = vadd.f32 %v81, %v453
  %v455 = vpop.f32.mrb[0].mxu0
  %456 = vmatprep.mubr.bf16.mxu0 0
  %457 = vmatmul.mubr.bf16.gmra.mrb[0].mxu0 %v259
  %v458 = vpop.f32.mrb[0].mxu0
  %v459 = vadd.f32 %v81, %v458
  %v460 = vpop.f32.mrb[0].mxu0
  %v461 = vpop.f32.mrb[0].mxu0
  %v462 = vadd.f32 %v81, %v461
  %v463 = vpop.f32.mrb[0].mxu0
  %464 = vmatprep.mubr.bf16.mxu0 0
  %465 = vmatmul.mubr.bf16.gmra.mrb[0].mxu0 %v262
  %v466 = vpop.f32.mrb[0].mxu0
  %v467 = vadd.f32 %v81, %v466
  %v468 = vpop.f32.mrb[0].mxu0
  %v469 = vpop.f32.mrb[0].mxu0
  %v470 = vadd.f32 %v81, %v469
  %v471 = vpop.f32.mrb[0].mxu0
  %472 = vmatprep.mubr.bf16.mxu0 0
  %473 = vmatmul.mubr.bf16.gmra.mrb[0].mxu0 %v265
  %v474 = vpop.f32.mrb[0].mxu0
  %v475 = vadd.f32 %v81, %v474
  %v476 = vpop.f32.mrb[0].mxu0
  %v477 = vpop.f32.mrb[0].mxu0
  %v478 = vadd.f32 %v81, %v477
  %v479 = vpop.f32.mrb[0].mxu0
  %480 = vmatprep.mubr.bf16.mxu0 0
  %481 = vmatmul.mubr.bf16.gmra.mrb[0].mxu0 %v268
  %v482 = vpop.f32.mrb[0].mxu0
  %v483 = vadd.f32 %v81, %v482
  %v484 = vpop.f32.mrb[0].mxu0
  %v485 = vpop.f32.mrb[0].mxu0
  %v486 = vadd.f32 %v81, %v485
  %v487 = vpop.f32.mrb[0].mxu0
  %488 = vmatprep.mubr.bf16.mxu0 0
  %489 = vmatmul.mubr.bf16.gmra.mrb[0].mxu0 %v271
  %v490 = vpop.f32.mrb[0].mxu0
  %v491 = vadd.f32 %v81, %v490
  %v492 = vpop.f32.mrb[0].mxu0
  %v493 = vpop.f32.mrb[0].mxu0
  %v494 = vadd.f32 %v81, %v493
  %v495 = vpop.f32.mrb[0].mxu0
  %496 = vmatprep.mubr.bf16.mxu0 0
  %497 = vmatmul.mubr.bf16.gmra.mrb[0].mxu0 %v274
  %v498 = vpop.f32.mrb[0].mxu0
  %v499 = vadd.f32 %v81, %v498
  %v500 = vpop.f32.mrb[0].mxu0
  %v501 = vpop.f32.mrb[0].mxu0
  %v502 = vadd.f32 %v81, %v501
  %v503 = vpop.f32.mrb[0].mxu0
  %504 = vdwg.mxu0
  %vm505 = vcmp.gt.f32.partialorder %v315, 0.0
  %vm506 = vcmp.gt.f32.partialorder %v318, 0.0
  %vm507 = vcmp.gt.f32.partialorder %v323, 0.0
  %vm508 = vcmp.gt.f32.partialorder %v326, 0.0
  %vm509 = vcmp.gt.f32.partialorder %v331, 0.0
  %vm510 = vcmp.gt.f32.partialorder %v334, 0.0
  %vm511 = vcmp.gt.f32.partialorder %v339, 0.0
  %vm512 = vcmp.gt.f32.partialorder %v342, 0.0
  %vm513 = vcmp.gt.f32.partialorder %v347, 0.0
  %vm514 = vcmp.gt.f32.partialorder %v350, 0.0
  %vm515 = vcmp.gt.f32.partialorder %v355, 0.0
  %vm516 = vcmp.gt.f32.partialorder %v358, 0.0
  %vm517 = vcmp.gt.f32.partialorder %v363, 0.0
  %vm518 = vcmp.gt.f32.partialorder %v366, 0.0
  %vm519 = vcmp.gt.f32.partialorder %v371, 0.0
  %vm520 = vcmp.gt.f32.partialorder %v374, 0.0
  %vm521 = vcmp.gt.f32.partialorder %v379, 0.0
  %vm522 = vcmp.gt.f32.partialorder %v382, 0.0
  %vm523 = vcmp.gt.f32.partialorder %v387, 0.0
  %vm524 = vcmp.gt.f32.partialorder %v390, 0.0
  %vm525 = vcmp.gt.f32.partialorder %v395, 0.0
  %vm526 = vcmp.gt.f32.partialorder %v398, 0.0
  %vm527 = vcmp.gt.f32.partialorder %v403, 0.0
  %vm528 = vcmp.gt.f32.partialorder %v406, 0.0
  %vm529 = vcmp.gt.f32.partialorder %v411, 0.0
  %vm530 = vcmp.gt.f32.partialorder %v414, 0.0
  %vm531 = vcmp.gt.f32.partialorder %v419, 0.0
  %vm532 = vcmp.gt.f32.partialorder %v422, 0.0
  %vm533 = vcmp.gt.f32.partialorder %v427, 0.0
  %vm534 = vcmp.gt.f32.partialorder %v430, 0.0
  %vm535 = vcmp.gt.f32.partialorder %v435, 0.0
  %vm536 = vcmp.gt.f32.partialorder %v438, 0.0
  %vm537 = vcmp.gt.f32.partialorder %v443, 0.0
  %vm538 = vcmp.gt.f32.partialorder %v446, 0.0
  %vm539 = vcmp.gt.f32.partialorder %v451, 0.0
  %vm540 = vcmp.gt.f32.partialorder %v454, 0.0
  %vm541 = vcmp.gt.f32.partialorder %v459, 0.0
  %vm542 = vcmp.gt.f32.partialorder %v462, 0.0
  %vm543 = vcmp.gt.f32.partialorder %v467, 0.0
  %vm544 = vcmp.gt.f32.partialorder %v470, 0.0
  %vm545 = vcmp.gt.f32.partialorder %v475, 0.0
  %vm546 = vcmp.gt.f32.partialorder %v478, 0.0
  %vm547 = vcmp.gt.f32.partialorder %v483, 0.0
  %vm548 = vcmp.gt.f32.partialorder %v486, 0.0
  %vm549 = vcmp.gt.f32.partialorder %v491, 0.0
  %vm550 = vcmp.gt.f32.partialorder %v494, 0.0
  %vm551 = vcmp.gt.f32.partialorder %v499, 0.0
  %vm552 = vcmp.gt.f32.partialorder %v502, 0.0
  %v553 = vmul.f32 %v315, 0.1
  %v554 = vmul.f32 %v318, 0.1
  %v555 = vmul.f32 %v323, 0.1
  %v556 = vmul.f32 %v326, 0.1
  %v557 = vmul.f32 %v331, 0.1
  %v558 = vmul.f32 %v334, 0.1
  %v559 = vmul.f32 %v339, 0.1
  %v560 = vmul.f32 %v342, 0.1
  %v561 = vmul.f32 %v347, 0.1
  %v562 = vmul.f32 %v350, 0.1
  %v563 = vmul.f32 %v355, 0.1
  %v564 = vmul.f32 %v358, 0.1
  %v565 = vmul.f32 %v363, 0.1
  %v566 = vmul.f32 %v366, 0.1
  %v567 = vmul.f32 %v371, 0.1
  %v568 = vmul.f32 %v374, 0.1
  %v569 = vmul.f32 %v379, 0.1
  %v570 = vmul.f32 %v382, 0.1
  %v571 = vmul.f32 %v387, 0.1
  %v572 = vmul.f32 %v390, 0.1
  %v573 = vmul.f32 %v395, 0.1
  %v574 = vmul.f32 %v398, 0.1
  %v575 = vmul.f32 %v403, 0.1
  %v576 = vmul.f32 %v406, 0.1
  %v577 = vmul.f32 %v411, 0.1
  %v578 = vmul.f32 %v414, 0.1
  %v579 = vmul.f32 %v419, 0.1
  %v580 = vmul.f32 %v422, 0.1
  %v581 = vmul.f32 %v427, 0.1
  %v582 = vmul.f32 %v430, 0.1
  %v583 = vmul.f32 %v435, 0.1
  %v584 = vmul.f32 %v438, 0.1
  %v585 = vmul.f32 %v443, 0.1
  %v586 = vmul.f32 %v446, 0.1
  %v587 = vmul.f32 %v451, 0.1
  %v588 = vmul.f32 %v454, 0.1
  %v589 = vmul.f32 %v459, 0.1
  %v590 = vmul.f32 %v462, 0.1
  %v591 = vmul.f32 %v467, 0.1
  %v592 = vmul.f32 %v470, 0.1
  %v593 = vmul.f32 %v475, 0.1
  %v594 = vmul.f32 %v478, 0.1
  %v595 = vmul.f32 %v483, 0.1
  %v596 = vmul.f32 %v486, 0.1
  %v597 = vmul.f32 %v491, 0.1
  %v598 = vmul.f32 %v494, 0.1
  %v599 = vmul.f32 %v499, 0.1
  %v600 = vmul.f32 %v502, 0.1
  %v601 = vsel %vm505, %v315, %v553
  %v602 = vsel %vm506, %v318, %v554
  %v603 = vsel %vm507, %v323, %v555
  %v604 = vsel %vm508, %v326, %v556
  %v605 = vsel %vm509, %v331, %v557
  %v606 = vsel %vm510, %v334, %v558
  %v607 = vsel %vm511, %v339, %v559
  %v608 = vsel %vm512, %v342, %v560
  %v609 = vsel %vm513, %v347, %v561
  %v610 = vsel %vm514, %v350, %v562
  %v611 = vsel %vm515, %v355, %v563
  %v612 = vsel %vm516, %v358, %v564
  %v613 = vsel %vm517, %v363, %v565
  %v614 = vsel %vm518, %v366, %v566
  %v615 = vsel %vm519, %v371, %v567
  %v616 = vsel %vm520, %v374, %v568
  %v617 = vsel %vm521, %v379, %v569
  %v618 = vsel %vm522, %v382, %v570
  %v619 = vsel %vm523, %v387, %v571
  %v620 = vsel %vm524, %v390, %v572
  %v621 = vsel %vm525, %v395, %v573
  %v622 = vsel %vm526, %v398, %v574
  %v623 = vsel %vm527, %v403, %v575
  %v624 = vsel %vm528, %v406, %v576
  %v625 = vsel %vm529, %v411, %v577
  %v626 = vsel %vm530, %v414, %v578
  %v627 = vsel %vm531, %v419, %v579
  %v628 = vsel %vm532, %v422, %v580
  %v629 = vsel %vm533, %v427, %v581
  %v630 = vsel %vm534, %v430, %v582
  %v631 = vsel %vm535, %v435, %v583
  %v632 = vsel %vm536, %v438, %v584
  %v633 = vsel %vm537, %v443, %v585
  %v634 = vsel %vm538, %v446, %v586
  %v635 = vsel %vm539, %v451, %v587
  %v636 = vsel %vm540, %v454, %v588
  %v637 = vsel %vm541, %v459, %v589
  %v638 = vsel %vm542, %v462, %v590
  %v639 = vsel %vm543, %v467, %v591
  %v640 = vsel %vm544, %v470, %v592
  %v641 = vsel %vm545, %v475, %v593
  %v642 = vsel %vm546, %v478, %v594
  %v643 = vsel %vm547, %v483, %v595
  %v644 = vsel %vm548, %v486, %v596
  %v645 = vsel %vm549, %v491, %v597
  %v646 = vsel %vm550, %v494, %v598
  %v647 = vsel %vm551, %v499, %v599
  %v648 = vsel %vm552, %v502, %v600
  %v649 = vpack.c.bf16 %v602, %v601
  %v650 = vpack.c.bf16 %v604, %v603
  %v651 = vpack.c.bf16 %v606, %v605
  %v652 = vpack.c.bf16 %v608, %v607
  %v653 = vpack.c.bf16 %v610, %v609
  %v654 = vpack.c.bf16 %v612, %v611
  %v655 = vpack.c.bf16 %v614, %v613
  %v656 = vpack.c.bf16 %v616, %v615
  %v657 = vpack.c.bf16 %v618, %v617
  %v658 = vpack.c.bf16 %v620, %v619
  %v659 = vpack.c.bf16 %v622, %v621
  %v660 = vpack.c.bf16 %v624, %v623
  %v661 = vpack.c.bf16 %v626, %v625
  %v662 = vpack.c.bf16 %v628, %v627
  %v663 = vpack.c.bf16 %v630, %v629
  %v664 = vpack.c.bf16 %v632, %v631
  %v665 = vpack.c.bf16 %v634, %v633
  %v666 = vpack.c.bf16 %v636, %v635
  %v667 = vpack.c.bf16 %v638, %v637
  %v668 = vpack.c.bf16 %v640, %v639
  %v669 = vpack.c.bf16 %v642, %v641
  %v670 = vpack.c.bf16 %v644, %v643
  %v671 = vpack.c.bf16 %v646, %v645
  %v672 = vpack.c.bf16 %v648, %v647
  %v673 = vld [vmem:[%s3] sm:$0xf]
  %v674 = vld [vmem:[%s3 + $0x4] sm:$0xf]
  %v675 = vld [vmem:[%s3 + $0x8] sm:$0xf]
  %v676 = vld [vmem:[%s3 + $0xc] sm:$0xf]
  %v677 = vld [vmem:[%s4] sm:$0x1]
  %v679 = vlaneseq
  %v680 = vshrl.u32 %v679, 7
  %v681 = vsub.s32 0, %v680
  %v682 = vrot.slane %v677, %v681
  %v688 = vunpack.c.l.b16 %v673
  %v689 = vunpack.c.l.b16 %v674
  %v690 = vunpack.c.l.b16 %v675
  %v691 = vunpack.c.l.b16 %v676
  %v692 = vpack.c.b16 %v689, %v688
  %v693 = vpack.c.b16 %v691, %v690
  %vm696 = vcmask 261120
  %v698 = vsel %vm696, %v649, 0
  %v701 = vsel %vm696, %v650, 0
  %v704 = vsel %vm696, %v651, 0
  %v707 = vsel %vm696, %v652, 0
  %v710 = vsel %vm696, %v653, 0
  %v713 = vsel %vm696, %v654, 0
  %v716 = vsel %vm696, %v655, 0
  %v719 = vsel %vm696, %v656, 0
  %v722 = vsel %vm696, %v657, 0
  %v725 = vsel %vm696, %v658, 0
  %v728 = vsel %vm696, %v659, 0
  %v731 = vsel %vm696, %v660, 0
  %v734 = vsel %vm696, %v661, 0
  %v737 = vsel %vm696, %v662, 0
  %v740 = vsel %vm696, %v663, 0
  %v743 = vsel %vm696, %v664, 0
  %v746 = vsel %vm696, %v665, 0
  %v749 = vsel %vm696, %v666, 0
  %v752 = vsel %vm696, %v667, 0
  %v755 = vsel %vm696, %v668, 0
  %v758 = vsel %vm696, %v669, 0
  %v761 = vsel %vm696, %v670, 0
  %v764 = vsel %vm696, %v671, 0
  %v767 = vsel %vm696, %v672, 0
  %769 = vmatprep.subr.bf16.mxu0 0
  %770 = vmatpush1.bf16.msra.mxu0 %v692
  %771 = vmatprep.subr.bf16.mxu0 0
  %772 = vmatpush1.bf16.msra.mxu0 %v693
  %773 = vmatprep.subr.bf16.mxu0 0
  %774 = vmatpush1.bf16.msra.mxu0 0
  %775 = vmatprep.subr.bf16.mxu0 0
  %776 = vmatpush1.bf16.msra.mxu0 0
  %777 = vmatprep.subr.bf16.mxu0 0
  %778 = vmatpush1.bf16.msra.mxu0 0
  %779 = vmatprep.subr.bf16.mxu0 0
  %780 = vmatpush1.bf16.msra.mxu0 0
  %781 = vmatprep.subr.bf16.mxu0 0
  %782 = vmatpush1.bf16.msra.mxu0 0
  %783 = vmatprep.subr.bf16.mxu0 0
  %784 = vmatpush1.bf16.msra.mxu0 0
  %785 = vmatprep.subr.bf16.mxu0 0
  %786 = vmatpush1.bf16.msra.mxu0 0
  %787 = vmatprep.subr.bf16.mxu0 0
  %788 = vmatpush1.bf16.msra.mxu0 0
  %789 = vmatprep.subr.bf16.mxu0 0
  %790 = vmatpush1.bf16.msra.mxu0 0
  %791 = vmatprep.subr.bf16.mxu0 0
  %792 = vmatpush1.bf16.msra.mxu0 0
  %793 = vmatprep.subr.bf16.mxu0 0
  %794 = vmatpush1.bf16.msra.mxu0 0
  %795 = vmatprep.subr.bf16.mxu0 0
  %796 = vmatpush1.bf16.msra.mxu0 0
  %797 = vmatprep.subr.bf16.mxu0 0
  %798 = vmatpush1.bf16.msra.mxu0 0
  %799 = vmatprep.subr.bf16.mxu0 0
  %800 = vmatpush1.bf16.msra.mxu0 0
  %801 = vmatprep.mubr.bf16.mxu0 0
  %802 = vmatmul.mubr.bf16.gmra.mrb[0].mxu0 %v698
  %v803 = vpop.f32.mrb[0].mxu0
  %v804 = vadd.f32 %v682, %v803
  %v805 = vpop.f32.mrb[0].mxu0
  %v806 = vpop.f32.mrb[0].mxu0
  %v807 = vadd.f32 %v682, %v806
  %v808 = vpop.f32.mrb[0].mxu0
  %809 = vmatprep.mubr.bf16.mxu0 0
  %810 = vmatmul.mubr.bf16.gmra.mrb[0].mxu0 %v701
  %v811 = vpop.f32.mrb[0].mxu0
  %v812 = vadd.f32 %v682, %v811
  %v813 = vpop.f32.mrb[0].mxu0
  %v814 = vpop.f32.mrb[0].mxu0
  %v815 = vadd.f32 %v682, %v814
  %v816 = vpop.f32.mrb[0].mxu0
  %817 = vmatprep.mubr.bf16.mxu0 0
  %818 = vmatmul.mubr.bf16.gmra.mrb[0].mxu0 %v704
  %v819 = vpop.f32.mrb[0].mxu0
  %v820 = vadd.f32 %v682, %v819
  %v821 = vpop.f32.mrb[0].mxu0
  %v822 = vpop.f32.mrb[0].mxu0
  %v823 = vadd.f32 %v682, %v822
  %v824 = vpop.f32.mrb[0].mxu0
  %825 = vmatprep.mubr.bf16.mxu0 0
  %826 = vmatmul.mubr.bf16.gmra.mrb[0].mxu0 %v707
  %v827 = vpop.f32.mrb[0].mxu0
  %v828 = vadd.f32 %v682, %v827
  %v829 = vpop.f32.mrb[0].mxu0
  %v830 = vpop.f32.mrb[0].mxu0
  %v831 = vadd.f32 %v682, %v830
  %v832 = vpop.f32.mrb[0].mxu0
  %833 = vmatprep.mubr.bf16.mxu0 0
  %834 = vmatmul.mubr.bf16.gmra.mrb[0].mxu0 %v710
  %v835 = vpop.f32.mrb[0].mxu0
  %v836 = vadd.f32 %v682, %v835
  %v837 = vpop.f32.mrb[0].mxu0
  %v838 = vpop.f32.mrb[0].mxu0
  %v839 = vadd.f32 %v682, %v838
  %v840 = vpop.f32.mrb[0].mxu0
  %841 = vmatprep.mubr.bf16.mxu0 0
  %842 = vmatmul.mubr.bf16.gmra.mrb[0].mxu0 %v713
  %v843 = vpop.f32.mrb[0].mxu0
  %v844 = vadd.f32 %v682, %v843
  %v845 = vpop.f32.mrb[0].mxu0
  %v846 = vpop.f32.mrb[0].mxu0
  %v847 = vadd.f32 %v682, %v846
  %v848 = vpop.f32.mrb[0].mxu0
  %849 = vmatprep.mubr.bf16.mxu0 0
  %850 = vmatmul.mubr.bf16.gmra.mrb[0].mxu0 %v716
  %v851 = vpop.f32.mrb[0].mxu0
  %v852 = vadd.f32 %v682, %v851
  %v853 = vpop.f32.mrb[0].mxu0
  %v854 = vpop.f32.mrb[0].mxu0
  %v855 = vadd.f32 %v682, %v854
  %v856 = vpop.f32.mrb[0].mxu0
  %857 = vmatprep.mubr.bf16.mxu0 0
  %858 = vmatmul.mubr.bf16.gmra.mrb[0].mxu0 %v719
  %v859 = vpop.f32.mrb[0].mxu0
  %v860 = vadd.f32 %v682, %v859
  %v861 = vpop.f32.mrb[0].mxu0
  %v862 = vpop.f32.mrb[0].mxu0
  %v863 = vadd.f32 %v682, %v862
  %v864 = vpop.f32.mrb[0].mxu0
  %865 = vmatprep.mubr.bf16.mxu0 0
  %866 = vmatmul.mubr.bf16.gmra.mrb[0].mxu0 %v722
  %v867 = vpop.f32.mrb[0].mxu0
  %v868 = vadd.f32 %v682, %v867
  %v869 = vpop.f32.mrb[0].mxu0
  %v870 = vpop.f32.mrb[0].mxu0
  %v871 = vadd.f32 %v682, %v870
  %v872 = vpop.f32.mrb[0].mxu0
  %873 = vmatprep.mubr.bf16.mxu0 0
  %874 = vmatmul.mubr.bf16.gmra.mrb[0].mxu0 %v725
  %v875 = vpop.f32.mrb[0].mxu0
  %v876 = vadd.f32 %v682, %v875
  %v877 = vpop.f32.mrb[0].mxu0
  %v878 = vpop.f32.mrb[0].mxu0
  %v879 = vadd.f32 %v682, %v878
  %v880 = vpop.f32.mrb[0].mxu0
  %881 = vmatprep.mubr.bf16.mxu0 0
  %882 = vmatmul.mubr.bf16.gmra.mrb[0].mxu0 %v728
  %v883 = vpop.f32.mrb[0].mxu0
  %v884 = vadd.f32 %v682, %v883
  %v885 = vpop.f32.mrb[0].mxu0
  %v886 = vpop.f32.mrb[0].mxu0
  %v887 = vadd.f32 %v682, %v886
  %v888 = vpop.f32.mrb[0].mxu0
  %889 = vmatprep.mubr.bf16.mxu0 0
  %890 = vmatmul.mubr.bf16.gmra.mrb[0].mxu0 %v731
  %v891 = vpop.f32.mrb[0].mxu0
  %v892 = vadd.f32 %v682, %v891
  %v893 = vpop.f32.mrb[0].mxu0
  %v894 = vpop.f32.mrb[0].mxu0
  %v895 = vadd.f32 %v682, %v894
  %v896 = vpop.f32.mrb[0].mxu0
  %897 = vmatprep.mubr.bf16.mxu0 0
  %898 = vmatmul.mubr.bf16.gmra.mrb[0].mxu0 %v734
  %v899 = vpop.f32.mrb[0].mxu0
  %v900 = vadd.f32 %v682, %v899
  %v901 = vpop.f32.mrb[0].mxu0
  %v902 = vpop.f32.mrb[0].mxu0
  %v903 = vadd.f32 %v682, %v902
  %v904 = vpop.f32.mrb[0].mxu0
  %905 = vmatprep.mubr.bf16.mxu0 0
  %906 = vmatmul.mubr.bf16.gmra.mrb[0].mxu0 %v737
  %v907 = vpop.f32.mrb[0].mxu0
  %v908 = vadd.f32 %v682, %v907
  %v909 = vpop.f32.mrb[0].mxu0
  %v910 = vpop.f32.mrb[0].mxu0
  %v911 = vadd.f32 %v682, %v910
  %v912 = vpop.f32.mrb[0].mxu0
  %913 = vmatprep.mubr.bf16.mxu0 0
  %914 = vmatmul.mubr.bf16.gmra.mrb[0].mxu0 %v740
  %v915 = vpop.f32.mrb[0].mxu0
  %v916 = vadd.f32 %v682, %v915
  %v917 = vpop.f32.mrb[0].mxu0
  %v918 = vpop.f32.mrb[0].mxu0
  %v919 = vadd.f32 %v682, %v918
  %v920 = vpop.f32.mrb[0].mxu0
  %921 = vmatprep.mubr.bf16.mxu0 0
  %922 = vmatmul.mubr.bf16.gmra.mrb[0].mxu0 %v743
  %v923 = vpop.f32.mrb[0].mxu0
  %v924 = vadd.f32 %v682, %v923
  %v925 = vpop.f32.mrb[0].mxu0
  %v926 = vpop.f32.mrb[0].mxu0
  %v927 = vadd.f32 %v682, %v926
  %v928 = vpop.f32.mrb[0].mxu0
  %929 = vmatprep.mubr.bf16.mxu0 0
  %930 = vmatmul.mubr.bf16.gmra.mrb[0].mxu0 %v746
  %v931 = vpop.f32.mrb[0].mxu0
  %v932 = vadd.f32 %v682, %v931
  %v933 = vpop.f32.mrb[0].mxu0
  %v934 = vpop.f32.mrb[0].mxu0
  %v935 = vadd.f32 %v682, %v934
  %v936 = vpop.f32.mrb[0].mxu0
  %937 = vmatprep.mubr.bf16.mxu0 0
  %938 = vmatmul.mubr.bf16.gmra.mrb[0].mxu0 %v749
  %v939 = vpop.f32.mrb[0].mxu0
  %v940 = vadd.f32 %v682, %v939
  %v941 = vpop.f32.mrb[0].mxu0
  %v942 = vpop.f32.mrb[0].mxu0
  %v943 = vadd.f32 %v682, %v942
  %v944 = vpop.f32.mrb[0].mxu0
  %945 = vmatprep.mubr.bf16.mxu0 0
  %946 = vmatmul.mubr.bf16.gmra.mrb[0].mxu0 %v752
  %v947 = vpop.f32.mrb[0].mxu0
  %v948 = vadd.f32 %v682, %v947
  %v949 = vpop.f32.mrb[0].mxu0
  %v950 = vpop.f32.mrb[0].mxu0
  %v951 = vadd.f32 %v682, %v950
  %v952 = vpop.f32.mrb[0].mxu0
  %953 = vmatprep.mubr.bf16.mxu0 0
  %954 = vmatmul.mubr.bf16.gmra.mrb[0].mxu0 %v755
  %v955 = vpop.f32.mrb[0].mxu0
  %v956 = vadd.f32 %v682, %v955
  %v957 = vpop.f32.mrb[0].mxu0
  %v958 = vpop.f32.mrb[0].mxu0
  %v959 = vadd.f32 %v682, %v958
  %v960 = vpop.f32.mrb[0].mxu0
  %961 = vmatprep.mubr.bf16.mxu0 0
  %962 = vmatmul.mubr.bf16.gmra.mrb[0].mxu0 %v758
  %v963 = vpop.f32.mrb[0].mxu0
  %v964 = vadd.f32 %v682, %v963
  %v965 = vpop.f32.mrb[0].mxu0
  %v966 = vpop.f32.mrb[0].mxu0
  %v967 = vadd.f32 %v682, %v966
  %v968 = vpop.f32.mrb[0].mxu0
  %969 = vmatprep.mubr.bf16.mxu0 0
  %970 = vmatmul.mubr.bf16.gmra.mrb[0].mxu0 %v761
  %v971 = vpop.f32.mrb[0].mxu0
  %v972 = vadd.f32 %v682, %v971
  %v973 = vpop.f32.mrb[0].mxu0
  %v974 = vpop.f32.mrb[0].mxu0
  %v975 = vadd.f32 %v682, %v974
  %v976 = vpop.f32.mrb[0].mxu0
  %977 = vmatprep.mubr.bf16.mxu0 0
  %978 = vmatmul.mubr.bf16.gmra.mrb[0].mxu0 %v764
  %v979 = vpop.f32.mrb[0].mxu0
  %v980 = vadd.f32 %v682, %v979
  %v981 = vpop.f32.mrb[0].mxu0
  %v982 = vpop.f32.mrb[0].mxu0
  %v983 = vadd.f32 %v682, %v982
  %v984 = vpop.f32.mrb[0].mxu0
  %985 = vmatprep.mubr.bf16.mxu0 0
  %986 = vmatmul.mubr.bf16.gmra.mrb[0].mxu0 %v767
  %v987 = vpop.f32.mrb[0].mxu0
  %v988 = vadd.f32 %v682, %v987
  %v989 = vpop.f32.mrb[0].mxu0
  %v990 = vpop.f32.mrb[0].mxu0
  %v991 = vadd.f32 %v682, %v990
  %v992 = vpop.f32.mrb[0].mxu0
  %993 = vdwg.mxu0
  %vm994 = vcmp.gt.f32.partialorder %v804, 0.0
  %vm995 = vcmp.gt.f32.partialorder %v807, 0.0
  %vm996 = vcmp.gt.f32.partialorder %v812, 0.0
  %vm997 = vcmp.gt.f32.partialorder %v815, 0.0
  %vm998 = vcmp.gt.f32.partialorder %v820, 0.0
  %vm999 = vcmp.gt.f32.partialorder %v823, 0.0
  %vm1000 = vcmp.gt.f32.partialorder %v828, 0.0
  %vm1001 = vcmp.gt.f32.partialorder %v831, 0.0
  %vm1002 = vcmp.gt.f32.partialorder %v836, 0.0
  %vm1003 = vcmp.gt.f32.partialorder %v839, 0.0
  %vm1004 = vcmp.gt.f32.partialorder %v844, 0.0
  %vm1005 = vcmp.gt.f32.partialorder %v847, 0.0
  %vm1006 = vcmp.gt.f32.partialorder %v852, 0.0
  %vm1007 = vcmp.gt.f32.partialorder %v855, 0.0
  %vm1008 = vcmp.gt.f32.partialorder %v860, 0.0
  %vm1009 = vcmp.gt.f32.partialorder %v863, 0.0
  %vm1010 = vcmp.gt.f32.partialorder %v868, 0.0
  %vm1011 = vcmp.gt.f32.partialorder %v871, 0.0
  %vm1012 = vcmp.gt.f32.partialorder %v876, 0.0
  %vm1013 = vcmp.gt.f32.partialorder %v879, 0.0
  %vm1014 = vcmp.gt.f32.partialorder %v884, 0.0
  %vm1015 = vcmp.gt.f32.partialorder %v887, 0.0
  %vm1016 = vcmp.gt.f32.partialorder %v892, 0.0
  %vm1017 = vcmp.gt.f32.partialorder %v895, 0.0
  %vm1018 = vcmp.gt.f32.partialorder %v900, 0.0
  %vm1019 = vcmp.gt.f32.partialorder %v903, 0.0
  %vm1020 = vcmp.gt.f32.partialorder %v908, 0.0
  %vm1021 = vcmp.gt.f32.partialorder %v911, 0.0
  %vm1022 = vcmp.gt.f32.partialorder %v916, 0.0
  %vm1023 = vcmp.gt.f32.partialorder %v919, 0.0
  %vm1024 = vcmp.gt.f32.partialorder %v924, 0.0
  %vm1025 = vcmp.gt.f32.partialorder %v927, 0.0
  %vm1026 = vcmp.gt.f32.partialorder %v932, 0.0
  %vm1027 = vcmp.gt.f32.partialorder %v935, 0.0
  %vm1028 = vcmp.gt.f32.partialorder %v940, 0.0
  %vm1029 = vcmp.gt.f32.partialorder %v943, 0.0
  %vm1030 = vcmp.gt.f32.partialorder %v948, 0.0
  %vm1031 = vcmp.gt.f32.partialorder %v951, 0.0
  %vm1032 = vcmp.gt.f32.partialorder %v956, 0.0
  %vm1033 = vcmp.gt.f32.partialorder %v959, 0.0
  %vm1034 = vcmp.gt.f32.partialorder %v964, 0.0
  %vm1035 = vcmp.gt.f32.partialorder %v967, 0.0
  %vm1036 = vcmp.gt.f32.partialorder %v972, 0.0
  %vm1037 = vcmp.gt.f32.partialorder %v975, 0.0
  %vm1038 = vcmp.gt.f32.partialorder %v980, 0.0
  %vm1039 = vcmp.gt.f32.partialorder %v983, 0.0
  %vm1040 = vcmp.gt.f32.partialorder %v988, 0.0
  %vm1041 = vcmp.gt.f32.partialorder %v991, 0.0
  %v1042 = vmul.f32 %v804, 0.1
  %v1043 = vmul.f32 %v807, 0.1
  %v1044 = vmul.f32 %v812, 0.1
  %v1045 = vmul.f32 %v815, 0.1
  %v1046 = vmul.f32 %v820, 0.1
  %v1047 = vmul.f32 %v823, 0.1
  %v1048 = vmul.f32 %v828, 0.1
  %v1049 = vmul.f32 %v831, 0.1
  %v1050 = vmul.f32 %v836, 0.1
  %v1051 = vmul.f32 %v839, 0.1
  %v1052 = vmul.f32 %v844, 0.1
  %v1053 = vmul.f32 %v847, 0.1
  %v1054 = vmul.f32 %v852, 0.1
  %v1055 = vmul.f32 %v855, 0.1
  %v1056 = vmul.f32 %v860, 0.1
  %v1057 = vmul.f32 %v863, 0.1
  %v1058 = vmul.f32 %v868, 0.1
  %v1059 = vmul.f32 %v871, 0.1
  %v1060 = vmul.f32 %v876, 0.1
  %v1061 = vmul.f32 %v879, 0.1
  %v1062 = vmul.f32 %v884, 0.1
  %v1063 = vmul.f32 %v887, 0.1
  %v1064 = vmul.f32 %v892, 0.1
  %v1065 = vmul.f32 %v895, 0.1
  %v1066 = vmul.f32 %v900, 0.1
  %v1067 = vmul.f32 %v903, 0.1
  %v1068 = vmul.f32 %v908, 0.1
  %v1069 = vmul.f32 %v911, 0.1
  %v1070 = vmul.f32 %v916, 0.1
  %v1071 = vmul.f32 %v919, 0.1
  %v1072 = vmul.f32 %v924, 0.1
  %v1073 = vmul.f32 %v927, 0.1
  %v1074 = vmul.f32 %v932, 0.1
  %v1075 = vmul.f32 %v935, 0.1
  %v1076 = vmul.f32 %v940, 0.1
  %v1077 = vmul.f32 %v943, 0.1
  %v1078 = vmul.f32 %v948, 0.1
  %v1079 = vmul.f32 %v951, 0.1
  %v1080 = vmul.f32 %v956, 0.1
  %v1081 = vmul.f32 %v959, 0.1
  %v1082 = vmul.f32 %v964, 0.1
  %v1083 = vmul.f32 %v967, 0.1
  %v1084 = vmul.f32 %v972, 0.1
  %v1085 = vmul.f32 %v975, 0.1
  %v1086 = vmul.f32 %v980, 0.1
  %v1087 = vmul.f32 %v983, 0.1
  %v1088 = vmul.f32 %v988, 0.1
  %v1089 = vmul.f32 %v991, 0.1
  %v1090 = vsel %vm994, %v804, %v1042
  %v1091 = vsel %vm995, %v807, %v1043
  %v1092 = vsel %vm996, %v812, %v1044
  %v1093 = vsel %vm997, %v815, %v1045
  %v1094 = vsel %vm998, %v820, %v1046
  %v1095 = vsel %vm999, %v823, %v1047
  %v1096 = vsel %vm1000, %v828, %v1048
  %v1097 = vsel %vm1001, %v831, %v1049
  %v1098 = vsel %vm1002, %v836, %v1050
  %v1099 = vsel %vm1003, %v839, %v1051
  %v1100 = vsel %vm1004, %v844, %v1052
  %v1101 = vsel %vm1005, %v847, %v1053
  %v1102 = vsel %vm1006, %v852, %v1054
  %v1103 = vsel %vm1007, %v855, %v1055
  %v1104 = vsel %vm1008, %v860, %v1056
  %v1105 = vsel %vm1009, %v863, %v1057
  %v1106 = vsel %vm1010, %v868, %v1058
  %v1107 = vsel %vm1011, %v871, %v1059
  %v1108 = vsel %vm1012, %v876, %v1060
  %v1109 = vsel %vm1013, %v879, %v1061
  %v1110 = vsel %vm1014, %v884, %v1062
  %v1111 = vsel %vm1015, %v887, %v1063
  %v1112 = vsel %vm1016, %v892, %v1064
  %v1113 = vsel %vm1017, %v895, %v1065
  %v1114 = vsel %vm1018, %v900, %v1066
  %v1115 = vsel %vm1019, %v903, %v1067
  %v1116 = vsel %vm1020, %v908, %v1068
  %v1117 = vsel %vm1021, %v911, %v1069
  %v1118 = vsel %vm1022, %v916, %v1070
  %v1119 = vsel %vm1023, %v919, %v1071
  %v1120 = vsel %vm1024, %v924, %v1072
  %v1121 = vsel %vm1025, %v927, %v1073
  %v1122 = vsel %vm1026, %v932, %v1074
  %v1123 = vsel %vm1027, %v935, %v1075
  %v1124 = vsel %vm1028, %v940, %v1076
  %v1125 = vsel %vm1029, %v943, %v1077
  %v1126 = vsel %vm1030, %v948, %v1078
  %v1127 = vsel %vm1031, %v951, %v1079
  %v1128 = vsel %vm1032, %v956, %v1080
  %v1129 = vsel %vm1033, %v959, %v1081
  %v1130 = vsel %vm1034, %v964, %v1082
  %v1131 = vsel %vm1035, %v967, %v1083
  %v1132 = vsel %vm1036, %v972, %v1084
  %v1133 = vsel %vm1037, %v975, %v1085
  %v1134 = vsel %vm1038, %v980, %v1086
  %v1135 = vsel %vm1039, %v983, %v1087
  %v1136 = vsel %vm1040, %v988, %v1088
  %v1137 = vsel %vm1041, %v991, %v1089
  %v1138 = vpack.c.bf16 %v1091, %v1090
  %v1139 = vpack.c.bf16 %v1093, %v1092
  %v1140 = vpack.c.bf16 %v1095, %v1094
  %v1141 = vpack.c.bf16 %v1097, %v1096
  %v1142 = vpack.c.bf16 %v1099, %v1098
  %v1143 = vpack.c.bf16 %v1101, %v1100
  %v1144 = vpack.c.bf16 %v1103, %v1102
  %v1145 = vpack.c.bf16 %v1105, %v1104
  %v1146 = vpack.c.bf16 %v1107, %v1106
  %v1147 = vpack.c.bf16 %v1109, %v1108
  %v1148 = vpack.c.bf16 %v1111, %v1110
  %v1149 = vpack.c.bf16 %v1113, %v1112
  %v1150 = vpack.c.bf16 %v1115, %v1114
  %v1151 = vpack.c.bf16 %v1117, %v1116
  %v1152 = vpack.c.bf16 %v1119, %v1118
  %v1153 = vpack.c.bf16 %v1121, %v1120
  %v1154 = vpack.c.bf16 %v1123, %v1122
  %v1155 = vpack.c.bf16 %v1125, %v1124
  %v1156 = vpack.c.bf16 %v1127, %v1126
  %v1157 = vpack.c.bf16 %v1129, %v1128
  %v1158 = vpack.c.bf16 %v1131, %v1130
  %v1159 = vpack.c.bf16 %v1133, %v1132
  %v1160 = vpack.c.bf16 %v1135, %v1134
  %v1161 = vpack.c.bf16 %v1137, %v1136
  %v1162 = vld [vmem:[%s5] sm:$0xf]
  %v1163 = vld [vmem:[%s5 + $0x4] sm:$0xf]
  %v1164 = vld [vmem:[%s5 + $0x8] sm:$0xf]
  %v1165 = vld [vmem:[%s5 + $0xc] sm:$0xf]
  %v1166 = vld [vmem:[%s6] sm:$0x1]
  %v1168 = vlaneseq
  %v1169 = vshrl.u32 %v1168, 7
  %v1170 = vsub.s32 0, %v1169
  %v1171 = vrot.slane %v1166, %v1170
  %v1177 = vunpack.c.l.b16 %v1162
  %v1178 = vunpack.c.l.b16 %v1163
  %v1179 = vunpack.c.l.b16 %v1164
  %v1180 = vunpack.c.l.b16 %v1165
  %v1181 = vpack.c.b16 %v1178, %v1177
  %v1182 = vpack.c.b16 %v1180, %v1179
  %v1186 = vsel %vm696, %v1138, 0
  %v1189 = vsel %vm696, %v1139, 0
  %v1192 = vsel %vm696, %v1140, 0
  %v1195 = vsel %vm696, %v1141, 0
  %v1198 = vsel %vm696, %v1142, 0
  %v1201 = vsel %vm696, %v1143, 0
  %v1204 = vsel %vm696, %v1144, 0
  %v1207 = vsel %vm696, %v1145, 0
  %v1210 = vsel %vm696, %v1146, 0
  %v1213 = vsel %vm696, %v1147, 0
  %v1216 = vsel %vm696, %v1148, 0
  %v1219 = vsel %vm696, %v1149, 0
  %v1222 = vsel %vm696, %v1150, 0
  %v1225 = vsel %vm696, %v1151, 0
  %v1228 = vsel %vm696, %v1152, 0
  %v1231 = vsel %vm696, %v1153, 0
  %v1234 = vsel %vm696, %v1154, 0
  %v1237 = vsel %vm696, %v1155, 0
  %v1240 = vsel %vm696, %v1156, 0
  %v1243 = vsel %vm696, %v1157, 0
  %v1246 = vsel %vm696, %v1158, 0
  %v1249 = vsel %vm696, %v1159, 0
  %v1252 = vsel %vm696, %v1160, 0
  %v1255 = vsel %vm696, %v1161, 0
  %1257 = vmatprep.subr.bf16.mxu0 0
  %1258 = vmatpush1.bf16.msra.mxu0 %v1181
  %1259 = vmatprep.subr.bf16.mxu0 0
  %1260 = vmatpush1.bf16.msra.mxu0 %v1182
  %1261 = vmatprep.subr.bf16.mxu0 0
  %1262 = vmatpush1.bf16.msra.mxu0 0
  %1263 = vmatprep.subr.bf16.mxu0 0
  %1264 = vmatpush1.bf16.msra.mxu0 0
  %1265 = vmatprep.subr.bf16.mxu0 0
  %1266 = vmatpush1.bf16.msra.mxu0 0
  %1267 = vmatprep.subr.bf16.mxu0 0
  %1268 = vmatpush1.bf16.msra.mxu0 0
  %1269 = vmatprep.subr.bf16.mxu0 0
  %1270 = vmatpush1.bf16.msra.mxu0 0
  %1271 = vmatprep.subr.bf16.mxu0 0
  %1272 = vmatpush1.bf16.msra.mxu0 0
  %1273 = vmatprep.subr.bf16.mxu0 0
  %1274 = vmatpush1.bf16.msra.mxu0 0
  %1275 = vmatprep.subr.bf16.mxu0 0
  %1276 = vmatpush1.bf16.msra.mxu0 0
  %1277 = vmatprep.subr.bf16.mxu0 0
  %1278 = vmatpush1.bf16.msra.mxu0 0
  %1279 = vmatprep.subr.bf16.mxu0 0
  %1280 = vmatpush1.bf16.msra.mxu0 0
  %1281 = vmatprep.subr.bf16.mxu0 0
  %1282 = vmatpush1.bf16.msra.mxu0 0
  %1283 = vmatprep.subr.bf16.mxu0 0
  %1284 = vmatpush1.bf16.msra.mxu0 0
  %1285 = vmatprep.subr.bf16.mxu0 0
  %1286 = vmatpush1.bf16.msra.mxu0 0
  %1287 = vmatprep.subr.bf16.mxu0 0
  %1288 = vmatpush1.bf16.msra.mxu0 0
  %1289 = vmatprep.mubr.bf16.mxu0 0
  %1290 = vmatmul.mubr.bf16.gmra.mrb[0].mxu0 %v1186
  %v1291 = vpop.f32.mrb[0].mxu0
  %v1292 = vadd.f32 %v1171, %v1291
  %v1293 = vpop.f32.mrb[0].mxu0
  %v1294 = vpop.f32.mrb[0].mxu0
  %v1295 = vadd.f32 %v1171, %v1294
  %v1296 = vpop.f32.mrb[0].mxu0
  %1297 = vmatprep.mubr.bf16.mxu0 0
  %1298 = vmatmul.mubr.bf16.gmra.mrb[0].mxu0 %v1189
  %v1299 = vpop.f32.mrb[0].mxu0
  %v1300 = vadd.f32 %v1171, %v1299
  %v1301 = vpop.f32.mrb[0].mxu0
  %v1302 = vpop.f32.mrb[0].mxu0
  %v1303 = vadd.f32 %v1171, %v1302
  %v1304 = vpop.f32.mrb[0].mxu0
  %1305 = vmatprep.mubr.bf16.mxu0 0
  %1306 = vmatmul.mubr.bf16.gmra.mrb[0].mxu0 %v1192
  %v1307 = vpop.f32.mrb[0].mxu0
  %v1308 = vadd.f32 %v1171, %v1307
  %v1309 = vpop.f32.mrb[0].mxu0
  %v1310 = vpop.f32.mrb[0].mxu0
  %v1311 = vadd.f32 %v1171, %v1310
  %v1312 = vpop.f32.mrb[0].mxu0
  %1313 = vmatprep.mubr.bf16.mxu0 0
  %1314 = vmatmul.mubr.bf16.gmra.mrb[0].mxu0 %v1195
  %v1315 = vpop.f32.mrb[0].mxu0
  %v1316 = vadd.f32 %v1171, %v1315
  %v1317 = vpop.f32.mrb[0].mxu0
  %v1318 = vpop.f32.mrb[0].mxu0
  %v1319 = vadd.f32 %v1171, %v1318
  %v1320 = vpop.f32.mrb[0].mxu0
  %1321 = vmatprep.mubr.bf16.mxu0 0
  %1322 = vmatmul.mubr.bf16.gmra.mrb[0].mxu0 %v1198
  %v1323 = vpop.f32.mrb[0].mxu0
  %v1324 = vadd.f32 %v1171, %v1323
  %v1325 = vpop.f32.mrb[0].mxu0
  %v1326 = vpop.f32.mrb[0].mxu0
  %v1327 = vadd.f32 %v1171, %v1326
  %v1328 = vpop.f32.mrb[0].mxu0
  %1329 = vmatprep.mubr.bf16.mxu0 0
  %1330 = vmatmul.mubr.bf16.gmra.mrb[0].mxu0 %v1201
  %v1331 = vpop.f32.mrb[0].mxu0
  %v1332 = vadd.f32 %v1171, %v1331
  %v1333 = vpop.f32.mrb[0].mxu0
  %v1334 = vpop.f32.mrb[0].mxu0
  %v1335 = vadd.f32 %v1171, %v1334
  %v1336 = vpop.f32.mrb[0].mxu0
  %1337 = vmatprep.mubr.bf16.mxu0 0
  %1338 = vmatmul.mubr.bf16.gmra.mrb[0].mxu0 %v1204
  %v1339 = vpop.f32.mrb[0].mxu0
  %v1340 = vadd.f32 %v1171, %v1339
  %v1341 = vpop.f32.mrb[0].mxu0
  %v1342 = vpop.f32.mrb[0].mxu0
  %v1343 = vadd.f32 %v1171, %v1342
  %v1344 = vpop.f32.mrb[0].mxu0
  %1345 = vmatprep.mubr.bf16.mxu0 0
  %1346 = vmatmul.mubr.bf16.gmra.mrb[0].mxu0 %v1207
  %v1347 = vpop.f32.mrb[0].mxu0
  %v1348 = vadd.f32 %v1171, %v1347
  %v1349 = vpop.f32.mrb[0].mxu0
  %v1350 = vpop.f32.mrb[0].mxu0
  %v1351 = vadd.f32 %v1171, %v1350
  %v1352 = vpop.f32.mrb[0].mxu0
  %1353 = vmatprep.mubr.bf16.mxu0 0
  %1354 = vmatmul.mubr.bf16.gmra.mrb[0].mxu0 %v1210
  %v1355 = vpop.f32.mrb[0].mxu0
  %v1356 = vadd.f32 %v1171, %v1355
  %v1357 = vpop.f32.mrb[0].mxu0
  %v1358 = vpop.f32.mrb[0].mxu0
  %v1359 = vadd.f32 %v1171, %v1358
  %v1360 = vpop.f32.mrb[0].mxu0
  %1361 = vmatprep.mubr.bf16.mxu0 0
  %1362 = vmatmul.mubr.bf16.gmra.mrb[0].mxu0 %v1213
  %v1363 = vpop.f32.mrb[0].mxu0
  %v1364 = vadd.f32 %v1171, %v1363
  %v1365 = vpop.f32.mrb[0].mxu0
  %v1366 = vpop.f32.mrb[0].mxu0
  %v1367 = vadd.f32 %v1171, %v1366
  %v1368 = vpop.f32.mrb[0].mxu0
  %1369 = vmatprep.mubr.bf16.mxu0 0
  %1370 = vmatmul.mubr.bf16.gmra.mrb[0].mxu0 %v1216
  %v1371 = vpop.f32.mrb[0].mxu0
  %v1372 = vadd.f32 %v1171, %v1371
  %v1373 = vpop.f32.mrb[0].mxu0
  %v1374 = vpop.f32.mrb[0].mxu0
  %v1375 = vadd.f32 %v1171, %v1374
  %v1376 = vpop.f32.mrb[0].mxu0
  %1377 = vmatprep.mubr.bf16.mxu0 0
  %1378 = vmatmul.mubr.bf16.gmra.mrb[0].mxu0 %v1219
  %v1379 = vpop.f32.mrb[0].mxu0
  %v1380 = vadd.f32 %v1171, %v1379
  %v1381 = vpop.f32.mrb[0].mxu0
  %v1382 = vpop.f32.mrb[0].mxu0
  %v1383 = vadd.f32 %v1171, %v1382
  %v1384 = vpop.f32.mrb[0].mxu0
  %1385 = vmatprep.mubr.bf16.mxu0 0
  %1386 = vmatmul.mubr.bf16.gmra.mrb[0].mxu0 %v1222
  %v1387 = vpop.f32.mrb[0].mxu0
  %v1388 = vadd.f32 %v1171, %v1387
  %v1389 = vpop.f32.mrb[0].mxu0
  %v1390 = vpop.f32.mrb[0].mxu0
  %v1391 = vadd.f32 %v1171, %v1390
  %v1392 = vpop.f32.mrb[0].mxu0
  %1393 = vmatprep.mubr.bf16.mxu0 0
  %1394 = vmatmul.mubr.bf16.gmra.mrb[0].mxu0 %v1225
  %v1395 = vpop.f32.mrb[0].mxu0
  %v1396 = vadd.f32 %v1171, %v1395
  %v1397 = vpop.f32.mrb[0].mxu0
  %v1398 = vpop.f32.mrb[0].mxu0
  %v1399 = vadd.f32 %v1171, %v1398
  %v1400 = vpop.f32.mrb[0].mxu0
  %1401 = vmatprep.mubr.bf16.mxu0 0
  %1402 = vmatmul.mubr.bf16.gmra.mrb[0].mxu0 %v1228
  %v1403 = vpop.f32.mrb[0].mxu0
  %v1404 = vadd.f32 %v1171, %v1403
  %v1405 = vpop.f32.mrb[0].mxu0
  %v1406 = vpop.f32.mrb[0].mxu0
  %v1407 = vadd.f32 %v1171, %v1406
  %v1408 = vpop.f32.mrb[0].mxu0
  %1409 = vmatprep.mubr.bf16.mxu0 0
  %1410 = vmatmul.mubr.bf16.gmra.mrb[0].mxu0 %v1231
  %v1411 = vpop.f32.mrb[0].mxu0
  %v1412 = vadd.f32 %v1171, %v1411
  %v1413 = vpop.f32.mrb[0].mxu0
  %v1414 = vpop.f32.mrb[0].mxu0
  %v1415 = vadd.f32 %v1171, %v1414
  %v1416 = vpop.f32.mrb[0].mxu0
  %1417 = vmatprep.mubr.bf16.mxu0 0
  %1418 = vmatmul.mubr.bf16.gmra.mrb[0].mxu0 %v1234
  %v1419 = vpop.f32.mrb[0].mxu0
  %v1420 = vadd.f32 %v1171, %v1419
  %v1421 = vpop.f32.mrb[0].mxu0
  %v1422 = vpop.f32.mrb[0].mxu0
  %v1423 = vadd.f32 %v1171, %v1422
  %v1424 = vpop.f32.mrb[0].mxu0
  %1425 = vmatprep.mubr.bf16.mxu0 0
  %1426 = vmatmul.mubr.bf16.gmra.mrb[0].mxu0 %v1237
  %v1427 = vpop.f32.mrb[0].mxu0
  %v1428 = vadd.f32 %v1171, %v1427
  %v1429 = vpop.f32.mrb[0].mxu0
  %v1430 = vpop.f32.mrb[0].mxu0
  %v1431 = vadd.f32 %v1171, %v1430
  %v1432 = vpop.f32.mrb[0].mxu0
  %1433 = vmatprep.mubr.bf16.mxu0 0
  %1434 = vmatmul.mubr.bf16.gmra.mrb[0].mxu0 %v1240
  %v1435 = vpop.f32.mrb[0].mxu0
  %v1436 = vadd.f32 %v1171, %v1435
  %v1437 = vpop.f32.mrb[0].mxu0
  %v1438 = vpop.f32.mrb[0].mxu0
  %v1439 = vadd.f32 %v1171, %v1438
  %v1440 = vpop.f32.mrb[0].mxu0
  %1441 = vmatprep.mubr.bf16.mxu0 0
  %1442 = vmatmul.mubr.bf16.gmra.mrb[0].mxu0 %v1243
  %v1443 = vpop.f32.mrb[0].mxu0
  %v1444 = vadd.f32 %v1171, %v1443
  %v1445 = vpop.f32.mrb[0].mxu0
  %v1446 = vpop.f32.mrb[0].mxu0
  %v1447 = vadd.f32 %v1171, %v1446
  %v1448 = vpop.f32.mrb[0].mxu0
  %1449 = vmatprep.mubr.bf16.mxu0 0
  %1450 = vmatmul.mubr.bf16.gmra.mrb[0].mxu0 %v1246
  %v1451 = vpop.f32.mrb[0].mxu0
  %v1452 = vadd.f32 %v1171, %v1451
  %v1453 = vpop.f32.mrb[0].mxu0
  %v1454 = vpop.f32.mrb[0].mxu0
  %v1455 = vadd.f32 %v1171, %v1454
  %v1456 = vpop.f32.mrb[0].mxu0
  %1457 = vmatprep.mubr.bf16.mxu0 0
  %1458 = vmatmul.mubr.bf16.gmra.mrb[0].mxu0 %v1249
  %v1459 = vpop.f32.mrb[0].mxu0
  %v1460 = vadd.f32 %v1171, %v1459
  %v1461 = vpop.f32.mrb[0].mxu0
  %v1462 = vpop.f32.mrb[0].mxu0
  %v1463 = vadd.f32 %v1171, %v1462
  %v1464 = vpop.f32.mrb[0].mxu0
  %1465 = vmatprep.mubr.bf16.mxu0 0
  %1466 = vmatmul.mubr.bf16.gmra.mrb[0].mxu0 %v1252
  %v1467 = vpop.f32.mrb[0].mxu0
  %v1468 = vadd.f32 %v1171, %v1467
  %v1469 = vpop.f32.mrb[0].mxu0
  %v1470 = vpop.f32.mrb[0].mxu0
  %v1471 = vadd.f32 %v1171, %v1470
  %v1472 = vpop.f32.mrb[0].mxu0
  %1473 = vmatprep.mubr.bf16.mxu0 0
  %1474 = vmatmul.mubr.bf16.gmra.mrb[0].mxu0 %v1255
  %v1475 = vpop.f32.mrb[0].mxu0
  %v1476 = vadd.f32 %v1171, %v1475
  %v1477 = vpop.f32.mrb[0].mxu0
  %v1478 = vpop.f32.mrb[0].mxu0
  %v1479 = vadd.f32 %v1171, %v1478
  %v1480 = vpop.f32.mrb[0].mxu0
  %1481 = vdwg.mxu0
  %v1482 = vadd.f32 %v1292, %v1324
  %v1483 = vadd.f32 %v1295, %v1327
  %v1484 = vadd.f32 %v1300, %v1332
  %v1485 = vadd.f32 %v1303, %v1335
  %v1486 = vadd.f32 %v1308, %v1340
  %v1487 = vadd.f32 %v1311, %v1343
  %v1488 = vadd.f32 %v1316, %v1348
  %v1489 = vadd.f32 %v1319, %v1351
  %v1490 = vadd.f32 %v1482, %v1356
  %v1491 = vadd.f32 %v1483, %v1359
  %v1492 = vadd.f32 %v1484, %v1364
  %v1493 = vadd.f32 %v1485, %v1367
  %v1494 = vadd.f32 %v1486, %v1372
  %v1495 = vadd.f32 %v1487, %v1375
  %v1496 = vadd.f32 %v1488, %v1380
  %v1497 = vadd.f32 %v1489, %v1383
  %v1498 = vadd.f32 %v1490, %v1388
  %v1499 = vadd.f32 %v1491, %v1391
  %v1500 = vadd.f32 %v1492, %v1396
  %v1501 = vadd.f32 %v1493, %v1399
  %v1502 = vadd.f32 %v1494, %v1404
  %v1503 = vadd.f32 %v1495, %v1407
  %v1504 = vadd.f32 %v1496, %v1412
  %v1505 = vadd.f32 %v1497, %v1415
  %v1506 = vadd.f32 %v1498, %v1420
  %v1507 = vadd.f32 %v1499, %v1423
  %v1508 = vadd.f32 %v1500, %v1428
  %v1509 = vadd.f32 %v1501, %v1431
  %v1510 = vadd.f32 %v1502, %v1436
  %v1511 = vadd.f32 %v1503, %v1439
  %v1512 = vadd.f32 %v1504, %v1444
  %v1513 = vadd.f32 %v1505, %v1447
  %v1514 = vadd.f32 %v1506, %v1452
  %v1515 = vadd.f32 %v1507, %v1455
  %v1516 = vadd.f32 %v1508, %v1460
  %v1517 = vadd.f32 %v1509, %v1463
  %v1518 = vadd.f32 %v1510, %v1468
  %v1519 = vadd.f32 %v1511, %v1471
  %v1520 = vadd.f32 %v1512, %v1476
  %v1521 = vadd.f32 %v1513, %v1479
  %1522 = vst [vmem:[%s7] sm:$0xff] %v1514
  %1523 = vst [vmem:[%s7 + $0x8] sm:$0xff] %v1515
  %1524 = vst [vmem:[%s7 + $0x10] sm:$0xff] %v1516
  %1525 = vst [vmem:[%s7 + $0x18] sm:$0xff] %v1517
  %1526 = vst [vmem:[%s7 + $0x20] sm:$0xff] %v1518
  %1527 = vst [vmem:[%s7 + $0x28] sm:$0xff] %v1519
  %1528 = vst [vmem:[%s7 + $0x30] sm:$0xff] %v1520
  %1529 = vst [vmem:[%s7 + $0x38] sm:$0xff] %v1521
  // Predicated region
  $region30: #{flow_ml_error_forward.12} parent=0 // pred_check
    _
  $region31: #{flow_ml_error_forward.12} parent=0 // pred_check_branch
    %1531 = sbr.rel (0) target = $region33
  $region32: #{flow_ml_error_forward.12} parent=0 // pred_region
    _
  $region33: #{flow_ml_error_forward.12} parent=0 // pred_fallthru
    _
  // Predicated region
  $region34: #{flow_ml_error_forward.12} parent=0 // pred_check
    _
  $region35: #{flow_ml_error_forward.12} parent=0 // pred_check_branch
    %1533 = sbr.rel (0) target = $region37
  $region36: #{flow_ml_error_forward.12} parent=0 // pred_region
    _
  $region37: #{flow_ml_error_forward.12} parent=0 // pred_fallthru
    _

// kernel: flow_ml_error_forward.14
$region0: #{flow_ml_error_forward.14}
  #allocation0 [shape = 'u32[]', space=smem, size = 0x4, offset = 0x4, fixed_abs, tag = 'smem constant byte address 0x4 - core index']
  #allocation1 [shape = 'u32[144,128]{1,0:T(1,128)}', space=vmem, size = 0x12000, scoped, tag = 'internal scratch']
  %s0 = inlined_call_operand.vmem [shape: bf16[384,128], index: 0, kind: input, shape index: {}]
  %s1 = inlined_call_operand.vmem [shape: bf16[128,32], index: 1, kind: input, shape index: {}]
  %s2 = inlined_call_operand.vmem [shape: f32[1,32], index: 2, kind: input, shape index: {}]
  %s3 = inlined_call_operand.vmem [shape: bf16[32,32], index: 3, kind: input, shape index: {}]
  %s4 = inlined_call_operand.vmem [shape: f32[1,32], index: 4, kind: input, shape index: {}]
  %s5 = inlined_call_operand.vmem [shape: bf16[32,128], index: 5, kind: input, shape index: {}]
  %s6 = inlined_call_operand.vmem [shape: f32[1,128], index: 6, kind: input, shape index: {}]
  %s7 = inlined_call_operand.vmem [shape: f32[64,128], index: 7, kind: output, shape index: {}]
  %s8 = sld [smem:[#allocation0]]
  $region38: #{flow_ml_error_forward.14} parent=0
    _
  %s10 = ssub.s32 1, %s8
  %s11 = scalar_select 0, %s10, %s8
  // Predicated region
  $region2: #{flow_ml_error_forward.14} parent=0 // pred_check
    _
  $region3: #{flow_ml_error_forward.14} parent=0 // pred_check_branch
    %13 = sbr.rel (0) target = $region5
  $region4: #{flow_ml_error_forward.14} parent=0 // pred_region
    _
  $region5: #{flow_ml_error_forward.14} parent=0 // pred_fallthru
    _
  // Predicated region
  $region6: #{flow_ml_error_forward.14} parent=0 // pred_check
    _
  $region7: #{flow_ml_error_forward.14} parent=0 // pred_check_branch
    %15 = sbr.rel (0) target = $region9
  $region8: #{flow_ml_error_forward.14} parent=0 // pred_region
    _
  $region9: #{flow_ml_error_forward.14} parent=0 // pred_fallthru
    _
  // Predicated region
  $region10: #{flow_ml_error_forward.14} parent=0 // pred_check
    _
  $region11: #{flow_ml_error_forward.14} parent=0 // pred_check_branch
    %17 = sbr.rel (0) target = $region13
  $region12: #{flow_ml_error_forward.14} parent=0 // pred_region
    _
  $region13: #{flow_ml_error_forward.14} parent=0 // pred_fallthru
    _
  // Predicated region
  $region14: #{flow_ml_error_forward.14} parent=0 // pred_check
    _
  $region15: #{flow_ml_error_forward.14} parent=0 // pred_check_branch
    %19 = sbr.rel (0) target = $region17
  $region16: #{flow_ml_error_forward.14} parent=0 // pred_region
    _
  $region17: #{flow_ml_error_forward.14} parent=0 // pred_fallthru
    _
  // Predicated region
  $region18: #{flow_ml_error_forward.14} parent=0 // pred_check
    _
  $region19: #{flow_ml_error_forward.14} parent=0 // pred_check_branch
    %21 = sbr.rel (0) target = $region21
  $region20: #{flow_ml_error_forward.14} parent=0 // pred_region
    _
  $region21: #{flow_ml_error_forward.14} parent=0 // pred_fallthru
    _
  // Predicated region
  $region22: #{flow_ml_error_forward.14} parent=0 // pred_check
    _
  $region23: #{flow_ml_error_forward.14} parent=0 // pred_check_branch
    %23 = sbr.rel (0) target = $region25
  $region24: #{flow_ml_error_forward.14} parent=0 // pred_region
    _
  $region25: #{flow_ml_error_forward.14} parent=0 // pred_fallthru
    _
  // Predicated region
  $region26: #{flow_ml_error_forward.14} parent=0 // pred_check
    _
  $region27: #{flow_ml_error_forward.14} parent=0 // pred_check_branch
    %25 = sbr.rel (0) target = $region29
  $region28: #{flow_ml_error_forward.14} parent=0 // pred_region
    _
  $region29: #{flow_ml_error_forward.14} parent=0 // pred_fallthru
    _
  %v27 = vld [vmem:[%s0] sm:$0xf]
  %v28 = vld [vmem:[%s0 + $0x4] sm:$0xf]
  %v29 = vld [vmem:[%s0 + $0x8] sm:$0xf]
  %v30 = vld [vmem:[%s0 + $0xc] sm:$0xf]
  %v31 = vld [vmem:[%s0 + $0x10] sm:$0xf]
  %v32 = vld [vmem:[%s0 + $0x14] sm:$0xf]
  %v33 = vld [vmem:[%s0 + $0x18] sm:$0xf]
  %v34 = vld [vmem:[%s0 + $0x1c] sm:$0xf]
  %v35 = vld [vmem:[%s0 + $0x20] sm:$0xf]
  %v36 = vld [vmem:[%s0 + $0x24] sm:$0xf]
  %v37 = vld [vmem:[%s0 + $0x28] sm:$0xf]
  %v38 = vld [vmem:[%s0 + $0x2c] sm:$0xf]
  %v39 = vld [vmem:[%s0 + $0x30] sm:$0xf]
  %v40 = vld [vmem:[%s0 + $0x34] sm:$0xf]
  %v41 = vld [vmem:[%s0 + $0x38] sm:$0xf]
  %v42 = vld [vmem:[%s0 + $0x3c] sm:$0xf]
  %v43 = vld [vmem:[%s0 + $0x40] sm:$0xf]
  %v44 = vld [vmem:[%s0 + $0x44] sm:$0xf]
  %v45 = vld [vmem:[%s0 + $0x48] sm:$0xf]
  %v46 = vld [vmem:[%s0 + $0x4c] sm:$0xf]
  %v47 = vld [vmem:[%s0 + $0x50] sm:$0xf]
  %v48 = vld [vmem:[%s0 + $0x54] sm:$0xf]
  %v49 = vld [vmem:[%s0 + $0x58] sm:$0xf]
  %v50 = vld [vmem:[%s0 + $0x5c] sm:$0xf]
  %v51 = vld [vmem:[%s0 + $0x60] sm:$0xf]
  %v52 = vld [vmem:[%s0 + $0x64] sm:$0xf]
  %v53 = vld [vmem:[%s0 + $0x68] sm:$0xf]
  %v54 = vld [vmem:[%s0 + $0x6c] sm:$0xf]
  %v55 = vld [vmem:[%s0 + $0x70] sm:$0xf]
  %v56 = vld [vmem:[%s0 + $0x74] sm:$0xf]
  %v57 = vld [vmem:[%s0 + $0x78] sm:$0xf]
  %v58 = vld [vmem:[%s0 + $0x7c] sm:$0xf]
  %v59 = vld [vmem:[%s0 + $0x80] sm:$0xf]
  %v60 = vld [vmem:[%s0 + $0x84] sm:$0xf]
  %v61 = vld [vmem:[%s0 + $0x88] sm:$0xf]
  %v62 = vld [vmem:[%s0 + $0x8c] sm:$0xf]
  %v63 = vld [vmem:[%s0 + $0x90] sm:$0xf]
  %v64 = vld [vmem:[%s0 + $0x94] sm:$0xf]
  %v65 = vld [vmem:[%s0 + $0x98] sm:$0xf]
  %v66 = vld [vmem:[%s0 + $0x9c] sm:$0xf]
  %v67 = vld [vmem:[%s0 + $0xa0] sm:$0xf]
  %v68 = vld [vmem:[%s0 + $0xa4] sm:$0xf]
  %v69 = vld [vmem:[%s0 + $0xa8] sm:$0xf]
  %v70 = vld [vmem:[%s0 + $0xac] sm:$0xf]
  %v71 = vld [vmem:[%s0 + $0xb0] sm:$0xf]
  %v72 = vld [vmem:[%s0 + $0xb4] sm:$0xf]
  %v73 = vld [vmem:[%s0 + $0xb8] sm:$0xf]
  %v74 = vld [vmem:[%s0 + $0xbc] sm:$0xf]
  %v75 = vld [vmem:[%s1] sm:$0xf]
  %v76 = vld [vmem:[%s1 + $0x4] sm:$0xf]
  %v77 = vld [vmem:[%s1 + $0x8] sm:$0xf]
  %v78 = vld [vmem:[%s1 + $0xc] sm:$0xf]
  %v79 = vld [vmem:[%s1 + $0x10] sm:$0xf]
  %v80 = vld [vmem:[%s1 + $0x14] sm:$0xf]
  %v81 = vld [vmem:[%s1 + $0x18] sm:$0xf]
  %v82 = vld [vmem:[%s1 + $0x1c] sm:$0xf]
  %v83 = vld [vmem:[%s1 + $0x20] sm:$0xf]
  %v84 = vld [vmem:[%s1 + $0x24] sm:$0xf]
  %v85 = vld [vmem:[%s1 + $0x28] sm:$0xf]
  %v86 = vld [vmem:[%s1 + $0x2c] sm:$0xf]
  %v87 = vld [vmem:[%s1 + $0x30] sm:$0xf]
  %v88 = vld [vmem:[%s1 + $0x34] sm:$0xf]
  %v89 = vld [vmem:[%s1 + $0x38] sm:$0xf]
  %v90 = vld [vmem:[%s1 + $0x3c] sm:$0xf]
  %v91 = vld [vmem:[%s2] sm:$0x1]
  %v93 = vlaneseq
  %v94 = vshrl.u32 %v93, 7
  %v95 = vsub.s32 0, %v94
  %v96 = vrot.slane %v91, %v95
  %v146 = vunpack.c.l.b16 %v27
  %v147 = vunpack.c.l.b16 %v28
  %v148 = vunpack.c.l.b16 %v29
  %v149 = vunpack.c.l.b16 %v30
  %v150 = vunpack.c.l.b16 %v31
  %v151 = vunpack.c.l.b16 %v32
  %v152 = vunpack.c.l.b16 %v33
  %v153 = vunpack.c.l.b16 %v34
  %v154 = vunpack.c.l.b16 %v35
  %v155 = vunpack.c.l.b16 %v36
  %v156 = vunpack.c.l.b16 %v37
  %v157 = vunpack.c.l.b16 %v38
  %v158 = vunpack.c.l.b16 %v39
  %v159 = vunpack.c.l.b16 %v40
  %v160 = vunpack.c.l.b16 %v41
  %v161 = vunpack.c.l.b16 %v42
  %v162 = vunpack.c.l.b16 %v43
  %v163 = vunpack.c.l.b16 %v44
  %v164 = vunpack.c.l.b16 %v45
  %v165 = vunpack.c.l.b16 %v46
  %v166 = vunpack.c.l.b16 %v47
  %v167 = vunpack.c.l.b16 %v48
  %v168 = vunpack.c.l.b16 %v49
  %v169 = vunpack.c.l.b16 %v50
  %v170 = vunpack.c.l.b16 %v51
  %v171 = vunpack.c.l.b16 %v52
  %v172 = vunpack.c.l.b16 %v53
  %v173 = vunpack.c.l.b16 %v54
  %v174 = vunpack.c.l.b16 %v55
  %v175 = vunpack.c.l.b16 %v56
  %v176 = vunpack.c.l.b16 %v57
  %v177 = vunpack.c.l.b16 %v58
  %v178 = vunpack.c.l.b16 %v59
  %v179 = vunpack.c.l.b16 %v60
  %v180 = vunpack.c.l.b16 %v61
  %v181 = vunpack.c.l.b16 %v62
  %v182 = vunpack.c.l.b16 %v63
  %v183 = vunpack.c.l.b16 %v64
  %v184 = vunpack.c.l.b16 %v65
  %v185 = vunpack.c.l.b16 %v66
  %v186 = vunpack.c.l.b16 %v67
  %v187 = vunpack.c.l.b16 %v68
  %v188 = vunpack.c.l.b16 %v69
  %v189 = vunpack.c.l.b16 %v70
  %v190 = vunpack.c.l.b16 %v71
  %v191 = vunpack.c.l.b16 %v72
  %v192 = vunpack.c.l.b16 %v73
  %v193 = vunpack.c.l.b16 %v74
  %v194 = vpack.c.b16 %v147, %v146
  %v195 = vpack.c.b16 %v149, %v148
  %v196 = vpack.c.b16 %v151, %v150
  %v197 = vpack.c.b16 %v153, %v152
  %v198 = vpack.c.b16 %v155, %v154
  %v199 = vpack.c.b16 %v157, %v156
  %v200 = vpack.c.b16 %v159, %v158
  %v201 = vpack.c.b16 %v161, %v160
  %v202 = vpack.c.b16 %v163, %v162
  %v203 = vpack.c.b16 %v165, %v164
  %v204 = vpack.c.b16 %v167, %v166
  %v205 = vpack.c.b16 %v169, %v168
  %v206 = vpack.c.b16 %v171, %v170
  %v207 = vpack.c.b16 %v173, %v172
  %v208 = vpack.c.b16 %v175, %v174
  %v209 = vpack.c.b16 %v177, %v176
  %v210 = vpack.c.b16 %v179, %v178
  %v211 = vpack.c.b16 %v181, %v180
  %v212 = vpack.c.b16 %v183, %v182
  %v213 = vpack.c.b16 %v185, %v184
  %v214 = vpack.c.b16 %v187, %v186
  %v215 = vpack.c.b16 %v189, %v188
  %v216 = vpack.c.b16 %v191, %v190
  %v217 = vpack.c.b16 %v193, %v192
  %v258 = vunpack.c.l.b16 %v75
  %v259 = vunpack.c.l.b16 %v76
  %v260 = vunpack.c.l.b16 %v77
  %v261 = vunpack.c.l.b16 %v78
  %v262 = vunpack.c.l.b16 %v79
  %v263 = vunpack.c.l.b16 %v80
  %v264 = vunpack.c.l.b16 %v81
  %v265 = vunpack.c.l.b16 %v82
  %v266 = vunpack.c.l.b16 %v83
  %v267 = vunpack.c.l.b16 %v84
  %v268 = vunpack.c.l.b16 %v85
  %v269 = vunpack.c.l.b16 %v86
  %v270 = vunpack.c.l.b16 %v87
  %v271 = vunpack.c.l.b16 %v88
  %v272 = vunpack.c.l.b16 %v89
  %v273 = vunpack.c.l.b16 %v90
  %v274 = vpack.c.b16 %v259, %v258
  %v275 = vpack.c.b16 %v261, %v260
  %v276 = vpack.c.b16 %v263, %v262
  %v277 = vpack.c.b16 %v265, %v264
  %v278 = vpack.c.b16 %v267, %v266
  %v279 = vpack.c.b16 %v269, %v268
  %v280 = vpack.c.b16 %v271, %v270
  %v281 = vpack.c.b16 %v273, %v272
  %290 = vmatprep.subr.bf16.mxu0 0
  %291 = vmatpush1.bf16.msra.mxu0 %v274
  %292 = vmatprep.subr.bf16.mxu0 0
  %293 = vmatpush1.bf16.msra.mxu0 %v275
  %294 = vmatprep.subr.bf16.mxu0 0
  %295 = vmatpush1.bf16.msra.mxu0 %v276
  %296 = vmatprep.subr.bf16.mxu0 0
  %297 = vmatpush1.bf16.msra.mxu0 %v277
  %298 = vmatprep.subr.bf16.mxu0 0
  %299 = vmatpush1.bf16.msra.mxu0 %v278
  %300 = vmatprep.subr.bf16.mxu0 0
  %301 = vmatpush1.bf16.msra.mxu0 %v279
  %302 = vmatprep.subr.bf16.mxu0 0
  %303 = vmatpush1.bf16.msra.mxu0 %v280
  %304 = vmatprep.subr.bf16.mxu0 0
  %305 = vmatpush1.bf16.msra.mxu0 %v281
  %306 = vmatprep.subr.bf16.mxu0 0
  %307 = vmatpush1.bf16.msra.mxu0 0
  %308 = vmatprep.subr.bf16.mxu0 0
  %309 = vmatpush1.bf16.msra.mxu0 0
  %310 = vmatprep.subr.bf16.mxu0 0
  %311 = vmatpush1.bf16.msra.mxu0 0
  %312 = vmatprep.subr.bf16.mxu0 0
  %313 = vmatpush1.bf16.msra.mxu0 0
  %314 = vmatprep.subr.bf16.mxu0 0
  %315 = vmatpush1.bf16.msra.mxu0 0
  %316 = vmatprep.subr.bf16.mxu0 0
  %317 = vmatpush1.bf16.msra.mxu0 0
  %318 = vmatprep.subr.bf16.mxu0 0
  %319 = vmatpush1.bf16.msra.mxu0 0
  %320 = vmatprep.subr.bf16.mxu0 0
  %321 = vmatpush1.bf16.msra.mxu0 0
  %322 = vmatprep.mubr.bf16.mxu0 0
  %323 = vmatmul.mubr.bf16.gmra.mrb[0].mxu0 %v194
  %v324 = vpop.f32.mrb[0].mxu0
  %v325 = vadd.f32 %v96, %v324
  %v326 = vpop.f32.mrb[0].mxu0
  %v327 = vpop.f32.mrb[0].mxu0
  %v328 = vadd.f32 %v96, %v327
  %v329 = vpop.f32.mrb[0].mxu0
  %330 = vmatprep.mubr.bf16.mxu0 0
  %331 = vmatmul.mubr.bf16.gmra.mrb[0].mxu0 %v195
  %v332 = vpop.f32.mrb[0].mxu0
  %v333 = vadd.f32 %v96, %v332
  %v334 = vpop.f32.mrb[0].mxu0
  %v335 = vpop.f32.mrb[0].mxu0
  %v336 = vadd.f32 %v96, %v335
  %v337 = vpop.f32.mrb[0].mxu0
  %338 = vmatprep.mubr.bf16.mxu0 0
  %339 = vmatmul.mubr.bf16.gmra.mrb[0].mxu0 %v196
  %v340 = vpop.f32.mrb[0].mxu0
  %v341 = vadd.f32 %v96, %v340
  %v342 = vpop.f32.mrb[0].mxu0
  %v343 = vpop.f32.mrb[0].mxu0
  %v344 = vadd.f32 %v96, %v343
  %v345 = vpop.f32.mrb[0].mxu0
  %346 = vmatprep.mubr.bf16.mxu0 0
  %347 = vmatmul.mubr.bf16.gmra.mrb[0].mxu0 %v197
  %v348 = vpop.f32.mrb[0].mxu0
  %v349 = vadd.f32 %v96, %v348
  %v350 = vpop.f32.mrb[0].mxu0
  %v351 = vpop.f32.mrb[0].mxu0
  %v352 = vadd.f32 %v96, %v351
  %v353 = vpop.f32.mrb[0].mxu0
  %354 = vmatprep.mubr.bf16.mxu0 0
  %355 = vmatmul.mubr.bf16.gmra.mrb[0].mxu0 %v198
  %v356 = vpop.f32.mrb[0].mxu0
  %v357 = vadd.f32 %v96, %v356
  %v358 = vpop.f32.mrb[0].mxu0
  %v359 = vpop.f32.mrb[0].mxu0
  %v360 = vadd.f32 %v96, %v359
  %v361 = vpop.f32.mrb[0].mxu0
  %362 = vmatprep.mubr.bf16.mxu0 0
  %363 = vmatmul.mubr.bf16.gmra.mrb[0].mxu0 %v199
  %v364 = vpop.f32.mrb[0].mxu0
  %v365 = vadd.f32 %v96, %v364
  %v366 = vpop.f32.mrb[0].mxu0
  %v367 = vpop.f32.mrb[0].mxu0
  %v368 = vadd.f32 %v96, %v367
  %v369 = vpop.f32.mrb[0].mxu0
  %370 = vmatprep.mubr.bf16.mxu0 0
  %371 = vmatmul.mubr.bf16.gmra.mrb[0].mxu0 %v200
  %v372 = vpop.f32.mrb[0].mxu0
  %v373 = vadd.f32 %v96, %v372
  %v374 = vpop.f32.mrb[0].mxu0
  %v375 = vpop.f32.mrb[0].mxu0
  %v376 = vadd.f32 %v96, %v375
  %v377 = vpop.f32.mrb[0].mxu0
  %378 = vmatprep.mubr.bf16.mxu0 0
  %379 = vmatmul.mubr.bf16.gmra.mrb[0].mxu0 %v201
  %v380 = vpop.f32.mrb[0].mxu0
  %v381 = vadd.f32 %v96, %v380
  %v382 = vpop.f32.mrb[0].mxu0
  %v383 = vpop.f32.mrb[0].mxu0
  %v384 = vadd.f32 %v96, %v383
  %v385 = vpop.f32.mrb[0].mxu0
  %386 = vmatprep.mubr.bf16.mxu0 0
  %387 = vmatmul.mubr.bf16.gmra.mrb[0].mxu0 %v202
  %v388 = vpop.f32.mrb[0].mxu0
  %v389 = vadd.f32 %v96, %v388
  %v390 = vpop.f32.mrb[0].mxu0
  %v391 = vpop.f32.mrb[0].mxu0
  %v392 = vadd.f32 %v96, %v391
  %v393 = vpop.f32.mrb[0].mxu0
  %394 = vmatprep.mubr.bf16.mxu0 0
  %395 = vmatmul.mubr.bf16.gmra.mrb[0].mxu0 %v203
  %v396 = vpop.f32.mrb[0].mxu0
  %v397 = vadd.f32 %v96, %v396
  %v398 = vpop.f32.mrb[0].mxu0
  %v399 = vpop.f32.mrb[0].mxu0
  %v400 = vadd.f32 %v96, %v399
  %v401 = vpop.f32.mrb[0].mxu0
  %402 = vmatprep.mubr.bf16.mxu0 0
  %403 = vmatmul.mubr.bf16.gmra.mrb[0].mxu0 %v204
  %v404 = vpop.f32.mrb[0].mxu0
  %v405 = vadd.f32 %v96, %v404
  %v406 = vpop.f32.mrb[0].mxu0
  %v407 = vpop.f32.mrb[0].mxu0
  %v408 = vadd.f32 %v96, %v407
  %v409 = vpop.f32.mrb[0].mxu0
  %410 = vmatprep.mubr.bf16.mxu0 0
  %411 = vmatmul.mubr.bf16.gmra.mrb[0].mxu0 %v205
  %v412 = vpop.f32.mrb[0].mxu0
  %v413 = vadd.f32 %v96, %v412
  %v414 = vpop.f32.mrb[0].mxu0
  %v415 = vpop.f32.mrb[0].mxu0
  %v416 = vadd.f32 %v96, %v415
  %v417 = vpop.f32.mrb[0].mxu0
  %418 = vmatprep.mubr.bf16.mxu0 0
  %419 = vmatmul.mubr.bf16.gmra.mrb[0].mxu0 %v206
  %v420 = vpop.f32.mrb[0].mxu0
  %v421 = vadd.f32 %v96, %v420
  %v422 = vpop.f32.mrb[0].mxu0
  %v423 = vpop.f32.mrb[0].mxu0
  %v424 = vadd.f32 %v96, %v423
  %v425 = vpop.f32.mrb[0].mxu0
  %426 = vmatprep.mubr.bf16.mxu0 0
  %427 = vmatmul.mubr.bf16.gmra.mrb[0].mxu0 %v207
  %v428 = vpop.f32.mrb[0].mxu0
  %v429 = vadd.f32 %v96, %v428
  %v430 = vpop.f32.mrb[0].mxu0
  %v431 = vpop.f32.mrb[0].mxu0
  %v432 = vadd.f32 %v96, %v431
  %v433 = vpop.f32.mrb[0].mxu0
  %434 = vmatprep.mubr.bf16.mxu0 0
  %435 = vmatmul.mubr.bf16.gmra.mrb[0].mxu0 %v208
  %v436 = vpop.f32.mrb[0].mxu0
  %v437 = vadd.f32 %v96, %v436
  %v438 = vpop.f32.mrb[0].mxu0
  %v439 = vpop.f32.mrb[0].mxu0
  %v440 = vadd.f32 %v96, %v439
  %v441 = vpop.f32.mrb[0].mxu0
  %442 = vmatprep.mubr.bf16.mxu0 0
  %443 = vmatmul.mubr.bf16.gmra.mrb[0].mxu0 %v209
  %v444 = vpop.f32.mrb[0].mxu0
  %v445 = vadd.f32 %v96, %v444
  %v446 = vpop.f32.mrb[0].mxu0
  %v447 = vpop.f32.mrb[0].mxu0
  %v448 = vadd.f32 %v96, %v447
  %v449 = vpop.f32.mrb[0].mxu0
  %450 = vmatprep.mubr.bf16.mxu0 0
  %451 = vmatmul.mubr.bf16.gmra.mrb[0].mxu0 %v210
  %v452 = vpop.f32.mrb[0].mxu0
  %v453 = vadd.f32 %v96, %v452
  %v454 = vpop.f32.mrb[0].mxu0
  %v455 = vpop.f32.mrb[0].mxu0
  %v456 = vadd.f32 %v96, %v455
  %v457 = vpop.f32.mrb[0].mxu0
  %458 = vmatprep.mubr.bf16.mxu0 0
  %459 = vmatmul.mubr.bf16.gmra.mrb[0].mxu0 %v211
  %v460 = vpop.f32.mrb[0].mxu0
  %v461 = vadd.f32 %v96, %v460
  %v462 = vpop.f32.mrb[0].mxu0
  %v463 = vpop.f32.mrb[0].mxu0
  %v464 = vadd.f32 %v96, %v463
  %v465 = vpop.f32.mrb[0].mxu0
  %466 = vmatprep.mubr.bf16.mxu0 0
  %467 = vmatmul.mubr.bf16.gmra.mrb[0].mxu0 %v212
  %v468 = vpop.f32.mrb[0].mxu0
  %v469 = vadd.f32 %v96, %v468
  %v470 = vpop.f32.mrb[0].mxu0
  %v471 = vpop.f32.mrb[0].mxu0
  %v472 = vadd.f32 %v96, %v471
  %v473 = vpop.f32.mrb[0].mxu0
  %474 = vmatprep.mubr.bf16.mxu0 0
  %475 = vmatmul.mubr.bf16.gmra.mrb[0].mxu0 %v213
  %v476 = vpop.f32.mrb[0].mxu0
  %v477 = vadd.f32 %v96, %v476
  %v478 = vpop.f32.mrb[0].mxu0
  %v479 = vpop.f32.mrb[0].mxu0
  %v480 = vadd.f32 %v96, %v479
  %v481 = vpop.f32.mrb[0].mxu0
  %482 = vmatprep.mubr.bf16.mxu0 0
  %483 = vmatmul.mubr.bf16.gmra.mrb[0].mxu0 %v214
  %v484 = vpop.f32.mrb[0].mxu0
  %v485 = vadd.f32 %v96, %v484
  %v486 = vpop.f32.mrb[0].mxu0
  %v487 = vpop.f32.mrb[0].mxu0
  %v488 = vadd.f32 %v96, %v487
  %v489 = vpop.f32.mrb[0].mxu0
  %490 = vmatprep.mubr.bf16.mxu0 0
  %491 = vmatmul.mubr.bf16.gmra.mrb[0].mxu0 %v215
  %v492 = vpop.f32.mrb[0].mxu0
  %v493 = vadd.f32 %v96, %v492
  %v494 = vpop.f32.mrb[0].mxu0
  %v495 = vpop.f32.mrb[0].mxu0
  %v496 = vadd.f32 %v96, %v495
  %v497 = vpop.f32.mrb[0].mxu0
  %498 = vmatprep.mubr.bf16.mxu0 0
  %499 = vmatmul.mubr.bf16.gmra.mrb[0].mxu0 %v216
  %v500 = vpop.f32.mrb[0].mxu0
  %v501 = vadd.f32 %v96, %v500
  %v502 = vpop.f32.mrb[0].mxu0
  %v503 = vpop.f32.mrb[0].mxu0
  %v504 = vadd.f32 %v96, %v503
  %v505 = vpop.f32.mrb[0].mxu0
  %506 = vmatprep.mubr.bf16.mxu0 0
  %507 = vmatmul.mubr.bf16.gmra.mrb[0].mxu0 %v217
  %v508 = vpop.f32.mrb[0].mxu0
  %v509 = vadd.f32 %v96, %v508
  %v510 = vpop.f32.mrb[0].mxu0
  %v511 = vpop.f32.mrb[0].mxu0
  %v512 = vadd.f32 %v96, %v511
  %v513 = vpop.f32.mrb[0].mxu0
  %514 = vdwg.mxu0
  %vm515 = vcmp.gt.f32.partialorder %v325, 0.0
  %vm516 = vcmp.gt.f32.partialorder %v328, 0.0
  %vm517 = vcmp.gt.f32.partialorder %v333, 0.0
  %vm518 = vcmp.gt.f32.partialorder %v336, 0.0
  %vm519 = vcmp.gt.f32.partialorder %v341, 0.0
  %vm520 = vcmp.gt.f32.partialorder %v344, 0.0
  %vm521 = vcmp.gt.f32.partialorder %v349, 0.0
  %vm522 = vcmp.gt.f32.partialorder %v352, 0.0
  %vm523 = vcmp.gt.f32.partialorder %v357, 0.0
  %vm524 = vcmp.gt.f32.partialorder %v360, 0.0
  %vm525 = vcmp.gt.f32.partialorder %v365, 0.0
  %vm526 = vcmp.gt.f32.partialorder %v368, 0.0
  %vm527 = vcmp.gt.f32.partialorder %v373, 0.0
  %vm528 = vcmp.gt.f32.partialorder %v376, 0.0
  %vm529 = vcmp.gt.f32.partialorder %v381, 0.0
  %vm530 = vcmp.gt.f32.partialorder %v384, 0.0
  %vm531 = vcmp.gt.f32.partialorder %v389, 0.0
  %vm532 = vcmp.gt.f32.partialorder %v392, 0.0
  %vm533 = vcmp.gt.f32.partialorder %v397, 0.0
  %vm534 = vcmp.gt.f32.partialorder %v400, 0.0
  %vm535 = vcmp.gt.f32.partialorder %v405, 0.0
  %vm536 = vcmp.gt.f32.partialorder %v408, 0.0
  %vm537 = vcmp.gt.f32.partialorder %v413, 0.0
  %vm538 = vcmp.gt.f32.partialorder %v416, 0.0
  %vm539 = vcmp.gt.f32.partialorder %v421, 0.0
  %vm540 = vcmp.gt.f32.partialorder %v424, 0.0
  %vm541 = vcmp.gt.f32.partialorder %v429, 0.0
  %vm542 = vcmp.gt.f32.partialorder %v432, 0.0
  %vm543 = vcmp.gt.f32.partialorder %v437, 0.0
  %vm544 = vcmp.gt.f32.partialorder %v440, 0.0
  %vm545 = vcmp.gt.f32.partialorder %v445, 0.0
  %vm546 = vcmp.gt.f32.partialorder %v448, 0.0
  %vm547 = vcmp.gt.f32.partialorder %v453, 0.0
  %vm548 = vcmp.gt.f32.partialorder %v456, 0.0
  %vm549 = vcmp.gt.f32.partialorder %v461, 0.0
  %vm550 = vcmp.gt.f32.partialorder %v464, 0.0
  %vm551 = vcmp.gt.f32.partialorder %v469, 0.0
  %vm552 = vcmp.gt.f32.partialorder %v472, 0.0
  %vm553 = vcmp.gt.f32.partialorder %v477, 0.0
  %vm554 = vcmp.gt.f32.partialorder %v480, 0.0
  %vm555 = vcmp.gt.f32.partialorder %v485, 0.0
  %vm556 = vcmp.gt.f32.partialorder %v488, 0.0
  %vm557 = vcmp.gt.f32.partialorder %v493, 0.0
  %vm558 = vcmp.gt.f32.partialorder %v496, 0.0
  %vm559 = vcmp.gt.f32.partialorder %v501, 0.0
  %vm560 = vcmp.gt.f32.partialorder %v504, 0.0
  %vm561 = vcmp.gt.f32.partialorder %v509, 0.0
  %vm562 = vcmp.gt.f32.partialorder %v512, 0.0
  %v563 = vmul.f32 %v325, 0.1
  %v564 = vmul.f32 %v328, 0.1
  %v565 = vmul.f32 %v333, 0.1
  %v566 = vmul.f32 %v336, 0.1
  %v567 = vmul.f32 %v341, 0.1
  %v568 = vmul.f32 %v344, 0.1
  %v569 = vmul.f32 %v349, 0.1
  %v570 = vmul.f32 %v352, 0.1
  %v571 = vmul.f32 %v357, 0.1
  %v572 = vmul.f32 %v360, 0.1
  %v573 = vmul.f32 %v365, 0.1
  %v574 = vmul.f32 %v368, 0.1
  %v575 = vmul.f32 %v373, 0.1
  %v576 = vmul.f32 %v376, 0.1
  %v577 = vmul.f32 %v381, 0.1
  %v578 = vmul.f32 %v384, 0.1
  %v579 = vmul.f32 %v389, 0.1
  %v580 = vmul.f32 %v392, 0.1
  %v581 = vmul.f32 %v397, 0.1
  %v582 = vmul.f32 %v400, 0.1
  %v583 = vmul.f32 %v405, 0.1
  %v584 = vmul.f32 %v408, 0.1
  %v585 = vmul.f32 %v413, 0.1
  %v586 = vmul.f32 %v416, 0.1
  %v587 = vmul.f32 %v421, 0.1
  %v588 = vmul.f32 %v424, 0.1
  %v589 = vmul.f32 %v429, 0.1
  %v590 = vmul.f32 %v432, 0.1
  %v591 = vmul.f32 %v437, 0.1
  %v592 = vmul.f32 %v440, 0.1
  %v593 = vmul.f32 %v445, 0.1
  %v594 = vmul.f32 %v448, 0.1
  %v595 = vmul.f32 %v453, 0.1
  %v596 = vmul.f32 %v456, 0.1
  %v597 = vmul.f32 %v461, 0.1
  %v598 = vmul.f32 %v464, 0.1
  %v599 = vmul.f32 %v469, 0.1
  %v600 = vmul.f32 %v472, 0.1
  %v601 = vmul.f32 %v477, 0.1
  %v602 = vmul.f32 %v480, 0.1
  %v603 = vmul.f32 %v485, 0.1
  %v604 = vmul.f32 %v488, 0.1
  %v605 = vmul.f32 %v493, 0.1
  %v606 = vmul.f32 %v496, 0.1
  %v607 = vmul.f32 %v501, 0.1
  %v608 = vmul.f32 %v504, 0.1
  %v609 = vmul.f32 %v509, 0.1
  %v610 = vmul.f32 %v512, 0.1
  %v611 = vsel %vm515, %v325, %v563
  %v612 = vsel %vm516, %v328, %v564
  %v613 = vsel %vm517, %v333, %v565
  %v614 = vsel %vm518, %v336, %v566
  %v615 = vsel %vm519, %v341, %v567
  %v616 = vsel %vm520, %v344, %v568
  %v617 = vsel %vm521, %v349, %v569
  %v618 = vsel %vm522, %v352, %v570
  %v619 = vsel %vm523, %v357, %v571
  %v620 = vsel %vm524, %v360, %v572
  %v621 = vsel %vm525, %v365, %v573
  %v622 = vsel %vm526, %v368, %v574
  %v623 = vsel %vm527, %v373, %v575
  %v624 = vsel %vm528, %v376, %v576
  %v625 = vsel %vm529, %v381, %v577
  %v626 = vsel %vm530, %v384, %v578
  %v627 = vsel %vm531, %v389, %v579
  %v628 = vsel %vm532, %v392, %v580
  %v629 = vsel %vm533, %v397, %v581
  %v630 = vsel %vm534, %v400, %v582
  %v631 = vsel %vm535, %v405, %v583
  %v632 = vsel %vm536, %v408, %v584
  %v633 = vsel %vm537, %v413, %v585
  %v634 = vsel %vm538, %v416, %v586
  %v635 = vsel %vm539, %v421, %v587
  %v636 = vsel %vm540, %v424, %v588
  %v637 = vsel %vm541, %v429, %v589
  %v638 = vsel %vm542, %v432, %v590
  %v639 = vsel %vm543, %v437, %v591
  %v640 = vsel %vm544, %v440, %v592
  %v641 = vsel %vm545, %v445, %v593
  %v642 = vsel %vm546, %v448, %v594
  %v643 = vsel %vm547, %v453, %v595
  %v644 = vsel %vm548, %v456, %v596
  %v645 = vsel %vm549, %v461, %v597
  %v646 = vsel %vm550, %v464, %v598
  %v647 = vsel %vm551, %v469, %v599
  %v648 = vsel %vm552, %v472, %v600
  %v649 = vsel %vm553, %v477, %v601
  %v650 = vsel %vm554, %v480, %v602
  %v651 = vsel %vm555, %v485, %v603
  %v652 = vsel %vm556, %v488, %v604
  %v653 = vsel %vm557, %v493, %v605
  %v654 = vsel %vm558, %v496, %v606
  %v655 = vsel %vm559, %v501, %v607
  %v656 = vsel %vm560, %v504, %v608
  %v657 = vsel %vm561, %v509, %v609
  %v658 = vsel %vm562, %v512, %v610
  %v659 = vpack.c.bf16 %v612, %v611
  %v660 = vpack.c.bf16 %v614, %v613
  %v661 = vpack.c.bf16 %v616, %v615
  %v662 = vpack.c.bf16 %v618, %v617
  %v663 = vpack.c.bf16 %v620, %v619
  %v664 = vpack.c.bf16 %v622, %v621
  %v665 = vpack.c.bf16 %v624, %v623
  %v666 = vpack.c.bf16 %v626, %v625
  %v667 = vpack.c.bf16 %v628, %v627
  %v668 = vpack.c.bf16 %v630, %v629
  %v669 = vpack.c.bf16 %v632, %v631
  %v670 = vpack.c.bf16 %v634, %v633
  %v671 = vpack.c.bf16 %v636, %v635
  %v672 = vpack.c.bf16 %v638, %v637
  %v673 = vpack.c.bf16 %v640, %v639
  %v674 = vpack.c.bf16 %v642, %v641
  %v675 = vpack.c.bf16 %v644, %v643
  %v676 = vpack.c.bf16 %v646, %v645
  %v677 = vpack.c.bf16 %v648, %v647
  %v678 = vpack.c.bf16 %v650, %v649
  %v679 = vpack.c.bf16 %v652, %v651
  %v680 = vpack.c.bf16 %v654, %v653
  %v681 = vpack.c.bf16 %v656, %v655
  %v682 = vpack.c.bf16 %v658, %v657
  %v683 = vld [vmem:[%s3] sm:$0xf]
  %v684 = vld [vmem:[%s3 + $0x4] sm:$0xf]
  %v685 = vld [vmem:[%s3 + $0x8] sm:$0xf]
  %v686 = vld [vmem:[%s3 + $0xc] sm:$0xf]
  %v687 = vld [vmem:[%s4] sm:$0x1]
  %v689 = vlaneseq
  %v690 = vshrl.u32 %v689, 7
  %v691 = vsub.s32 0, %v690
  %v692 = vrot.slane %v687, %v691
  %v698 = vunpack.c.l.b16 %v683
  %v699 = vunpack.c.l.b16 %v684
  %v700 = vunpack.c.l.b16 %v685
  %v701 = vunpack.c.l.b16 %v686
  %v702 = vpack.c.b16 %v699, %v698
  %v703 = vpack.c.b16 %v701, %v700
  %vm706 = vcmask 261120
  %v708 = vsel %vm706, %v659, 0
  %v711 = vsel %vm706, %v660, 0
  %v714 = vsel %vm706, %v661, 0
  %v717 = vsel %vm706, %v662, 0
  %v720 = vsel %vm706, %v663, 0
  %v723 = vsel %vm706, %v664, 0
  %v726 = vsel %vm706, %v665, 0
  %v729 = vsel %vm706, %v666, 0
  %v732 = vsel %vm706, %v667, 0
  %v735 = vsel %vm706, %v668, 0
  %v738 = vsel %vm706, %v669, 0
  %v741 = vsel %vm706, %v670, 0
  %v744 = vsel %vm706, %v671, 0
  %v747 = vsel %vm706, %v672, 0
  %v750 = vsel %vm706, %v673, 0
  %v753 = vsel %vm706, %v674, 0
  %v756 = vsel %vm706, %v675, 0
  %v759 = vsel %vm706, %v676, 0
  %v762 = vsel %vm706, %v677, 0
  %v765 = vsel %vm706, %v678, 0
  %v768 = vsel %vm706, %v679, 0
  %v771 = vsel %vm706, %v680, 0
  %v774 = vsel %vm706, %v681, 0
  %v777 = vsel %vm706, %v682, 0
  %779 = vmatprep.subr.bf16.mxu0 0
  %780 = vmatpush1.bf16.msra.mxu0 %v702
  %781 = vmatprep.subr.bf16.mxu0 0
  %782 = vmatpush1.bf16.msra.mxu0 %v703
  %783 = vmatprep.subr.bf16.mxu0 0
  %784 = vmatpush1.bf16.msra.mxu0 0
  %785 = vmatprep.subr.bf16.mxu0 0
  %786 = vmatpush1.bf16.msra.mxu0 0
  %787 = vmatprep.subr.bf16.mxu0 0
  %788 = vmatpush1.bf16.msra.mxu0 0
  %789 = vmatprep.subr.bf16.mxu0 0
  %790 = vmatpush1.bf16.msra.mxu0 0
  %791 = vmatprep.subr.bf16.mxu0 0
  %792 = vmatpush1.bf16.msra.mxu0 0
  %793 = vmatprep.subr.bf16.mxu0 0
  %794 = vmatpush1.bf16.msra.mxu0 0
  %795 = vmatprep.subr.bf16.mxu0 0
  %796 = vmatpush1.bf16.msra.mxu0 0
  %797 = vmatprep.subr.bf16.mxu0 0
  %798 = vmatpush1.bf16.msra.mxu0 0
  %799 = vmatprep.subr.bf16.mxu0 0
  %800 = vmatpush1.bf16.msra.mxu0 0
  %801 = vmatprep.subr.bf16.mxu0 0
  %802 = vmatpush1.bf16.msra.mxu0 0
  %803 = vmatprep.subr.bf16.mxu0 0
  %804 = vmatpush1.bf16.msra.mxu0 0
  %805 = vmatprep.subr.bf16.mxu0 0
  %806 = vmatpush1.bf16.msra.mxu0 0
  %807 = vmatprep.subr.bf16.mxu0 0
  %808 = vmatpush1.bf16.msra.mxu0 0
  %809 = vmatprep.subr.bf16.mxu0 0
  %810 = vmatpush1.bf16.msra.mxu0 0
  %811 = vmatprep.mubr.bf16.mxu0 0
  %812 = vmatmul.mubr.bf16.gmra.mrb[0].mxu0 %v708
  %v813 = vpop.f32.mrb[0].mxu0
  %v814 = vadd.f32 %v692, %v813
  %v815 = vpop.f32.mrb[0].mxu0
  %v816 = vpop.f32.mrb[0].mxu0
  %v817 = vadd.f32 %v692, %v816
  %v818 = vpop.f32.mrb[0].mxu0
  %819 = vmatprep.mubr.bf16.mxu0 0
  %820 = vmatmul.mubr.bf16.gmra.mrb[0].mxu0 %v711
  %v821 = vpop.f32.mrb[0].mxu0
  %v822 = vadd.f32 %v692, %v821
  %v823 = vpop.f32.mrb[0].mxu0
  %v824 = vpop.f32.mrb[0].mxu0
  %v825 = vadd.f32 %v692, %v824
  %v826 = vpop.f32.mrb[0].mxu0
  %827 = vmatprep.mubr.bf16.mxu0 0
  %828 = vmatmul.mubr.bf16.gmra.mrb[0].mxu0 %v714
  %v829 = vpop.f32.mrb[0].mxu0
  %v830 = vadd.f32 %v692, %v829
  %v831 = vpop.f32.mrb[0].mxu0
  %v832 = vpop.f32.mrb[0].mxu0
  %v833 = vadd.f32 %v692, %v832
  %v834 = vpop.f32.mrb[0].mxu0
  %835 = vmatprep.mubr.bf16.mxu0 0
  %836 = vmatmul.mubr.bf16.gmra.mrb[0].mxu0 %v717
  %v837 = vpop.f32.mrb[0].mxu0
  %v838 = vadd.f32 %v692, %v837
  %v839 = vpop.f32.mrb[0].mxu0
  %v840 = vpop.f32.mrb[0].mxu0
  %v841 = vadd.f32 %v692, %v840
  %v842 = vpop.f32.mrb[0].mxu0
  %843 = vmatprep.mubr.bf16.mxu0 0
  %844 = vmatmul.mubr.bf16.gmra.mrb[0].mxu0 %v720
  %v845 = vpop.f32.mrb[0].mxu0
  %v846 = vadd.f32 %v692, %v845
  %v847 = vpop.f32.mrb[0].mxu0
  %v848 = vpop.f32.mrb[0].mxu0
  %v849 = vadd.f32 %v692, %v848
  %v850 = vpop.f32.mrb[0].mxu0
  %851 = vmatprep.mubr.bf16.mxu0 0
  %852 = vmatmul.mubr.bf16.gmra.mrb[0].mxu0 %v723
  %v853 = vpop.f32.mrb[0].mxu0
  %v854 = vadd.f32 %v692, %v853
  %v855 = vpop.f32.mrb[0].mxu0
  %v856 = vpop.f32.mrb[0].mxu0
  %v857 = vadd.f32 %v692, %v856
  %v858 = vpop.f32.mrb[0].mxu0
  %859 = vmatprep.mubr.bf16.mxu0 0
  %860 = vmatmul.mubr.bf16.gmra.mrb[0].mxu0 %v726
  %v861 = vpop.f32.mrb[0].mxu0
  %v862 = vadd.f32 %v692, %v861
  %v863 = vpop.f32.mrb[0].mxu0
  %v864 = vpop.f32.mrb[0].mxu0
  %v865 = vadd.f32 %v692, %v864
  %v866 = vpop.f32.mrb[0].mxu0
  %867 = vmatprep.mubr.bf16.mxu0 0
  %868 = vmatmul.mubr.bf16.gmra.mrb[0].mxu0 %v729
  %v869 = vpop.f32.mrb[0].mxu0
  %v870 = vadd.f32 %v692, %v869
  %v871 = vpop.f32.mrb[0].mxu0
  %v872 = vpop.f32.mrb[0].mxu0
  %v873 = vadd.f32 %v692, %v872
  %v874 = vpop.f32.mrb[0].mxu0
  %875 = vmatprep.mubr.bf16.mxu0 0
  %876 = vmatmul.mubr.bf16.gmra.mrb[0].mxu0 %v732
  %v877 = vpop.f32.mrb[0].mxu0
  %v878 = vadd.f32 %v692, %v877
  %v879 = vpop.f32.mrb[0].mxu0
  %v880 = vpop.f32.mrb[0].mxu0
  %v881 = vadd.f32 %v692, %v880
  %v882 = vpop.f32.mrb[0].mxu0
  %883 = vmatprep.mubr.bf16.mxu0 0
  %884 = vmatmul.mubr.bf16.gmra.mrb[0].mxu0 %v735
  %v885 = vpop.f32.mrb[0].mxu0
  %v886 = vadd.f32 %v692, %v885
  %v887 = vpop.f32.mrb[0].mxu0
  %v888 = vpop.f32.mrb[0].mxu0
  %v889 = vadd.f32 %v692, %v888
  %v890 = vpop.f32.mrb[0].mxu0
  %891 = vmatprep.mubr.bf16.mxu0 0
  %892 = vmatmul.mubr.bf16.gmra.mrb[0].mxu0 %v738
  %v893 = vpop.f32.mrb[0].mxu0
  %v894 = vadd.f32 %v692, %v893
  %v895 = vpop.f32.mrb[0].mxu0
  %v896 = vpop.f32.mrb[0].mxu0
  %v897 = vadd.f32 %v692, %v896
  %v898 = vpop.f32.mrb[0].mxu0
  %899 = vmatprep.mubr.bf16.mxu0 0
  %900 = vmatmul.mubr.bf16.gmra.mrb[0].mxu0 %v741
  %v901 = vpop.f32.mrb[0].mxu0
  %v902 = vadd.f32 %v692, %v901
  %v903 = vpop.f32.mrb[0].mxu0
  %v904 = vpop.f32.mrb[0].mxu0
  %v905 = vadd.f32 %v692, %v904
  %v906 = vpop.f32.mrb[0].mxu0
  %907 = vmatprep.mubr.bf16.mxu0 0
  %908 = vmatmul.mubr.bf16.gmra.mrb[0].mxu0 %v744
  %v909 = vpop.f32.mrb[0].mxu0
  %v910 = vadd.f32 %v692, %v909
  %v911 = vpop.f32.mrb[0].mxu0
  %v912 = vpop.f32.mrb[0].mxu0
  %v913 = vadd.f32 %v692, %v912
  %v914 = vpop.f32.mrb[0].mxu0
  %915 = vmatprep.mubr.bf16.mxu0 0
  %916 = vmatmul.mubr.bf16.gmra.mrb[0].mxu0 %v747
  %v917 = vpop.f32.mrb[0].mxu0
  %v918 = vadd.f32 %v692, %v917
  %v919 = vpop.f32.mrb[0].mxu0
  %v920 = vpop.f32.mrb[0].mxu0
  %v921 = vadd.f32 %v692, %v920
  %v922 = vpop.f32.mrb[0].mxu0
  %923 = vmatprep.mubr.bf16.mxu0 0
  %924 = vmatmul.mubr.bf16.gmra.mrb[0].mxu0 %v750
  %v925 = vpop.f32.mrb[0].mxu0
  %v926 = vadd.f32 %v692, %v925
  %v927 = vpop.f32.mrb[0].mxu0
  %v928 = vpop.f32.mrb[0].mxu0
  %v929 = vadd.f32 %v692, %v928
  %v930 = vpop.f32.mrb[0].mxu0
  %931 = vmatprep.mubr.bf16.mxu0 0
  %932 = vmatmul.mubr.bf16.gmra.mrb[0].mxu0 %v753
  %v933 = vpop.f32.mrb[0].mxu0
  %v934 = vadd.f32 %v692, %v933
  %v935 = vpop.f32.mrb[0].mxu0
  %v936 = vpop.f32.mrb[0].mxu0
  %v937 = vadd.f32 %v692, %v936
  %v938 = vpop.f32.mrb[0].mxu0
  %939 = vmatprep.mubr.bf16.mxu0 0
  %940 = vmatmul.mubr.bf16.gmra.mrb[0].mxu0 %v756
  %v941 = vpop.f32.mrb[0].mxu0
  %v942 = vadd.f32 %v692, %v941
  %v943 = vpop.f32.mrb[0].mxu0
  %v944 = vpop.f32.mrb[0].mxu0
  %v945 = vadd.f32 %v692, %v944
  %v946 = vpop.f32.mrb[0].mxu0
  %947 = vmatprep.mubr.bf16.mxu0 0
  %948 = vmatmul.mubr.bf16.gmra.mrb[0].mxu0 %v759
  %v949 = vpop.f32.mrb[0].mxu0
  %v950 = vadd.f32 %v692, %v949
  %v951 = vpop.f32.mrb[0].mxu0
  %v952 = vpop.f32.mrb[0].mxu0
  %v953 = vadd.f32 %v692, %v952
  %v954 = vpop.f32.mrb[0].mxu0
  %955 = vmatprep.mubr.bf16.mxu0 0
  %956 = vmatmul.mubr.bf16.gmra.mrb[0].mxu0 %v762
  %v957 = vpop.f32.mrb[0].mxu0
  %v958 = vadd.f32 %v692, %v957
  %v959 = vpop.f32.mrb[0].mxu0
  %v960 = vpop.f32.mrb[0].mxu0
  %v961 = vadd.f32 %v692, %v960
  %v962 = vpop.f32.mrb[0].mxu0
  %963 = vmatprep.mubr.bf16.mxu0 0
  %964 = vmatmul.mubr.bf16.gmra.mrb[0].mxu0 %v765
  %v965 = vpop.f32.mrb[0].mxu0
  %v966 = vadd.f32 %v692, %v965
  %v967 = vpop.f32.mrb[0].mxu0
  %v968 = vpop.f32.mrb[0].mxu0
  %v969 = vadd.f32 %v692, %v968
  %v970 = vpop.f32.mrb[0].mxu0
  %971 = vmatprep.mubr.bf16.mxu0 0
  %972 = vmatmul.mubr.bf16.gmra.mrb[0].mxu0 %v768
  %v973 = vpop.f32.mrb[0].mxu0
  %v974 = vadd.f32 %v692, %v973
  %v975 = vpop.f32.mrb[0].mxu0
  %v976 = vpop.f32.mrb[0].mxu0
  %v977 = vadd.f32 %v692, %v976
  %v978 = vpop.f32.mrb[0].mxu0
  %979 = vmatprep.mubr.bf16.mxu0 0
  %980 = vmatmul.mubr.bf16.gmra.mrb[0].mxu0 %v771
  %v981 = vpop.f32.mrb[0].mxu0
  %v982 = vadd.f32 %v692, %v981
  %v983 = vpop.f32.mrb[0].mxu0
  %v984 = vpop.f32.mrb[0].mxu0
  %v985 = vadd.f32 %v692, %v984
  %v986 = vpop.f32.mrb[0].mxu0
  %987 = vmatprep.mubr.bf16.mxu0 0
  %988 = vmatmul.mubr.bf16.gmra.mrb[0].mxu0 %v774
  %v989 = vpop.f32.mrb[0].mxu0
  %v990 = vadd.f32 %v692, %v989
  %v991 = vpop.f32.mrb[0].mxu0
  %v992 = vpop.f32.mrb[0].mxu0
  %v993 = vadd.f32 %v692, %v992
  %v994 = vpop.f32.mrb[0].mxu0
  %995 = vmatprep.mubr.bf16.mxu0 0
  %996 = vmatmul.mubr.bf16.gmra.mrb[0].mxu0 %v777
  %v997 = vpop.f32.mrb[0].mxu0
  %v998 = vadd.f32 %v692, %v997
  %v999 = vpop.f32.mrb[0].mxu0
  %v1000 = vpop.f32.mrb[0].mxu0
  %v1001 = vadd.f32 %v692, %v1000
  %v1002 = vpop.f32.mrb[0].mxu0
  %1003 = vdwg.mxu0
  %vm1004 = vcmp.gt.f32.partialorder %v814, 0.0
  %vm1005 = vcmp.gt.f32.partialorder %v817, 0.0
  %vm1006 = vcmp.gt.f32.partialorder %v822, 0.0
  %vm1007 = vcmp.gt.f32.partialorder %v825, 0.0
  %vm1008 = vcmp.gt.f32.partialorder %v830, 0.0
  %vm1009 = vcmp.gt.f32.partialorder %v833, 0.0
  %vm1010 = vcmp.gt.f32.partialorder %v838, 0.0
  %vm1011 = vcmp.gt.f32.partialorder %v841, 0.0
  %vm1012 = vcmp.gt.f32.partialorder %v846, 0.0
  %vm1013 = vcmp.gt.f32.partialorder %v849, 0.0
  %vm1014 = vcmp.gt.f32.partialorder %v854, 0.0
  %vm1015 = vcmp.gt.f32.partialorder %v857, 0.0
  %vm1016 = vcmp.gt.f32.partialorder %v862, 0.0
  %vm1017 = vcmp.gt.f32.partialorder %v865, 0.0
  %vm1018 = vcmp.gt.f32.partialorder %v870, 0.0
  %vm1019 = vcmp.gt.f32.partialorder %v873, 0.0
  %vm1020 = vcmp.gt.f32.partialorder %v878, 0.0
  %vm1021 = vcmp.gt.f32.partialorder %v881, 0.0
  %vm1022 = vcmp.gt.f32.partialorder %v886, 0.0
  %vm1023 = vcmp.gt.f32.partialorder %v889, 0.0
  %vm1024 = vcmp.gt.f32.partialorder %v894, 0.0
  %vm1025 = vcmp.gt.f32.partialorder %v897, 0.0
  %vm1026 = vcmp.gt.f32.partialorder %v902, 0.0
  %vm1027 = vcmp.gt.f32.partialorder %v905, 0.0
  %vm1028 = vcmp.gt.f32.partialorder %v910, 0.0
  %vm1029 = vcmp.gt.f32.partialorder %v913, 0.0
  %vm1030 = vcmp.gt.f32.partialorder %v918, 0.0
  %vm1031 = vcmp.gt.f32.partialorder %v921, 0.0
  %vm1032 = vcmp.gt.f32.partialorder %v926, 0.0
  %vm1033 = vcmp.gt.f32.partialorder %v929, 0.0
  %vm1034 = vcmp.gt.f32.partialorder %v934, 0.0
  %vm1035 = vcmp.gt.f32.partialorder %v937, 0.0
  %vm1036 = vcmp.gt.f32.partialorder %v942, 0.0
  %vm1037 = vcmp.gt.f32.partialorder %v945, 0.0
  %vm1038 = vcmp.gt.f32.partialorder %v950, 0.0
  %vm1039 = vcmp.gt.f32.partialorder %v953, 0.0
  %vm1040 = vcmp.gt.f32.partialorder %v958, 0.0
  %vm1041 = vcmp.gt.f32.partialorder %v961, 0.0
  %vm1042 = vcmp.gt.f32.partialorder %v966, 0.0
  %vm1043 = vcmp.gt.f32.partialorder %v969, 0.0
  %vm1044 = vcmp.gt.f32.partialorder %v974, 0.0
  %vm1045 = vcmp.gt.f32.partialorder %v977, 0.0
  %vm1046 = vcmp.gt.f32.partialorder %v982, 0.0
  %vm1047 = vcmp.gt.f32.partialorder %v985, 0.0
  %vm1048 = vcmp.gt.f32.partialorder %v990, 0.0
  %vm1049 = vcmp.gt.f32.partialorder %v993, 0.0
  %vm1050 = vcmp.gt.f32.partialorder %v998, 0.0
  %vm1051 = vcmp.gt.f32.partialorder %v1001, 0.0
  %v1052 = vmul.f32 %v814, 0.1
  %v1053 = vmul.f32 %v817, 0.1
  %v1054 = vmul.f32 %v822, 0.1
  %v1055 = vmul.f32 %v825, 0.1
  %v1056 = vmul.f32 %v830, 0.1
  %v1057 = vmul.f32 %v833, 0.1
  %v1058 = vmul.f32 %v838, 0.1
  %v1059 = vmul.f32 %v841, 0.1
  %v1060 = vmul.f32 %v846, 0.1
  %v1061 = vmul.f32 %v849, 0.1
  %v1062 = vmul.f32 %v854, 0.1
  %v1063 = vmul.f32 %v857, 0.1
  %v1064 = vmul.f32 %v862, 0.1
  %v1065 = vmul.f32 %v865, 0.1
  %v1066 = vmul.f32 %v870, 0.1
  %v1067 = vmul.f32 %v873, 0.1
  %v1068 = vmul.f32 %v878, 0.1
  %v1069 = vmul.f32 %v881, 0.1
  %v1070 = vmul.f32 %v886, 0.1
  %v1071 = vmul.f32 %v889, 0.1
  %v1072 = vmul.f32 %v894, 0.1
  %v1073 = vmul.f32 %v897, 0.1
  %v1074 = vmul.f32 %v902, 0.1
  %v1075 = vmul.f32 %v905, 0.1
  %v1076 = vmul.f32 %v910, 0.1
  %v1077 = vmul.f32 %v913, 0.1
  %v1078 = vmul.f32 %v918, 0.1
  %v1079 = vmul.f32 %v921, 0.1
  %v1080 = vmul.f32 %v926, 0.1
  %v1081 = vmul.f32 %v929, 0.1
  %v1082 = vmul.f32 %v934, 0.1
  %v1083 = vmul.f32 %v937, 0.1
  %v1084 = vmul.f32 %v942, 0.1
  %v1085 = vmul.f32 %v945, 0.1
  %v1086 = vmul.f32 %v950, 0.1
  %v1087 = vmul.f32 %v953, 0.1
  %v1088 = vmul.f32 %v958, 0.1
  %v1089 = vmul.f32 %v961, 0.1
  %v1090 = vmul.f32 %v966, 0.1
  %v1091 = vmul.f32 %v969, 0.1
  %v1092 = vmul.f32 %v974, 0.1
  %v1093 = vmul.f32 %v977, 0.1
  %v1094 = vmul.f32 %v982, 0.1
  %v1095 = vmul.f32 %v985, 0.1
  %v1096 = vmul.f32 %v990, 0.1
  %v1097 = vmul.f32 %v993, 0.1
  %v1098 = vmul.f32 %v998, 0.1
  %v1099 = vmul.f32 %v1001, 0.1
  %v1100 = vsel %vm1004, %v814, %v1052
  %v1101 = vsel %vm1005, %v817, %v1053
  %v1102 = vsel %vm1006, %v822, %v1054
  %v1103 = vsel %vm1007, %v825, %v1055
  %v1104 = vsel %vm1008, %v830, %v1056
  %v1105 = vsel %vm1009, %v833, %v1057
  %v1106 = vsel %vm1010, %v838, %v1058
  %v1107 = vsel %vm1011, %v841, %v1059
  %v1108 = vsel %vm1012, %v846, %v1060
  %v1109 = vsel %vm1013, %v849, %v1061
  %v1110 = vsel %vm1014, %v854, %v1062
  %v1111 = vsel %vm1015, %v857, %v1063
  %v1112 = vsel %vm1016, %v862, %v1064
  %v1113 = vsel %vm1017, %v865, %v1065
  %v1114 = vsel %vm1018, %v870, %v1066
  %v1115 = vsel %vm1019, %v873, %v1067
  %v1116 = vsel %vm1020, %v878, %v1068
  %v1117 = vsel %vm1021, %v881, %v1069
  %v1118 = vsel %vm1022, %v886, %v1070
  %v1119 = vsel %vm1023, %v889, %v1071
  %v1120 = vsel %vm1024, %v894, %v1072
  %v1121 = vsel %vm1025, %v897, %v1073
  %v1122 = vsel %vm1026, %v902, %v1074
  %v1123 = vsel %vm1027, %v905, %v1075
  %v1124 = vsel %vm1028, %v910, %v1076
  %v1125 = vsel %vm1029, %v913, %v1077
  %v1126 = vsel %vm1030, %v918, %v1078
  %v1127 = vsel %vm1031, %v921, %v1079
  %v1128 = vsel %vm1032, %v926, %v1080
  %v1129 = vsel %vm1033, %v929, %v1081
  %v1130 = vsel %vm1034, %v934, %v1082
  %v1131 = vsel %vm1035, %v937, %v1083
  %v1132 = vsel %vm1036, %v942, %v1084
  %v1133 = vsel %vm1037, %v945, %v1085
  %v1134 = vsel %vm1038, %v950, %v1086
  %v1135 = vsel %vm1039, %v953, %v1087
  %v1136 = vsel %vm1040, %v958, %v1088
  %v1137 = vsel %vm1041, %v961, %v1089
  %v1138 = vsel %vm1042, %v966, %v1090
  %v1139 = vsel %vm1043, %v969, %v1091
  %v1140 = vsel %vm1044, %v974, %v1092
  %v1141 = vsel %vm1045, %v977, %v1093
  %v1142 = vsel %vm1046, %v982, %v1094
  %v1143 = vsel %vm1047, %v985, %v1095
  %v1144 = vsel %vm1048, %v990, %v1096
  %v1145 = vsel %vm1049, %v993, %v1097
  %v1146 = vsel %vm1050, %v998, %v1098
  %v1147 = vsel %vm1051, %v1001, %v1099
  %v1148 = vpack.c.bf16 %v1101, %v1100
  %v1149 = vpack.c.bf16 %v1103, %v1102
  %v1150 = vpack.c.bf16 %v1105, %v1104
  %v1151 = vpack.c.bf16 %v1107, %v1106
  %v1152 = vpack.c.bf16 %v1109, %v1108
  %v1153 = vpack.c.bf16 %v1111, %v1110
  %v1154 = vpack.c.bf16 %v1113, %v1112
  %v1155 = vpack.c.bf16 %v1115, %v1114
  %v1156 = vpack.c.bf16 %v1117, %v1116
  %v1157 = vpack.c.bf16 %v1119, %v1118
  %v1158 = vpack.c.bf16 %v1121, %v1120
  %v1159 = vpack.c.bf16 %v1123, %v1122
  %v1160 = vpack.c.bf16 %v1125, %v1124
  %v1161 = vpack.c.bf16 %v1127, %v1126
  %v1162 = vpack.c.bf16 %v1129, %v1128
  %v1163 = vpack.c.bf16 %v1131, %v1130
  %v1164 = vpack.c.bf16 %v1133, %v1132
  %v1165 = vpack.c.bf16 %v1135, %v1134
  %v1166 = vpack.c.bf16 %v1137, %v1136
  %v1167 = vpack.c.bf16 %v1139, %v1138
  %v1168 = vpack.c.bf16 %v1141, %v1140
  %v1169 = vpack.c.bf16 %v1143, %v1142
  %v1170 = vpack.c.bf16 %v1145, %v1144
  %v1171 = vpack.c.bf16 %v1147, %v1146
  %v1172 = vld [vmem:[%s5] sm:$0xf]
  %v1173 = vld [vmem:[%s5 + $0x4] sm:$0xf]
  %v1174 = vld [vmem:[%s5 + $0x8] sm:$0xf]
  %v1175 = vld [vmem:[%s5 + $0xc] sm:$0xf]
  %v1176 = vld [vmem:[%s6] sm:$0x1]
  %v1178 = vlaneseq
  %v1179 = vshrl.u32 %v1178, 7
  %v1180 = vsub.s32 0, %v1179
  %v1181 = vrot.slane %v1176, %v1180
  %v1187 = vunpack.c.l.b16 %v1172
  %v1188 = vunpack.c.l.b16 %v1173
  %v1189 = vunpack.c.l.b16 %v1174
  %v1190 = vunpack.c.l.b16 %v1175
  %v1191 = vpack.c.b16 %v1188, %v1187
  %v1192 = vpack.c.b16 %v1190, %v1189
  %v1196 = vsel %vm706, %v1148, 0
  %v1199 = vsel %vm706, %v1149, 0
  %v1202 = vsel %vm706, %v1150, 0
  %v1205 = vsel %vm706, %v1151, 0
  %v1208 = vsel %vm706, %v1152, 0
  %v1211 = vsel %vm706, %v1153, 0
  %v1214 = vsel %vm706, %v1154, 0
  %v1217 = vsel %vm706, %v1155, 0
  %v1220 = vsel %vm706, %v1156, 0
  %v1223 = vsel %vm706, %v1157, 0
  %v1226 = vsel %vm706, %v1158, 0
  %v1229 = vsel %vm706, %v1159, 0
  %v1232 = vsel %vm706, %v1160, 0
  %v1235 = vsel %vm706, %v1161, 0
  %v1238 = vsel %vm706, %v1162, 0
  %v1241 = vsel %vm706, %v1163, 0
  %v1244 = vsel %vm706, %v1164, 0
  %v1247 = vsel %vm706, %v1165, 0
  %v1250 = vsel %vm706, %v1166, 0
  %v1253 = vsel %vm706, %v1167, 0
  %v1256 = vsel %vm706, %v1168, 0
  %v1259 = vsel %vm706, %v1169, 0
  %v1262 = vsel %vm706, %v1170, 0
  %v1265 = vsel %vm706, %v1171, 0
  %1267 = vmatprep.subr.bf16.mxu0 0
  %1268 = vmatpush1.bf16.msra.mxu0 %v1191
  %1269 = vmatprep.subr.bf16.mxu0 0
  %1270 = vmatpush1.bf16.msra.mxu0 %v1192
  %1271 = vmatprep.subr.bf16.mxu0 0
  %1272 = vmatpush1.bf16.msra.mxu0 0
  %1273 = vmatprep.subr.bf16.mxu0 0
  %1274 = vmatpush1.bf16.msra.mxu0 0
  %1275 = vmatprep.subr.bf16.mxu0 0
  %1276 = vmatpush1.bf16.msra.mxu0 0
  %1277 = vmatprep.subr.bf16.mxu0 0
  %1278 = vmatpush1.bf16.msra.mxu0 0
  %1279 = vmatprep.subr.bf16.mxu0 0
  %1280 = vmatpush1.bf16.msra.mxu0 0
  %1281 = vmatprep.subr.bf16.mxu0 0
  %1282 = vmatpush1.bf16.msra.mxu0 0
  %1283 = vmatprep.subr.bf16.mxu0 0
  %1284 = vmatpush1.bf16.msra.mxu0 0
  %1285 = vmatprep.subr.bf16.mxu0 0
  %1286 = vmatpush1.bf16.msra.mxu0 0
  %1287 = vmatprep.subr.bf16.mxu0 0
  %1288 = vmatpush1.bf16.msra.mxu0 0
  %1289 = vmatprep.subr.bf16.mxu0 0
  %1290 = vmatpush1.bf16.msra.mxu0 0
  %1291 = vmatprep.subr.bf16.mxu0 0
  %1292 = vmatpush1.bf16.msra.mxu0 0
  %1293 = vmatprep.subr.bf16.mxu0 0
  %1294 = vmatpush1.bf16.msra.mxu0 0
  %1295 = vmatprep.subr.bf16.mxu0 0
  %1296 = vmatpush1.bf16.msra.mxu0 0
  %1297 = vmatprep.subr.bf16.mxu0 0
  %1298 = vmatpush1.bf16.msra.mxu0 0
  %1299 = vmatprep.mubr.bf16.mxu0 0
  %1300 = vmatmul.mubr.bf16.gmra.mrb[0].mxu0 %v1196
  %v1301 = vpop.f32.mrb[0].mxu0
  %v1302 = vadd.f32 %v1181, %v1301
  %v1303 = vpop.f32.mrb[0].mxu0
  %v1304 = vpop.f32.mrb[0].mxu0
  %v1305 = vadd.f32 %v1181, %v1304
  %v1306 = vpop.f32.mrb[0].mxu0
  %1307 = vmatprep.mubr.bf16.mxu0 0
  %1308 = vmatmul.mubr.bf16.gmra.mrb[0].mxu0 %v1199
  %v1309 = vpop.f32.mrb[0].mxu0
  %v1310 = vadd.f32 %v1181, %v1309
  %v1311 = vpop.f32.mrb[0].mxu0
  %v1312 = vpop.f32.mrb[0].mxu0
  %v1313 = vadd.f32 %v1181, %v1312
  %v1314 = vpop.f32.mrb[0].mxu0
  %1315 = vmatprep.mubr.bf16.mxu0 0
  %1316 = vmatmul.mubr.bf16.gmra.mrb[0].mxu0 %v1202
  %v1317 = vpop.f32.mrb[0].mxu0
  %v1318 = vadd.f32 %v1181, %v1317
  %v1319 = vpop.f32.mrb[0].mxu0
  %v1320 = vpop.f32.mrb[0].mxu0
  %v1321 = vadd.f32 %v1181, %v1320
  %v1322 = vpop.f32.mrb[0].mxu0
  %1323 = vmatprep.mubr.bf16.mxu0 0
  %1324 = vmatmul.mubr.bf16.gmra.mrb[0].mxu0 %v1205
  %v1325 = vpop.f32.mrb[0].mxu0
  %v1326 = vadd.f32 %v1181, %v1325
  %v1327 = vpop.f32.mrb[0].mxu0
  %v1328 = vpop.f32.mrb[0].mxu0
  %v1329 = vadd.f32 %v1181, %v1328
  %v1330 = vpop.f32.mrb[0].mxu0
  %1331 = vmatprep.mubr.bf16.mxu0 0
  %1332 = vmatmul.mubr.bf16.gmra.mrb[0].mxu0 %v1208
  %v1333 = vpop.f32.mrb[0].mxu0
  %v1334 = vadd.f32 %v1181, %v1333
  %v1335 = vpop.f32.mrb[0].mxu0
  %v1336 = vpop.f32.mrb[0].mxu0
  %v1337 = vadd.f32 %v1181, %v1336
  %v1338 = vpop.f32.mrb[0].mxu0
  %1339 = vmatprep.mubr.bf16.mxu0 0
  %1340 = vmatmul.mubr.bf16.gmra.mrb[0].mxu0 %v1211
  %v1341 = vpop.f32.mrb[0].mxu0
  %v1342 = vadd.f32 %v1181, %v1341
  %v1343 = vpop.f32.mrb[0].mxu0
  %v1344 = vpop.f32.mrb[0].mxu0
  %v1345 = vadd.f32 %v1181, %v1344
  %v1346 = vpop.f32.mrb[0].mxu0
  %1347 = vmatprep.mubr.bf16.mxu0 0
  %1348 = vmatmul.mubr.bf16.gmra.mrb[0].mxu0 %v1214
  %v1349 = vpop.f32.mrb[0].mxu0
  %v1350 = vadd.f32 %v1181, %v1349
  %v1351 = vpop.f32.mrb[0].mxu0
  %v1352 = vpop.f32.mrb[0].mxu0
  %v1353 = vadd.f32 %v1181, %v1352
  %v1354 = vpop.f32.mrb[0].mxu0
  %1355 = vmatprep.mubr.bf16.mxu0 0
  %1356 = vmatmul.mubr.bf16.gmra.mrb[0].mxu0 %v1217
  %v1357 = vpop.f32.mrb[0].mxu0
  %v1358 = vadd.f32 %v1181, %v1357
  %v1359 = vpop.f32.mrb[0].mxu0
  %v1360 = vpop.f32.mrb[0].mxu0
  %v1361 = vadd.f32 %v1181, %v1360
  %v1362 = vpop.f32.mrb[0].mxu0
  %1363 = vmatprep.mubr.bf16.mxu0 0
  %1364 = vmatmul.mubr.bf16.gmra.mrb[0].mxu0 %v1220
  %v1365 = vpop.f32.mrb[0].mxu0
  %v1366 = vadd.f32 %v1181, %v1365
  %v1367 = vpop.f32.mrb[0].mxu0
  %v1368 = vpop.f32.mrb[0].mxu0
  %v1369 = vadd.f32 %v1181, %v1368
  %v1370 = vpop.f32.mrb[0].mxu0
  %1371 = vmatprep.mubr.bf16.mxu0 0
  %1372 = vmatmul.mubr.bf16.gmra.mrb[0].mxu0 %v1223
  %v1373 = vpop.f32.mrb[0].mxu0
  %v1374 = vadd.f32 %v1181, %v1373
  %v1375 = vpop.f32.mrb[0].mxu0
  %v1376 = vpop.f32.mrb[0].mxu0
  %v1377 = vadd.f32 %v1181, %v1376
  %v1378 = vpop.f32.mrb[0].mxu0
  %1379 = vmatprep.mubr.bf16.mxu0 0
  %1380 = vmatmul.mubr.bf16.gmra.mrb[0].mxu0 %v1226
  %v1381 = vpop.f32.mrb[0].mxu0
  %v1382 = vadd.f32 %v1181, %v1381
  %v1383 = vpop.f32.mrb[0].mxu0
  %v1384 = vpop.f32.mrb[0].mxu0
  %v1385 = vadd.f32 %v1181, %v1384
  %v1386 = vpop.f32.mrb[0].mxu0
  %1387 = vmatprep.mubr.bf16.mxu0 0
  %1388 = vmatmul.mubr.bf16.gmra.mrb[0].mxu0 %v1229
  %v1389 = vpop.f32.mrb[0].mxu0
  %v1390 = vadd.f32 %v1181, %v1389
  %v1391 = vpop.f32.mrb[0].mxu0
  %v1392 = vpop.f32.mrb[0].mxu0
  %v1393 = vadd.f32 %v1181, %v1392
  %v1394 = vpop.f32.mrb[0].mxu0
  %1395 = vmatprep.mubr.bf16.mxu0 0
  %1396 = vmatmul.mubr.bf16.gmra.mrb[0].mxu0 %v1232
  %v1397 = vpop.f32.mrb[0].mxu0
  %v1398 = vadd.f32 %v1181, %v1397
  %v1399 = vpop.f32.mrb[0].mxu0
  %v1400 = vpop.f32.mrb[0].mxu0
  %v1401 = vadd.f32 %v1181, %v1400
  %v1402 = vpop.f32.mrb[0].mxu0
  %1403 = vmatprep.mubr.bf16.mxu0 0
  %1404 = vmatmul.mubr.bf16.gmra.mrb[0].mxu0 %v1235
  %v1405 = vpop.f32.mrb[0].mxu0
  %v1406 = vadd.f32 %v1181, %v1405
  %v1407 = vpop.f32.mrb[0].mxu0
  %v1408 = vpop.f32.mrb[0].mxu0
  %v1409 = vadd.f32 %v1181, %v1408
  %v1410 = vpop.f32.mrb[0].mxu0
  %1411 = vmatprep.mubr.bf16.mxu0 0
  %1412 = vmatmul.mubr.bf16.gmra.mrb[0].mxu0 %v1238
  %v1413 = vpop.f32.mrb[0].mxu0
  %v1414 = vadd.f32 %v1181, %v1413
  %v1415 = vpop.f32.mrb[0].mxu0
  %v1416 = vpop.f32.mrb[0].mxu0
  %v1417 = vadd.f32 %v1181, %v1416
  %v1418 = vpop.f32.mrb[0].mxu0
  %1419 = vmatprep.mubr.bf16.mxu0 0
  %1420 = vmatmul.mubr.bf16.gmra.mrb[0].mxu0 %v1241
  %v1421 = vpop.f32.mrb[0].mxu0
  %v1422 = vadd.f32 %v1181, %v1421
  %v1423 = vpop.f32.mrb[0].mxu0
  %v1424 = vpop.f32.mrb[0].mxu0
  %v1425 = vadd.f32 %v1181, %v1424
  %v1426 = vpop.f32.mrb[0].mxu0
  %1427 = vmatprep.mubr.bf16.mxu0 0
  %1428 = vmatmul.mubr.bf16.gmra.mrb[0].mxu0 %v1244
  %v1429 = vpop.f32.mrb[0].mxu0
  %v1430 = vadd.f32 %v1181, %v1429
  %v1431 = vpop.f32.mrb[0].mxu0
  %v1432 = vpop.f32.mrb[0].mxu0
  %v1433 = vadd.f32 %v1181, %v1432
  %v1434 = vpop.f32.mrb[0].mxu0
  %1435 = vmatprep.mubr.bf16.mxu0 0
  %1436 = vmatmul.mubr.bf16.gmra.mrb[0].mxu0 %v1247
  %v1437 = vpop.f32.mrb[0].mxu0
  %v1438 = vadd.f32 %v1181, %v1437
  %v1439 = vpop.f32.mrb[0].mxu0
  %v1440 = vpop.f32.mrb[0].mxu0
  %v1441 = vadd.f32 %v1181, %v1440
  %v1442 = vpop.f32.mrb[0].mxu0
  %1443 = vmatprep.mubr.bf16.mxu0 0
  %1444 = vmatmul.mubr.bf16.gmra.mrb[0].mxu0 %v1250
  %v1445 = vpop.f32.mrb[0].mxu0
  %v1446 = vadd.f32 %v1181, %v1445
  %v1447 = vpop.f32.mrb[0].mxu0
  %v1448 = vpop.f32.mrb[0].mxu0
  %v1449 = vadd.f32 %v1181, %v1448
  %v1450 = vpop.f32.mrb[0].mxu0
  %1451 = vmatprep.mubr.bf16.mxu0 0
  %1452 = vmatmul.mubr.bf16.gmra.mrb[0].mxu0 %v1253
  %v1453 = vpop.f32.mrb[0].mxu0
  %v1454 = vadd.f32 %v1181, %v1453
  %v1455 = vpop.f32.mrb[0].mxu0
  %v1456 = vpop.f32.mrb[0].mxu0
  %v1457 = vadd.f32 %v1181, %v1456
  %v1458 = vpop.f32.mrb[0].mxu0
  %1459 = vmatprep.mubr.bf16.mxu0 0
  %1460 = vmatmul.mubr.bf16.gmra.mrb[0].mxu0 %v1256
  %v1461 = vpop.f32.mrb[0].mxu0
  %v1462 = vadd.f32 %v1181, %v1461
  %v1463 = vpop.f32.mrb[0].mxu0
  %v1464 = vpop.f32.mrb[0].mxu0
  %v1465 = vadd.f32 %v1181, %v1464
  %v1466 = vpop.f32.mrb[0].mxu0
  %1467 = vmatprep.mubr.bf16.mxu0 0
  %1468 = vmatmul.mubr.bf16.gmra.mrb[0].mxu0 %v1259
  %v1469 = vpop.f32.mrb[0].mxu0
  %v1470 = vadd.f32 %v1181, %v1469
  %v1471 = vpop.f32.mrb[0].mxu0
  %v1472 = vpop.f32.mrb[0].mxu0
  %v1473 = vadd.f32 %v1181, %v1472
  %v1474 = vpop.f32.mrb[0].mxu0
  %1475 = vmatprep.mubr.bf16.mxu0 0
  %1476 = vmatmul.mubr.bf16.gmra.mrb[0].mxu0 %v1262
  %v1477 = vpop.f32.mrb[0].mxu0
  %v1478 = vadd.f32 %v1181, %v1477
  %v1479 = vpop.f32.mrb[0].mxu0
  %v1480 = vpop.f32.mrb[0].mxu0
  %v1481 = vadd.f32 %v1181, %v1480
  %v1482 = vpop.f32.mrb[0].mxu0
  %1483 = vmatprep.mubr.bf16.mxu0 0
  %1484 = vmatmul.mubr.bf16.gmra.mrb[0].mxu0 %v1265
  %v1485 = vpop.f32.mrb[0].mxu0
  %v1486 = vadd.f32 %v1181, %v1485
  %v1487 = vpop.f32.mrb[0].mxu0
  %v1488 = vpop.f32.mrb[0].mxu0
  %v1489 = vadd.f32 %v1181, %v1488
  %v1490 = vpop.f32.mrb[0].mxu0
  %1491 = vdwg.mxu0
  %v1492 = vadd.f32 %v1302, %v1334
  %v1493 = vadd.f32 %v1305, %v1337
  %v1494 = vadd.f32 %v1310, %v1342
  %v1495 = vadd.f32 %v1313, %v1345
  %v1496 = vadd.f32 %v1318, %v1350
  %v1497 = vadd.f32 %v1321, %v1353
  %v1498 = vadd.f32 %v1326, %v1358
  %v1499 = vadd.f32 %v1329, %v1361
  %v1500 = vadd.f32 %v1492, %v1366
  %v1501 = vadd.f32 %v1493, %v1369
  %v1502 = vadd.f32 %v1494, %v1374
  %v1503 = vadd.f32 %v1495, %v1377
  %v1504 = vadd.f32 %v1496, %v1382
  %v1505 = vadd.f32 %v1497, %v1385
  %v1506 = vadd.f32 %v1498, %v1390
  %v1507 = vadd.f32 %v1499, %v1393
  %v1508 = vadd.f32 %v1500, %v1398
  %v1509 = vadd.f32 %v1501, %v1401
  %v1510 = vadd.f32 %v1502, %v1406
  %v1511 = vadd.f32 %v1503, %v1409
  %v1512 = vadd.f32 %v1504, %v1414
  %v1513 = vadd.f32 %v1505, %v1417
  %v1514 = vadd.f32 %v1506, %v1422
  %v1515 = vadd.f32 %v1507, %v1425
  %v1516 = vadd.f32 %v1508, %v1430
  %v1517 = vadd.f32 %v1509, %v1433
  %v1518 = vadd.f32 %v1510, %v1438
  %v1519 = vadd.f32 %v1511, %v1441
  %v1520 = vadd.f32 %v1512, %v1446
  %v1521 = vadd.f32 %v1513, %v1449
  %v1522 = vadd.f32 %v1514, %v1454
  %v1523 = vadd.f32 %v1515, %v1457
  %v1524 = vadd.f32 %v1516, %v1462
  %v1525 = vadd.f32 %v1517, %v1465
  %v1526 = vadd.f32 %v1518, %v1470
  %v1527 = vadd.f32 %v1519, %v1473
  %v1528 = vadd.f32 %v1520, %v1478
  %v1529 = vadd.f32 %v1521, %v1481
  %v1530 = vadd.f32 %v1522, %v1486
  %v1531 = vadd.f32 %v1523, %v1489
  %1532 = vst [vmem:[%s7] sm:$0xff] %v1524
  %1533 = vst [vmem:[%s7 + $0x8] sm:$0xff] %v1525
  %1534 = vst [vmem:[%s7 + $0x10] sm:$0xff] %v1526
  %1535 = vst [vmem:[%s7 + $0x18] sm:$0xff] %v1527
  %1536 = vst [vmem:[%s7 + $0x20] sm:$0xff] %v1528
  %1537 = vst [vmem:[%s7 + $0x28] sm:$0xff] %v1529
  %1538 = vst [vmem:[%s7 + $0x30] sm:$0xff] %v1530
  %1539 = vst [vmem:[%s7 + $0x38] sm:$0xff] %v1531
  // Predicated region
  $region30: #{flow_ml_error_forward.14} parent=0 // pred_check
    _
  $region31: #{flow_ml_error_forward.14} parent=0 // pred_check_branch
    %1541 = sbr.rel (0) target = $region33
  $region32: #{flow_ml_error_forward.14} parent=0 // pred_region
    _
  $region33: #{flow_ml_error_forward.14} parent=0 // pred_fallthru
    _
  // Predicated region
  $region34: #{flow_ml_error_forward.14} parent=0 // pred_check
    _
  $region35: #{flow_ml_error_forward.14} parent=0 // pred_check_branch
    %1543 = sbr.rel (0) target = $region37
  $region36: #{flow_ml_error_forward.14} parent=0 // pred_region
    _
  $region37: #{flow_ml_error_forward.14} parent=0 // pred_fallthru
    _

// kernel: flow_ml_error_forward.19
$region0: #{flow_ml_error_forward.19}
  #allocation0 [shape = 'u32[]', space=smem, size = 0x4, offset = 0x4, fixed_abs, tag = 'smem constant byte address 0x4 - core index']
  #allocation1 [shape = 'u32[144,128]{1,0:T(1,128)}', space=vmem, size = 0x12000, scoped, tag = 'internal scratch']
  %s0 = inlined_call_operand.vmem [shape: f32[64,192], index: 0, kind: input, shape index: {}]
  %s1 = inlined_call_operand.vmem [shape: f32[192,64], index: 1, kind: input, shape index: {}]
  %s2 = inlined_call_operand.vmem [shape: f32[64,64], index: 2, kind: output, shape index: {}]
  %s3 = sld [smem:[#allocation0]]
  $region18: #{flow_ml_error_forward.19} parent=0
    _
  %s5 = ssub.s32 1, %s3
  %s6 = scalar_select 0, %s5, %s3
  // Predicated region
  $region2: #{flow_ml_error_forward.19} parent=0 // pred_check
    _
  $region3: #{flow_ml_error_forward.19} parent=0 // pred_check_branch
    %8 = sbr.rel (0) target = $region5
  $region4: #{flow_ml_error_forward.19} parent=0 // pred_region
    _
  $region5: #{flow_ml_error_forward.19} parent=0 // pred_fallthru
    _
  // Predicated region
  $region6: #{flow_ml_error_forward.19} parent=0 // pred_check
    _
  $region7: #{flow_ml_error_forward.19} parent=0 // pred_check_branch
    %10 = sbr.rel (0) target = $region9
  $region8: #{flow_ml_error_forward.19} parent=0 // pred_region
    _
  $region9: #{flow_ml_error_forward.19} parent=0 // pred_fallthru
    _
  %v11 = vld [vmem:[%s0] sm:$0xff]
  %v12 = vld [vmem:[%s0 + $0x8] sm:$0xff]
  %v13 = vld [vmem:[%s0 + $0x10] sm:$0xff]
  %v14 = vld [vmem:[%s0 + $0x18] sm:$0xff]
  %v15 = vld [vmem:[%s0 + $0x20] sm:$0xff]
  %v16 = vld [vmem:[%s0 + $0x28] sm:$0xff]
  %v17 = vld [vmem:[%s0 + $0x30] sm:$0xff]
  %v18 = vld [vmem:[%s0 + $0x38] sm:$0xff]
  %v19 = vld [vmem:[%s0 + $0x40] sm:$0xff]
  %v20 = vld [vmem:[%s0 + $0x48] sm:$0xff]
  %v21 = vld [vmem:[%s0 + $0x50] sm:$0xff]
  %v22 = vld [vmem:[%s0 + $0x58] sm:$0xff]
  %v23 = vld [vmem:[%s0 + $0x60] sm:$0xff]
  %v24 = vld [vmem:[%s0 + $0x68] sm:$0xff]
  %v25 = vld [vmem:[%s0 + $0x70] sm:$0xff]
  %v26 = vld [vmem:[%s0 + $0x78] sm:$0xff]
  %v27 = vld [vmem:[%s1] sm:$0xff]
  %v28 = vld [vmem:[%s1 + $0x8] sm:$0xff]
  %v29 = vld [vmem:[%s1 + $0x10] sm:$0xff]
  %v30 = vld [vmem:[%s1 + $0x18] sm:$0xff]
  %v31 = vld [vmem:[%s1 + $0x20] sm:$0xff]
  %v32 = vld [vmem:[%s1 + $0x28] sm:$0xff]
  %v33 = vld [vmem:[%s1 + $0x30] sm:$0xff]
  %v34 = vld [vmem:[%s1 + $0x38] sm:$0xff]
  %v35 = vld [vmem:[%s1 + $0x40] sm:$0xff]
  %v36 = vld [vmem:[%s1 + $0x48] sm:$0xff]
  %v37 = vld [vmem:[%s1 + $0x50] sm:$0xff]
  %v38 = vld [vmem:[%s1 + $0x58] sm:$0xff]
  %v39 = vld [vmem:[%s1 + $0x60] sm:$0xff]
  %v40 = vld [vmem:[%s1 + $0x68] sm:$0xff]
  %v41 = vld [vmem:[%s1 + $0x70] sm:$0xff]
  %v42 = vld [vmem:[%s1 + $0x78] sm:$0xff]
  %v43 = vld [vmem:[%s1 + $0x80] sm:$0xff]
  %v44 = vld [vmem:[%s1 + $0x88] sm:$0xff]
  %v45 = vld [vmem:[%s1 + $0x90] sm:$0xff]
  %v46 = vld [vmem:[%s1 + $0x98] sm:$0xff]
  %v47 = vld [vmem:[%s1 + $0xa0] sm:$0xff]
  %v48 = vld [vmem:[%s1 + $0xa8] sm:$0xff]
  %v49 = vld [vmem:[%s1 + $0xb0] sm:$0xff]
  %v50 = vld [vmem:[%s1 + $0xb8] sm:$0xff]
  %v51 = vmul.f32 %v11, %v11
  %v52 = vmul.f32 %v12, %v12
  %v53 = vmul.f32 %v13, %v13
  %v54 = vmul.f32 %v14, %v14
  %v55 = vmul.f32 %v15, %v15
  %v56 = vmul.f32 %v16, %v16
  %v57 = vmul.f32 %v17, %v17
  %v58 = vmul.f32 %v18, %v18
  %v59 = vmul.f32 %v19, %v19
  %v60 = vmul.f32 %v20, %v20
  %v61 = vmul.f32 %v21, %v21
  %v62 = vmul.f32 %v22, %v22
  %v63 = vmul.f32 %v23, %v23
  %v64 = vmul.f32 %v24, %v24
  %v65 = vmul.f32 %v25, %v25
  %v66 = vmul.f32 %v26, %v26
  %vm67 = vcmask 523264
  %v68 = vsel %vm67, %v52, 0.0
  %v69 = vadd.f32 %v51, %v68
  %70 = vadd.xlane.f32.xlu0 %v69
  %v71 = vpop.xlane.xlu0 %70
  %v72 = vsel %vm67, %v54, 0.0
  %v73 = vadd.f32 %v53, %v72
  %74 = vadd.xlane.f32.xlu0 %v73
  %v75 = vpop.xlane.xlu0 %74
  %v76 = vsel %vm67, %v56, 0.0
  %v77 = vadd.f32 %v55, %v76
  %78 = vadd.xlane.f32.xlu0 %v77
  %v79 = vpop.xlane.xlu0 %78
  %v80 = vsel %vm67, %v58, 0.0
  %v81 = vadd.f32 %v57, %v80
  %82 = vadd.xlane.f32.xlu0 %v81
  %v83 = vpop.xlane.xlu0 %82
  %v84 = vsel %vm67, %v60, 0.0
  %v85 = vadd.f32 %v59, %v84
  %86 = vadd.xlane.f32.xlu0 %v85
  %v87 = vpop.xlane.xlu0 %86
  %v88 = vsel %vm67, %v62, 0.0
  %v89 = vadd.f32 %v61, %v88
  %90 = vadd.xlane.f32.xlu0 %v89
  %v91 = vpop.xlane.xlu0 %90
  %v92 = vsel %vm67, %v64, 0.0
  %v93 = vadd.f32 %v63, %v92
  %94 = vadd.xlane.f32.xlu0 %v93
  %v95 = vpop.xlane.xlu0 %94
  %v96 = vsel %vm67, %v66, 0.0
  %v97 = vadd.f32 %v65, %v96
  %98 = vadd.xlane.f32.xlu0 %v97
  %v99 = vpop.xlane.xlu0 %98
  %v100 = vmul.f32 %v27, %v27
  %v101 = vmul.f32 %v28, %v28
  %v102 = vmul.f32 %v29, %v29
  %v103 = vmul.f32 %v30, %v30
  %v104 = vmul.f32 %v31, %v31
  %v105 = vmul.f32 %v32, %v32
  %v106 = vmul.f32 %v33, %v33
  %v107 = vmul.f32 %v34, %v34
  %v108 = vmul.f32 %v35, %v35
  %v109 = vmul.f32 %v36, %v36
  %v110 = vmul.f32 %v37, %v37
  %v111 = vmul.f32 %v38, %v38
  %v112 = vmul.f32 %v39, %v39
  %v113 = vmul.f32 %v40, %v40
  %v114 = vmul.f32 %v41, %v41
  %v115 = vmul.f32 %v42, %v42
  %v116 = vmul.f32 %v43, %v43
  %v117 = vmul.f32 %v44, %v44
  %v118 = vmul.f32 %v45, %v45
  %v119 = vmul.f32 %v46, %v46
  %v120 = vmul.f32 %v47, %v47
  %v121 = vmul.f32 %v48, %v48
  %v122 = vmul.f32 %v49, %v49
  %v123 = vmul.f32 %v50, %v50
  %v124 = vsel %vm67, %v100, 0.0
  %v125 = vsel %vm67, %v101, 0.0
  %v126 = vadd.f32 %v124, %v125
  %v127 = vsel %vm67, %v102, 0.0
  %v128 = vadd.f32 %v126, %v127
  %v129 = vsel %vm67, %v103, 0.0
  %v130 = vadd.f32 %v128, %v129
  %v131 = vsel %vm67, %v104, 0.0
  %v132 = vadd.f32 %v130, %v131
  %v133 = vsel %vm67, %v105, 0.0
  %v134 = vadd.f32 %v132, %v133
  %v135 = vsel %vm67, %v106, 0.0
  %v136 = vadd.f32 %v134, %v135
  %v137 = vsel %vm67, %v107, 0.0
  %v138 = vadd.f32 %v136, %v137
  %v139 = vsel %vm67, %v108, 0.0
  %v140 = vadd.f32 %v138, %v139
  %v141 = vsel %vm67, %v109, 0.0
  %v142 = vadd.f32 %v140, %v141
  %v143 = vsel %vm67, %v110, 0.0
  %v144 = vadd.f32 %v142, %v143
  %v145 = vsel %vm67, %v111, 0.0
  %v146 = vadd.f32 %v144, %v145
  %v147 = vsel %vm67, %v112, 0.0
  %v148 = vadd.f32 %v146, %v147
  %v149 = vsel %vm67, %v113, 0.0
  %v150 = vadd.f32 %v148, %v149
  %v151 = vsel %vm67, %v114, 0.0
  %v152 = vadd.f32 %v150, %v151
  %v153 = vsel %vm67, %v115, 0.0
  %v154 = vadd.f32 %v152, %v153
  %v155 = vsel %vm67, %v116, 0.0
  %v156 = vadd.f32 %v154, %v155
  %v157 = vsel %vm67, %v117, 0.0
  %v158 = vadd.f32 %v156, %v157
  %v159 = vsel %vm67, %v118, 0.0
  %v160 = vadd.f32 %v158, %v159
  %v161 = vsel %vm67, %v119, 0.0
  %v162 = vadd.f32 %v160, %v161
  %v163 = vsel %vm67, %v120, 0.0
  %v164 = vadd.f32 %v162, %v163
  %v165 = vsel %vm67, %v121, 0.0
  %v166 = vadd.f32 %v164, %v165
  %v167 = vsel %vm67, %v122, 0.0
  %v168 = vadd.f32 %v166, %v167
  %v169 = vsel %vm67, %v123, 0.0
  %v170 = vadd.f32 %v168, %v169
  %v171 = vrot.slane %v170, 4
  %v172 = vadd.f32 %v170, %v171
  %v173 = vrot.slane %v172, 2
  %v174 = vadd.f32 %v172, %v173
  %v175 = vrot.slane %v174, 1
  %v176 = vadd.f32 %v174, %v175
  %v178 = vsel %vm67, %v12, 0
  %v181 = vsel %vm67, %v14, 0
  %v184 = vsel %vm67, %v16, 0
  %v187 = vsel %vm67, %v18, 0
  %v190 = vsel %vm67, %v20, 0
  %v193 = vsel %vm67, %v22, 0
  %v196 = vsel %vm67, %v24, 0
  %v199 = vsel %vm67, %v26, 0
  %201 = vmatprep.subr.mxu0 0.0
  %202 = vmatpush1.msra.mxu0 %v27
  %203 = vmatprep.subr.mxu0 0.0
  %204 = vmatpush1.msra.mxu0 %v28
  %205 = vmatprep.subr.mxu0 0.0
  %206 = vmatpush1.msra.mxu0 %v29
  %207 = vmatprep.subr.mxu0 0.0
  %208 = vmatpush1.msra.mxu0 %v30
  %209 = vmatprep.subr.mxu0 0.0
  %210 = vmatpush1.msra.mxu0 %v31
  %211 = vmatprep.subr.mxu0 0.0
  %212 = vmatpush1.msra.mxu0 %v32
  %213 = vmatprep.subr.mxu0 0.0
  %214 = vmatpush1.msra.mxu0 %v33
  %215 = vmatprep.subr.mxu0 0.0
  %216 = vmatpush1.msra.mxu0 %v34
  %217 = vmatprep.subr.mxu0 0.0
  %218 = vmatpush1.msra.mxu0 %v35
  %219 = vmatprep.subr.mxu0 0.0
  %220 = vmatpush1.msra.mxu0 %v36
  %221 = vmatprep.subr.mxu0 0.0
  %222 = vmatpush1.msra.mxu0 %v37
  %223 = vmatprep.subr.mxu0 0.0
  %224 = vmatpush1.msra.mxu0 %v38
  %225 = vmatprep.subr.mxu0 0.0
  %226 = vmatpush1.msra.mxu0 %v39
  %227 = vmatprep.subr.mxu0 0.0
  %228 = vmatpush1.msra.mxu0 %v40
  %229 = vmatprep.subr.mxu0 0.0
  %230 = vmatpush1.msra.mxu0 %v41
  %231 = vmatprep.subr.mxu0 0.0
  %232 = vmatpush1.msra.mxu0 %v42
  %233 = vmatprep.subr.mxu0 0.0
  %234 = vmatpush1.msra.mxu0 %v43
  %235 = vmatprep.subr.mxu0 0.0
  %236 = vmatpush1.msra.mxu0 %v44
  %237 = vmatprep.subr.mxu0 0.0
  %238 = vmatpush1.msra.mxu0 %v45
  %239 = vmatprep.subr.mxu0 0.0
  %240 = vmatpush1.msra.mxu0 %v46
  %241 = vmatprep.subr.mxu0 0.0
  %242 = vmatpush1.msra.mxu0 %v47
  %243 = vmatprep.subr.mxu0 0.0
  %244 = vmatpush1.msra.mxu0 %v48
  %245 = vmatprep.subr.mxu0 0.0
  %246 = vmatpush1.msra.mxu0 %v49
  %247 = vmatprep.subr.mxu0 0.0
  %248 = vmatpush1.msra.mxu0 %v50
  %249 = vmatprep.subr.mxu0 0.0
  %250 = vmatpush1.msra.mxu0 0.0
  %251 = vmatprep.subr.mxu0 0.0
  %252 = vmatpush1.msra.mxu0 0.0
  %253 = vmatprep.subr.mxu0 0.0
  %254 = vmatpush1.msra.mxu0 0.0
  %255 = vmatprep.subr.mxu0 0.0
  %256 = vmatpush1.msra.mxu0 0.0
  %257 = vmatprep.subr.mxu0 0.0
  %258 = vmatpush1.msra.mxu0 0.0
  %259 = vmatprep.subr.mxu0 0.0
  %260 = vmatpush1.msra.mxu0 0.0
  %261 = vmatprep.subr.mxu0 0.0
  %262 = vmatpush1.msra.mxu0 0.0
  %263 = vmatprep.subr.mxu0 0.0
  %264 = vmatpush1.msra.mxu0 0.0
  %265 = vmatprep.mubr.f32.mxu0 %v178
  %266 = vmatmul.mubr.f32.gmra.mrb[0].mxu0 %v11
  %v267 = vpop.f32.mrb[0].mxu0
  %v268 = vadd.f32 0.0, %v267
  %v269 = vpop.f32.mrb[0].mxu0
  %270 = vmatprep.mubr.f32.mxu0 %v181
  %271 = vmatmul.mubr.f32.gmra.mrb[0].mxu0 %v13
  %v272 = vpop.f32.mrb[0].mxu0
  %v273 = vadd.f32 0.0, %v272
  %v274 = vpop.f32.mrb[0].mxu0
  %275 = vmatprep.mubr.f32.mxu0 %v184
  %276 = vmatmul.mubr.f32.gmra.mrb[0].mxu0 %v15
  %v277 = vpop.f32.mrb[0].mxu0
  %v278 = vadd.f32 0.0, %v277
  %v279 = vpop.f32.mrb[0].mxu0
  %280 = vmatprep.mubr.f32.mxu0 %v187
  %281 = vmatmul.mubr.f32.gmra.mrb[0].mxu0 %v17
  %v282 = vpop.f32.mrb[0].mxu0
  %v283 = vadd.f32 0.0, %v282
  %v284 = vpop.f32.mrb[0].mxu0
  %285 = vmatprep.mubr.f32.mxu0 %v190
  %286 = vmatmul.mubr.f32.gmra.mrb[0].mxu0 %v19
  %v287 = vpop.f32.mrb[0].mxu0
  %v288 = vadd.f32 0.0, %v287
  %v289 = vpop.f32.mrb[0].mxu0
  %290 = vmatprep.mubr.f32.mxu0 %v193
  %291 = vmatmul.mubr.f32.gmra.mrb[0].mxu0 %v21
  %v292 = vpop.f32.mrb[0].mxu0
  %v293 = vadd.f32 0.0, %v292
  %v294 = vpop.f32.mrb[0].mxu0
  %295 = vmatprep.mubr.f32.mxu0 %v196
  %296 = vmatmul.mubr.f32.gmra.mrb[0].mxu0 %v23
  %v297 = vpop.f32.mrb[0].mxu0
  %v298 = vadd.f32 0.0, %v297
  %v299 = vpop.f32.mrb[0].mxu0
  %300 = vmatprep.mubr.f32.mxu0 %v199
  %301 = vmatmul.mubr.f32.gmra.mrb[0].mxu0 %v25
  %v302 = vpop.f32.mrb[0].mxu0
  %v303 = vadd.f32 0.0, %v302
  %v304 = vpop.f32.mrb[0].mxu0
  %305 = vdwg.mxu0
  %v306 = vadd.f32 %v71, %v176
  %v307 = vadd.f32 %v75, %v176
  %v308 = vadd.f32 %v79, %v176
  %v309 = vadd.f32 %v83, %v176
  %v310 = vadd.f32 %v87, %v176
  %v311 = vadd.f32 %v91, %v176
  %v312 = vadd.f32 %v95, %v176
  %v313 = vadd.f32 %v99, %v176
  %v314 = vmul.f32 %v268, 2.0
  %v315 = vmul.f32 %v273, 2.0
  %v316 = vmul.f32 %v278, 2.0
  %v317 = vmul.f32 %v283, 2.0
  %v318 = vmul.f32 %v288, 2.0
  %v319 = vmul.f32 %v293, 2.0
  %v320 = vmul.f32 %v298, 2.0
  %v321 = vmul.f32 %v303, 2.0
  %v322 = vsub.f32 %v306, %v314
  %v323 = vsub.f32 %v307, %v315
  %v324 = vsub.f32 %v308, %v316
  %v325 = vsub.f32 %v309, %v317
  %v326 = vsub.f32 %v310, %v318
  %v327 = vsub.f32 %v311, %v319
  %v328 = vsub.f32 %v312, %v320
  %v329 = vsub.f32 %v313, %v321
  %330 = vst.msk [vmem:[%s2] sm:$0xff] %vm67, %v322
  %331 = vst.msk [vmem:[%s2 + $0x8] sm:$0xff] %vm67, %v323
  %332 = vst.msk [vmem:[%s2 + $0x10] sm:$0xff] %vm67, %v324
  %333 = vst.msk [vmem:[%s2 + $0x18] sm:$0xff] %vm67, %v325
  %334 = vst.msk [vmem:[%s2 + $0x20] sm:$0xff] %vm67, %v326
  %335 = vst.msk [vmem:[%s2 + $0x28] sm:$0xff] %vm67, %v327
  %336 = vst.msk [vmem:[%s2 + $0x30] sm:$0xff] %vm67, %v328
  %337 = vst.msk [vmem:[%s2 + $0x38] sm:$0xff] %vm67, %v329
  // Predicated region
  $region10: #{flow_ml_error_forward.19} parent=0 // pred_check
    _
  $region11: #{flow_ml_error_forward.19} parent=0 // pred_check_branch
    %339 = sbr.rel (0) target = $region13
  $region12: #{flow_ml_error_forward.19} parent=0 // pred_region
    _
  $region13: #{flow_ml_error_forward.19} parent=0 // pred_fallthru
    _
  // Predicated region
  $region14: #{flow_ml_error_forward.19} parent=0 // pred_check
    _
  $region15: #{flow_ml_error_forward.19} parent=0 // pred_check_branch
    %341 = sbr.rel (0) target = $region17
  $region16: #{flow_ml_error_forward.19} parent=0 // pred_region
    _
  $region17: #{flow_ml_error_forward.19} parent=0 // pred_fallthru
    _

// kernel: flow_ml_error_forward.20
$region0: #{flow_ml_error_forward.20}
  #allocation0 [shape = 'u32[]', space=smem, size = 0x4, offset = 0x4, fixed_abs, tag = 'smem constant byte address 0x4 - core index']
  #allocation1 [shape = 'u32[144,128]{1,0:T(1,128)}', space=vmem, size = 0x12000, scoped, tag = 'internal scratch']
  %s0 = inlined_call_operand.vmem [shape: bf16[384,384], index: 0, kind: input, shape index: {}]
  %s1 = inlined_call_operand.vmem [shape: bf16[384,32], index: 1, kind: input, shape index: {}]
  %s2 = inlined_call_operand.vmem [shape: f32[1,32], index: 2, kind: input, shape index: {}]
  %s3 = inlined_call_operand.vmem [shape: bf16[32,32], index: 3, kind: input, shape index: {}]
  %s4 = inlined_call_operand.vmem [shape: f32[1,32], index: 4, kind: input, shape index: {}]
  %s5 = inlined_call_operand.vmem [shape: bf16[32,128], index: 5, kind: input, shape index: {}]
  %s6 = inlined_call_operand.vmem [shape: f32[1,128], index: 6, kind: input, shape index: {}]
  %s7 = inlined_call_operand.vmem [shape: f32[64,128], index: 7, kind: output, shape index: {}]
  %s8 = sld [smem:[#allocation0]]
  $region38: #{flow_ml_error_forward.20} parent=0
    _
  %s10 = ssub.s32 1, %s8
  %s11 = scalar_select 0, %s10, %s8
  // Predicated region
  $region2: #{flow_ml_error_forward.20} parent=0 // pred_check
    _
  $region3: #{flow_ml_error_forward.20} parent=0 // pred_check_branch
    %13 = sbr.rel (0) target = $region5
  $region4: #{flow_ml_error_forward.20} parent=0 // pred_region
    _
  $region5: #{flow_ml_error_forward.20} parent=0 // pred_fallthru
    _
  // Predicated region
  $region6: #{flow_ml_error_forward.20} parent=0 // pred_check
    _
  $region7: #{flow_ml_error_forward.20} parent=0 // pred_check_branch
    %15 = sbr.rel (0) target = $region9
  $region8: #{flow_ml_error_forward.20} parent=0 // pred_region
    _
  $region9: #{flow_ml_error_forward.20} parent=0 // pred_fallthru
    _
  // Predicated region
  $region10: #{flow_ml_error_forward.20} parent=0 // pred_check
    _
  $region11: #{flow_ml_error_forward.20} parent=0 // pred_check_branch
    %17 = sbr.rel (0) target = $region13
  $region12: #{flow_ml_error_forward.20} parent=0 // pred_region
    _
  $region13: #{flow_ml_error_forward.20} parent=0 // pred_fallthru
    _
  // Predicated region
  $region14: #{flow_ml_error_forward.20} parent=0 // pred_check
    _
  $region15: #{flow_ml_error_forward.20} parent=0 // pred_check_branch
    %19 = sbr.rel (0) target = $region17
  $region16: #{flow_ml_error_forward.20} parent=0 // pred_region
    _
  $region17: #{flow_ml_error_forward.20} parent=0 // pred_fallthru
    _
  // Predicated region
  $region18: #{flow_ml_error_forward.20} parent=0 // pred_check
    _
  $region19: #{flow_ml_error_forward.20} parent=0 // pred_check_branch
    %21 = sbr.rel (0) target = $region21
  $region20: #{flow_ml_error_forward.20} parent=0 // pred_region
    _
  $region21: #{flow_ml_error_forward.20} parent=0 // pred_fallthru
    _
  // Predicated region
  $region22: #{flow_ml_error_forward.20} parent=0 // pred_check
    _
  $region23: #{flow_ml_error_forward.20} parent=0 // pred_check_branch
    %23 = sbr.rel (0) target = $region25
  $region24: #{flow_ml_error_forward.20} parent=0 // pred_region
    _
  $region25: #{flow_ml_error_forward.20} parent=0 // pred_fallthru
    _
  // Predicated region
  $region26: #{flow_ml_error_forward.20} parent=0 // pred_check
    _
  $region27: #{flow_ml_error_forward.20} parent=0 // pred_check_branch
    %25 = sbr.rel (0) target = $region29
  $region28: #{flow_ml_error_forward.20} parent=0 // pred_region
    _
  $region29: #{flow_ml_error_forward.20} parent=0 // pred_fallthru
    _
  %v27 = vld [vmem:[%s0] sm:$0xff]
  %v28 = vld [vmem:[%s0 + $0x8] sm:$0xf]
  %v29 = vld [vmem:[%s0 + $0xc] sm:$0xff]
  %v30 = vld [vmem:[%s0 + $0x14] sm:$0xf]
  %v31 = vld [vmem:[%s0 + $0x18] sm:$0xff]
  %v32 = vld [vmem:[%s0 + $0x20] sm:$0xf]
  %v33 = vld [vmem:[%s0 + $0x24] sm:$0xff]
  %v34 = vld [vmem:[%s0 + $0x2c] sm:$0xf]
  %v35 = vld [vmem:[%s0 + $0x30] sm:$0xff]
  %v36 = vld [vmem:[%s0 + $0x38] sm:$0xf]
  %v37 = vld [vmem:[%s0 + $0x3c] sm:$0xff]
  %v38 = vld [vmem:[%s0 + $0x44] sm:$0xf]
  %v39 = vld [vmem:[%s0 + $0x48] sm:$0xff]
  %v40 = vld [vmem:[%s0 + $0x50] sm:$0xf]
  %v41 = vld [vmem:[%s0 + $0x54] sm:$0xff]
  %v42 = vld [vmem:[%s0 + $0x5c] sm:$0xf]
  %v43 = vld [vmem:[%s0 + $0x60] sm:$0xff]
  %v44 = vld [vmem:[%s0 + $0x68] sm:$0xf]
  %v45 = vld [vmem:[%s0 + $0x6c] sm:$0xff]
  %v46 = vld [vmem:[%s0 + $0x74] sm:$0xf]
  %v47 = vld [vmem:[%s0 + $0x78] sm:$0xff]
  %v48 = vld [vmem:[%s0 + $0x80] sm:$0xf]
  %v49 = vld [vmem:[%s0 + $0x84] sm:$0xff]
  %v50 = vld [vmem:[%s0 + $0x8c] sm:$0xf]
  %v51 = vld [vmem:[%s0 + $0x90] sm:$0xff]
  %v52 = vld [vmem:[%s0 + $0x98] sm:$0xf]
  %v53 = vld [vmem:[%s0 + $0x9c] sm:$0xff]
  %v54 = vld [vmem:[%s0 + $0xa4] sm:$0xf]
  %v55 = vld [vmem:[%s0 + $0xa8] sm:$0xff]
  %v56 = vld [vmem:[%s0 + $0xb0] sm:$0xf]
  %v57 = vld [vmem:[%s0 + $0xb4] sm:$0xff]
  %v58 = vld [vmem:[%s0 + $0xbc] sm:$0xf]
  %v59 = vld [vmem:[%s0 + $0xc0] sm:$0xff]
  %v60 = vld [vmem:[%s0 + $0xc8] sm:$0xf]
  %v61 = vld [vmem:[%s0 + $0xcc] sm:$0xff]
  %v62 = vld [vmem:[%s0 + $0xd4] sm:$0xf]
  %v63 = vld [vmem:[%s0 + $0xd8] sm:$0xff]
  %v64 = vld [vmem:[%s0 + $0xe0] sm:$0xf]
  %v65 = vld [vmem:[%s0 + $0xe4] sm:$0xff]
  %v66 = vld [vmem:[%s0 + $0xec] sm:$0xf]
  %v67 = vld [vmem:[%s0 + $0xf0] sm:$0xff]
  %v68 = vld [vmem:[%s0 + $0xf8] sm:$0xf]
  %v69 = vld [vmem:[%s0 + $0xfc] sm:$0xff]
  %v70 = vld [vmem:[%s0 + $0x104] sm:$0xf]
  %v71 = vld [vmem:[%s0 + $0x108] sm:$0xff]
  %v72 = vld [vmem:[%s0 + $0x110] sm:$0xf]
  %v73 = vld [vmem:[%s0 + $0x114] sm:$0xff]
  %v74 = vld [vmem:[%s0 + $0x11c] sm:$0xf]
  %v75 = vld [vmem:[%s0 + $0x120] sm:$0xff]
  %v76 = vld [vmem:[%s0 + $0x128] sm:$0xf]
  %v77 = vld [vmem:[%s0 + $0x12c] sm:$0xff]
  %v78 = vld [vmem:[%s0 + $0x134] sm:$0xf]
  %v79 = vld [vmem:[%s0 + $0x138] sm:$0xff]
  %v80 = vld [vmem:[%s0 + $0x140] sm:$0xf]
  %v81 = vld [vmem:[%s0 + $0x144] sm:$0xff]
  %v82 = vld [vmem:[%s0 + $0x14c] sm:$0xf]
  %v83 = vld [vmem:[%s0 + $0x150] sm:$0xff]
  %v84 = vld [vmem:[%s0 + $0x158] sm:$0xf]
  %v85 = vld [vmem:[%s0 + $0x15c] sm:$0xff]
  %v86 = vld [vmem:[%s0 + $0x164] sm:$0xf]
  %v87 = vld [vmem:[%s0 + $0x168] sm:$0xff]
  %v88 = vld [vmem:[%s0 + $0x170] sm:$0xf]
  %v89 = vld [vmem:[%s0 + $0x174] sm:$0xff]
  %v90 = vld [vmem:[%s0 + $0x17c] sm:$0xf]
  %v91 = vld [vmem:[%s0 + $0x180] sm:$0xff]
  %v92 = vld [vmem:[%s0 + $0x188] sm:$0xf]
  %v93 = vld [vmem:[%s0 + $0x18c] sm:$0xff]
  %v94 = vld [vmem:[%s0 + $0x194] sm:$0xf]
  %v95 = vld [vmem:[%s0 + $0x198] sm:$0xff]
  %v96 = vld [vmem:[%s0 + $0x1a0] sm:$0xf]
  %v97 = vld [vmem:[%s0 + $0x1a4] sm:$0xff]
  %v98 = vld [vmem:[%s0 + $0x1ac] sm:$0xf]
  %v99 = vld [vmem:[%s0 + $0x1b0] sm:$0xff]
  %v100 = vld [vmem:[%s0 + $0x1b8] sm:$0xf]
  %v101 = vld [vmem:[%s0 + $0x1bc] sm:$0xff]
  %v102 = vld [vmem:[%s0 + $0x1c4] sm:$0xf]
  %v103 = vld [vmem:[%s0 + $0x1c8] sm:$0xff]
  %v104 = vld [vmem:[%s0 + $0x1d0] sm:$0xf]
  %v105 = vld [vmem:[%s0 + $0x1d4] sm:$0xff]
  %v106 = vld [vmem:[%s0 + $0x1dc] sm:$0xf]
  %v107 = vld [vmem:[%s0 + $0x1e0] sm:$0xff]
  %v108 = vld [vmem:[%s0 + $0x1e8] sm:$0xf]
  %v109 = vld [vmem:[%s0 + $0x1ec] sm:$0xff]
  %v110 = vld [vmem:[%s0 + $0x1f4] sm:$0xf]
  %v111 = vld [vmem:[%s0 + $0x1f8] sm:$0xff]
  %v112 = vld [vmem:[%s0 + $0x200] sm:$0xf]
  %v113 = vld [vmem:[%s0 + $0x204] sm:$0xff]
  %v114 = vld [vmem:[%s0 + $0x20c] sm:$0xf]
  %v115 = vld [vmem:[%s0 + $0x210] sm:$0xff]
  %v116 = vld [vmem:[%s0 + $0x218] sm:$0xf]
  %v117 = vld [vmem:[%s0 + $0x21c] sm:$0xff]
  %v118 = vld [vmem:[%s0 + $0x224] sm:$0xf]
  %v119 = vld [vmem:[%s0 + $0x228] sm:$0xff]
  %v120 = vld [vmem:[%s0 + $0x230] sm:$0xf]
  %v121 = vld [vmem:[%s0 + $0x234] sm:$0xff]
  %v122 = vld [vmem:[%s0 + $0x23c] sm:$0xf]
  %v123 = vld [vmem:[%s1] sm:$0xf]
  %v124 = vld [vmem:[%s1 + $0x4] sm:$0xf]
  %v125 = vld [vmem:[%s1 + $0x8] sm:$0xf]
  %v126 = vld [vmem:[%s1 + $0xc] sm:$0xf]
  %v127 = vld [vmem:[%s1 + $0x10] sm:$0xf]
  %v128 = vld [vmem:[%s1 + $0x14] sm:$0xf]
  %v129 = vld [vmem:[%s1 + $0x18] sm:$0xf]
  %v130 = vld [vmem:[%s1 + $0x1c] sm:$0xf]
  %v131 = vld [vmem:[%s1 + $0x20] sm:$0xf]
  %v132 = vld [vmem:[%s1 + $0x24] sm:$0xf]
  %v133 = vld [vmem:[%s1 + $0x28] sm:$0xf]
  %v134 = vld [vmem:[%s1 + $0x2c] sm:$0xf]
  %v135 = vld [vmem:[%s1 + $0x30] sm:$0xf]
  %v136 = vld [vmem:[%s1 + $0x34] sm:$0xf]
  %v137 = vld [vmem:[%s1 + $0x38] sm:$0xf]
  %v138 = vld [vmem:[%s1 + $0x3c] sm:$0xf]
  %v139 = vld [vmem:[%s1 + $0x40] sm:$0xf]
  %v140 = vld [vmem:[%s1 + $0x44] sm:$0xf]
  %v141 = vld [vmem:[%s1 + $0x48] sm:$0xf]
  %v142 = vld [vmem:[%s1 + $0x4c] sm:$0xf]
  %v143 = vld [vmem:[%s1 + $0x50] sm:$0xf]
  %v144 = vld [vmem:[%s1 + $0x54] sm:$0xf]
  %v145 = vld [vmem:[%s1 + $0x58] sm:$0xf]
  %v146 = vld [vmem:[%s1 + $0x5c] sm:$0xf]
  %v147 = vld [vmem:[%s1 + $0x60] sm:$0xf]
  %v148 = vld [vmem:[%s1 + $0x64] sm:$0xf]
  %v149 = vld [vmem:[%s1 + $0x68] sm:$0xf]
  %v150 = vld [vmem:[%s1 + $0x6c] sm:$0xf]
  %v151 = vld [vmem:[%s1 + $0x70] sm:$0xf]
  %v152 = vld [vmem:[%s1 + $0x74] sm:$0xf]
  %v153 = vld [vmem:[%s1 + $0x78] sm:$0xf]
  %v154 = vld [vmem:[%s1 + $0x7c] sm:$0xf]
  %v155 = vld [vmem:[%s1 + $0x80] sm:$0xf]
  %v156 = vld [vmem:[%s1 + $0x84] sm:$0xf]
  %v157 = vld [vmem:[%s1 + $0x88] sm:$0xf]
  %v158 = vld [vmem:[%s1 + $0x8c] sm:$0xf]
  %v159 = vld [vmem:[%s1 + $0x90] sm:$0xf]
  %v160 = vld [vmem:[%s1 + $0x94] sm:$0xf]
  %v161 = vld [vmem:[%s1 + $0x98] sm:$0xf]
  %v162 = vld [vmem:[%s1 + $0x9c] sm:$0xf]
  %v163 = vld [vmem:[%s1 + $0xa0] sm:$0xf]
  %v164 = vld [vmem:[%s1 + $0xa4] sm:$0xf]
  %v165 = vld [vmem:[%s1 + $0xa8] sm:$0xf]
  %v166 = vld [vmem:[%s1 + $0xac] sm:$0xf]
  %v167 = vld [vmem:[%s1 + $0xb0] sm:$0xf]
  %v168 = vld [vmem:[%s1 + $0xb4] sm:$0xf]
  %v169 = vld [vmem:[%s1 + $0xb8] sm:$0xf]
  %v170 = vld [vmem:[%s1 + $0xbc] sm:$0xf]
  %v171 = vld [vmem:[%s2] sm:$0x1]
  %v173 = vlaneseq
  %v174 = vshrl.u32 %v173, 7
  %v175 = vsub.s32 0, %v174
  %v176 = vrot.slane %v171, %v175
  %v274 = vunpack.c.l.b16 %v27
  %v275 = vunpack.c.h.b16 %v27
  %v276 = vunpack.c.l.b16 %v28
  %v277 = vunpack.c.l.b16 %v29
  %v278 = vunpack.c.h.b16 %v29
  %v279 = vunpack.c.l.b16 %v30
  %v280 = vunpack.c.l.b16 %v31
  %v281 = vunpack.c.h.b16 %v31
  %v282 = vunpack.c.l.b16 %v32
  %v283 = vunpack.c.l.b16 %v33
  %v284 = vunpack.c.h.b16 %v33
  %v285 = vunpack.c.l.b16 %v34
  %v286 = vunpack.c.l.b16 %v35
  %v287 = vunpack.c.h.b16 %v35
  %v288 = vunpack.c.l.b16 %v36
  %v289 = vunpack.c.l.b16 %v37
  %v290 = vunpack.c.h.b16 %v37
  %v291 = vunpack.c.l.b16 %v38
  %v292 = vunpack.c.l.b16 %v39
  %v293 = vunpack.c.h.b16 %v39
  %v294 = vunpack.c.l.b16 %v40
  %v295 = vunpack.c.l.b16 %v41
  %v296 = vunpack.c.h.b16 %v41
  %v297 = vunpack.c.l.b16 %v42
  %v298 = vunpack.c.l.b16 %v43
  %v299 = vunpack.c.h.b16 %v43
  %v300 = vunpack.c.l.b16 %v44
  %v301 = vunpack.c.l.b16 %v45
  %v302 = vunpack.c.h.b16 %v45
  %v303 = vunpack.c.l.b16 %v46
  %v304 = vunpack.c.l.b16 %v47
  %v305 = vunpack.c.h.b16 %v47
  %v306 = vunpack.c.l.b16 %v48
  %v307 = vunpack.c.l.b16 %v49
  %v308 = vunpack.c.h.b16 %v49
  %v309 = vunpack.c.l.b16 %v50
  %v310 = vunpack.c.l.b16 %v51
  %v311 = vunpack.c.h.b16 %v51
  %v312 = vunpack.c.l.b16 %v52
  %v313 = vunpack.c.l.b16 %v53
  %v314 = vunpack.c.h.b16 %v53
  %v315 = vunpack.c.l.b16 %v54
  %v316 = vunpack.c.l.b16 %v55
  %v317 = vunpack.c.h.b16 %v55
  %v318 = vunpack.c.l.b16 %v56
  %v319 = vunpack.c.l.b16 %v57
  %v320 = vunpack.c.h.b16 %v57
  %v321 = vunpack.c.l.b16 %v58
  %v322 = vunpack.c.l.b16 %v59
  %v323 = vunpack.c.h.b16 %v59
  %v324 = vunpack.c.l.b16 %v60
  %v325 = vunpack.c.l.b16 %v61
  %v326 = vunpack.c.h.b16 %v61
  %v327 = vunpack.c.l.b16 %v62
  %v328 = vunpack.c.l.b16 %v63
  %v329 = vunpack.c.h.b16 %v63
  %v330 = vunpack.c.l.b16 %v64
  %v331 = vunpack.c.l.b16 %v65
  %v332 = vunpack.c.h.b16 %v65
  %v333 = vunpack.c.l.b16 %v66
  %v334 = vunpack.c.l.b16 %v67
  %v335 = vunpack.c.h.b16 %v67
  %v336 = vunpack.c.l.b16 %v68
  %v337 = vunpack.c.l.b16 %v69
  %v338 = vunpack.c.h.b16 %v69
  %v339 = vunpack.c.l.b16 %v70
  %v340 = vunpack.c.l.b16 %v71
  %v341 = vunpack.c.h.b16 %v71
  %v342 = vunpack.c.l.b16 %v72
  %v343 = vunpack.c.l.b16 %v73
  %v344 = vunpack.c.h.b16 %v73
  %v345 = vunpack.c.l.b16 %v74
  %v346 = vunpack.c.l.b16 %v75
  %v347 = vunpack.c.h.b16 %v75
  %v348 = vunpack.c.l.b16 %v76
  %v349 = vunpack.c.l.b16 %v77
  %v350 = vunpack.c.h.b16 %v77
  %v351 = vunpack.c.l.b16 %v78
  %v352 = vunpack.c.l.b16 %v79
  %v353 = vunpack.c.h.b16 %v79
  %v354 = vunpack.c.l.b16 %v80
  %v355 = vunpack.c.l.b16 %v81
  %v356 = vunpack.c.h.b16 %v81
  %v357 = vunpack.c.l.b16 %v82
  %v358 = vunpack.c.l.b16 %v83
  %v359 = vunpack.c.h.b16 %v83
  %v360 = vunpack.c.l.b16 %v84
  %v361 = vunpack.c.l.b16 %v85
  %v362 = vunpack.c.h.b16 %v85
  %v363 = vunpack.c.l.b16 %v86
  %v364 = vunpack.c.l.b16 %v87
  %v365 = vunpack.c.h.b16 %v87
  %v366 = vunpack.c.l.b16 %v88
  %v367 = vunpack.c.l.b16 %v89
  %v368 = vunpack.c.h.b16 %v89
  %v369 = vunpack.c.l.b16 %v90
  %v370 = vunpack.c.l.b16 %v91
  %v371 = vunpack.c.h.b16 %v91
  %v372 = vunpack.c.l.b16 %v92
  %v373 = vunpack.c.l.b16 %v93
  %v374 = vunpack.c.h.b16 %v93
  %v375 = vunpack.c.l.b16 %v94
  %v376 = vunpack.c.l.b16 %v95
  %v377 = vunpack.c.h.b16 %v95
  %v378 = vunpack.c.l.b16 %v96
  %v379 = vunpack.c.l.b16 %v97
  %v380 = vunpack.c.h.b16 %v97
  %v381 = vunpack.c.l.b16 %v98
  %v382 = vunpack.c.l.b16 %v99
  %v383 = vunpack.c.h.b16 %v99
  %v384 = vunpack.c.l.b16 %v100
  %v385 = vunpack.c.l.b16 %v101
  %v386 = vunpack.c.h.b16 %v101
  %v387 = vunpack.c.l.b16 %v102
  %v388 = vunpack.c.l.b16 %v103
  %v389 = vunpack.c.h.b16 %v103
  %v390 = vunpack.c.l.b16 %v104
  %v391 = vunpack.c.l.b16 %v105
  %v392 = vunpack.c.h.b16 %v105
  %v393 = vunpack.c.l.b16 %v106
  %v394 = vunpack.c.l.b16 %v107
  %v395 = vunpack.c.h.b16 %v107
  %v396 = vunpack.c.l.b16 %v108
  %v397 = vunpack.c.l.b16 %v109
  %v398 = vunpack.c.h.b16 %v109
  %v399 = vunpack.c.l.b16 %v110
  %v400 = vunpack.c.l.b16 %v111
  %v401 = vunpack.c.h.b16 %v111
  %v402 = vunpack.c.l.b16 %v112
  %v403 = vunpack.c.l.b16 %v113
  %v404 = vunpack.c.h.b16 %v113
  %v405 = vunpack.c.l.b16 %v114
  %v406 = vunpack.c.l.b16 %v115
  %v407 = vunpack.c.h.b16 %v115
  %v408 = vunpack.c.l.b16 %v116
  %v409 = vunpack.c.l.b16 %v117
  %v410 = vunpack.c.h.b16 %v117
  %v411 = vunpack.c.l.b16 %v118
  %v412 = vunpack.c.l.b16 %v119
  %v413 = vunpack.c.h.b16 %v119
  %v414 = vunpack.c.l.b16 %v120
  %v415 = vunpack.c.l.b16 %v121
  %v416 = vunpack.c.h.b16 %v121
  %v417 = vunpack.c.l.b16 %v122
  %v418 = vpack.c.b16 %v277, %v274
  %v419 = vpack.c.b16 %v278, %v275
  %v420 = vpack.c.b16 %v279, %v276
  %v421 = vpack.c.b16 %v283, %v280
  %v422 = vpack.c.b16 %v284, %v281
  %v423 = vpack.c.b16 %v285, %v282
  %v424 = vpack.c.b16 %v289, %v286
  %v425 = vpack.c.b16 %v290, %v287
  %v426 = vpack.c.b16 %v291, %v288
  %v427 = vpack.c.b16 %v295, %v292
  %v428 = vpack.c.b16 %v296, %v293
  %v429 = vpack.c.b16 %v297, %v294
  %v430 = vpack.c.b16 %v301, %v298
  %v431 = vpack.c.b16 %v302, %v299
  %v432 = vpack.c.b16 %v303, %v300
  %v433 = vpack.c.b16 %v307, %v304
  %v434 = vpack.c.b16 %v308, %v305
  %v435 = vpack.c.b16 %v309, %v306
  %v436 = vpack.c.b16 %v313, %v310
  %v437 = vpack.c.b16 %v314, %v311
  %v438 = vpack.c.b16 %v315, %v312
  %v439 = vpack.c.b16 %v319, %v316
  %v440 = vpack.c.b16 %v320, %v317
  %v441 = vpack.c.b16 %v321, %v318
  %v442 = vpack.c.b16 %v325, %v322
  %v443 = vpack.c.b16 %v326, %v323
  %v444 = vpack.c.b16 %v327, %v324
  %v445 = vpack.c.b16 %v331, %v328
  %v446 = vpack.c.b16 %v332, %v329
  %v447 = vpack.c.b16 %v333, %v330
  %v448 = vpack.c.b16 %v337, %v334
  %v449 = vpack.c.b16 %v338, %v335
  %v450 = vpack.c.b16 %v339, %v336
  %v451 = vpack.c.b16 %v343, %v340
  %v452 = vpack.c.b16 %v344, %v341
  %v453 = vpack.c.b16 %v345, %v342
  %v454 = vpack.c.b16 %v349, %v346
  %v455 = vpack.c.b16 %v350, %v347
  %v456 = vpack.c.b16 %v351, %v348
  %v457 = vpack.c.b16 %v355, %v352
  %v458 = vpack.c.b16 %v356, %v353
  %v459 = vpack.c.b16 %v357, %v354
  %v460 = vpack.c.b16 %v361, %v358
  %v461 = vpack.c.b16 %v362, %v359
  %v462 = vpack.c.b16 %v363, %v360
  %v463 = vpack.c.b16 %v367, %v364
  %v464 = vpack.c.b16 %v368, %v365
  %v465 = vpack.c.b16 %v369, %v366
  %v466 = vpack.c.b16 %v373, %v370
  %v467 = vpack.c.b16 %v374, %v371
  %v468 = vpack.c.b16 %v375, %v372
  %v469 = vpack.c.b16 %v379, %v376
  %v470 = vpack.c.b16 %v380, %v377
  %v471 = vpack.c.b16 %v381, %v378
  %v472 = vpack.c.b16 %v385, %v382
  %v473 = vpack.c.b16 %v386, %v383
  %v474 = vpack.c.b16 %v387, %v384
  %v475 = vpack.c.b16 %v391, %v388
  %v476 = vpack.c.b16 %v392, %v389
  %v477 = vpack.c.b16 %v393, %v390
  %v478 = vpack.c.b16 %v397, %v394
  %v479 = vpack.c.b16 %v398, %v395
  %v480 = vpack.c.b16 %v399, %v396
  %v481 = vpack.c.b16 %v403, %v400
  %v482 = vpack.c.b16 %v404, %v401
  %v483 = vpack.c.b16 %v405, %v402
  %v484 = vpack.c.b16 %v409, %v406
  %v485 = vpack.c.b16 %v410, %v407
  %v486 = vpack.c.b16 %v411, %v408
  %v487 = vpack.c.b16 %v415, %v412
  %v488 = vpack.c.b16 %v416, %v413
  %v489 = vpack.c.b16 %v417, %v414
  %v610 = vunpack.c.l.b16 %v123
  %v611 = vunpack.c.l.b16 %v124
  %v612 = vunpack.c.l.b16 %v125
  %v613 = vunpack.c.l.b16 %v126
  %v614 = vunpack.c.l.b16 %v127
  %v615 = vunpack.c.l.b16 %v128
  %v616 = vunpack.c.l.b16 %v129
  %v617 = vunpack.c.l.b16 %v130
  %v618 = vunpack.c.l.b16 %v131
  %v619 = vunpack.c.l.b16 %v132
  %v620 = vunpack.c.l.b16 %v133
  %v621 = vunpack.c.l.b16 %v134
  %v622 = vunpack.c.l.b16 %v135
  %v623 = vunpack.c.l.b16 %v136
  %v624 = vunpack.c.l.b16 %v137
  %v625 = vunpack.c.l.b16 %v138
  %v626 = vunpack.c.l.b16 %v139
  %v627 = vunpack.c.l.b16 %v140
  %v628 = vunpack.c.l.b16 %v141
  %v629 = vunpack.c.l.b16 %v142
  %v630 = vunpack.c.l.b16 %v143
  %v631 = vunpack.c.l.b16 %v144
  %v632 = vunpack.c.l.b16 %v145
  %v633 = vunpack.c.l.b16 %v146
  %v634 = vunpack.c.l.b16 %v147
  %v635 = vunpack.c.l.b16 %v148
  %v636 = vunpack.c.l.b16 %v149
  %v637 = vunpack.c.l.b16 %v150
  %v638 = vunpack.c.l.b16 %v151
  %v639 = vunpack.c.l.b16 %v152
  %v640 = vunpack.c.l.b16 %v153
  %v641 = vunpack.c.l.b16 %v154
  %v642 = vunpack.c.l.b16 %v155
  %v643 = vunpack.c.l.b16 %v156
  %v644 = vunpack.c.l.b16 %v157
  %v645 = vunpack.c.l.b16 %v158
  %v646 = vunpack.c.l.b16 %v159
  %v647 = vunpack.c.l.b16 %v160
  %v648 = vunpack.c.l.b16 %v161
  %v649 = vunpack.c.l.b16 %v162
  %v650 = vunpack.c.l.b16 %v163
  %v651 = vunpack.c.l.b16 %v164
  %v652 = vunpack.c.l.b16 %v165
  %v653 = vunpack.c.l.b16 %v166
  %v654 = vunpack.c.l.b16 %v167
  %v655 = vunpack.c.l.b16 %v168
  %v656 = vunpack.c.l.b16 %v169
  %v657 = vunpack.c.l.b16 %v170
  %v658 = vpack.c.b16 %v611, %v610
  %v659 = vpack.c.b16 %v613, %v612
  %v660 = vpack.c.b16 %v615, %v614
  %v661 = vpack.c.b16 %v617, %v616
  %v662 = vpack.c.b16 %v619, %v618
  %v663 = vpack.c.b16 %v621, %v620
  %v664 = vpack.c.b16 %v623, %v622
  %v665 = vpack.c.b16 %v625, %v624
  %v666 = vpack.c.b16 %v627, %v626
  %v667 = vpack.c.b16 %v629, %v628
  %v668 = vpack.c.b16 %v631, %v630
  %v669 = vpack.c.b16 %v633, %v632
  %v670 = vpack.c.b16 %v635, %v634
  %v671 = vpack.c.b16 %v637, %v636
  %v672 = vpack.c.b16 %v639, %v638
  %v673 = vpack.c.b16 %v641, %v640
  %v674 = vpack.c.b16 %v643, %v642
  %v675 = vpack.c.b16 %v645, %v644
  %v676 = vpack.c.b16 %v647, %v646
  %v677 = vpack.c.b16 %v649, %v648
  %v678 = vpack.c.b16 %v651, %v650
  %v679 = vpack.c.b16 %v653, %v652
  %v680 = vpack.c.b16 %v655, %v654
  %v681 = vpack.c.b16 %v657, %v656
  %706 = vmatprep.subr.bf16.mxu0 0
  %707 = vmatpush1.bf16.msra.mxu0 %v658
  %708 = vmatprep.subr.bf16.mxu0 0
  %709 = vmatpush1.bf16.msra.mxu0 %v659
  %710 = vmatprep.subr.bf16.mxu0 0
  %711 = vmatpush1.bf16.msra.mxu0 %v660
  %712 = vmatprep.subr.bf16.mxu0 0
  %713 = vmatpush1.bf16.msra.mxu0 %v661
  %714 = vmatprep.subr.bf16.mxu0 0
  %715 = vmatpush1.bf16.msra.mxu0 %v662
  %716 = vmatprep.subr.bf16.mxu0 0
  %717 = vmatpush1.bf16.msra.mxu0 %v663
  %718 = vmatprep.subr.bf16.mxu0 0
  %719 = vmatpush1.bf16.msra.mxu0 %v664
  %720 = vmatprep.subr.bf16.mxu0 0
  %721 = vmatpush1.bf16.msra.mxu0 %v665
  %722 = vmatprep.subr.bf16.mxu0 0
  %723 = vmatpush1.bf16.msra.mxu0 %v666
  %724 = vmatprep.subr.bf16.mxu0 0
  %725 = vmatpush1.bf16.msra.mxu0 %v667
  %726 = vmatprep.subr.bf16.mxu0 0
  %727 = vmatpush1.bf16.msra.mxu0 %v668
  %728 = vmatprep.subr.bf16.mxu0 0
  %729 = vmatpush1.bf16.msra.mxu0 %v669
  %730 = vmatprep.subr.bf16.mxu0 0
  %731 = vmatpush1.bf16.msra.mxu0 %v670
  %732 = vmatprep.subr.bf16.mxu0 0
  %733 = vmatpush1.bf16.msra.mxu0 %v671
  %734 = vmatprep.subr.bf16.mxu0 0
  %735 = vmatpush1.bf16.msra.mxu0 %v672
  %736 = vmatprep.subr.bf16.mxu0 0
  %737 = vmatpush1.bf16.msra.mxu0 %v673
  %738 = vmatprep.mubr.bf16.mxu0 %v419
  %739 = vmatmul.mubr.bf16.gmra.mrb[0].mxu0 %v418
  %v740 = vpop.f32.mrb[0].mxu0
  %v741 = vadd.f32 %v176, %v740
  %v742 = vpop.f32.mrb[0].mxu0
  %v743 = vpop.f32.mrb[0].mxu0
  %v744 = vadd.f32 %v176, %v743
  %v745 = vpop.f32.mrb[0].mxu0
  %746 = vmatprep.mubr.bf16.mxu0 %v422
  %747 = vmatmul.mubr.bf16.gmra.mrb[0].mxu0 %v421
  %v748 = vpop.f32.mrb[0].mxu0
  %v749 = vadd.f32 %v176, %v748
  %v750 = vpop.f32.mrb[0].mxu0
  %v751 = vpop.f32.mrb[0].mxu0
  %v752 = vadd.f32 %v176, %v751
  %v753 = vpop.f32.mrb[0].mxu0
  %754 = vmatprep.mubr.bf16.mxu0 %v425
  %755 = vmatmul.mubr.bf16.gmra.mrb[0].mxu0 %v424
  %v756 = vpop.f32.mrb[0].mxu0
  %v757 = vadd.f32 %v176, %v756
  %v758 = vpop.f32.mrb[0].mxu0
  %v759 = vpop.f32.mrb[0].mxu0
  %v760 = vadd.f32 %v176, %v759
  %v761 = vpop.f32.mrb[0].mxu0
  %762 = vmatprep.mubr.bf16.mxu0 %v428
  %763 = vmatmul.mubr.bf16.gmra.mrb[0].mxu0 %v427
  %v764 = vpop.f32.mrb[0].mxu0
  %v765 = vadd.f32 %v176, %v764
  %v766 = vpop.f32.mrb[0].mxu0
  %v767 = vpop.f32.mrb[0].mxu0
  %v768 = vadd.f32 %v176, %v767
  %v769 = vpop.f32.mrb[0].mxu0
  %770 = vmatprep.mubr.bf16.mxu0 %v431
  %771 = vmatmul.mubr.bf16.gmra.mrb[0].mxu0 %v430
  %v772 = vpop.f32.mrb[0].mxu0
  %v773 = vadd.f32 %v176, %v772
  %v774 = vpop.f32.mrb[0].mxu0
  %v775 = vpop.f32.mrb[0].mxu0
  %v776 = vadd.f32 %v176, %v775
  %v777 = vpop.f32.mrb[0].mxu0
  %778 = vmatprep.mubr.bf16.mxu0 %v434
  %779 = vmatmul.mubr.bf16.gmra.mrb[0].mxu0 %v433
  %v780 = vpop.f32.mrb[0].mxu0
  %v781 = vadd.f32 %v176, %v780
  %v782 = vpop.f32.mrb[0].mxu0
  %v783 = vpop.f32.mrb[0].mxu0
  %v784 = vadd.f32 %v176, %v783
  %v785 = vpop.f32.mrb[0].mxu0
  %786 = vmatprep.mubr.bf16.mxu0 %v437
  %787 = vmatmul.mubr.bf16.gmra.mrb[0].mxu0 %v436
  %v788 = vpop.f32.mrb[0].mxu0
  %v789 = vadd.f32 %v176, %v788
  %v790 = vpop.f32.mrb[0].mxu0
  %v791 = vpop.f32.mrb[0].mxu0
  %v792 = vadd.f32 %v176, %v791
  %v793 = vpop.f32.mrb[0].mxu0
  %794 = vmatprep.mubr.bf16.mxu0 %v440
  %795 = vmatmul.mubr.bf16.gmra.mrb[0].mxu0 %v439
  %v796 = vpop.f32.mrb[0].mxu0
  %v797 = vadd.f32 %v176, %v796
  %v798 = vpop.f32.mrb[0].mxu0
  %v799 = vpop.f32.mrb[0].mxu0
  %v800 = vadd.f32 %v176, %v799
  %v801 = vpop.f32.mrb[0].mxu0
  %802 = vmatprep.mubr.bf16.mxu0 %v443
  %803 = vmatmul.mubr.bf16.gmra.mrb[0].mxu0 %v442
  %v804 = vpop.f32.mrb[0].mxu0
  %v805 = vadd.f32 %v176, %v804
  %v806 = vpop.f32.mrb[0].mxu0
  %v807 = vpop.f32.mrb[0].mxu0
  %v808 = vadd.f32 %v176, %v807
  %v809 = vpop.f32.mrb[0].mxu0
  %810 = vmatprep.mubr.bf16.mxu0 %v446
  %811 = vmatmul.mubr.bf16.gmra.mrb[0].mxu0 %v445
  %v812 = vpop.f32.mrb[0].mxu0
  %v813 = vadd.f32 %v176, %v812
  %v814 = vpop.f32.mrb[0].mxu0
  %v815 = vpop.f32.mrb[0].mxu0
  %v816 = vadd.f32 %v176, %v815
  %v817 = vpop.f32.mrb[0].mxu0
  %818 = vmatprep.mubr.bf16.mxu0 %v449
  %819 = vmatmul.mubr.bf16.gmra.mrb[0].mxu0 %v448
  %v820 = vpop.f32.mrb[0].mxu0
  %v821 = vadd.f32 %v176, %v820
  %v822 = vpop.f32.mrb[0].mxu0
  %v823 = vpop.f32.mrb[0].mxu0
  %v824 = vadd.f32 %v176, %v823
  %v825 = vpop.f32.mrb[0].mxu0
  %826 = vmatprep.mubr.bf16.mxu0 %v452
  %827 = vmatmul.mubr.bf16.gmra.mrb[0].mxu0 %v451
  %v828 = vpop.f32.mrb[0].mxu0
  %v829 = vadd.f32 %v176, %v828
  %v830 = vpop.f32.mrb[0].mxu0
  %v831 = vpop.f32.mrb[0].mxu0
  %v832 = vadd.f32 %v176, %v831
  %v833 = vpop.f32.mrb[0].mxu0
  %834 = vmatprep.mubr.bf16.mxu0 %v455
  %835 = vmatmul.mubr.bf16.gmra.mrb[0].mxu0 %v454
  %v836 = vpop.f32.mrb[0].mxu0
  %v837 = vadd.f32 %v176, %v836
  %v838 = vpop.f32.mrb[0].mxu0
  %v839 = vpop.f32.mrb[0].mxu0
  %v840 = vadd.f32 %v176, %v839
  %v841 = vpop.f32.mrb[0].mxu0
  %842 = vmatprep.mubr.bf16.mxu0 %v458
  %843 = vmatmul.mubr.bf16.gmra.mrb[0].mxu0 %v457
  %v844 = vpop.f32.mrb[0].mxu0
  %v845 = vadd.f32 %v176, %v844
  %v846 = vpop.f32.mrb[0].mxu0
  %v847 = vpop.f32.mrb[0].mxu0
  %v848 = vadd.f32 %v176, %v847
  %v849 = vpop.f32.mrb[0].mxu0
  %850 = vmatprep.mubr.bf16.mxu0 %v461
  %851 = vmatmul.mubr.bf16.gmra.mrb[0].mxu0 %v460
  %v852 = vpop.f32.mrb[0].mxu0
  %v853 = vadd.f32 %v176, %v852
  %v854 = vpop.f32.mrb[0].mxu0
  %v855 = vpop.f32.mrb[0].mxu0
  %v856 = vadd.f32 %v176, %v855
  %v857 = vpop.f32.mrb[0].mxu0
  %858 = vmatprep.mubr.bf16.mxu0 %v464
  %859 = vmatmul.mubr.bf16.gmra.mrb[0].mxu0 %v463
  %v860 = vpop.f32.mrb[0].mxu0
  %v861 = vadd.f32 %v176, %v860
  %v862 = vpop.f32.mrb[0].mxu0
  %v863 = vpop.f32.mrb[0].mxu0
  %v864 = vadd.f32 %v176, %v863
  %v865 = vpop.f32.mrb[0].mxu0
  %866 = vmatprep.mubr.bf16.mxu0 %v467
  %867 = vmatmul.mubr.bf16.gmra.mrb[0].mxu0 %v466
  %v868 = vpop.f32.mrb[0].mxu0
  %v869 = vadd.f32 %v176, %v868
  %v870 = vpop.f32.mrb[0].mxu0
  %v871 = vpop.f32.mrb[0].mxu0
  %v872 = vadd.f32 %v176, %v871
  %v873 = vpop.f32.mrb[0].mxu0
  %874 = vmatprep.mubr.bf16.mxu0 %v470
  %875 = vmatmul.mubr.bf16.gmra.mrb[0].mxu0 %v469
  %v876 = vpop.f32.mrb[0].mxu0
  %v877 = vadd.f32 %v176, %v876
  %v878 = vpop.f32.mrb[0].mxu0
  %v879 = vpop.f32.mrb[0].mxu0
  %v880 = vadd.f32 %v176, %v879
  %v881 = vpop.f32.mrb[0].mxu0
  %882 = vmatprep.mubr.bf16.mxu0 %v473
  %883 = vmatmul.mubr.bf16.gmra.mrb[0].mxu0 %v472
  %v884 = vpop.f32.mrb[0].mxu0
  %v885 = vadd.f32 %v176, %v884
  %v886 = vpop.f32.mrb[0].mxu0
  %v887 = vpop.f32.mrb[0].mxu0
  %v888 = vadd.f32 %v176, %v887
  %v889 = vpop.f32.mrb[0].mxu0
  %890 = vmatprep.mubr.bf16.mxu0 %v476
  %891 = vmatmul.mubr.bf16.gmra.mrb[0].mxu0 %v475
  %v892 = vpop.f32.mrb[0].mxu0
  %v893 = vadd.f32 %v176, %v892
  %v894 = vpop.f32.mrb[0].mxu0
  %v895 = vpop.f32.mrb[0].mxu0
  %v896 = vadd.f32 %v176, %v895
  %v897 = vpop.f32.mrb[0].mxu0
  %898 = vmatprep.mubr.bf16.mxu0 %v479
  %899 = vmatmul.mubr.bf16.gmra.mrb[0].mxu0 %v478
  %v900 = vpop.f32.mrb[0].mxu0
  %v901 = vadd.f32 %v176, %v900
  %v902 = vpop.f32.mrb[0].mxu0
  %v903 = vpop.f32.mrb[0].mxu0
  %v904 = vadd.f32 %v176, %v903
  %v905 = vpop.f32.mrb[0].mxu0
  %906 = vmatprep.mubr.bf16.mxu0 %v482
  %907 = vmatmul.mubr.bf16.gmra.mrb[0].mxu0 %v481
  %v908 = vpop.f32.mrb[0].mxu0
  %v909 = vadd.f32 %v176, %v908
  %v910 = vpop.f32.mrb[0].mxu0
  %v911 = vpop.f32.mrb[0].mxu0
  %v912 = vadd.f32 %v176, %v911
  %v913 = vpop.f32.mrb[0].mxu0
  %914 = vmatprep.mubr.bf16.mxu0 %v485
  %915 = vmatmul.mubr.bf16.gmra.mrb[0].mxu0 %v484
  %v916 = vpop.f32.mrb[0].mxu0
  %v917 = vadd.f32 %v176, %v916
  %v918 = vpop.f32.mrb[0].mxu0
  %v919 = vpop.f32.mrb[0].mxu0
  %v920 = vadd.f32 %v176, %v919
  %v921 = vpop.f32.mrb[0].mxu0
  %922 = vmatprep.mubr.bf16.mxu0 %v488
  %923 = vmatmul.mubr.bf16.gmra.mrb[0].mxu0 %v487
  %v924 = vpop.f32.mrb[0].mxu0
  %v925 = vadd.f32 %v176, %v924
  %v926 = vpop.f32.mrb[0].mxu0
  %v927 = vpop.f32.mrb[0].mxu0
  %v928 = vadd.f32 %v176, %v927
  %v929 = vpop.f32.mrb[0].mxu0
  %930 = vdwg.mxu0
  %931 = vmatprep.subr.bf16.mxu0 0
  %932 = vmatpush1.bf16.msra.mxu0 %v674
  %933 = vmatprep.subr.bf16.mxu0 0
  %934 = vmatpush1.bf16.msra.mxu0 %v675
  %935 = vmatprep.subr.bf16.mxu0 0
  %936 = vmatpush1.bf16.msra.mxu0 %v676
  %937 = vmatprep.subr.bf16.mxu0 0
  %938 = vmatpush1.bf16.msra.mxu0 %v677
  %939 = vmatprep.subr.bf16.mxu0 0
  %940 = vmatpush1.bf16.msra.mxu0 %v678
  %941 = vmatprep.subr.bf16.mxu0 0
  %942 = vmatpush1.bf16.msra.mxu0 %v679
  %943 = vmatprep.subr.bf16.mxu0 0
  %944 = vmatpush1.bf16.msra.mxu0 %v680
  %945 = vmatprep.subr.bf16.mxu0 0
  %946 = vmatpush1.bf16.msra.mxu0 %v681
  %947 = vmatprep.subr.bf16.mxu0 0
  %948 = vmatpush1.bf16.msra.mxu0 0
  %949 = vmatprep.subr.bf16.mxu0 0
  %950 = vmatpush1.bf16.msra.mxu0 0
  %951 = vmatprep.subr.bf16.mxu0 0
  %952 = vmatpush1.bf16.msra.mxu0 0
  %953 = vmatprep.subr.bf16.mxu0 0
  %954 = vmatpush1.bf16.msra.mxu0 0
  %955 = vmatprep.subr.bf16.mxu0 0
  %956 = vmatpush1.bf16.msra.mxu0 0
  %957 = vmatprep.subr.bf16.mxu0 0
  %958 = vmatpush1.bf16.msra.mxu0 0
  %959 = vmatprep.subr.bf16.mxu0 0
  %960 = vmatpush1.bf16.msra.mxu0 0
  %961 = vmatprep.subr.bf16.mxu0 0
  %962 = vmatpush1.bf16.msra.mxu0 0
  %963 = vmatprep.mubr.bf16.mxu0 0
  %964 = vmatmul.mubr.bf16.gmra.mrb[0].mxu0 %v420
  %v965 = vpop.f32.mrb[0].mxu0
  %v966 = vadd.f32 %v741, %v965
  %v967 = vpop.f32.mrb[0].mxu0
  %v968 = vpop.f32.mrb[0].mxu0
  %v969 = vadd.f32 %v744, %v968
  %v970 = vpop.f32.mrb[0].mxu0
  %971 = vmatprep.mubr.bf16.mxu0 0
  %972 = vmatmul.mubr.bf16.gmra.mrb[0].mxu0 %v423
  %v973 = vpop.f32.mrb[0].mxu0
  %v974 = vadd.f32 %v749, %v973
  %v975 = vpop.f32.mrb[0].mxu0
  %v976 = vpop.f32.mrb[0].mxu0
  %v977 = vadd.f32 %v752, %v976
  %v978 = vpop.f32.mrb[0].mxu0
  %979 = vmatprep.mubr.bf16.mxu0 0
  %980 = vmatmul.mubr.bf16.gmra.mrb[0].mxu0 %v426
  %v981 = vpop.f32.mrb[0].mxu0
  %v982 = vadd.f32 %v757, %v981
  %v983 = vpop.f32.mrb[0].mxu0
  %v984 = vpop.f32.mrb[0].mxu0
  %v985 = vadd.f32 %v760, %v984
  %v986 = vpop.f32.mrb[0].mxu0
  %987 = vmatprep.mubr.bf16.mxu0 0
  %988 = vmatmul.mubr.bf16.gmra.mrb[0].mxu0 %v429
  %v989 = vpop.f32.mrb[0].mxu0
  %v990 = vadd.f32 %v765, %v989
  %v991 = vpop.f32.mrb[0].mxu0
  %v992 = vpop.f32.mrb[0].mxu0
  %v993 = vadd.f32 %v768, %v992
  %v994 = vpop.f32.mrb[0].mxu0
  %995 = vmatprep.mubr.bf16.mxu0 0
  %996 = vmatmul.mubr.bf16.gmra.mrb[0].mxu0 %v432
  %v997 = vpop.f32.mrb[0].mxu0
  %v998 = vadd.f32 %v773, %v997
  %v999 = vpop.f32.mrb[0].mxu0
  %v1000 = vpop.f32.mrb[0].mxu0
  %v1001 = vadd.f32 %v776, %v1000
  %v1002 = vpop.f32.mrb[0].mxu0
  %1003 = vmatprep.mubr.bf16.mxu0 0
  %1004 = vmatmul.mubr.bf16.gmra.mrb[0].mxu0 %v435
  %v1005 = vpop.f32.mrb[0].mxu0
  %v1006 = vadd.f32 %v781, %v1005
  %v1007 = vpop.f32.mrb[0].mxu0
  %v1008 = vpop.f32.mrb[0].mxu0
  %v1009 = vadd.f32 %v784, %v1008
  %v1010 = vpop.f32.mrb[0].mxu0
  %1011 = vmatprep.mubr.bf16.mxu0 0
  %1012 = vmatmul.mubr.bf16.gmra.mrb[0].mxu0 %v438
  %v1013 = vpop.f32.mrb[0].mxu0
  %v1014 = vadd.f32 %v789, %v1013
  %v1015 = vpop.f32.mrb[0].mxu0
  %v1016 = vpop.f32.mrb[0].mxu0
  %v1017 = vadd.f32 %v792, %v1016
  %v1018 = vpop.f32.mrb[0].mxu0
  %1019 = vmatprep.mubr.bf16.mxu0 0
  %1020 = vmatmul.mubr.bf16.gmra.mrb[0].mxu0 %v441
  %v1021 = vpop.f32.mrb[0].mxu0
  %v1022 = vadd.f32 %v797, %v1021
  %v1023 = vpop.f32.mrb[0].mxu0
  %v1024 = vpop.f32.mrb[0].mxu0
  %v1025 = vadd.f32 %v800, %v1024
  %v1026 = vpop.f32.mrb[0].mxu0
  %1027 = vmatprep.mubr.bf16.mxu0 0
  %1028 = vmatmul.mubr.bf16.gmra.mrb[0].mxu0 %v444
  %v1029 = vpop.f32.mrb[0].mxu0
  %v1030 = vadd.f32 %v805, %v1029
  %v1031 = vpop.f32.mrb[0].mxu0
  %v1032 = vpop.f32.mrb[0].mxu0
  %v1033 = vadd.f32 %v808, %v1032
  %v1034 = vpop.f32.mrb[0].mxu0
  %1035 = vmatprep.mubr.bf16.mxu0 0
  %1036 = vmatmul.mubr.bf16.gmra.mrb[0].mxu0 %v447
  %v1037 = vpop.f32.mrb[0].mxu0
  %v1038 = vadd.f32 %v813, %v1037
  %v1039 = vpop.f32.mrb[0].mxu0
  %v1040 = vpop.f32.mrb[0].mxu0
  %v1041 = vadd.f32 %v816, %v1040
  %v1042 = vpop.f32.mrb[0].mxu0
  %1043 = vmatprep.mubr.bf16.mxu0 0
  %1044 = vmatmul.mubr.bf16.gmra.mrb[0].mxu0 %v450
  %v1045 = vpop.f32.mrb[0].mxu0
  %v1046 = vadd.f32 %v821, %v1045
  %v1047 = vpop.f32.mrb[0].mxu0
  %v1048 = vpop.f32.mrb[0].mxu0
  %v1049 = vadd.f32 %v824, %v1048
  %v1050 = vpop.f32.mrb[0].mxu0
  %1051 = vmatprep.mubr.bf16.mxu0 0
  %1052 = vmatmul.mubr.bf16.gmra.mrb[0].mxu0 %v453
  %v1053 = vpop.f32.mrb[0].mxu0
  %v1054 = vadd.f32 %v829, %v1053
  %v1055 = vpop.f32.mrb[0].mxu0
  %v1056 = vpop.f32.mrb[0].mxu0
  %v1057 = vadd.f32 %v832, %v1056
  %v1058 = vpop.f32.mrb[0].mxu0
  %1059 = vmatprep.mubr.bf16.mxu0 0
  %1060 = vmatmul.mubr.bf16.gmra.mrb[0].mxu0 %v456
  %v1061 = vpop.f32.mrb[0].mxu0
  %v1062 = vadd.f32 %v837, %v1061
  %v1063 = vpop.f32.mrb[0].mxu0
  %v1064 = vpop.f32.mrb[0].mxu0
  %v1065 = vadd.f32 %v840, %v1064
  %v1066 = vpop.f32.mrb[0].mxu0
  %1067 = vmatprep.mubr.bf16.mxu0 0
  %1068 = vmatmul.mubr.bf16.gmra.mrb[0].mxu0 %v459
  %v1069 = vpop.f32.mrb[0].mxu0
  %v1070 = vadd.f32 %v845, %v1069
  %v1071 = vpop.f32.mrb[0].mxu0
  %v1072 = vpop.f32.mrb[0].mxu0
  %v1073 = vadd.f32 %v848, %v1072
  %v1074 = vpop.f32.mrb[0].mxu0
  %1075 = vmatprep.mubr.bf16.mxu0 0
  %1076 = vmatmul.mubr.bf16.gmra.mrb[0].mxu0 %v462
  %v1077 = vpop.f32.mrb[0].mxu0
  %v1078 = vadd.f32 %v853, %v1077
  %v1079 = vpop.f32.mrb[0].mxu0
  %v1080 = vpop.f32.mrb[0].mxu0
  %v1081 = vadd.f32 %v856, %v1080
  %v1082 = vpop.f32.mrb[0].mxu0
  %1083 = vmatprep.mubr.bf16.mxu0 0
  %1084 = vmatmul.mubr.bf16.gmra.mrb[0].mxu0 %v465
  %v1085 = vpop.f32.mrb[0].mxu0
  %v1086 = vadd.f32 %v861, %v1085
  %v1087 = vpop.f32.mrb[0].mxu0
  %v1088 = vpop.f32.mrb[0].mxu0
  %v1089 = vadd.f32 %v864, %v1088
  %v1090 = vpop.f32.mrb[0].mxu0
  %1091 = vmatprep.mubr.bf16.mxu0 0
  %1092 = vmatmul.mubr.bf16.gmra.mrb[0].mxu0 %v468
  %v1093 = vpop.f32.mrb[0].mxu0
  %v1094 = vadd.f32 %v869, %v1093
  %v1095 = vpop.f32.mrb[0].mxu0
  %v1096 = vpop.f32.mrb[0].mxu0
  %v1097 = vadd.f32 %v872, %v1096
  %v1098 = vpop.f32.mrb[0].mxu0
  %1099 = vmatprep.mubr.bf16.mxu0 0
  %1100 = vmatmul.mubr.bf16.gmra.mrb[0].mxu0 %v471
  %v1101 = vpop.f32.mrb[0].mxu0
  %v1102 = vadd.f32 %v877, %v1101
  %v1103 = vpop.f32.mrb[0].mxu0
  %v1104 = vpop.f32.mrb[0].mxu0
  %v1105 = vadd.f32 %v880, %v1104
  %v1106 = vpop.f32.mrb[0].mxu0
  %1107 = vmatprep.mubr.bf16.mxu0 0
  %1108 = vmatmul.mubr.bf16.gmra.mrb[0].mxu0 %v474
  %v1109 = vpop.f32.mrb[0].mxu0
  %v1110 = vadd.f32 %v885, %v1109
  %v1111 = vpop.f32.mrb[0].mxu0
  %v1112 = vpop.f32.mrb[0].mxu0
  %v1113 = vadd.f32 %v888, %v1112
  %v1114 = vpop.f32.mrb[0].mxu0
  %1115 = vmatprep.mubr.bf16.mxu0 0
  %1116 = vmatmul.mubr.bf16.gmra.mrb[0].mxu0 %v477
  %v1117 = vpop.f32.mrb[0].mxu0
  %v1118 = vadd.f32 %v893, %v1117
  %v1119 = vpop.f32.mrb[0].mxu0
  %v1120 = vpop.f32.mrb[0].mxu0
  %v1121 = vadd.f32 %v896, %v1120
  %v1122 = vpop.f32.mrb[0].mxu0
  %1123 = vmatprep.mubr.bf16.mxu0 0
  %1124 = vmatmul.mubr.bf16.gmra.mrb[0].mxu0 %v480
  %v1125 = vpop.f32.mrb[0].mxu0
  %v1126 = vadd.f32 %v901, %v1125
  %v1127 = vpop.f32.mrb[0].mxu0
  %v1128 = vpop.f32.mrb[0].mxu0
  %v1129 = vadd.f32 %v904, %v1128
  %v1130 = vpop.f32.mrb[0].mxu0
  %1131 = vmatprep.mubr.bf16.mxu0 0
  %1132 = vmatmul.mubr.bf16.gmra.mrb[0].mxu0 %v483
  %v1133 = vpop.f32.mrb[0].mxu0
  %v1134 = vadd.f32 %v909, %v1133
  %v1135 = vpop.f32.mrb[0].mxu0
  %v1136 = vpop.f32.mrb[0].mxu0
  %v1137 = vadd.f32 %v912, %v1136
  %v1138 = vpop.f32.mrb[0].mxu0
  %1139 = vmatprep.mubr.bf16.mxu0 0
  %1140 = vmatmul.mubr.bf16.gmra.mrb[0].mxu0 %v486
  %v1141 = vpop.f32.mrb[0].mxu0
  %v1142 = vadd.f32 %v917, %v1141
  %v1143 = vpop.f32.mrb[0].mxu0
  %v1144 = vpop.f32.mrb[0].mxu0
  %v1145 = vadd.f32 %v920, %v1144
  %v1146 = vpop.f32.mrb[0].mxu0
  %1147 = vmatprep.mubr.bf16.mxu0 0
  %1148 = vmatmul.mubr.bf16.gmra.mrb[0].mxu0 %v489
  %v1149 = vpop.f32.mrb[0].mxu0
  %v1150 = vadd.f32 %v925, %v1149
  %v1151 = vpop.f32.mrb[0].mxu0
  %v1152 = vpop.f32.mrb[0].mxu0
  %v1153 = vadd.f32 %v928, %v1152
  %v1154 = vpop.f32.mrb[0].mxu0
  %1155 = vdwg.mxu0
  %vm1156 = vcmp.gt.f32.partialorder %v966, 0.0
  %vm1157 = vcmp.gt.f32.partialorder %v969, 0.0
  %vm1158 = vcmp.gt.f32.partialorder %v974, 0.0
  %vm1159 = vcmp.gt.f32.partialorder %v977, 0.0
  %vm1160 = vcmp.gt.f32.partialorder %v982, 0.0
  %vm1161 = vcmp.gt.f32.partialorder %v985, 0.0
  %vm1162 = vcmp.gt.f32.partialorder %v990, 0.0
  %vm1163 = vcmp.gt.f32.partialorder %v993, 0.0
  %vm1164 = vcmp.gt.f32.partialorder %v998, 0.0
  %vm1165 = vcmp.gt.f32.partialorder %v1001, 0.0
  %vm1166 = vcmp.gt.f32.partialorder %v1006, 0.0
  %vm1167 = vcmp.gt.f32.partialorder %v1009, 0.0
  %vm1168 = vcmp.gt.f32.partialorder %v1014, 0.0
  %vm1169 = vcmp.gt.f32.partialorder %v1017, 0.0
  %vm1170 = vcmp.gt.f32.partialorder %v1022, 0.0
  %vm1171 = vcmp.gt.f32.partialorder %v1025, 0.0
  %vm1172 = vcmp.gt.f32.partialorder %v1030, 0.0
  %vm1173 = vcmp.gt.f32.partialorder %v1033, 0.0
  %vm1174 = vcmp.gt.f32.partialorder %v1038, 0.0
  %vm1175 = vcmp.gt.f32.partialorder %v1041, 0.0
  %vm1176 = vcmp.gt.f32.partialorder %v1046, 0.0
  %vm1177 = vcmp.gt.f32.partialorder %v1049, 0.0
  %vm1178 = vcmp.gt.f32.partialorder %v1054, 0.0
  %vm1179 = vcmp.gt.f32.partialorder %v1057, 0.0
  %vm1180 = vcmp.gt.f32.partialorder %v1062, 0.0
  %vm1181 = vcmp.gt.f32.partialorder %v1065, 0.0
  %vm1182 = vcmp.gt.f32.partialorder %v1070, 0.0
  %vm1183 = vcmp.gt.f32.partialorder %v1073, 0.0
  %vm1184 = vcmp.gt.f32.partialorder %v1078, 0.0
  %vm1185 = vcmp.gt.f32.partialorder %v1081, 0.0
  %vm1186 = vcmp.gt.f32.partialorder %v1086, 0.0
  %vm1187 = vcmp.gt.f32.partialorder %v1089, 0.0
  %vm1188 = vcmp.gt.f32.partialorder %v1094, 0.0
  %vm1189 = vcmp.gt.f32.partialorder %v1097, 0.0
  %vm1190 = vcmp.gt.f32.partialorder %v1102, 0.0
  %vm1191 = vcmp.gt.f32.partialorder %v1105, 0.0
  %vm1192 = vcmp.gt.f32.partialorder %v1110, 0.0
  %vm1193 = vcmp.gt.f32.partialorder %v1113, 0.0
  %vm1194 = vcmp.gt.f32.partialorder %v1118, 0.0
  %vm1195 = vcmp.gt.f32.partialorder %v1121, 0.0
  %vm1196 = vcmp.gt.f32.partialorder %v1126, 0.0
  %vm1197 = vcmp.gt.f32.partialorder %v1129, 0.0
  %vm1198 = vcmp.gt.f32.partialorder %v1134, 0.0
  %vm1199 = vcmp.gt.f32.partialorder %v1137, 0.0
  %vm1200 = vcmp.gt.f32.partialorder %v1142, 0.0
  %vm1201 = vcmp.gt.f32.partialorder %v1145, 0.0
  %vm1202 = vcmp.gt.f32.partialorder %v1150, 0.0
  %vm1203 = vcmp.gt.f32.partialorder %v1153, 0.0
  %v1204 = vmul.f32 %v966, 0.1
  %v1205 = vmul.f32 %v969, 0.1
  %v1206 = vmul.f32 %v974, 0.1
  %v1207 = vmul.f32 %v977, 0.1
  %v1208 = vmul.f32 %v982, 0.1
  %v1209 = vmul.f32 %v985, 0.1
  %v1210 = vmul.f32 %v990, 0.1
  %v1211 = vmul.f32 %v993, 0.1
  %v1212 = vmul.f32 %v998, 0.1
  %v1213 = vmul.f32 %v1001, 0.1
  %v1214 = vmul.f32 %v1006, 0.1
  %v1215 = vmul.f32 %v1009, 0.1
  %v1216 = vmul.f32 %v1014, 0.1
  %v1217 = vmul.f32 %v1017, 0.1
  %v1218 = vmul.f32 %v1022, 0.1
  %v1219 = vmul.f32 %v1025, 0.1
  %v1220 = vmul.f32 %v1030, 0.1
  %v1221 = vmul.f32 %v1033, 0.1
  %v1222 = vmul.f32 %v1038, 0.1
  %v1223 = vmul.f32 %v1041, 0.1
  %v1224 = vmul.f32 %v1046, 0.1
  %v1225 = vmul.f32 %v1049, 0.1
  %v1226 = vmul.f32 %v1054, 0.1
  %v1227 = vmul.f32 %v1057, 0.1
  %v1228 = vmul.f32 %v1062, 0.1
  %v1229 = vmul.f32 %v1065, 0.1
  %v1230 = vmul.f32 %v1070, 0.1
  %v1231 = vmul.f32 %v1073, 0.1
  %v1232 = vmul.f32 %v1078, 0.1
  %v1233 = vmul.f32 %v1081, 0.1
  %v1234 = vmul.f32 %v1086, 0.1
  %v1235 = vmul.f32 %v1089, 0.1
  %v1236 = vmul.f32 %v1094, 0.1
  %v1237 = vmul.f32 %v1097, 0.1
  %v1238 = vmul.f32 %v1102, 0.1
  %v1239 = vmul.f32 %v1105, 0.1
  %v1240 = vmul.f32 %v1110, 0.1
  %v1241 = vmul.f32 %v1113, 0.1
  %v1242 = vmul.f32 %v1118, 0.1
  %v1243 = vmul.f32 %v1121, 0.1
  %v1244 = vmul.f32 %v1126, 0.1
  %v1245 = vmul.f32 %v1129, 0.1
  %v1246 = vmul.f32 %v1134, 0.1
  %v1247 = vmul.f32 %v1137, 0.1
  %v1248 = vmul.f32 %v1142, 0.1
  %v1249 = vmul.f32 %v1145, 0.1
  %v1250 = vmul.f32 %v1150, 0.1
  %v1251 = vmul.f32 %v1153, 0.1
  %v1252 = vsel %vm1156, %v966, %v1204
  %v1253 = vsel %vm1157, %v969, %v1205
  %v1254 = vsel %vm1158, %v974, %v1206
  %v1255 = vsel %vm1159, %v977, %v1207
  %v1256 = vsel %vm1160, %v982, %v1208
  %v1257 = vsel %vm1161, %v985, %v1209
  %v1258 = vsel %vm1162, %v990, %v1210
  %v1259 = vsel %vm1163, %v993, %v1211
  %v1260 = vsel %vm1164, %v998, %v1212
  %v1261 = vsel %vm1165, %v1001, %v1213
  %v1262 = vsel %vm1166, %v1006, %v1214
  %v1263 = vsel %vm1167, %v1009, %v1215
  %v1264 = vsel %vm1168, %v1014, %v1216
  %v1265 = vsel %vm1169, %v1017, %v1217
  %v1266 = vsel %vm1170, %v1022, %v1218
  %v1267 = vsel %vm1171, %v1025, %v1219
  %v1268 = vsel %vm1172, %v1030, %v1220
  %v1269 = vsel %vm1173, %v1033, %v1221
  %v1270 = vsel %vm1174, %v1038, %v1222
  %v1271 = vsel %vm1175, %v1041, %v1223
  %v1272 = vsel %vm1176, %v1046, %v1224
  %v1273 = vsel %vm1177, %v1049, %v1225
  %v1274 = vsel %vm1178, %v1054, %v1226
  %v1275 = vsel %vm1179, %v1057, %v1227
  %v1276 = vsel %vm1180, %v1062, %v1228
  %v1277 = vsel %vm1181, %v1065, %v1229
  %v1278 = vsel %vm1182, %v1070, %v1230
  %v1279 = vsel %vm1183, %v1073, %v1231
  %v1280 = vsel %vm1184, %v1078, %v1232
  %v1281 = vsel %vm1185, %v1081, %v1233
  %v1282 = vsel %vm1186, %v1086, %v1234
  %v1283 = vsel %vm1187, %v1089, %v1235
  %v1284 = vsel %vm1188, %v1094, %v1236
  %v1285 = vsel %vm1189, %v1097, %v1237
  %v1286 = vsel %vm1190, %v1102, %v1238
  %v1287 = vsel %vm1191, %v1105, %v1239
  %v1288 = vsel %vm1192, %v1110, %v1240
  %v1289 = vsel %vm1193, %v1113, %v1241
  %v1290 = vsel %vm1194, %v1118, %v1242
  %v1291 = vsel %vm1195, %v1121, %v1243
  %v1292 = vsel %vm1196, %v1126, %v1244
  %v1293 = vsel %vm1197, %v1129, %v1245
  %v1294 = vsel %vm1198, %v1134, %v1246
  %v1295 = vsel %vm1199, %v1137, %v1247
  %v1296 = vsel %vm1200, %v1142, %v1248
  %v1297 = vsel %vm1201, %v1145, %v1249
  %v1298 = vsel %vm1202, %v1150, %v1250
  %v1299 = vsel %vm1203, %v1153, %v1251
  %v1300 = vpack.c.bf16 %v1253, %v1252
  %v1301 = vpack.c.bf16 %v1255, %v1254
  %v1302 = vpack.c.bf16 %v1257, %v1256
  %v1303 = vpack.c.bf16 %v1259, %v1258
  %v1304 = vpack.c.bf16 %v1261, %v1260
  %v1305 = vpack.c.bf16 %v1263, %v1262
  %v1306 = vpack.c.bf16 %v1265, %v1264
  %v1307 = vpack.c.bf16 %v1267, %v1266
  %v1308 = vpack.c.bf16 %v1269, %v1268
  %v1309 = vpack.c.bf16 %v1271, %v1270
  %v1310 = vpack.c.bf16 %v1273, %v1272
  %v1311 = vpack.c.bf16 %v1275, %v1274
  %v1312 = vpack.c.bf16 %v1277, %v1276
  %v1313 = vpack.c.bf16 %v1279, %v1278
  %v1314 = vpack.c.bf16 %v1281, %v1280
  %v1315 = vpack.c.bf16 %v1283, %v1282
  %v1316 = vpack.c.bf16 %v1285, %v1284
  %v1317 = vpack.c.bf16 %v1287, %v1286
  %v1318 = vpack.c.bf16 %v1289, %v1288
  %v1319 = vpack.c.bf16 %v1291, %v1290
  %v1320 = vpack.c.bf16 %v1293, %v1292
  %v1321 = vpack.c.bf16 %v1295, %v1294
  %v1322 = vpack.c.bf16 %v1297, %v1296
  %v1323 = vpack.c.bf16 %v1299, %v1298
  %v1324 = vld [vmem:[%s3] sm:$0xf]
  %v1325 = vld [vmem:[%s3 + $0x4] sm:$0xf]
  %v1326 = vld [vmem:[%s3 + $0x8] sm:$0xf]
  %v1327 = vld [vmem:[%s3 + $0xc] sm:$0xf]
  %v1328 = vld [vmem:[%s4] sm:$0x1]
  %v1330 = vlaneseq
  %v1331 = vshrl.u32 %v1330, 7
  %v1332 = vsub.s32 0, %v1331
  %v1333 = vrot.slane %v1328, %v1332
  %v1339 = vunpack.c.l.b16 %v1324
  %v1340 = vunpack.c.l.b16 %v1325
  %v1341 = vunpack.c.l.b16 %v1326
  %v1342 = vunpack.c.l.b16 %v1327
  %v1343 = vpack.c.b16 %v1340, %v1339
  %v1344 = vpack.c.b16 %v1342, %v1341
  %vm1347 = vcmask 261120
  %v1349 = vsel %vm1347, %v1300, 0
  %v1352 = vsel %vm1347, %v1301, 0
  %v1355 = vsel %vm1347, %v1302, 0
  %v1358 = vsel %vm1347, %v1303, 0
  %v1361 = vsel %vm1347, %v1304, 0
  %v1364 = vsel %vm1347, %v1305, 0
  %v1367 = vsel %vm1347, %v1306, 0
  %v1370 = vsel %vm1347, %v1307, 0
  %v1373 = vsel %vm1347, %v1308, 0
  %v1376 = vsel %vm1347, %v1309, 0
  %v1379 = vsel %vm1347, %v1310, 0
  %v1382 = vsel %vm1347, %v1311, 0
  %v1385 = vsel %vm1347, %v1312, 0
  %v1388 = vsel %vm1347, %v1313, 0
  %v1391 = vsel %vm1347, %v1314, 0
  %v1394 = vsel %vm1347, %v1315, 0
  %v1397 = vsel %vm1347, %v1316, 0
  %v1400 = vsel %vm1347, %v1317, 0
  %v1403 = vsel %vm1347, %v1318, 0
  %v1406 = vsel %vm1347, %v1319, 0
  %v1409 = vsel %vm1347, %v1320, 0
  %v1412 = vsel %vm1347, %v1321, 0
  %v1415 = vsel %vm1347, %v1322, 0
  %v1418 = vsel %vm1347, %v1323, 0
  %1420 = vmatprep.subr.bf16.mxu0 0
  %1421 = vmatpush1.bf16.msra.mxu0 %v1343
  %1422 = vmatprep.subr.bf16.mxu0 0
  %1423 = vmatpush1.bf16.msra.mxu0 %v1344
  %1424 = vmatprep.subr.bf16.mxu0 0
  %1425 = vmatpush1.bf16.msra.mxu0 0
  %1426 = vmatprep.subr.bf16.mxu0 0
  %1427 = vmatpush1.bf16.msra.mxu0 0
  %1428 = vmatprep.subr.bf16.mxu0 0
  %1429 = vmatpush1.bf16.msra.mxu0 0
  %1430 = vmatprep.subr.bf16.mxu0 0
  %1431 = vmatpush1.bf16.msra.mxu0 0
  %1432 = vmatprep.subr.bf16.mxu0 0
  %1433 = vmatpush1.bf16.msra.mxu0 0
  %1434 = vmatprep.subr.bf16.mxu0 0
  %1435 = vmatpush1.bf16.msra.mxu0 0
  %1436 = vmatprep.subr.bf16.mxu0 0
  %1437 = vmatpush1.bf16.msra.mxu0 0
  %1438 = vmatprep.subr.bf16.mxu0 0
  %1439 = vmatpush1.bf16.msra.mxu0 0
  %1440 = vmatprep.subr.bf16.mxu0 0
  %1441 = vmatpush1.bf16.msra.mxu0 0
  %1442 = vmatprep.subr.bf16.mxu0 0
  %1443 = vmatpush1.bf16.msra.mxu0 0
  %1444 = vmatprep.subr.bf16.mxu0 0
  %1445 = vmatpush1.bf16.msra.mxu0 0
  %1446 = vmatprep.subr.bf16.mxu0 0
  %1447 = vmatpush1.bf16.msra.mxu0 0
  %1448 = vmatprep.subr.bf16.mxu0 0
  %1449 = vmatpush1.bf16.msra.mxu0 0
  %1450 = vmatprep.subr.bf16.mxu0 0
  %1451 = vmatpush1.bf16.msra.mxu0 0
  %1452 = vmatprep.mubr.bf16.mxu0 0
  %1453 = vmatmul.mubr.bf16.gmra.mrb[0].mxu0 %v1349
  %v1454 = vpop.f32.mrb[0].mxu0
  %v1455 = vadd.f32 %v1333, %v1454
  %v1456 = vpop.f32.mrb[0].mxu0
  %v1457 = vpop.f32.mrb[0].mxu0
  %v1458 = vadd.f32 %v1333, %v1457
  %v1459 = vpop.f32.mrb[0].mxu0
  %1460 = vmatprep.mubr.bf16.mxu0 0
  %1461 = vmatmul.mubr.bf16.gmra.mrb[0].mxu0 %v1352
  %v1462 = vpop.f32.mrb[0].mxu0
  %v1463 = vadd.f32 %v1333, %v1462
  %v1464 = vpop.f32.mrb[0].mxu0
  %v1465 = vpop.f32.mrb[0].mxu0
  %v1466 = vadd.f32 %v1333, %v1465
  %v1467 = vpop.f32.mrb[0].mxu0
  %1468 = vmatprep.mubr.bf16.mxu0 0
  %1469 = vmatmul.mubr.bf16.gmra.mrb[0].mxu0 %v1355
  %v1470 = vpop.f32.mrb[0].mxu0
  %v1471 = vadd.f32 %v1333, %v1470
  %v1472 = vpop.f32.mrb[0].mxu0
  %v1473 = vpop.f32.mrb[0].mxu0
  %v1474 = vadd.f32 %v1333, %v1473
  %v1475 = vpop.f32.mrb[0].mxu0
  %1476 = vmatprep.mubr.bf16.mxu0 0
  %1477 = vmatmul.mubr.bf16.gmra.mrb[0].mxu0 %v1358
  %v1478 = vpop.f32.mrb[0].mxu0
  %v1479 = vadd.f32 %v1333, %v1478
  %v1480 = vpop.f32.mrb[0].mxu0
  %v1481 = vpop.f32.mrb[0].mxu0
  %v1482 = vadd.f32 %v1333, %v1481
  %v1483 = vpop.f32.mrb[0].mxu0
  %1484 = vmatprep.mubr.bf16.mxu0 0
  %1485 = vmatmul.mubr.bf16.gmra.mrb[0].mxu0 %v1361
  %v1486 = vpop.f32.mrb[0].mxu0
  %v1487 = vadd.f32 %v1333, %v1486
  %v1488 = vpop.f32.mrb[0].mxu0
  %v1489 = vpop.f32.mrb[0].mxu0
  %v1490 = vadd.f32 %v1333, %v1489
  %v1491 = vpop.f32.mrb[0].mxu0
  %1492 = vmatprep.mubr.bf16.mxu0 0
  %1493 = vmatmul.mubr.bf16.gmra.mrb[0].mxu0 %v1364
  %v1494 = vpop.f32.mrb[0].mxu0
  %v1495 = vadd.f32 %v1333, %v1494
  %v1496 = vpop.f32.mrb[0].mxu0
  %v1497 = vpop.f32.mrb[0].mxu0
  %v1498 = vadd.f32 %v1333, %v1497
  %v1499 = vpop.f32.mrb[0].mxu0
  %1500 = vmatprep.mubr.bf16.mxu0 0
  %1501 = vmatmul.mubr.bf16.gmra.mrb[0].mxu0 %v1367
  %v1502 = vpop.f32.mrb[0].mxu0
  %v1503 = vadd.f32 %v1333, %v1502
  %v1504 = vpop.f32.mrb[0].mxu0
  %v1505 = vpop.f32.mrb[0].mxu0
  %v1506 = vadd.f32 %v1333, %v1505
  %v1507 = vpop.f32.mrb[0].mxu0
  %1508 = vmatprep.mubr.bf16.mxu0 0
  %1509 = vmatmul.mubr.bf16.gmra.mrb[0].mxu0 %v1370
  %v1510 = vpop.f32.mrb[0].mxu0
  %v1511 = vadd.f32 %v1333, %v1510
  %v1512 = vpop.f32.mrb[0].mxu0
  %v1513 = vpop.f32.mrb[0].mxu0
  %v1514 = vadd.f32 %v1333, %v1513
  %v1515 = vpop.f32.mrb[0].mxu0
  %1516 = vmatprep.mubr.bf16.mxu0 0
  %1517 = vmatmul.mubr.bf16.gmra.mrb[0].mxu0 %v1373
  %v1518 = vpop.f32.mrb[0].mxu0
  %v1519 = vadd.f32 %v1333, %v1518
  %v1520 = vpop.f32.mrb[0].mxu0
  %v1521 = vpop.f32.mrb[0].mxu0
  %v1522 = vadd.f32 %v1333, %v1521
  %v1523 = vpop.f32.mrb[0].mxu0
  %1524 = vmatprep.mubr.bf16.mxu0 0
  %1525 = vmatmul.mubr.bf16.gmra.mrb[0].mxu0 %v1376
  %v1526 = vpop.f32.mrb[0].mxu0
  %v1527 = vadd.f32 %v1333, %v1526
  %v1528 = vpop.f32.mrb[0].mxu0
  %v1529 = vpop.f32.mrb[0].mxu0
  %v1530 = vadd.f32 %v1333, %v1529
  %v1531 = vpop.f32.mrb[0].mxu0
  %1532 = vmatprep.mubr.bf16.mxu0 0
  %1533 = vmatmul.mubr.bf16.gmra.mrb[0].mxu0 %v1379
  %v1534 = vpop.f32.mrb[0].mxu0
  %v1535 = vadd.f32 %v1333, %v1534
  %v1536 = vpop.f32.mrb[0].mxu0
  %v1537 = vpop.f32.mrb[0].mxu0
  %v1538 = vadd.f32 %v1333, %v1537
  %v1539 = vpop.f32.mrb[0].mxu0
  %1540 = vmatprep.mubr.bf16.mxu0 0
  %1541 = vmatmul.mubr.bf16.gmra.mrb[0].mxu0 %v1382
  %v1542 = vpop.f32.mrb[0].mxu0
  %v1543 = vadd.f32 %v1333, %v1542
  %v1544 = vpop.f32.mrb[0].mxu0
  %v1545 = vpop.f32.mrb[0].mxu0
  %v1546 = vadd.f32 %v1333, %v1545
  %v1547 = vpop.f32.mrb[0].mxu0
  %1548 = vmatprep.mubr.bf16.mxu0 0
  %1549 = vmatmul.mubr.bf16.gmra.mrb[0].mxu0 %v1385
  %v1550 = vpop.f32.mrb[0].mxu0
  %v1551 = vadd.f32 %v1333, %v1550
  %v1552 = vpop.f32.mrb[0].mxu0
  %v1553 = vpop.f32.mrb[0].mxu0
  %v1554 = vadd.f32 %v1333, %v1553
  %v1555 = vpop.f32.mrb[0].mxu0
  %1556 = vmatprep.mubr.bf16.mxu0 0
  %1557 = vmatmul.mubr.bf16.gmra.mrb[0].mxu0 %v1388
  %v1558 = vpop.f32.mrb[0].mxu0
  %v1559 = vadd.f32 %v1333, %v1558
  %v1560 = vpop.f32.mrb[0].mxu0
  %v1561 = vpop.f32.mrb[0].mxu0
  %v1562 = vadd.f32 %v1333, %v1561
  %v1563 = vpop.f32.mrb[0].mxu0
  %1564 = vmatprep.mubr.bf16.mxu0 0
  %1565 = vmatmul.mubr.bf16.gmra.mrb[0].mxu0 %v1391
  %v1566 = vpop.f32.mrb[0].mxu0
  %v1567 = vadd.f32 %v1333, %v1566
  %v1568 = vpop.f32.mrb[0].mxu0
  %v1569 = vpop.f32.mrb[0].mxu0
  %v1570 = vadd.f32 %v1333, %v1569
  %v1571 = vpop.f32.mrb[0].mxu0
  %1572 = vmatprep.mubr.bf16.mxu0 0
  %1573 = vmatmul.mubr.bf16.gmra.mrb[0].mxu0 %v1394
  %v1574 = vpop.f32.mrb[0].mxu0
  %v1575 = vadd.f32 %v1333, %v1574
  %v1576 = vpop.f32.mrb[0].mxu0
  %v1577 = vpop.f32.mrb[0].mxu0
  %v1578 = vadd.f32 %v1333, %v1577
  %v1579 = vpop.f32.mrb[0].mxu0
  %1580 = vmatprep.mubr.bf16.mxu0 0
  %1581 = vmatmul.mubr.bf16.gmra.mrb[0].mxu0 %v1397
  %v1582 = vpop.f32.mrb[0].mxu0
  %v1583 = vadd.f32 %v1333, %v1582
  %v1584 = vpop.f32.mrb[0].mxu0
  %v1585 = vpop.f32.mrb[0].mxu0
  %v1586 = vadd.f32 %v1333, %v1585
  %v1587 = vpop.f32.mrb[0].mxu0
  %1588 = vmatprep.mubr.bf16.mxu0 0
  %1589 = vmatmul.mubr.bf16.gmra.mrb[0].mxu0 %v1400
  %v1590 = vpop.f32.mrb[0].mxu0
  %v1591 = vadd.f32 %v1333, %v1590
  %v1592 = vpop.f32.mrb[0].mxu0
  %v1593 = vpop.f32.mrb[0].mxu0
  %v1594 = vadd.f32 %v1333, %v1593
  %v1595 = vpop.f32.mrb[0].mxu0
  %1596 = vmatprep.mubr.bf16.mxu0 0
  %1597 = vmatmul.mubr.bf16.gmra.mrb[0].mxu0 %v1403
  %v1598 = vpop.f32.mrb[0].mxu0
  %v1599 = vadd.f32 %v1333, %v1598
  %v1600 = vpop.f32.mrb[0].mxu0
  %v1601 = vpop.f32.mrb[0].mxu0
  %v1602 = vadd.f32 %v1333, %v1601
  %v1603 = vpop.f32.mrb[0].mxu0
  %1604 = vmatprep.mubr.bf16.mxu0 0
  %1605 = vmatmul.mubr.bf16.gmra.mrb[0].mxu0 %v1406
  %v1606 = vpop.f32.mrb[0].mxu0
  %v1607 = vadd.f32 %v1333, %v1606
  %v1608 = vpop.f32.mrb[0].mxu0
  %v1609 = vpop.f32.mrb[0].mxu0
  %v1610 = vadd.f32 %v1333, %v1609
  %v1611 = vpop.f32.mrb[0].mxu0
  %1612 = vmatprep.mubr.bf16.mxu0 0
  %1613 = vmatmul.mubr.bf16.gmra.mrb[0].mxu0 %v1409
  %v1614 = vpop.f32.mrb[0].mxu0
  %v1615 = vadd.f32 %v1333, %v1614
  %v1616 = vpop.f32.mrb[0].mxu0
  %v1617 = vpop.f32.mrb[0].mxu0
  %v1618 = vadd.f32 %v1333, %v1617
  %v1619 = vpop.f32.mrb[0].mxu0
  %1620 = vmatprep.mubr.bf16.mxu0 0
  %1621 = vmatmul.mubr.bf16.gmra.mrb[0].mxu0 %v1412
  %v1622 = vpop.f32.mrb[0].mxu0
  %v1623 = vadd.f32 %v1333, %v1622
  %v1624 = vpop.f32.mrb[0].mxu0
  %v1625 = vpop.f32.mrb[0].mxu0
  %v1626 = vadd.f32 %v1333, %v1625
  %v1627 = vpop.f32.mrb[0].mxu0
  %1628 = vmatprep.mubr.bf16.mxu0 0
  %1629 = vmatmul.mubr.bf16.gmra.mrb[0].mxu0 %v1415
  %v1630 = vpop.f32.mrb[0].mxu0
  %v1631 = vadd.f32 %v1333, %v1630
  %v1632 = vpop.f32.mrb[0].mxu0
  %v1633 = vpop.f32.mrb[0].mxu0
  %v1634 = vadd.f32 %v1333, %v1633
  %v1635 = vpop.f32.mrb[0].mxu0
  %1636 = vmatprep.mubr.bf16.mxu0 0
  %1637 = vmatmul.mubr.bf16.gmra.mrb[0].mxu0 %v1418
  %v1638 = vpop.f32.mrb[0].mxu0
  %v1639 = vadd.f32 %v1333, %v1638
  %v1640 = vpop.f32.mrb[0].mxu0
  %v1641 = vpop.f32.mrb[0].mxu0
  %v1642 = vadd.f32 %v1333, %v1641
  %v1643 = vpop.f32.mrb[0].mxu0
  %1644 = vdwg.mxu0
  %vm1645 = vcmp.gt.f32.partialorder %v1455, 0.0
  %vm1646 = vcmp.gt.f32.partialorder %v1458, 0.0
  %vm1647 = vcmp.gt.f32.partialorder %v1463, 0.0
  %vm1648 = vcmp.gt.f32.partialorder %v1466, 0.0
  %vm1649 = vcmp.gt.f32.partialorder %v1471, 0.0
  %vm1650 = vcmp.gt.f32.partialorder %v1474, 0.0
  %vm1651 = vcmp.gt.f32.partialorder %v1479, 0.0
  %vm1652 = vcmp.gt.f32.partialorder %v1482, 0.0
  %vm1653 = vcmp.gt.f32.partialorder %v1487, 0.0
  %vm1654 = vcmp.gt.f32.partialorder %v1490, 0.0
  %vm1655 = vcmp.gt.f32.partialorder %v1495, 0.0
  %vm1656 = vcmp.gt.f32.partialorder %v1498, 0.0
  %vm1657 = vcmp.gt.f32.partialorder %v1503, 0.0
  %vm1658 = vcmp.gt.f32.partialorder %v1506, 0.0
  %vm1659 = vcmp.gt.f32.partialorder %v1511, 0.0
  %vm1660 = vcmp.gt.f32.partialorder %v1514, 0.0
  %vm1661 = vcmp.gt.f32.partialorder %v1519, 0.0
  %vm1662 = vcmp.gt.f32.partialorder %v1522, 0.0
  %vm1663 = vcmp.gt.f32.partialorder %v1527, 0.0
  %vm1664 = vcmp.gt.f32.partialorder %v1530, 0.0
  %vm1665 = vcmp.gt.f32.partialorder %v1535, 0.0
  %vm1666 = vcmp.gt.f32.partialorder %v1538, 0.0
  %vm1667 = vcmp.gt.f32.partialorder %v1543, 0.0
  %vm1668 = vcmp.gt.f32.partialorder %v1546, 0.0
  %vm1669 = vcmp.gt.f32.partialorder %v1551, 0.0
  %vm1670 = vcmp.gt.f32.partialorder %v1554, 0.0
  %vm1671 = vcmp.gt.f32.partialorder %v1559, 0.0
  %vm1672 = vcmp.gt.f32.partialorder %v1562, 0.0
  %vm1673 = vcmp.gt.f32.partialorder %v1567, 0.0
  %vm1674 = vcmp.gt.f32.partialorder %v1570, 0.0
  %vm1675 = vcmp.gt.f32.partialorder %v1575, 0.0
  %vm1676 = vcmp.gt.f32.partialorder %v1578, 0.0
  %vm1677 = vcmp.gt.f32.partialorder %v1583, 0.0
  %vm1678 = vcmp.gt.f32.partialorder %v1586, 0.0
  %vm1679 = vcmp.gt.f32.partialorder %v1591, 0.0
  %vm1680 = vcmp.gt.f32.partialorder %v1594, 0.0
  %vm1681 = vcmp.gt.f32.partialorder %v1599, 0.0
  %vm1682 = vcmp.gt.f32.partialorder %v1602, 0.0
  %vm1683 = vcmp.gt.f32.partialorder %v1607, 0.0
  %vm1684 = vcmp.gt.f32.partialorder %v1610, 0.0
  %vm1685 = vcmp.gt.f32.partialorder %v1615, 0.0
  %vm1686 = vcmp.gt.f32.partialorder %v1618, 0.0
  %vm1687 = vcmp.gt.f32.partialorder %v1623, 0.0
  %vm1688 = vcmp.gt.f32.partialorder %v1626, 0.0
  %vm1689 = vcmp.gt.f32.partialorder %v1631, 0.0
  %vm1690 = vcmp.gt.f32.partialorder %v1634, 0.0
  %vm1691 = vcmp.gt.f32.partialorder %v1639, 0.0
  %vm1692 = vcmp.gt.f32.partialorder %v1642, 0.0
  %v1693 = vmul.f32 %v1455, 0.1
  %v1694 = vmul.f32 %v1458, 0.1
  %v1695 = vmul.f32 %v1463, 0.1
  %v1696 = vmul.f32 %v1466, 0.1
  %v1697 = vmul.f32 %v1471, 0.1
  %v1698 = vmul.f32 %v1474, 0.1
  %v1699 = vmul.f32 %v1479, 0.1
  %v1700 = vmul.f32 %v1482, 0.1
  %v1701 = vmul.f32 %v1487, 0.1
  %v1702 = vmul.f32 %v1490, 0.1
  %v1703 = vmul.f32 %v1495, 0.1
  %v1704 = vmul.f32 %v1498, 0.1
  %v1705 = vmul.f32 %v1503, 0.1
  %v1706 = vmul.f32 %v1506, 0.1
  %v1707 = vmul.f32 %v1511, 0.1
  %v1708 = vmul.f32 %v1514, 0.1
  %v1709 = vmul.f32 %v1519, 0.1
  %v1710 = vmul.f32 %v1522, 0.1
  %v1711 = vmul.f32 %v1527, 0.1
  %v1712 = vmul.f32 %v1530, 0.1
  %v1713 = vmul.f32 %v1535, 0.1
  %v1714 = vmul.f32 %v1538, 0.1
  %v1715 = vmul.f32 %v1543, 0.1
  %v1716 = vmul.f32 %v1546, 0.1
  %v1717 = vmul.f32 %v1551, 0.1
  %v1718 = vmul.f32 %v1554, 0.1
  %v1719 = vmul.f32 %v1559, 0.1
  %v1720 = vmul.f32 %v1562, 0.1
  %v1721 = vmul.f32 %v1567, 0.1
  %v1722 = vmul.f32 %v1570, 0.1
  %v1723 = vmul.f32 %v1575, 0.1
  %v1724 = vmul.f32 %v1578, 0.1
  %v1725 = vmul.f32 %v1583, 0.1
  %v1726 = vmul.f32 %v1586, 0.1
  %v1727 = vmul.f32 %v1591, 0.1
  %v1728 = vmul.f32 %v1594, 0.1
  %v1729 = vmul.f32 %v1599, 0.1
  %v1730 = vmul.f32 %v1602, 0.1
  %v1731 = vmul.f32 %v1607, 0.1
  %v1732 = vmul.f32 %v1610, 0.1
  %v1733 = vmul.f32 %v1615, 0.1
  %v1734 = vmul.f32 %v1618, 0.1
  %v1735 = vmul.f32 %v1623, 0.1
  %v1736 = vmul.f32 %v1626, 0.1
  %v1737 = vmul.f32 %v1631, 0.1
  %v1738 = vmul.f32 %v1634, 0.1
  %v1739 = vmul.f32 %v1639, 0.1
  %v1740 = vmul.f32 %v1642, 0.1
  %v1741 = vsel %vm1645, %v1455, %v1693
  %v1742 = vsel %vm1646, %v1458, %v1694
  %v1743 = vsel %vm1647, %v1463, %v1695
  %v1744 = vsel %vm1648, %v1466, %v1696
  %v1745 = vsel %vm1649, %v1471, %v1697
  %v1746 = vsel %vm1650, %v1474, %v1698
  %v1747 = vsel %vm1651, %v1479, %v1699
  %v1748 = vsel %vm1652, %v1482, %v1700
  %v1749 = vsel %vm1653, %v1487, %v1701
  %v1750 = vsel %vm1654, %v1490, %v1702
  %v1751 = vsel %vm1655, %v1495, %v1703
  %v1752 = vsel %vm1656, %v1498, %v1704
  %v1753 = vsel %vm1657, %v1503, %v1705
  %v1754 = vsel %vm1658, %v1506, %v1706
  %v1755 = vsel %vm1659, %v1511, %v1707
  %v1756 = vsel %vm1660, %v1514, %v1708
  %v1757 = vsel %vm1661, %v1519, %v1709
  %v1758 = vsel %vm1662, %v1522, %v1710
  %v1759 = vsel %vm1663, %v1527, %v1711
  %v1760 = vsel %vm1664, %v1530, %v1712
  %v1761 = vsel %vm1665, %v1535, %v1713
  %v1762 = vsel %vm1666, %v1538, %v1714
  %v1763 = vsel %vm1667, %v1543, %v1715
  %v1764 = vsel %vm1668, %v1546, %v1716
  %v1765 = vsel %vm1669, %v1551, %v1717
  %v1766 = vsel %vm1670, %v1554, %v1718
  %v1767 = vsel %vm1671, %v1559, %v1719
  %v1768 = vsel %vm1672, %v1562, %v1720
  %v1769 = vsel %vm1673, %v1567, %v1721
  %v1770 = vsel %vm1674, %v1570, %v1722
  %v1771 = vsel %vm1675, %v1575, %v1723
  %v1772 = vsel %vm1676, %v1578, %v1724
  %v1773 = vsel %vm1677, %v1583, %v1725
  %v1774 = vsel %vm1678, %v1586, %v1726
  %v1775 = vsel %vm1679, %v1591, %v1727
  %v1776 = vsel %vm1680, %v1594, %v1728
  %v1777 = vsel %vm1681, %v1599, %v1729
  %v1778 = vsel %vm1682, %v1602, %v1730
  %v1779 = vsel %vm1683, %v1607, %v1731
  %v1780 = vsel %vm1684, %v1610, %v1732
  %v1781 = vsel %vm1685, %v1615, %v1733
  %v1782 = vsel %vm1686, %v1618, %v1734
  %v1783 = vsel %vm1687, %v1623, %v1735
  %v1784 = vsel %vm1688, %v1626, %v1736
  %v1785 = vsel %vm1689, %v1631, %v1737
  %v1786 = vsel %vm1690, %v1634, %v1738
  %v1787 = vsel %vm1691, %v1639, %v1739
  %v1788 = vsel %vm1692, %v1642, %v1740
  %v1789 = vpack.c.bf16 %v1742, %v1741
  %v1790 = vpack.c.bf16 %v1744, %v1743
  %v1791 = vpack.c.bf16 %v1746, %v1745
  %v1792 = vpack.c.bf16 %v1748, %v1747
  %v1793 = vpack.c.bf16 %v1750, %v1749
  %v1794 = vpack.c.bf16 %v1752, %v1751
  %v1795 = vpack.c.bf16 %v1754, %v1753
  %v1796 = vpack.c.bf16 %v1756, %v1755
  %v1797 = vpack.c.bf16 %v1758, %v1757
  %v1798 = vpack.c.bf16 %v1760, %v1759
  %v1799 = vpack.c.bf16 %v1762, %v1761
  %v1800 = vpack.c.bf16 %v1764, %v1763
  %v1801 = vpack.c.bf16 %v1766, %v1765
  %v1802 = vpack.c.bf16 %v1768, %v1767
  %v1803 = vpack.c.bf16 %v1770, %v1769
  %v1804 = vpack.c.bf16 %v1772, %v1771
  %v1805 = vpack.c.bf16 %v1774, %v1773
  %v1806 = vpack.c.bf16 %v1776, %v1775
  %v1807 = vpack.c.bf16 %v1778, %v1777
  %v1808 = vpack.c.bf16 %v1780, %v1779
  %v1809 = vpack.c.bf16 %v1782, %v1781
  %v1810 = vpack.c.bf16 %v1784, %v1783
  %v1811 = vpack.c.bf16 %v1786, %v1785
  %v1812 = vpack.c.bf16 %v1788, %v1787
  %v1813 = vld [vmem:[%s5] sm:$0xf]
  %v1814 = vld [vmem:[%s5 + $0x4] sm:$0xf]
  %v1815 = vld [vmem:[%s5 + $0x8] sm:$0xf]
  %v1816 = vld [vmem:[%s5 + $0xc] sm:$0xf]
  %v1817 = vld [vmem:[%s6] sm:$0x1]
  %v1819 = vlaneseq
  %v1820 = vshrl.u32 %v1819, 7
  %v1821 = vsub.s32 0, %v1820
  %v1822 = vrot.slane %v1817, %v1821
  %v1828 = vunpack.c.l.b16 %v1813
  %v1829 = vunpack.c.l.b16 %v1814
  %v1830 = vunpack.c.l.b16 %v1815
  %v1831 = vunpack.c.l.b16 %v1816
  %v1832 = vpack.c.b16 %v1829, %v1828
  %v1833 = vpack.c.b16 %v1831, %v1830
  %v1837 = vsel %vm1347, %v1789, 0
  %v1840 = vsel %vm1347, %v1790, 0
  %v1843 = vsel %vm1347, %v1791, 0
  %v1846 = vsel %vm1347, %v1792, 0
  %v1849 = vsel %vm1347, %v1793, 0
  %v1852 = vsel %vm1347, %v1794, 0
  %v1855 = vsel %vm1347, %v1795, 0
  %v1858 = vsel %vm1347, %v1796, 0
  %v1861 = vsel %vm1347, %v1797, 0
  %v1864 = vsel %vm1347, %v1798, 0
  %v1867 = vsel %vm1347, %v1799, 0
  %v1870 = vsel %vm1347, %v1800, 0
  %v1873 = vsel %vm1347, %v1801, 0
  %v1876 = vsel %vm1347, %v1802, 0
  %v1879 = vsel %vm1347, %v1803, 0
  %v1882 = vsel %vm1347, %v1804, 0
  %v1885 = vsel %vm1347, %v1805, 0
  %v1888 = vsel %vm1347, %v1806, 0
  %v1891 = vsel %vm1347, %v1807, 0
  %v1894 = vsel %vm1347, %v1808, 0
  %v1897 = vsel %vm1347, %v1809, 0
  %v1900 = vsel %vm1347, %v1810, 0
  %v1903 = vsel %vm1347, %v1811, 0
  %v1906 = vsel %vm1347, %v1812, 0
  %1908 = vmatprep.subr.bf16.mxu0 0
  %1909 = vmatpush1.bf16.msra.mxu0 %v1832
  %1910 = vmatprep.subr.bf16.mxu0 0
  %1911 = vmatpush1.bf16.msra.mxu0 %v1833
  %1912 = vmatprep.subr.bf16.mxu0 0
  %1913 = vmatpush1.bf16.msra.mxu0 0
  %1914 = vmatprep.subr.bf16.mxu0 0
  %1915 = vmatpush1.bf16.msra.mxu0 0
  %1916 = vmatprep.subr.bf16.mxu0 0
  %1917 = vmatpush1.bf16.msra.mxu0 0
  %1918 = vmatprep.subr.bf16.mxu0 0
  %1919 = vmatpush1.bf16.msra.mxu0 0
  %1920 = vmatprep.subr.bf16.mxu0 0
  %1921 = vmatpush1.bf16.msra.mxu0 0
  %1922 = vmatprep.subr.bf16.mxu0 0
  %1923 = vmatpush1.bf16.msra.mxu0 0
  %1924 = vmatprep.subr.bf16.mxu0 0
  %1925 = vmatpush1.bf16.msra.mxu0 0
  %1926 = vmatprep.subr.bf16.mxu0 0
  %1927 = vmatpush1.bf16.msra.mxu0 0
  %1928 = vmatprep.subr.bf16.mxu0 0
  %1929 = vmatpush1.bf16.msra.mxu0 0
  %1930 = vmatprep.subr.bf16.mxu0 0
  %1931 = vmatpush1.bf16.msra.mxu0 0
  %1932 = vmatprep.subr.bf16.mxu0 0
  %1933 = vmatpush1.bf16.msra.mxu0 0
  %1934 = vmatprep.subr.bf16.mxu0 0
  %1935 = vmatpush1.bf16.msra.mxu0 0
  %1936 = vmatprep.subr.bf16.mxu0 0
  %1937 = vmatpush1.bf16.msra.mxu0 0
  %1938 = vmatprep.subr.bf16.mxu0 0
  %1939 = vmatpush1.bf16.msra.mxu0 0
  %1940 = vmatprep.mubr.bf16.mxu0 0
  %1941 = vmatmul.mubr.bf16.gmra.mrb[0].mxu0 %v1837
  %v1942 = vpop.f32.mrb[0].mxu0
  %v1943 = vadd.f32 %v1822, %v1942
  %v1944 = vpop.f32.mrb[0].mxu0
  %v1945 = vpop.f32.mrb[0].mxu0
  %v1946 = vadd.f32 %v1822, %v1945
  %v1947 = vpop.f32.mrb[0].mxu0
  %1948 = vmatprep.mubr.bf16.mxu0 0
  %1949 = vmatmul.mubr.bf16.gmra.mrb[0].mxu0 %v1840
  %v1950 = vpop.f32.mrb[0].mxu0
  %v1951 = vadd.f32 %v1822, %v1950
  %v1952 = vpop.f32.mrb[0].mxu0
  %v1953 = vpop.f32.mrb[0].mxu0
  %v1954 = vadd.f32 %v1822, %v1953
  %v1955 = vpop.f32.mrb[0].mxu0
  %1956 = vmatprep.mubr.bf16.mxu0 0
  %1957 = vmatmul.mubr.bf16.gmra.mrb[0].mxu0 %v1843
  %v1958 = vpop.f32.mrb[0].mxu0
  %v1959 = vadd.f32 %v1822, %v1958
  %v1960 = vpop.f32.mrb[0].mxu0
  %v1961 = vpop.f32.mrb[0].mxu0
  %v1962 = vadd.f32 %v1822, %v1961
  %v1963 = vpop.f32.mrb[0].mxu0
  %1964 = vmatprep.mubr.bf16.mxu0 0
  %1965 = vmatmul.mubr.bf16.gmra.mrb[0].mxu0 %v1846
  %v1966 = vpop.f32.mrb[0].mxu0
  %v1967 = vadd.f32 %v1822, %v1966
  %v1968 = vpop.f32.mrb[0].mxu0
  %v1969 = vpop.f32.mrb[0].mxu0
  %v1970 = vadd.f32 %v1822, %v1969
  %v1971 = vpop.f32.mrb[0].mxu0
  %1972 = vmatprep.mubr.bf16.mxu0 0
  %1973 = vmatmul.mubr.bf16.gmra.mrb[0].mxu0 %v1849
  %v1974 = vpop.f32.mrb[0].mxu0
  %v1975 = vadd.f32 %v1822, %v1974
  %v1976 = vpop.f32.mrb[0].mxu0
  %v1977 = vpop.f32.mrb[0].mxu0
  %v1978 = vadd.f32 %v1822, %v1977
  %v1979 = vpop.f32.mrb[0].mxu0
  %1980 = vmatprep.mubr.bf16.mxu0 0
  %1981 = vmatmul.mubr.bf16.gmra.mrb[0].mxu0 %v1852
  %v1982 = vpop.f32.mrb[0].mxu0
  %v1983 = vadd.f32 %v1822, %v1982
  %v1984 = vpop.f32.mrb[0].mxu0
  %v1985 = vpop.f32.mrb[0].mxu0
  %v1986 = vadd.f32 %v1822, %v1985
  %v1987 = vpop.f32.mrb[0].mxu0
  %1988 = vmatprep.mubr.bf16.mxu0 0
  %1989 = vmatmul.mubr.bf16.gmra.mrb[0].mxu0 %v1855
  %v1990 = vpop.f32.mrb[0].mxu0
  %v1991 = vadd.f32 %v1822, %v1990
  %v1992 = vpop.f32.mrb[0].mxu0
  %v1993 = vpop.f32.mrb[0].mxu0
  %v1994 = vadd.f32 %v1822, %v1993
  %v1995 = vpop.f32.mrb[0].mxu0
  %1996 = vmatprep.mubr.bf16.mxu0 0
  %1997 = vmatmul.mubr.bf16.gmra.mrb[0].mxu0 %v1858
  %v1998 = vpop.f32.mrb[0].mxu0
  %v1999 = vadd.f32 %v1822, %v1998
  %v2000 = vpop.f32.mrb[0].mxu0
  %v2001 = vpop.f32.mrb[0].mxu0
  %v2002 = vadd.f32 %v1822, %v2001
  %v2003 = vpop.f32.mrb[0].mxu0
  %2004 = vmatprep.mubr.bf16.mxu0 0
  %2005 = vmatmul.mubr.bf16.gmra.mrb[0].mxu0 %v1861
  %v2006 = vpop.f32.mrb[0].mxu0
  %v2007 = vadd.f32 %v1822, %v2006
  %v2008 = vpop.f32.mrb[0].mxu0
  %v2009 = vpop.f32.mrb[0].mxu0
  %v2010 = vadd.f32 %v1822, %v2009
  %v2011 = vpop.f32.mrb[0].mxu0
  %2012 = vmatprep.mubr.bf16.mxu0 0
  %2013 = vmatmul.mubr.bf16.gmra.mrb[0].mxu0 %v1864
  %v2014 = vpop.f32.mrb[0].mxu0
  %v2015 = vadd.f32 %v1822, %v2014
  %v2016 = vpop.f32.mrb[0].mxu0
  %v2017 = vpop.f32.mrb[0].mxu0
  %v2018 = vadd.f32 %v1822, %v2017
  %v2019 = vpop.f32.mrb[0].mxu0
  %2020 = vmatprep.mubr.bf16.mxu0 0
  %2021 = vmatmul.mubr.bf16.gmra.mrb[0].mxu0 %v1867
  %v2022 = vpop.f32.mrb[0].mxu0
  %v2023 = vadd.f32 %v1822, %v2022
  %v2024 = vpop.f32.mrb[0].mxu0
  %v2025 = vpop.f32.mrb[0].mxu0
  %v2026 = vadd.f32 %v1822, %v2025
  %v2027 = vpop.f32.mrb[0].mxu0
  %2028 = vmatprep.mubr.bf16.mxu0 0
  %2029 = vmatmul.mubr.bf16.gmra.mrb[0].mxu0 %v1870
  %v2030 = vpop.f32.mrb[0].mxu0
  %v2031 = vadd.f32 %v1822, %v2030
  %v2032 = vpop.f32.mrb[0].mxu0
  %v2033 = vpop.f32.mrb[0].mxu0
  %v2034 = vadd.f32 %v1822, %v2033
  %v2035 = vpop.f32.mrb[0].mxu0
  %2036 = vmatprep.mubr.bf16.mxu0 0
  %2037 = vmatmul.mubr.bf16.gmra.mrb[0].mxu0 %v1873
  %v2038 = vpop.f32.mrb[0].mxu0
  %v2039 = vadd.f32 %v1822, %v2038
  %v2040 = vpop.f32.mrb[0].mxu0
  %v2041 = vpop.f32.mrb[0].mxu0
  %v2042 = vadd.f32 %v1822, %v2041
  %v2043 = vpop.f32.mrb[0].mxu0
  %2044 = vmatprep.mubr.bf16.mxu0 0
  %2045 = vmatmul.mubr.bf16.gmra.mrb[0].mxu0 %v1876
  %v2046 = vpop.f32.mrb[0].mxu0
  %v2047 = vadd.f32 %v1822, %v2046
  %v2048 = vpop.f32.mrb[0].mxu0
  %v2049 = vpop.f32.mrb[0].mxu0
  %v2050 = vadd.f32 %v1822, %v2049
  %v2051 = vpop.f32.mrb[0].mxu0
  %2052 = vmatprep.mubr.bf16.mxu0 0
  %2053 = vmatmul.mubr.bf16.gmra.mrb[0].mxu0 %v1879
  %v2054 = vpop.f32.mrb[0].mxu0
  %v2055 = vadd.f32 %v1822, %v2054
  %v2056 = vpop.f32.mrb[0].mxu0
  %v2057 = vpop.f32.mrb[0].mxu0
  %v2058 = vadd.f32 %v1822, %v2057
  %v2059 = vpop.f32.mrb[0].mxu0
  %2060 = vmatprep.mubr.bf16.mxu0 0
  %2061 = vmatmul.mubr.bf16.gmra.mrb[0].mxu0 %v1882
  %v2062 = vpop.f32.mrb[0].mxu0
  %v2063 = vadd.f32 %v1822, %v2062
  %v2064 = vpop.f32.mrb[0].mxu0
  %v2065 = vpop.f32.mrb[0].mxu0
  %v2066 = vadd.f32 %v1822, %v2065
  %v2067 = vpop.f32.mrb[0].mxu0
  %2068 = vmatprep.mubr.bf16.mxu0 0
  %2069 = vmatmul.mubr.bf16.gmra.mrb[0].mxu0 %v1885
  %v2070 = vpop.f32.mrb[0].mxu0
  %v2071 = vadd.f32 %v1822, %v2070
  %v2072 = vpop.f32.mrb[0].mxu0
  %v2073 = vpop.f32.mrb[0].mxu0
  %v2074 = vadd.f32 %v1822, %v2073
  %v2075 = vpop.f32.mrb[0].mxu0
  %2076 = vmatprep.mubr.bf16.mxu0 0
  %2077 = vmatmul.mubr.bf16.gmra.mrb[0].mxu0 %v1888
  %v2078 = vpop.f32.mrb[0].mxu0
  %v2079 = vadd.f32 %v1822, %v2078
  %v2080 = vpop.f32.mrb[0].mxu0
  %v2081 = vpop.f32.mrb[0].mxu0
  %v2082 = vadd.f32 %v1822, %v2081
  %v2083 = vpop.f32.mrb[0].mxu0
  %2084 = vmatprep.mubr.bf16.mxu0 0
  %2085 = vmatmul.mubr.bf16.gmra.mrb[0].mxu0 %v1891
  %v2086 = vpop.f32.mrb[0].mxu0
  %v2087 = vadd.f32 %v1822, %v2086
  %v2088 = vpop.f32.mrb[0].mxu0
  %v2089 = vpop.f32.mrb[0].mxu0
  %v2090 = vadd.f32 %v1822, %v2089
  %v2091 = vpop.f32.mrb[0].mxu0
  %2092 = vmatprep.mubr.bf16.mxu0 0
  %2093 = vmatmul.mubr.bf16.gmra.mrb[0].mxu0 %v1894
  %v2094 = vpop.f32.mrb[0].mxu0
  %v2095 = vadd.f32 %v1822, %v2094
  %v2096 = vpop.f32.mrb[0].mxu0
  %v2097 = vpop.f32.mrb[0].mxu0
  %v2098 = vadd.f32 %v1822, %v2097
  %v2099 = vpop.f32.mrb[0].mxu0
  %2100 = vmatprep.mubr.bf16.mxu0 0
  %2101 = vmatmul.mubr.bf16.gmra.mrb[0].mxu0 %v1897
  %v2102 = vpop.f32.mrb[0].mxu0
  %v2103 = vadd.f32 %v1822, %v2102
  %v2104 = vpop.f32.mrb[0].mxu0
  %v2105 = vpop.f32.mrb[0].mxu0
  %v2106 = vadd.f32 %v1822, %v2105
  %v2107 = vpop.f32.mrb[0].mxu0
  %2108 = vmatprep.mubr.bf16.mxu0 0
  %2109 = vmatmul.mubr.bf16.gmra.mrb[0].mxu0 %v1900
  %v2110 = vpop.f32.mrb[0].mxu0
  %v2111 = vadd.f32 %v1822, %v2110
  %v2112 = vpop.f32.mrb[0].mxu0
  %v2113 = vpop.f32.mrb[0].mxu0
  %v2114 = vadd.f32 %v1822, %v2113
  %v2115 = vpop.f32.mrb[0].mxu0
  %2116 = vmatprep.mubr.bf16.mxu0 0
  %2117 = vmatmul.mubr.bf16.gmra.mrb[0].mxu0 %v1903
  %v2118 = vpop.f32.mrb[0].mxu0
  %v2119 = vadd.f32 %v1822, %v2118
  %v2120 = vpop.f32.mrb[0].mxu0
  %v2121 = vpop.f32.mrb[0].mxu0
  %v2122 = vadd.f32 %v1822, %v2121
  %v2123 = vpop.f32.mrb[0].mxu0
  %2124 = vmatprep.mubr.bf16.mxu0 0
  %2125 = vmatmul.mubr.bf16.gmra.mrb[0].mxu0 %v1906
  %v2126 = vpop.f32.mrb[0].mxu0
  %v2127 = vadd.f32 %v1822, %v2126
  %v2128 = vpop.f32.mrb[0].mxu0
  %v2129 = vpop.f32.mrb[0].mxu0
  %v2130 = vadd.f32 %v1822, %v2129
  %v2131 = vpop.f32.mrb[0].mxu0
  %2132 = vdwg.mxu0
  %v2133 = vadd.f32 %v1943, %v1975
  %v2134 = vadd.f32 %v1946, %v1978
  %v2135 = vadd.f32 %v1951, %v1983
  %v2136 = vadd.f32 %v1954, %v1986
  %v2137 = vadd.f32 %v1959, %v1991
  %v2138 = vadd.f32 %v1962, %v1994
  %v2139 = vadd.f32 %v1967, %v1999
  %v2140 = vadd.f32 %v1970, %v2002
  %v2141 = vadd.f32 %v2133, %v2007
  %v2142 = vadd.f32 %v2134, %v2010
  %v2143 = vadd.f32 %v2135, %v2015
  %v2144 = vadd.f32 %v2136, %v2018
  %v2145 = vadd.f32 %v2137, %v2023
  %v2146 = vadd.f32 %v2138, %v2026
  %v2147 = vadd.f32 %v2139, %v2031
  %v2148 = vadd.f32 %v2140, %v2034
  %v2149 = vadd.f32 %v2141, %v2039
  %v2150 = vadd.f32 %v2142, %v2042
  %v2151 = vadd.f32 %v2143, %v2047
  %v2152 = vadd.f32 %v2144, %v2050
  %v2153 = vadd.f32 %v2145, %v2055
  %v2154 = vadd.f32 %v2146, %v2058
  %v2155 = vadd.f32 %v2147, %v2063
  %v2156 = vadd.f32 %v2148, %v2066
  %v2157 = vadd.f32 %v2149, %v2071
  %v2158 = vadd.f32 %v2150, %v2074
  %v2159 = vadd.f32 %v2151, %v2079
  %v2160 = vadd.f32 %v2152, %v2082
  %v2161 = vadd.f32 %v2153, %v2087
  %v2162 = vadd.f32 %v2154, %v2090
  %v2163 = vadd.f32 %v2155, %v2095
  %v2164 = vadd.f32 %v2156, %v2098
  %v2165 = vadd.f32 %v2157, %v2103
  %v2166 = vadd.f32 %v2158, %v2106
  %v2167 = vadd.f32 %v2159, %v2111
  %v2168 = vadd.f32 %v2160, %v2114
  %v2169 = vadd.f32 %v2161, %v2119
  %v2170 = vadd.f32 %v2162, %v2122
  %v2171 = vadd.f32 %v2163, %v2127
  %v2172 = vadd.f32 %v2164, %v2130
  %2173 = vst [vmem:[%s7] sm:$0xff] %v2165
  %2174 = vst [vmem:[%s7 + $0x8] sm:$0xff] %v2166
  %2175 = vst [vmem:[%s7 + $0x10] sm:$0xff] %v2167
  %2176 = vst [vmem:[%s7 + $0x18] sm:$0xff] %v2168
  %2177 = vst [vmem:[%s7 + $0x20] sm:$0xff] %v2169
  %2178 = vst [vmem:[%s7 + $0x28] sm:$0xff] %v2170
  %2179 = vst [vmem:[%s7 + $0x30] sm:$0xff] %v2171
  %2180 = vst [vmem:[%s7 + $0x38] sm:$0xff] %v2172
  // Predicated region
  $region30: #{flow_ml_error_forward.20} parent=0 // pred_check
    _
  $region31: #{flow_ml_error_forward.20} parent=0 // pred_check_branch
    %2182 = sbr.rel (0) target = $region33
  $region32: #{flow_ml_error_forward.20} parent=0 // pred_region
    _
  $region33: #{flow_ml_error_forward.20} parent=0 // pred_fallthru
    _
  // Predicated region
  $region34: #{flow_ml_error_forward.20} parent=0 // pred_check
    _
  $region35: #{flow_ml_error_forward.20} parent=0 // pred_check_branch
    %2184 = sbr.rel (0) target = $region37
  $region36: #{flow_ml_error_forward.20} parent=0 // pred_region
    _
  $region37: #{flow_ml_error_forward.20} parent=0 // pred_fallthru
    _

// kernel: flow_ml_error_forward.21
$region0: #{flow_ml_error_forward.21}
  #allocation0 [shape = 'u32[]', space=smem, size = 0x4, offset = 0x4, fixed_abs, tag = 'smem constant byte address 0x4 - core index']
  #allocation1 [shape = 'u32[144,128]{1,0:T(1,128)}', space=vmem, size = 0x12000, scoped, tag = 'internal scratch']
  %s0 = inlined_call_operand.vmem [shape: bf16[64,64], index: 0, kind: input, shape index: {}]
  %s1 = inlined_call_operand.vmem [shape: bf16[64,4], index: 1, kind: input, shape index: {}]
  %s2 = inlined_call_operand.vmem [shape: bf16[4,64], index: 2, kind: input, shape index: {}]
  %s3 = inlined_call_operand.vmem [shape: f32[1,64], index: 3, kind: input, shape index: {}]
  %s4 = inlined_call_operand.vmem [shape: bf16[64,64], index: 4, kind: input, shape index: {}]
  %s5 = inlined_call_operand.vmem [shape: f32[1,64], index: 5, kind: input, shape index: {}]
  %s6 = inlined_call_operand.vmem [shape: bf16[64,64], index: 6, kind: input, shape index: {}]
  %s7 = inlined_call_operand.vmem [shape: f32[1,64], index: 7, kind: input, shape index: {}]
  %s8 = inlined_call_operand.vmem [shape: bf16[64,64], index: 8, kind: input, shape index: {}]
  %s9 = inlined_call_operand.vmem [shape: f32[1,64], index: 9, kind: input, shape index: {}]
  %s10 = inlined_call_operand.vmem [shape: bf16[64,128], index: 10, kind: input, shape index: {}]
  %s11 = inlined_call_operand.vmem [shape: f32[1,128], index: 11, kind: input, shape index: {}]
  %s12 = inlined_call_operand.vmem [shape: f32[64,128], index: 12, kind: output, shape index: {}]
  %s13 = sld [smem:[#allocation0]]
  $region58: #{flow_ml_error_forward.21} parent=0
    _
  %s15 = ssub.s32 1, %s13
  %s16 = scalar_select 0, %s15, %s13
  // Predicated region
  $region2: #{flow_ml_error_forward.21} parent=0 // pred_check
    _
  $region3: #{flow_ml_error_forward.21} parent=0 // pred_check_branch
    %18 = sbr.rel (0) target = $region5
  $region4: #{flow_ml_error_forward.21} parent=0 // pred_region
    _
  $region5: #{flow_ml_error_forward.21} parent=0 // pred_fallthru
    _
  // Predicated region
  $region6: #{flow_ml_error_forward.21} parent=0 // pred_check
    _
  $region7: #{flow_ml_error_forward.21} parent=0 // pred_check_branch
    %20 = sbr.rel (0) target = $region9
  $region8: #{flow_ml_error_forward.21} parent=0 // pred_region
    _
  $region9: #{flow_ml_error_forward.21} parent=0 // pred_fallthru
    _
  // Predicated region
  $region10: #{flow_ml_error_forward.21} parent=0 // pred_check
    _
  $region11: #{flow_ml_error_forward.21} parent=0 // pred_check_branch
    %22 = sbr.rel (0) target = $region13
  $region12: #{flow_ml_error_forward.21} parent=0 // pred_region
    _
  $region13: #{flow_ml_error_forward.21} parent=0 // pred_fallthru
    _
  // Predicated region
  $region14: #{flow_ml_error_forward.21} parent=0 // pred_check
    _
  $region15: #{flow_ml_error_forward.21} parent=0 // pred_check_branch
    %24 = sbr.rel (0) target = $region17
  $region16: #{flow_ml_error_forward.21} parent=0 // pred_region
    _
  $region17: #{flow_ml_error_forward.21} parent=0 // pred_fallthru
    _
  // Predicated region
  $region18: #{flow_ml_error_forward.21} parent=0 // pred_check
    _
  $region19: #{flow_ml_error_forward.21} parent=0 // pred_check_branch
    %26 = sbr.rel (0) target = $region21
  $region20: #{flow_ml_error_forward.21} parent=0 // pred_region
    _
  $region21: #{flow_ml_error_forward.21} parent=0 // pred_fallthru
    _
  // Predicated region
  $region22: #{flow_ml_error_forward.21} parent=0 // pred_check
    _
  $region23: #{flow_ml_error_forward.21} parent=0 // pred_check_branch
    %28 = sbr.rel (0) target = $region25
  $region24: #{flow_ml_error_forward.21} parent=0 // pred_region
    _
  $region25: #{flow_ml_error_forward.21} parent=0 // pred_fallthru
    _
  // Predicated region
  $region26: #{flow_ml_error_forward.21} parent=0 // pred_check
    _
  $region27: #{flow_ml_error_forward.21} parent=0 // pred_check_branch
    %30 = sbr.rel (0) target = $region29
  $region28: #{flow_ml_error_forward.21} parent=0 // pred_region
    _
  $region29: #{flow_ml_error_forward.21} parent=0 // pred_fallthru
    _
  // Predicated region
  $region30: #{flow_ml_error_forward.21} parent=0 // pred_check
    _
  $region31: #{flow_ml_error_forward.21} parent=0 // pred_check_branch
    %32 = sbr.rel (0) target = $region33
  $region32: #{flow_ml_error_forward.21} parent=0 // pred_region
    _
  $region33: #{flow_ml_error_forward.21} parent=0 // pred_fallthru
    _
  // Predicated region
  $region34: #{flow_ml_error_forward.21} parent=0 // pred_check
    _
  $region35: #{flow_ml_error_forward.21} parent=0 // pred_check_branch
    %34 = sbr.rel (0) target = $region37
  $region36: #{flow_ml_error_forward.21} parent=0 // pred_region
    _
  $region37: #{flow_ml_error_forward.21} parent=0 // pred_fallthru
    _
  // Predicated region
  $region38: #{flow_ml_error_forward.21} parent=0 // pred_check
    _
  $region39: #{flow_ml_error_forward.21} parent=0 // pred_check_branch
    %36 = sbr.rel (0) target = $region41
  $region40: #{flow_ml_error_forward.21} parent=0 // pred_region
    _
  $region41: #{flow_ml_error_forward.21} parent=0 // pred_fallthru
    _
  // Predicated region
  $region42: #{flow_ml_error_forward.21} parent=0 // pred_check
    _
  $region43: #{flow_ml_error_forward.21} parent=0 // pred_check_branch
    %38 = sbr.rel (0) target = $region45
  $region44: #{flow_ml_error_forward.21} parent=0 // pred_region
    _
  $region45: #{flow_ml_error_forward.21} parent=0 // pred_fallthru
    _
  // Predicated region
  $region46: #{flow_ml_error_forward.21} parent=0 // pred_check
    _
  $region47: #{flow_ml_error_forward.21} parent=0 // pred_check_branch
    %40 = sbr.rel (0) target = $region49
  $region48: #{flow_ml_error_forward.21} parent=0 // pred_region
    _
  $region49: #{flow_ml_error_forward.21} parent=0 // pred_fallthru
    _
  %v42 = vld [vmem:[%s0] sm:$0xf]
  %v43 = vld [vmem:[%s0 + $0x4] sm:$0xf]
  %v44 = vld [vmem:[%s0 + $0x8] sm:$0xf]
  %v45 = vld [vmem:[%s0 + $0xc] sm:$0xf]
  %v46 = vld [vmem:[%s0 + $0x10] sm:$0xf]
  %v47 = vld [vmem:[%s0 + $0x14] sm:$0xf]
  %v48 = vld [vmem:[%s0 + $0x18] sm:$0xf]
  %v49 = vld [vmem:[%s0 + $0x1c] sm:$0xf]
  %v50 = vld [vmem:[%s1] sm:$0xf]
  %v51 = vld [vmem:[%s1 + $0x4] sm:$0xf]
  %v52 = vld [vmem:[%s1 + $0x8] sm:$0xf]
  %v53 = vld [vmem:[%s1 + $0xc] sm:$0xf]
  %v54 = vld [vmem:[%s1 + $0x10] sm:$0xf]
  %v55 = vld [vmem:[%s1 + $0x14] sm:$0xf]
  %v56 = vld [vmem:[%s1 + $0x18] sm:$0xf]
  %v57 = vld [vmem:[%s1 + $0x1c] sm:$0xf]
  %v58 = vld [vmem:[%s2] sm:$0x3]
  %v59 = vld [vmem:[%s3] sm:$0x1]
  %v68 = vunpack.c.l.b16 %v50
  %v69 = vunpack.c.l.b16 %v51
  %v70 = vunpack.c.l.b16 %v52
  %v71 = vunpack.c.l.b16 %v53
  %v72 = vunpack.c.l.b16 %v54
  %v73 = vunpack.c.l.b16 %v55
  %v74 = vunpack.c.l.b16 %v56
  %v75 = vunpack.c.l.b16 %v57
  %v76 = vpack.c.b16 %v69, %v68
  %v77 = vpack.c.b16 %v71, %v70
  %v78 = vpack.c.b16 %v73, %v72
  %v79 = vpack.c.b16 %v75, %v74
  %vm80 = vcmask 31744
  %v82 = vsel %vm80, %v76, 0
  %v85 = vsel %vm80, %v77, 0
  %v88 = vsel %vm80, %v78, 0
  %v91 = vsel %vm80, %v79, 0
  %vm93 = vcmask 1041408
  %v95 = vsel %vm93, %v58, 0
  %97 = vmatprep.subr.bf16.mxu0 0
  %98 = vmatpush1.bf16.msra.mxu0 %v95
  %99 = vmatprep.subr.bf16.mxu0 0
  %100 = vmatpush1.bf16.msra.mxu0 0
  %101 = vmatprep.subr.bf16.mxu0 0
  %102 = vmatpush1.bf16.msra.mxu0 0
  %103 = vmatprep.subr.bf16.mxu0 0
  %104 = vmatpush1.bf16.msra.mxu0 0
  %105 = vmatprep.subr.bf16.mxu0 0
  %106 = vmatpush1.bf16.msra.mxu0 0
  %107 = vmatprep.subr.bf16.mxu0 0
  %108 = vmatpush1.bf16.msra.mxu0 0
  %109 = vmatprep.subr.bf16.mxu0 0
  %110 = vmatpush1.bf16.msra.mxu0 0
  %111 = vmatprep.subr.bf16.mxu0 0
  %112 = vmatpush1.bf16.msra.mxu0 0
  %113 = vmatprep.subr.bf16.mxu0 0
  %114 = vmatpush1.bf16.msra.mxu0 0
  %115 = vmatprep.subr.bf16.mxu0 0
  %116 = vmatpush1.bf16.msra.mxu0 0
  %117 = vmatprep.subr.bf16.mxu0 0
  %118 = vmatpush1.bf16.msra.mxu0 0
  %119 = vmatprep.subr.bf16.mxu0 0
  %120 = vmatpush1.bf16.msra.mxu0 0
  %121 = vmatprep.subr.bf16.mxu0 0
  %122 = vmatpush1.bf16.msra.mxu0 0
  %123 = vmatprep.subr.bf16.mxu0 0
  %124 = vmatpush1.bf16.msra.mxu0 0
  %125 = vmatprep.subr.bf16.mxu0 0
  %126 = vmatpush1.bf16.msra.mxu0 0
  %127 = vmatprep.subr.bf16.mxu0 0
  %128 = vmatpush1.bf16.msra.mxu0 0
  %129 = vmatprep.mubr.bf16.mxu0 0
  %130 = vmatmul.mubr.bf16.gmra.mrb[0].mxu0 %v82
  %v131 = vpop.f32.mrb[0].mxu0
  %v132 = vadd.f32 0.0, %v131
  %v133 = vpop.f32.mrb[0].mxu0
  %v134 = vpop.f32.mrb[0].mxu0
  %v135 = vadd.f32 0.0, %v134
  %v136 = vpop.f32.mrb[0].mxu0
  %137 = vmatprep.mubr.bf16.mxu0 0
  %138 = vmatmul.mubr.bf16.gmra.mrb[0].mxu0 %v85
  %v139 = vpop.f32.mrb[0].mxu0
  %v140 = vadd.f32 0.0, %v139
  %v141 = vpop.f32.mrb[0].mxu0
  %v142 = vpop.f32.mrb[0].mxu0
  %v143 = vadd.f32 0.0, %v142
  %v144 = vpop.f32.mrb[0].mxu0
  %145 = vmatprep.mubr.bf16.mxu0 0
  %146 = vmatmul.mubr.bf16.gmra.mrb[0].mxu0 %v88
  %v147 = vpop.f32.mrb[0].mxu0
  %v148 = vadd.f32 0.0, %v147
  %v149 = vpop.f32.mrb[0].mxu0
  %v150 = vpop.f32.mrb[0].mxu0
  %v151 = vadd.f32 0.0, %v150
  %v152 = vpop.f32.mrb[0].mxu0
  %153 = vmatprep.mubr.bf16.mxu0 0
  %154 = vmatmul.mubr.bf16.gmra.mrb[0].mxu0 %v91
  %v155 = vpop.f32.mrb[0].mxu0
  %v156 = vadd.f32 0.0, %v155
  %v157 = vpop.f32.mrb[0].mxu0
  %v158 = vpop.f32.mrb[0].mxu0
  %v159 = vadd.f32 0.0, %v158
  %v160 = vpop.f32.mrb[0].mxu0
  %161 = vdwg.mxu0
  %v162 = vpack.c.bf16 %v135, %v132
  %v163 = vpack.c.bf16 %v143, %v140
  %v164 = vpack.c.bf16 %v151, %v148
  %v165 = vpack.c.bf16 %v159, %v156
  %v167 = vlaneseq
  %v168 = vshrl.u32 %v167, 7
  %v169 = vsub.s32 0, %v168
  %v170 = vrot.slane %v59, %v169
  %v180 = vunpack.c.l.b16 %v42
  %v181 = vunpack.c.l.b16 %v43
  %v182 = vunpack.c.l.b16 %v44
  %v183 = vunpack.c.l.b16 %v45
  %v184 = vunpack.c.l.b16 %v46
  %v185 = vunpack.c.l.b16 %v47
  %v186 = vunpack.c.l.b16 %v48
  %v187 = vunpack.c.l.b16 %v49
  %v188 = vpack.c.b16 %v181, %v180
  %v189 = vpack.c.b16 %v183, %v182
  %v190 = vpack.c.b16 %v185, %v184
  %v191 = vpack.c.b16 %v187, %v186
  %vm192 = vcmask 523264
  %v194 = vsel %vm192, %v188, 0
  %v197 = vsel %vm192, %v189, 0
  %v200 = vsel %vm192, %v190, 0
  %v203 = vsel %vm192, %v191, 0
  %205 = vmatprep.subr.bf16.mxu0 0
  %206 = vmatpush1.bf16.msra.mxu0 %v162
  %207 = vmatprep.subr.bf16.mxu0 0
  %208 = vmatpush1.bf16.msra.mxu0 %v163
  %209 = vmatprep.subr.bf16.mxu0 0
  %210 = vmatpush1.bf16.msra.mxu0 %v164
  %211 = vmatprep.subr.bf16.mxu0 0
  %212 = vmatpush1.bf16.msra.mxu0 %v165
  %213 = vmatprep.subr.bf16.mxu0 0
  %214 = vmatpush1.bf16.msra.mxu0 0
  %215 = vmatprep.subr.bf16.mxu0 0
  %216 = vmatpush1.bf16.msra.mxu0 0
  %217 = vmatprep.subr.bf16.mxu0 0
  %218 = vmatpush1.bf16.msra.mxu0 0
  %219 = vmatprep.subr.bf16.mxu0 0
  %220 = vmatpush1.bf16.msra.mxu0 0
  %221 = vmatprep.subr.bf16.mxu0 0
  %222 = vmatpush1.bf16.msra.mxu0 0
  %223 = vmatprep.subr.bf16.mxu0 0
  %224 = vmatpush1.bf16.msra.mxu0 0
  %225 = vmatprep.subr.bf16.mxu0 0
  %226 = vmatpush1.bf16.msra.mxu0 0
  %227 = vmatprep.subr.bf16.mxu0 0
  %228 = vmatpush1.bf16.msra.mxu0 0
  %229 = vmatprep.subr.bf16.mxu0 0
  %230 = vmatpush1.bf16.msra.mxu0 0
  %231 = vmatprep.subr.bf16.mxu0 0
  %232 = vmatpush1.bf16.msra.mxu0 0
  %233 = vmatprep.subr.bf16.mxu0 0
  %234 = vmatpush1.bf16.msra.mxu0 0
  %235 = vmatprep.subr.bf16.mxu0 0
  %236 = vmatpush1.bf16.msra.mxu0 0
  %237 = vmatprep.mubr.bf16.mxu0 0
  %238 = vmatmul.mubr.bf16.gmra.mrb[0].mxu0 %v194
  %v239 = vpop.f32.mrb[0].mxu0
  %v240 = vadd.f32 %v170, %v239
  %v241 = vpop.f32.mrb[0].mxu0
  %v242 = vpop.f32.mrb[0].mxu0
  %v243 = vadd.f32 %v170, %v242
  %v244 = vpop.f32.mrb[0].mxu0
  %245 = vmatprep.mubr.bf16.mxu0 0
  %246 = vmatmul.mubr.bf16.gmra.mrb[0].mxu0 %v197
  %v247 = vpop.f32.mrb[0].mxu0
  %v248 = vadd.f32 %v170, %v247
  %v249 = vpop.f32.mrb[0].mxu0
  %v250 = vpop.f32.mrb[0].mxu0
  %v251 = vadd.f32 %v170, %v250
  %v252 = vpop.f32.mrb[0].mxu0
  %253 = vmatprep.mubr.bf16.mxu0 0
  %254 = vmatmul.mubr.bf16.gmra.mrb[0].mxu0 %v200
  %v255 = vpop.f32.mrb[0].mxu0
  %v256 = vadd.f32 %v170, %v255
  %v257 = vpop.f32.mrb[0].mxu0
  %v258 = vpop.f32.mrb[0].mxu0
  %v259 = vadd.f32 %v170, %v258
  %v260 = vpop.f32.mrb[0].mxu0
  %261 = vmatprep.mubr.bf16.mxu0 0
  %262 = vmatmul.mubr.bf16.gmra.mrb[0].mxu0 %v203
  %v263 = vpop.f32.mrb[0].mxu0
  %v264 = vadd.f32 %v170, %v263
  %v265 = vpop.f32.mrb[0].mxu0
  %v266 = vpop.f32.mrb[0].mxu0
  %v267 = vadd.f32 %v170, %v266
  %v268 = vpop.f32.mrb[0].mxu0
  %269 = vdwg.mxu0
  %vm270 = vcmp.gt.f32.partialorder %v240, 0.0
  %vm271 = vcmp.gt.f32.partialorder %v243, 0.0
  %vm272 = vcmp.gt.f32.partialorder %v248, 0.0
  %vm273 = vcmp.gt.f32.partialorder %v251, 0.0
  %vm274 = vcmp.gt.f32.partialorder %v256, 0.0
  %vm275 = vcmp.gt.f32.partialorder %v259, 0.0
  %vm276 = vcmp.gt.f32.partialorder %v264, 0.0
  %vm277 = vcmp.gt.f32.partialorder %v267, 0.0
  %v278 = vmul.f32 %v240, 0.1
  %v279 = vmul.f32 %v243, 0.1
  %v280 = vmul.f32 %v248, 0.1
  %v281 = vmul.f32 %v251, 0.1
  %v282 = vmul.f32 %v256, 0.1
  %v283 = vmul.f32 %v259, 0.1
  %v284 = vmul.f32 %v264, 0.1
  %v285 = vmul.f32 %v267, 0.1
  %v286 = vsel %vm270, %v240, %v278
  %v287 = vsel %vm271, %v243, %v279
  %v288 = vsel %vm272, %v248, %v280
  %v289 = vsel %vm273, %v251, %v281
  %v290 = vsel %vm274, %v256, %v282
  %v291 = vsel %vm275, %v259, %v283
  %v292 = vsel %vm276, %v264, %v284
  %v293 = vsel %vm277, %v267, %v285
  %v294 = vpack.c.bf16 %v287, %v286
  %v295 = vpack.c.bf16 %v289, %v288
  %v296 = vpack.c.bf16 %v291, %v290
  %v297 = vpack.c.bf16 %v293, %v292
  %v298 = vld [vmem:[%s4] sm:$0xf]
  %v299 = vld [vmem:[%s4 + $0x4] sm:$0xf]
  %v300 = vld [vmem:[%s4 + $0x8] sm:$0xf]
  %v301 = vld [vmem:[%s4 + $0xc] sm:$0xf]
  %v302 = vld [vmem:[%s4 + $0x10] sm:$0xf]
  %v303 = vld [vmem:[%s4 + $0x14] sm:$0xf]
  %v304 = vld [vmem:[%s4 + $0x18] sm:$0xf]
  %v305 = vld [vmem:[%s4 + $0x1c] sm:$0xf]
  %v306 = vld [vmem:[%s5] sm:$0x1]
  %v315 = vunpack.c.l.b16 %v298
  %v316 = vunpack.c.l.b16 %v299
  %v317 = vunpack.c.l.b16 %v300
  %v318 = vunpack.c.l.b16 %v301
  %v319 = vunpack.c.l.b16 %v302
  %v320 = vunpack.c.l.b16 %v303
  %v321 = vunpack.c.l.b16 %v304
  %v322 = vunpack.c.l.b16 %v305
  %v323 = vpack.c.b16 %v316, %v315
  %v324 = vpack.c.b16 %v318, %v317
  %v325 = vpack.c.b16 %v320, %v319
  %v326 = vpack.c.b16 %v322, %v321
  %v332 = vsel %vm192, %v294, 0
  %v335 = vsel %vm192, %v295, 0
  %v338 = vsel %vm192, %v296, 0
  %v341 = vsel %vm192, %v297, 0
  %343 = vmatprep.subr.bf16.mxu0 0
  %344 = vmatpush1.bf16.msra.mxu0 %v323
  %345 = vmatprep.subr.bf16.mxu0 0
  %346 = vmatpush1.bf16.msra.mxu0 %v324
  %347 = vmatprep.subr.bf16.mxu0 0
  %348 = vmatpush1.bf16.msra.mxu0 %v325
  %349 = vmatprep.subr.bf16.mxu0 0
  %350 = vmatpush1.bf16.msra.mxu0 %v326
  %351 = vmatprep.subr.bf16.mxu0 0
  %352 = vmatpush1.bf16.msra.mxu0 0
  %353 = vmatprep.subr.bf16.mxu0 0
  %354 = vmatpush1.bf16.msra.mxu0 0
  %355 = vmatprep.subr.bf16.mxu0 0
  %356 = vmatpush1.bf16.msra.mxu0 0
  %357 = vmatprep.subr.bf16.mxu0 0
  %358 = vmatpush1.bf16.msra.mxu0 0
  %359 = vmatprep.subr.bf16.mxu0 0
  %360 = vmatpush1.bf16.msra.mxu0 0
  %361 = vmatprep.subr.bf16.mxu0 0
  %362 = vmatpush1.bf16.msra.mxu0 0
  %363 = vmatprep.subr.bf16.mxu0 0
  %364 = vmatpush1.bf16.msra.mxu0 0
  %365 = vmatprep.subr.bf16.mxu0 0
  %366 = vmatpush1.bf16.msra.mxu0 0
  %367 = vmatprep.subr.bf16.mxu0 0
  %368 = vmatpush1.bf16.msra.mxu0 0
  %369 = vmatprep.subr.bf16.mxu0 0
  %370 = vmatpush1.bf16.msra.mxu0 0
  %371 = vmatprep.subr.bf16.mxu0 0
  %372 = vmatpush1.bf16.msra.mxu0 0
  %373 = vmatprep.subr.bf16.mxu0 0
  %374 = vmatpush1.bf16.msra.mxu0 0
  %375 = vmatprep.mubr.bf16.mxu0 0
  %376 = vmatmul.mubr.bf16.gmra.mrb[0].mxu0 %v332
  %v377 = vpop.f32.mrb[0].mxu0
  %v378 = vadd.f32 0.0, %v377
  %v379 = vpop.f32.mrb[0].mxu0
  %v380 = vpop.f32.mrb[0].mxu0
  %v381 = vadd.f32 0.0, %v380
  %v382 = vpop.f32.mrb[0].mxu0
  %383 = vmatprep.mubr.bf16.mxu0 0
  %384 = vmatmul.mubr.bf16.gmra.mrb[0].mxu0 %v335
  %v385 = vpop.f32.mrb[0].mxu0
  %v386 = vadd.f32 0.0, %v385
  %v387 = vpop.f32.mrb[0].mxu0
  %v388 = vpop.f32.mrb[0].mxu0
  %v389 = vadd.f32 0.0, %v388
  %v390 = vpop.f32.mrb[0].mxu0
  %391 = vmatprep.mubr.bf16.mxu0 0
  %392 = vmatmul.mubr.bf16.gmra.mrb[0].mxu0 %v338
  %v393 = vpop.f32.mrb[0].mxu0
  %v394 = vadd.f32 0.0, %v393
  %v395 = vpop.f32.mrb[0].mxu0
  %v396 = vpop.f32.mrb[0].mxu0
  %v397 = vadd.f32 0.0, %v396
  %v398 = vpop.f32.mrb[0].mxu0
  %399 = vmatprep.mubr.bf16.mxu0 0
  %400 = vmatmul.mubr.bf16.gmra.mrb[0].mxu0 %v341
  %v401 = vpop.f32.mrb[0].mxu0
  %v402 = vadd.f32 0.0, %v401
  %v403 = vpop.f32.mrb[0].mxu0
  %v404 = vpop.f32.mrb[0].mxu0
  %v405 = vadd.f32 0.0, %v404
  %v406 = vpop.f32.mrb[0].mxu0
  %407 = vdwg.mxu0
  %v408 = vpack.c.bf16 %v381, %v378
  %v409 = vpack.c.bf16 %v389, %v386
  %v410 = vpack.c.bf16 %v397, %v394
  %v411 = vpack.c.bf16 %v405, %v402
  %v413 = vlaneseq
  %v414 = vshrl.u32 %v413, 7
  %v415 = vsub.s32 0, %v414
  %v416 = vrot.slane %v306, %v415
  %418 = vmatprep.subr.bf16.mxu0 0
  %419 = vmatpush1.bf16.msra.mxu0 %v408
  %420 = vmatprep.subr.bf16.mxu0 0
  %421 = vmatpush1.bf16.msra.mxu0 %v409
  %422 = vmatprep.subr.bf16.mxu0 0
  %423 = vmatpush1.bf16.msra.mxu0 %v410
  %424 = vmatprep.subr.bf16.mxu0 0
  %425 = vmatpush1.bf16.msra.mxu0 %v411
  %426 = vmatprep.subr.bf16.mxu0 0
  %427 = vmatpush1.bf16.msra.mxu0 0
  %428 = vmatprep.subr.bf16.mxu0 0
  %429 = vmatpush1.bf16.msra.mxu0 0
  %430 = vmatprep.subr.bf16.mxu0 0
  %431 = vmatpush1.bf16.msra.mxu0 0
  %432 = vmatprep.subr.bf16.mxu0 0
  %433 = vmatpush1.bf16.msra.mxu0 0
  %434 = vmatprep.subr.bf16.mxu0 0
  %435 = vmatpush1.bf16.msra.mxu0 0
  %436 = vmatprep.subr.bf16.mxu0 0
  %437 = vmatpush1.bf16.msra.mxu0 0
  %438 = vmatprep.subr.bf16.mxu0 0
  %439 = vmatpush1.bf16.msra.mxu0 0
  %440 = vmatprep.subr.bf16.mxu0 0
  %441 = vmatpush1.bf16.msra.mxu0 0
  %442 = vmatprep.subr.bf16.mxu0 0
  %443 = vmatpush1.bf16.msra.mxu0 0
  %444 = vmatprep.subr.bf16.mxu0 0
  %445 = vmatpush1.bf16.msra.mxu0 0
  %446 = vmatprep.subr.bf16.mxu0 0
  %447 = vmatpush1.bf16.msra.mxu0 0
  %448 = vmatprep.subr.bf16.mxu0 0
  %449 = vmatpush1.bf16.msra.mxu0 0
  %450 = vmatprep.mubr.bf16.mxu0 0
  %451 = vmatmul.mubr.bf16.gmra.mrb[0].mxu0 %v194
  %v452 = vpop.f32.mrb[0].mxu0
  %v453 = vadd.f32 %v416, %v452
  %v454 = vpop.f32.mrb[0].mxu0
  %v455 = vpop.f32.mrb[0].mxu0
  %v456 = vadd.f32 %v416, %v455
  %v457 = vpop.f32.mrb[0].mxu0
  %458 = vmatprep.mubr.bf16.mxu0 0
  %459 = vmatmul.mubr.bf16.gmra.mrb[0].mxu0 %v197
  %v460 = vpop.f32.mrb[0].mxu0
  %v461 = vadd.f32 %v416, %v460
  %v462 = vpop.f32.mrb[0].mxu0
  %v463 = vpop.f32.mrb[0].mxu0
  %v464 = vadd.f32 %v416, %v463
  %v465 = vpop.f32.mrb[0].mxu0
  %466 = vmatprep.mubr.bf16.mxu0 0
  %467 = vmatmul.mubr.bf16.gmra.mrb[0].mxu0 %v200
  %v468 = vpop.f32.mrb[0].mxu0
  %v469 = vadd.f32 %v416, %v468
  %v470 = vpop.f32.mrb[0].mxu0
  %v471 = vpop.f32.mrb[0].mxu0
  %v472 = vadd.f32 %v416, %v471
  %v473 = vpop.f32.mrb[0].mxu0
  %474 = vmatprep.mubr.bf16.mxu0 0
  %475 = vmatmul.mubr.bf16.gmra.mrb[0].mxu0 %v203
  %v476 = vpop.f32.mrb[0].mxu0
  %v477 = vadd.f32 %v416, %v476
  %v478 = vpop.f32.mrb[0].mxu0
  %v479 = vpop.f32.mrb[0].mxu0
  %v480 = vadd.f32 %v416, %v479
  %v481 = vpop.f32.mrb[0].mxu0
  %482 = vdwg.mxu0
  %vm483 = vcmp.gt.f32.partialorder %v453, 0.0
  %vm484 = vcmp.gt.f32.partialorder %v456, 0.0
  %vm485 = vcmp.gt.f32.partialorder %v461, 0.0
  %vm486 = vcmp.gt.f32.partialorder %v464, 0.0
  %vm487 = vcmp.gt.f32.partialorder %v469, 0.0
  %vm488 = vcmp.gt.f32.partialorder %v472, 0.0
  %vm489 = vcmp.gt.f32.partialorder %v477, 0.0
  %vm490 = vcmp.gt.f32.partialorder %v480, 0.0
  %v491 = vmul.f32 %v453, 0.1
  %v492 = vmul.f32 %v456, 0.1
  %v493 = vmul.f32 %v461, 0.1
  %v494 = vmul.f32 %v464, 0.1
  %v495 = vmul.f32 %v469, 0.1
  %v496 = vmul.f32 %v472, 0.1
  %v497 = vmul.f32 %v477, 0.1
  %v498 = vmul.f32 %v480, 0.1
  %v499 = vsel %vm483, %v453, %v491
  %v500 = vsel %vm484, %v456, %v492
  %v501 = vsel %vm485, %v461, %v493
  %v502 = vsel %vm486, %v464, %v494
  %v503 = vsel %vm487, %v469, %v495
  %v504 = vsel %vm488, %v472, %v496
  %v505 = vsel %vm489, %v477, %v497
  %v506 = vsel %vm490, %v480, %v498
  %v507 = vpack.c.bf16 %v500, %v499
  %v508 = vpack.c.bf16 %v502, %v501
  %v509 = vpack.c.bf16 %v504, %v503
  %v510 = vpack.c.bf16 %v506, %v505
  %v511 = vld [vmem:[%s6] sm:$0xf]
  %v512 = vld [vmem:[%s6 + $0x4] sm:$0xf]
  %v513 = vld [vmem:[%s6 + $0x8] sm:$0xf]
  %v514 = vld [vmem:[%s6 + $0xc] sm:$0xf]
  %v515 = vld [vmem:[%s6 + $0x10] sm:$0xf]
  %v516 = vld [vmem:[%s6 + $0x14] sm:$0xf]
  %v517 = vld [vmem:[%s6 + $0x18] sm:$0xf]
  %v518 = vld [vmem:[%s6 + $0x1c] sm:$0xf]
  %v519 = vld [vmem:[%s7] sm:$0x1]
  %v528 = vunpack.c.l.b16 %v511
  %v529 = vunpack.c.l.b16 %v512
  %v530 = vunpack.c.l.b16 %v513
  %v531 = vunpack.c.l.b16 %v514
  %v532 = vunpack.c.l.b16 %v515
  %v533 = vunpack.c.l.b16 %v516
  %v534 = vunpack.c.l.b16 %v517
  %v535 = vunpack.c.l.b16 %v518
  %v536 = vpack.c.b16 %v529, %v528
  %v537 = vpack.c.b16 %v531, %v530
  %v538 = vpack.c.b16 %v533, %v532
  %v539 = vpack.c.b16 %v535, %v534
  %v545 = vsel %vm192, %v507, 0
  %v548 = vsel %vm192, %v508, 0
  %v551 = vsel %vm192, %v509, 0
  %v554 = vsel %vm192, %v510, 0
  %556 = vmatprep.subr.bf16.mxu0 0
  %557 = vmatpush1.bf16.msra.mxu0 %v536
  %558 = vmatprep.subr.bf16.mxu0 0
  %559 = vmatpush1.bf16.msra.mxu0 %v537
  %560 = vmatprep.subr.bf16.mxu0 0
  %561 = vmatpush1.bf16.msra.mxu0 %v538
  %562 = vmatprep.subr.bf16.mxu0 0
  %563 = vmatpush1.bf16.msra.mxu0 %v539
  %564 = vmatprep.subr.bf16.mxu0 0
  %565 = vmatpush1.bf16.msra.mxu0 0
  %566 = vmatprep.subr.bf16.mxu0 0
  %567 = vmatpush1.bf16.msra.mxu0 0
  %568 = vmatprep.subr.bf16.mxu0 0
  %569 = vmatpush1.bf16.msra.mxu0 0
  %570 = vmatprep.subr.bf16.mxu0 0
  %571 = vmatpush1.bf16.msra.mxu0 0
  %572 = vmatprep.subr.bf16.mxu0 0
  %573 = vmatpush1.bf16.msra.mxu0 0
  %574 = vmatprep.subr.bf16.mxu0 0
  %575 = vmatpush1.bf16.msra.mxu0 0
  %576 = vmatprep.subr.bf16.mxu0 0
  %577 = vmatpush1.bf16.msra.mxu0 0
  %578 = vmatprep.subr.bf16.mxu0 0
  %579 = vmatpush1.bf16.msra.mxu0 0
  %580 = vmatprep.subr.bf16.mxu0 0
  %581 = vmatpush1.bf16.msra.mxu0 0
  %582 = vmatprep.subr.bf16.mxu0 0
  %583 = vmatpush1.bf16.msra.mxu0 0
  %584 = vmatprep.subr.bf16.mxu0 0
  %585 = vmatpush1.bf16.msra.mxu0 0
  %586 = vmatprep.subr.bf16.mxu0 0
  %587 = vmatpush1.bf16.msra.mxu0 0
  %588 = vmatprep.mubr.bf16.mxu0 0
  %589 = vmatmul.mubr.bf16.gmra.mrb[0].mxu0 %v545
  %v590 = vpop.f32.mrb[0].mxu0
  %v591 = vadd.f32 0.0, %v590
  %v592 = vpop.f32.mrb[0].mxu0
  %v593 = vpop.f32.mrb[0].mxu0
  %v594 = vadd.f32 0.0, %v593
  %v595 = vpop.f32.mrb[0].mxu0
  %596 = vmatprep.mubr.bf16.mxu0 0
  %597 = vmatmul.mubr.bf16.gmra.mrb[0].mxu0 %v548
  %v598 = vpop.f32.mrb[0].mxu0
  %v599 = vadd.f32 0.0, %v598
  %v600 = vpop.f32.mrb[0].mxu0
  %v601 = vpop.f32.mrb[0].mxu0
  %v602 = vadd.f32 0.0, %v601
  %v603 = vpop.f32.mrb[0].mxu0
  %604 = vmatprep.mubr.bf16.mxu0 0
  %605 = vmatmul.mubr.bf16.gmra.mrb[0].mxu0 %v551
  %v606 = vpop.f32.mrb[0].mxu0
  %v607 = vadd.f32 0.0, %v606
  %v608 = vpop.f32.mrb[0].mxu0
  %v609 = vpop.f32.mrb[0].mxu0
  %v610 = vadd.f32 0.0, %v609
  %v611 = vpop.f32.mrb[0].mxu0
  %612 = vmatprep.mubr.bf16.mxu0 0
  %613 = vmatmul.mubr.bf16.gmra.mrb[0].mxu0 %v554
  %v614 = vpop.f32.mrb[0].mxu0
  %v615 = vadd.f32 0.0, %v614
  %v616 = vpop.f32.mrb[0].mxu0
  %v617 = vpop.f32.mrb[0].mxu0
  %v618 = vadd.f32 0.0, %v617
  %v619 = vpop.f32.mrb[0].mxu0
  %620 = vdwg.mxu0
  %v621 = vpack.c.bf16 %v594, %v591
  %v622 = vpack.c.bf16 %v602, %v599
  %v623 = vpack.c.bf16 %v610, %v607
  %v624 = vpack.c.bf16 %v618, %v615
  %v626 = vlaneseq
  %v627 = vshrl.u32 %v626, 7
  %v628 = vsub.s32 0, %v627
  %v629 = vrot.slane %v519, %v628
  %631 = vmatprep.subr.bf16.mxu0 0
  %632 = vmatpush1.bf16.msra.mxu0 %v621
  %633 = vmatprep.subr.bf16.mxu0 0
  %634 = vmatpush1.bf16.msra.mxu0 %v622
  %635 = vmatprep.subr.bf16.mxu0 0
  %636 = vmatpush1.bf16.msra.mxu0 %v623
  %637 = vmatprep.subr.bf16.mxu0 0
  %638 = vmatpush1.bf16.msra.mxu0 %v624
  %639 = vmatprep.subr.bf16.mxu0 0
  %640 = vmatpush1.bf16.msra.mxu0 0
  %641 = vmatprep.subr.bf16.mxu0 0
  %642 = vmatpush1.bf16.msra.mxu0 0
  %643 = vmatprep.subr.bf16.mxu0 0
  %644 = vmatpush1.bf16.msra.mxu0 0
  %645 = vmatprep.subr.bf16.mxu0 0
  %646 = vmatpush1.bf16.msra.mxu0 0
  %647 = vmatprep.subr.bf16.mxu0 0
  %648 = vmatpush1.bf16.msra.mxu0 0
  %649 = vmatprep.subr.bf16.mxu0 0
  %650 = vmatpush1.bf16.msra.mxu0 0
  %651 = vmatprep.subr.bf16.mxu0 0
  %652 = vmatpush1.bf16.msra.mxu0 0
  %653 = vmatprep.subr.bf16.mxu0 0
  %654 = vmatpush1.bf16.msra.mxu0 0
  %655 = vmatprep.subr.bf16.mxu0 0
  %656 = vmatpush1.bf16.msra.mxu0 0
  %657 = vmatprep.subr.bf16.mxu0 0
  %658 = vmatpush1.bf16.msra.mxu0 0
  %659 = vmatprep.subr.bf16.mxu0 0
  %660 = vmatpush1.bf16.msra.mxu0 0
  %661 = vmatprep.subr.bf16.mxu0 0
  %662 = vmatpush1.bf16.msra.mxu0 0
  %663 = vmatprep.mubr.bf16.mxu0 0
  %664 = vmatmul.mubr.bf16.gmra.mrb[0].mxu0 %v194
  %v665 = vpop.f32.mrb[0].mxu0
  %v666 = vadd.f32 %v629, %v665
  %v667 = vpop.f32.mrb[0].mxu0
  %v668 = vpop.f32.mrb[0].mxu0
  %v669 = vadd.f32 %v629, %v668
  %v670 = vpop.f32.mrb[0].mxu0
  %671 = vmatprep.mubr.bf16.mxu0 0
  %672 = vmatmul.mubr.bf16.gmra.mrb[0].mxu0 %v197
  %v673 = vpop.f32.mrb[0].mxu0
  %v674 = vadd.f32 %v629, %v673
  %v675 = vpop.f32.mrb[0].mxu0
  %v676 = vpop.f32.mrb[0].mxu0
  %v677 = vadd.f32 %v629, %v676
  %v678 = vpop.f32.mrb[0].mxu0
  %679 = vmatprep.mubr.bf16.mxu0 0
  %680 = vmatmul.mubr.bf16.gmra.mrb[0].mxu0 %v200
  %v681 = vpop.f32.mrb[0].mxu0
  %v682 = vadd.f32 %v629, %v681
  %v683 = vpop.f32.mrb[0].mxu0
  %v684 = vpop.f32.mrb[0].mxu0
  %v685 = vadd.f32 %v629, %v684
  %v686 = vpop.f32.mrb[0].mxu0
  %687 = vmatprep.mubr.bf16.mxu0 0
  %688 = vmatmul.mubr.bf16.gmra.mrb[0].mxu0 %v203
  %v689 = vpop.f32.mrb[0].mxu0
  %v690 = vadd.f32 %v629, %v689
  %v691 = vpop.f32.mrb[0].mxu0
  %v692 = vpop.f32.mrb[0].mxu0
  %v693 = vadd.f32 %v629, %v692
  %v694 = vpop.f32.mrb[0].mxu0
  %695 = vdwg.mxu0
  %vm696 = vcmp.gt.f32.partialorder %v666, 0.0
  %vm697 = vcmp.gt.f32.partialorder %v669, 0.0
  %vm698 = vcmp.gt.f32.partialorder %v674, 0.0
  %vm699 = vcmp.gt.f32.partialorder %v677, 0.0
  %vm700 = vcmp.gt.f32.partialorder %v682, 0.0
  %vm701 = vcmp.gt.f32.partialorder %v685, 0.0
  %vm702 = vcmp.gt.f32.partialorder %v690, 0.0
  %vm703 = vcmp.gt.f32.partialorder %v693, 0.0
  %v704 = vmul.f32 %v666, 0.1
  %v705 = vmul.f32 %v669, 0.1
  %v706 = vmul.f32 %v674, 0.1
  %v707 = vmul.f32 %v677, 0.1
  %v708 = vmul.f32 %v682, 0.1
  %v709 = vmul.f32 %v685, 0.1
  %v710 = vmul.f32 %v690, 0.1
  %v711 = vmul.f32 %v693, 0.1
  %v712 = vsel %vm696, %v666, %v704
  %v713 = vsel %vm697, %v669, %v705
  %v714 = vsel %vm698, %v674, %v706
  %v715 = vsel %vm699, %v677, %v707
  %v716 = vsel %vm700, %v682, %v708
  %v717 = vsel %vm701, %v685, %v709
  %v718 = vsel %vm702, %v690, %v710
  %v719 = vsel %vm703, %v693, %v711
  %v720 = vpack.c.bf16 %v713, %v712
  %v721 = vpack.c.bf16 %v715, %v714
  %v722 = vpack.c.bf16 %v717, %v716
  %v723 = vpack.c.bf16 %v719, %v718
  %v724 = vld [vmem:[%s8] sm:$0xf]
  %v725 = vld [vmem:[%s8 + $0x4] sm:$0xf]
  %v726 = vld [vmem:[%s8 + $0x8] sm:$0xf]
  %v727 = vld [vmem:[%s8 + $0xc] sm:$0xf]
  %v728 = vld [vmem:[%s8 + $0x10] sm:$0xf]
  %v729 = vld [vmem:[%s8 + $0x14] sm:$0xf]
  %v730 = vld [vmem:[%s8 + $0x18] sm:$0xf]
  %v731 = vld [vmem:[%s8 + $0x1c] sm:$0xf]
  %v732 = vld [vmem:[%s9] sm:$0x1]
  %v741 = vunpack.c.l.b16 %v724
  %v742 = vunpack.c.l.b16 %v725
  %v743 = vunpack.c.l.b16 %v726
  %v744 = vunpack.c.l.b16 %v727
  %v745 = vunpack.c.l.b16 %v728
  %v746 = vunpack.c.l.b16 %v729
  %v747 = vunpack.c.l.b16 %v730
  %v748 = vunpack.c.l.b16 %v731
  %v749 = vpack.c.b16 %v742, %v741
  %v750 = vpack.c.b16 %v744, %v743
  %v751 = vpack.c.b16 %v746, %v745
  %v752 = vpack.c.b16 %v748, %v747
  %v758 = vsel %vm192, %v720, 0
  %v761 = vsel %vm192, %v721, 0
  %v764 = vsel %vm192, %v722, 0
  %v767 = vsel %vm192, %v723, 0
  %769 = vmatprep.subr.bf16.mxu0 0
  %770 = vmatpush1.bf16.msra.mxu0 %v749
  %771 = vmatprep.subr.bf16.mxu0 0
  %772 = vmatpush1.bf16.msra.mxu0 %v750
  %773 = vmatprep.subr.bf16.mxu0 0
  %774 = vmatpush1.bf16.msra.mxu0 %v751
  %775 = vmatprep.subr.bf16.mxu0 0
  %776 = vmatpush1.bf16.msra.mxu0 %v752
  %777 = vmatprep.subr.bf16.mxu0 0
  %778 = vmatpush1.bf16.msra.mxu0 0
  %779 = vmatprep.subr.bf16.mxu0 0
  %780 = vmatpush1.bf16.msra.mxu0 0
  %781 = vmatprep.subr.bf16.mxu0 0
  %782 = vmatpush1.bf16.msra.mxu0 0
  %783 = vmatprep.subr.bf16.mxu0 0
  %784 = vmatpush1.bf16.msra.mxu0 0
  %785 = vmatprep.subr.bf16.mxu0 0
  %786 = vmatpush1.bf16.msra.mxu0 0
  %787 = vmatprep.subr.bf16.mxu0 0
  %788 = vmatpush1.bf16.msra.mxu0 0
  %789 = vmatprep.subr.bf16.mxu0 0
  %790 = vmatpush1.bf16.msra.mxu0 0
  %791 = vmatprep.subr.bf16.mxu0 0
  %792 = vmatpush1.bf16.msra.mxu0 0
  %793 = vmatprep.subr.bf16.mxu0 0
  %794 = vmatpush1.bf16.msra.mxu0 0
  %795 = vmatprep.subr.bf16.mxu0 0
  %796 = vmatpush1.bf16.msra.mxu0 0
  %797 = vmatprep.subr.bf16.mxu0 0
  %798 = vmatpush1.bf16.msra.mxu0 0
  %799 = vmatprep.subr.bf16.mxu0 0
  %800 = vmatpush1.bf16.msra.mxu0 0
  %801 = vmatprep.mubr.bf16.mxu0 0
  %802 = vmatmul.mubr.bf16.gmra.mrb[0].mxu0 %v758
  %v803 = vpop.f32.mrb[0].mxu0
  %v804 = vadd.f32 0.0, %v803
  %v805 = vpop.f32.mrb[0].mxu0
  %v806 = vpop.f32.mrb[0].mxu0
  %v807 = vadd.f32 0.0, %v806
  %v808 = vpop.f32.mrb[0].mxu0
  %809 = vmatprep.mubr.bf16.mxu0 0
  %810 = vmatmul.mubr.bf16.gmra.mrb[0].mxu0 %v761
  %v811 = vpop.f32.mrb[0].mxu0
  %v812 = vadd.f32 0.0, %v811
  %v813 = vpop.f32.mrb[0].mxu0
  %v814 = vpop.f32.mrb[0].mxu0
  %v815 = vadd.f32 0.0, %v814
  %v816 = vpop.f32.mrb[0].mxu0
  %817 = vmatprep.mubr.bf16.mxu0 0
  %818 = vmatmul.mubr.bf16.gmra.mrb[0].mxu0 %v764
  %v819 = vpop.f32.mrb[0].mxu0
  %v820 = vadd.f32 0.0, %v819
  %v821 = vpop.f32.mrb[0].mxu0
  %v822 = vpop.f32.mrb[0].mxu0
  %v823 = vadd.f32 0.0, %v822
  %v824 = vpop.f32.mrb[0].mxu0
  %825 = vmatprep.mubr.bf16.mxu0 0
  %826 = vmatmul.mubr.bf16.gmra.mrb[0].mxu0 %v767
  %v827 = vpop.f32.mrb[0].mxu0
  %v828 = vadd.f32 0.0, %v827
  %v829 = vpop.f32.mrb[0].mxu0
  %v830 = vpop.f32.mrb[0].mxu0
  %v831 = vadd.f32 0.0, %v830
  %v832 = vpop.f32.mrb[0].mxu0
  %833 = vdwg.mxu0
  %v834 = vpack.c.bf16 %v807, %v804
  %v835 = vpack.c.bf16 %v815, %v812
  %v836 = vpack.c.bf16 %v823, %v820
  %v837 = vpack.c.bf16 %v831, %v828
  %v839 = vlaneseq
  %v840 = vshrl.u32 %v839, 7
  %v841 = vsub.s32 0, %v840
  %v842 = vrot.slane %v732, %v841
  %844 = vmatprep.subr.bf16.mxu0 0
  %845 = vmatpush1.bf16.msra.mxu0 %v834
  %846 = vmatprep.subr.bf16.mxu0 0
  %847 = vmatpush1.bf16.msra.mxu0 %v835
  %848 = vmatprep.subr.bf16.mxu0 0
  %849 = vmatpush1.bf16.msra.mxu0 %v836
  %850 = vmatprep.subr.bf16.mxu0 0
  %851 = vmatpush1.bf16.msra.mxu0 %v837
  %852 = vmatprep.subr.bf16.mxu0 0
  %853 = vmatpush1.bf16.msra.mxu0 0
  %854 = vmatprep.subr.bf16.mxu0 0
  %855 = vmatpush1.bf16.msra.mxu0 0
  %856 = vmatprep.subr.bf16.mxu0 0
  %857 = vmatpush1.bf16.msra.mxu0 0
  %858 = vmatprep.subr.bf16.mxu0 0
  %859 = vmatpush1.bf16.msra.mxu0 0
  %860 = vmatprep.subr.bf16.mxu0 0
  %861 = vmatpush1.bf16.msra.mxu0 0
  %862 = vmatprep.subr.bf16.mxu0 0
  %863 = vmatpush1.bf16.msra.mxu0 0
  %864 = vmatprep.subr.bf16.mxu0 0
  %865 = vmatpush1.bf16.msra.mxu0 0
  %866 = vmatprep.subr.bf16.mxu0 0
  %867 = vmatpush1.bf16.msra.mxu0 0
  %868 = vmatprep.subr.bf16.mxu0 0
  %869 = vmatpush1.bf16.msra.mxu0 0
  %870 = vmatprep.subr.bf16.mxu0 0
  %871 = vmatpush1.bf16.msra.mxu0 0
  %872 = vmatprep.subr.bf16.mxu0 0
  %873 = vmatpush1.bf16.msra.mxu0 0
  %874 = vmatprep.subr.bf16.mxu0 0
  %875 = vmatpush1.bf16.msra.mxu0 0
  %876 = vmatprep.mubr.bf16.mxu0 0
  %877 = vmatmul.mubr.bf16.gmra.mrb[0].mxu0 %v194
  %v878 = vpop.f32.mrb[0].mxu0
  %v879 = vadd.f32 %v842, %v878
  %v880 = vpop.f32.mrb[0].mxu0
  %v881 = vpop.f32.mrb[0].mxu0
  %v882 = vadd.f32 %v842, %v881
  %v883 = vpop.f32.mrb[0].mxu0
  %884 = vmatprep.mubr.bf16.mxu0 0
  %885 = vmatmul.mubr.bf16.gmra.mrb[0].mxu0 %v197
  %v886 = vpop.f32.mrb[0].mxu0
  %v887 = vadd.f32 %v842, %v886
  %v888 = vpop.f32.mrb[0].mxu0
  %v889 = vpop.f32.mrb[0].mxu0
  %v890 = vadd.f32 %v842, %v889
  %v891 = vpop.f32.mrb[0].mxu0
  %892 = vmatprep.mubr.bf16.mxu0 0
  %893 = vmatmul.mubr.bf16.gmra.mrb[0].mxu0 %v200
  %v894 = vpop.f32.mrb[0].mxu0
  %v895 = vadd.f32 %v842, %v894
  %v896 = vpop.f32.mrb[0].mxu0
  %v897 = vpop.f32.mrb[0].mxu0
  %v898 = vadd.f32 %v842, %v897
  %v899 = vpop.f32.mrb[0].mxu0
  %900 = vmatprep.mubr.bf16.mxu0 0
  %901 = vmatmul.mubr.bf16.gmra.mrb[0].mxu0 %v203
  %v902 = vpop.f32.mrb[0].mxu0
  %v903 = vadd.f32 %v842, %v902
  %v904 = vpop.f32.mrb[0].mxu0
  %v905 = vpop.f32.mrb[0].mxu0
  %v906 = vadd.f32 %v842, %v905
  %v907 = vpop.f32.mrb[0].mxu0
  %908 = vdwg.mxu0
  %vm909 = vcmp.gt.f32.partialorder %v879, 0.0
  %vm910 = vcmp.gt.f32.partialorder %v882, 0.0
  %vm911 = vcmp.gt.f32.partialorder %v887, 0.0
  %vm912 = vcmp.gt.f32.partialorder %v890, 0.0
  %vm913 = vcmp.gt.f32.partialorder %v895, 0.0
  %vm914 = vcmp.gt.f32.partialorder %v898, 0.0
  %vm915 = vcmp.gt.f32.partialorder %v903, 0.0
  %vm916 = vcmp.gt.f32.partialorder %v906, 0.0
  %v917 = vmul.f32 %v879, 0.1
  %v918 = vmul.f32 %v882, 0.1
  %v919 = vmul.f32 %v887, 0.1
  %v920 = vmul.f32 %v890, 0.1
  %v921 = vmul.f32 %v895, 0.1
  %v922 = vmul.f32 %v898, 0.1
  %v923 = vmul.f32 %v903, 0.1
  %v924 = vmul.f32 %v906, 0.1
  %v925 = vsel %vm909, %v879, %v917
  %v926 = vsel %vm910, %v882, %v918
  %v927 = vsel %vm911, %v887, %v919
  %v928 = vsel %vm912, %v890, %v920
  %v929 = vsel %vm913, %v895, %v921
  %v930 = vsel %vm914, %v898, %v922
  %v931 = vsel %vm915, %v903, %v923
  %v932 = vsel %vm916, %v906, %v924
  %v933 = vpack.c.bf16 %v926, %v925
  %v934 = vpack.c.bf16 %v928, %v927
  %v935 = vpack.c.bf16 %v930, %v929
  %v936 = vpack.c.bf16 %v932, %v931
  %v937 = vld [vmem:[%s10] sm:$0xf]
  %v938 = vld [vmem:[%s10 + $0x4] sm:$0xf]
  %v939 = vld [vmem:[%s10 + $0x8] sm:$0xf]
  %v940 = vld [vmem:[%s10 + $0xc] sm:$0xf]
  %v941 = vld [vmem:[%s10 + $0x10] sm:$0xf]
  %v942 = vld [vmem:[%s10 + $0x14] sm:$0xf]
  %v943 = vld [vmem:[%s10 + $0x18] sm:$0xf]
  %v944 = vld [vmem:[%s10 + $0x1c] sm:$0xf]
  %v945 = vld [vmem:[%s11] sm:$0x1]
  %v954 = vunpack.c.l.b16 %v937
  %v955 = vunpack.c.l.b16 %v938
  %v956 = vunpack.c.l.b16 %v939
  %v957 = vunpack.c.l.b16 %v940
  %v958 = vunpack.c.l.b16 %v941
  %v959 = vunpack.c.l.b16 %v942
  %v960 = vunpack.c.l.b16 %v943
  %v961 = vunpack.c.l.b16 %v944
  %v962 = vpack.c.b16 %v955, %v954
  %v963 = vpack.c.b16 %v957, %v956
  %v964 = vpack.c.b16 %v959, %v958
  %v965 = vpack.c.b16 %v961, %v960
  %v971 = vsel %vm192, %v933, 0
  %v974 = vsel %vm192, %v934, 0
  %v977 = vsel %vm192, %v935, 0
  %v980 = vsel %vm192, %v936, 0
  %982 = vmatprep.subr.bf16.mxu0 0
  %983 = vmatpush1.bf16.msra.mxu0 %v962
  %984 = vmatprep.subr.bf16.mxu0 0
  %985 = vmatpush1.bf16.msra.mxu0 %v963
  %986 = vmatprep.subr.bf16.mxu0 0
  %987 = vmatpush1.bf16.msra.mxu0 %v964
  %988 = vmatprep.subr.bf16.mxu0 0
  %989 = vmatpush1.bf16.msra.mxu0 %v965
  %990 = vmatprep.subr.bf16.mxu0 0
  %991 = vmatpush1.bf16.msra.mxu0 0
  %992 = vmatprep.subr.bf16.mxu0 0
  %993 = vmatpush1.bf16.msra.mxu0 0
  %994 = vmatprep.subr.bf16.mxu0 0
  %995 = vmatpush1.bf16.msra.mxu0 0
  %996 = vmatprep.subr.bf16.mxu0 0
  %997 = vmatpush1.bf16.msra.mxu0 0
  %998 = vmatprep.subr.bf16.mxu0 0
  %999 = vmatpush1.bf16.msra.mxu0 0
  %1000 = vmatprep.subr.bf16.mxu0 0
  %1001 = vmatpush1.bf16.msra.mxu0 0
  %1002 = vmatprep.subr.bf16.mxu0 0
  %1003 = vmatpush1.bf16.msra.mxu0 0
  %1004 = vmatprep.subr.bf16.mxu0 0
  %1005 = vmatpush1.bf16.msra.mxu0 0
  %1006 = vmatprep.subr.bf16.mxu0 0
  %1007 = vmatpush1.bf16.msra.mxu0 0
  %1008 = vmatprep.subr.bf16.mxu0 0
  %1009 = vmatpush1.bf16.msra.mxu0 0
  %1010 = vmatprep.subr.bf16.mxu0 0
  %1011 = vmatpush1.bf16.msra.mxu0 0
  %1012 = vmatprep.subr.bf16.mxu0 0
  %1013 = vmatpush1.bf16.msra.mxu0 0
  %1014 = vmatprep.mubr.bf16.mxu0 0
  %1015 = vmatmul.mubr.bf16.gmra.mrb[0].mxu0 %v971
  %v1016 = vpop.f32.mrb[0].mxu0
  %v1017 = vadd.f32 0.0, %v1016
  %v1018 = vpop.f32.mrb[0].mxu0
  %v1019 = vpop.f32.mrb[0].mxu0
  %v1020 = vadd.f32 0.0, %v1019
  %v1021 = vpop.f32.mrb[0].mxu0
  %1022 = vmatprep.mubr.bf16.mxu0 0
  %1023 = vmatmul.mubr.bf16.gmra.mrb[0].mxu0 %v974
  %v1024 = vpop.f32.mrb[0].mxu0
  %v1025 = vadd.f32 0.0, %v1024
  %v1026 = vpop.f32.mrb[0].mxu0
  %v1027 = vpop.f32.mrb[0].mxu0
  %v1028 = vadd.f32 0.0, %v1027
  %v1029 = vpop.f32.mrb[0].mxu0
  %1030 = vmatprep.mubr.bf16.mxu0 0
  %1031 = vmatmul.mubr.bf16.gmra.mrb[0].mxu0 %v977
  %v1032 = vpop.f32.mrb[0].mxu0
  %v1033 = vadd.f32 0.0, %v1032
  %v1034 = vpop.f32.mrb[0].mxu0
  %v1035 = vpop.f32.mrb[0].mxu0
  %v1036 = vadd.f32 0.0, %v1035
  %v1037 = vpop.f32.mrb[0].mxu0
  %1038 = vmatprep.mubr.bf16.mxu0 0
  %1039 = vmatmul.mubr.bf16.gmra.mrb[0].mxu0 %v980
  %v1040 = vpop.f32.mrb[0].mxu0
  %v1041 = vadd.f32 0.0, %v1040
  %v1042 = vpop.f32.mrb[0].mxu0
  %v1043 = vpop.f32.mrb[0].mxu0
  %v1044 = vadd.f32 0.0, %v1043
  %v1045 = vpop.f32.mrb[0].mxu0
  %1046 = vdwg.mxu0
  %v1047 = vpack.c.bf16 %v1020, %v1017
  %v1048 = vpack.c.bf16 %v1028, %v1025
  %v1049 = vpack.c.bf16 %v1036, %v1033
  %v1050 = vpack.c.bf16 %v1044, %v1041
  %v1052 = vlaneseq
  %v1053 = vshrl.u32 %v1052, 7
  %v1054 = vsub.s32 0, %v1053
  %v1055 = vrot.slane %v945, %v1054
  %1057 = vmatprep.subr.bf16.mxu0 0
  %1058 = vmatpush1.bf16.msra.mxu0 %v1047
  %1059 = vmatprep.subr.bf16.mxu0 0
  %1060 = vmatpush1.bf16.msra.mxu0 %v1048
  %1061 = vmatprep.subr.bf16.mxu0 0
  %1062 = vmatpush1.bf16.msra.mxu0 %v1049
  %1063 = vmatprep.subr.bf16.mxu0 0
  %1064 = vmatpush1.bf16.msra.mxu0 %v1050
  %1065 = vmatprep.subr.bf16.mxu0 0
  %1066 = vmatpush1.bf16.msra.mxu0 0
  %1067 = vmatprep.subr.bf16.mxu0 0
  %1068 = vmatpush1.bf16.msra.mxu0 0
  %1069 = vmatprep.subr.bf16.mxu0 0
  %1070 = vmatpush1.bf16.msra.mxu0 0
  %1071 = vmatprep.subr.bf16.mxu0 0
  %1072 = vmatpush1.bf16.msra.mxu0 0
  %1073 = vmatprep.subr.bf16.mxu0 0
  %1074 = vmatpush1.bf16.msra.mxu0 0
  %1075 = vmatprep.subr.bf16.mxu0 0
  %1076 = vmatpush1.bf16.msra.mxu0 0
  %1077 = vmatprep.subr.bf16.mxu0 0
  %1078 = vmatpush1.bf16.msra.mxu0 0
  %1079 = vmatprep.subr.bf16.mxu0 0
  %1080 = vmatpush1.bf16.msra.mxu0 0
  %1081 = vmatprep.subr.bf16.mxu0 0
  %1082 = vmatpush1.bf16.msra.mxu0 0
  %1083 = vmatprep.subr.bf16.mxu0 0
  %1084 = vmatpush1.bf16.msra.mxu0 0
  %1085 = vmatprep.subr.bf16.mxu0 0
  %1086 = vmatpush1.bf16.msra.mxu0 0
  %1087 = vmatprep.subr.bf16.mxu0 0
  %1088 = vmatpush1.bf16.msra.mxu0 0
  %1089 = vmatprep.mubr.bf16.mxu0 0
  %1090 = vmatmul.mubr.bf16.gmra.mrb[0].mxu0 %v194
  %v1091 = vpop.f32.mrb[0].mxu0
  %v1092 = vadd.f32 %v1055, %v1091
  %v1093 = vpop.f32.mrb[0].mxu0
  %v1094 = vpop.f32.mrb[0].mxu0
  %v1095 = vadd.f32 %v1055, %v1094
  %v1096 = vpop.f32.mrb[0].mxu0
  %1097 = vmatprep.mubr.bf16.mxu0 0
  %1098 = vmatmul.mubr.bf16.gmra.mrb[0].mxu0 %v197
  %v1099 = vpop.f32.mrb[0].mxu0
  %v1100 = vadd.f32 %v1055, %v1099
  %v1101 = vpop.f32.mrb[0].mxu0
  %v1102 = vpop.f32.mrb[0].mxu0
  %v1103 = vadd.f32 %v1055, %v1102
  %v1104 = vpop.f32.mrb[0].mxu0
  %1105 = vmatprep.mubr.bf16.mxu0 0
  %1106 = vmatmul.mubr.bf16.gmra.mrb[0].mxu0 %v200
  %v1107 = vpop.f32.mrb[0].mxu0
  %v1108 = vadd.f32 %v1055, %v1107
  %v1109 = vpop.f32.mrb[0].mxu0
  %v1110 = vpop.f32.mrb[0].mxu0
  %v1111 = vadd.f32 %v1055, %v1110
  %v1112 = vpop.f32.mrb[0].mxu0
  %1113 = vmatprep.mubr.bf16.mxu0 0
  %1114 = vmatmul.mubr.bf16.gmra.mrb[0].mxu0 %v203
  %v1115 = vpop.f32.mrb[0].mxu0
  %v1116 = vadd.f32 %v1055, %v1115
  %v1117 = vpop.f32.mrb[0].mxu0
  %v1118 = vpop.f32.mrb[0].mxu0
  %v1119 = vadd.f32 %v1055, %v1118
  %v1120 = vpop.f32.mrb[0].mxu0
  %1121 = vdwg.mxu0
  %1122 = vst [vmem:[%s12] sm:$0xff] %v1092
  %1123 = vst [vmem:[%s12 + $0x8] sm:$0xff] %v1095
  %1124 = vst [vmem:[%s12 + $0x10] sm:$0xff] %v1100
  %1125 = vst [vmem:[%s12 + $0x18] sm:$0xff] %v1103
  %1126 = vst [vmem:[%s12 + $0x20] sm:$0xff] %v1108
  %1127 = vst [vmem:[%s12 + $0x28] sm:$0xff] %v1111
  %1128 = vst [vmem:[%s12 + $0x30] sm:$0xff] %v1116
  %1129 = vst [vmem:[%s12 + $0x38] sm:$0xff] %v1119
  // Predicated region
  $region50: #{flow_ml_error_forward.21} parent=0 // pred_check
    _
  $region51: #{flow_ml_error_forward.21} parent=0 // pred_check_branch
    %1131 = sbr.rel (0) target = $region53
  $region52: #{flow_ml_error_forward.21} parent=0 // pred_region
    _
  $region53: #{flow_ml_error_forward.21} parent=0 // pred_fallthru
    _
  // Predicated region
  $region54: #{flow_ml_error_forward.21} parent=0 // pred_check
    _
  $region55: #{flow_ml_error_forward.21} parent=0 // pred_check_branch
    %1133 = sbr.rel (0) target = $region57
  $region56: #{flow_ml_error_forward.21} parent=0 // pred_region
    _
  $region57: #{flow_ml_error_forward.21} parent=0 // pred_fallthru
    _

</llo_original>
